<compile_context>
chip_gen: v5e
topology: v5e:2x2
jax: 0.10.0
libtpu: 0.0.40
codegen_flags: <defaults>
</compile_context>

<pallas_src>
import jax
import jax.numpy as jnp
from jax.experimental import pallas as pl
from jax.experimental.pallas import tpu as pltpu

EMBED_SIZE = 100   # args.embed_size
OUTPUT_SIZE = 2    # args.output_size
LANES = 128


def fasttext_kernel(tok_ref, emb_hbm, w_ref, b_ref, out_ref, gbuf, sems):
    """One grid step processes one batch tile.

    tok_ref : (B_pad, S) int32      SMEM (scalar prefetch)
    emb_hbm : (V, E_pad) float32    HBM  (memory_space=ANY, manual DMA gather)
    w_ref   : (E_pad, O) float32    VMEM -- linear weight with 1/S folded in
    b_ref   : (1, O)     float32    VMEM
    out_ref : (TILE_B, O) float32   VMEM
    gbuf    : (TILE_B, S, E_pad) f32 VMEM scratch (gather destination)
    sems    : (TILE_B, S) DMA semaphores
    """
    tile_b, seq, _ = gbuf.shape
    base = pl.program_id(0) * tile_b

    # Issue every row-gather DMA for this tile; they all overlap each other.
    for bb in range(tile_b):
        for ss in range(seq):
            tok = tok_ref[base + bb, ss]
            pltpu.make_async_copy(emb_hbm.at[tok], gbuf.at[bb, ss],
                                  sems.at[bb, ss]).start()

    # Wait for all gathers (source index is irrelevant for the wait descriptor).
    for bb in range(tile_b):
        for ss in range(seq):
            pltpu.make_async_copy(emb_hbm.at[0], gbuf.at[bb, ss],
                                  sems.at[bb, ss]).wait()

    x = gbuf[...]                              # (TILE_B, S, E_pad) f32
    pooled = jnp.sum(x, axis=1)                # sum over seq; 1/S already in w_ref
    out = jnp.dot(pooled, w_ref[...], preferred_element_type=jnp.float32)
    out_ref[...] = out + b_ref[...]            # broadcast bias (1, O)


def fasttext_forward(tokens, embedding_table, w, b, *, tile_b=8):
    """tokens: (B, S) int32, embedding_table: (V, E) f32, w: (E, O) f32, b: (O,)."""
    B, S = tokens.shape
    V, E = embedding_table.shape
    O = w.shape[1]
    e_pad = pl.cdiv(E, LANES) * LANES
    assert tile_b % 8 == 0  # keeps the (TILE_B, O) output block (8,128)-legal

    # --- parameter prep (would normally be done once, outside the step fn) ---
    # Pad the embed dim to full 128-lane vregs; fold the 1/S mean into the weight.
    table_p = jnp.zeros((V, e_pad), jnp.float32).at[:, :E].set(
        embedding_table.astype(jnp.float32))
    w_p = jnp.zeros((e_pad, O), jnp.float32).at[:E, :].set(
        w.astype(jnp.float32) / S)
    b_p = b.astype(jnp.float32).reshape(1, O)

    # Pad the batch to a tile multiple (padded rows gather token 0; sliced off below).
    b_pad = pl.cdiv(B, tile_b) * tile_b
    tok_p = jnp.zeros((b_pad, S), jnp.int32).at[:B, :].set(tokens.astype(jnp.int32))

    # VMEM for the gather buffer is tile_b * S * e_pad * 4 B (32 KiB here) --
    # comfortably inside even v7x's 64 MiB VMEM; raise tile_b for bigger batches.
    grid_spec = pltpu.PrefetchScalarGridSpec(
        num_scalar_prefetch=1,                               # tokens -> SMEM
        grid=(b_pad // tile_b,),
        in_specs=[
            pl.BlockSpec(memory_space=pl.ANY),               # embedding table (HBM)
            pl.BlockSpec((e_pad, O), lambda i, tok: (0, 0)),  # scaled weight
            pl.BlockSpec((1, O), lambda i, tok: (0, 0)),      # bias
        ],
        out_specs=pl.BlockSpec((tile_b, O), lambda i, tok: (i, 0)),
        scratch_shapes=[
            pltpu.VMEM((tile_b, S, e_pad), jnp.float32),     # gather destination
            pltpu.SemaphoreType.DMA((tile_b, S)),            # one sem per row copy
        ],
    )

    out = pl.pallas_call(
        fasttext_kernel,
        out_shape=jax.ShapeDtypeStruct((b_pad, O), jnp.float32),
        grid_spec=grid_spec,
        compiler_params=pltpu.CompilerParams(
            dimension_semantics=("parallel",)),
    )(tok_p, table_p, w_p, b_p)
    return out[:B]


if __name__ == "__main__":
    key = jax.random.PRNGKey(0)
    k_emb, k_w, k_b, k_tok = jax.random.split(key, 4)

    vocab_size = 50
    batch, seq = 4, 8

    # Deterministic parameter init (shapes from Net.__init__):
    #   nn.Embedding(vocab_size, 100) -> N(0, 1)
    #   nn.Linear(100, 2)             -> U(-1/sqrt(100), 1/sqrt(100))
    embedding_table = jax.random.normal(k_emb, (vocab_size, EMBED_SIZE),
                                        dtype=jnp.float32)
    bound = 1.0 / (EMBED_SIZE ** 0.5)
    w = jax.random.uniform(k_w, (EMBED_SIZE, OUTPUT_SIZE), minval=-bound,
                           maxval=bound, dtype=jnp.float32)
    b = jax.random.uniform(k_b, (OUTPUT_SIZE,), minval=-bound, maxval=bound,
                           dtype=jnp.float32)
    tokens = jax.random.randint(k_tok, (batch, seq), 0, vocab_size, dtype=jnp.int32)

    out = jax.block_until_ready(fasttext_forward(tokens, embedding_table, w, b))

    # Pure-JAX reference of the forward semantics (embedding -> mean -> linear).
    ref = jnp.take(embedding_table, tokens, axis=0).mean(axis=1) @ w + b

    assert out.shape == (batch, OUTPUT_SIZE)
    assert jnp.allclose(out, ref, atol=1e-4, rtol=1e-4), (out, ref)

    print("KERNEL_OK")
</pallas_src>

<mosaic_0001>
module attributes {stable_mosaic.version = 11 : i64} {
  func.func @fasttext_kernel(%arg0: i32, %arg1: memref<8x8xi32, #tpu.memory_space<smem>>, %arg2: memref<50x128xf32, #tpu.memory_space<any>>, %arg3: memref<128x2xf32, #tpu.memory_space<vmem>>, %arg4: memref<1x2xf32, #tpu.memory_space<vmem>>, %arg5: memref<8x2xf32, #tpu.memory_space<vmem>>, %arg6: memref<8x8x128xf32, #tpu.memory_space<vmem>>, %arg7: memref<8x8x!tpu.dma_semaphore, #tpu.memory_space<semaphore_mem>>) attributes {dimension_semantics = [#tpu.dimension_semantics<parallel>], iteration_bounds = array<i64: 1>, scalar_prefetch = 1 : i64, scratch_operands = 2 : i64, tpu.core_type = #tpu.core_type<tc>, window_params = [{}, {pipeline_mode = #tpu.pipeline_mode<synchronous>, transform_indices = @transform_1, window_bounds = array<i64: 128, 2>}, {pipeline_mode = #tpu.pipeline_mode<synchronous>, transform_indices = @transform_2, window_bounds = array<i64: 1, 2>}, {transform_indices = @transform_3, window_bounds = array<i64: 8, 2>}]} {
    %c8_i32 = arith.constant 8 : i32
    %0 = arith.muli %arg0, %c8_i32 : i32
    %c0_i32 = arith.constant 0 : i32
    %1 = arith.addi %0, %c0_i32 : i32
    %2 = arith.index_cast %1 : i32 to index
    %c0 = arith.constant 0 : index
    %3 = memref.load %arg1[%2, %c0] : memref<8x8xi32, #tpu.memory_space<smem>>
    %c0_i32_0 = arith.constant 0 : i32
    %c0_i32_1 = arith.constant 0 : i32
    %c0_i32_2 = arith.constant 0 : i32
    %c0_i32_3 = arith.constant 0 : i32
    %c0_i32_4 = arith.constant 0 : i32
    %4 = tpu.memref_slice %arg2[%3, %c0_i32_4] : memref<50x128xf32, #tpu.memory_space<any>> -> memref<1x128xf32, #tpu.memory_space<any>>
    %5 = tpu.memref_squeeze %4 : memref<1x128xf32, #tpu.memory_space<any>> -> memref<128xf32, #tpu.memory_space<any>>
    %c0_i32_5 = arith.constant 0 : i32
    %6 = tpu.memref_slice %arg6[%c0_i32_0, %c0_i32_1, %c0_i32_5] : memref<8x8x128xf32, #tpu.memory_space<vmem>> -> memref<1x1x128xf32, #tpu.memory_space<vmem>>
    %7 = tpu.memref_squeeze %6 : memref<1x1x128xf32, #tpu.memory_space<vmem>> -> memref<128xf32, #tpu.memory_space<vmem>>
    %8 = tpu.memref_slice %arg7[%c0_i32_2, %c0_i32_3] : memref<8x8x!tpu.dma_semaphore, #tpu.memory_space<semaphore_mem>> -> memref<1x1x!tpu.dma_semaphore, #tpu.memory_space<semaphore_mem>>
    %9 = tpu.memref_squeeze %8 : memref<1x1x!tpu.dma_semaphore, #tpu.memory_space<semaphore_mem>> -> memref<!tpu.dma_semaphore, #tpu.memory_space<semaphore_mem>>
    tpu.enqueue_dma source(%5 : memref<128xf32, #tpu.memory_space<any>>) target(%7 : memref<128xf32, #tpu.memory_space<vmem>>) target_semaphore(%9 : memref<!tpu.dma_semaphore, #tpu.memory_space<semaphore_mem>>)
    %c0_i32_6 = arith.constant 0 : i32
    %10 = arith.addi %0, %c0_i32_6 : i32
    %11 = arith.index_cast %10 : i32 to index
    %c1 = arith.constant 1 : index
    %12 = memref.load %arg1[%11, %c1] : memref<8x8xi32, #tpu.memory_space<smem>>
    %c0_i32_7 = arith.constant 0 : i32
    %c1_i32 = arith.constant 1 : i32
    %c0_i32_8 = arith.constant 0 : i32
    %c1_i32_9 = arith.constant 1 : i32
    %c0_i32_10 = arith.constant 0 : i32
    %13 = tpu.memref_slice %arg2[%12, %c0_i32_10] : memref<50x128xf32, #tpu.memory_space<any>> -> memref<1x128xf32, #tpu.memory_space<any>>
    %14 = tpu.memref_squeeze %13 : memref<1x128xf32, #tpu.memory_space<any>> -> memref<128xf32, #tpu.memory_space<any>>
    %c0_i32_11 = arith.constant 0 : i32
    %15 = tpu.memref_slice %arg6[%c0_i32_7, %c1_i32, %c0_i32_11] : memref<8x8x128xf32, #tpu.memory_space<vmem>> -> memref<1x1x128xf32, #tpu.memory_space<vmem>>
    %16 = tpu.memref_squeeze %15 : memref<1x1x128xf32, #tpu.memory_space<vmem>> -> memref<128xf32, #tpu.memory_space<vmem>>
    %17 = tpu.memref_slice %arg7[%c0_i32_8, %c1_i32_9] : memref<8x8x!tpu.dma_semaphore, #tpu.memory_space<semaphore_mem>> -> memref<1x1x!tpu.dma_semaphore, #tpu.memory_space<semaphore_mem>>
    %18 = tpu.memref_squeeze %17 : memref<1x1x!tpu.dma_semaphore, #tpu.memory_space<semaphore_mem>> -> memref<!tpu.dma_semaphore, #tpu.memory_space<semaphore_mem>>
    tpu.enqueue_dma source(%14 : memref<128xf32, #tpu.memory_space<any>>) target(%16 : memref<128xf32, #tpu.memory_space<vmem>>) target_semaphore(%18 : memref<!tpu.dma_semaphore, #tpu.memory_space<semaphore_mem>>)
    %c0_i32_12 = arith.constant 0 : i32
    %19 = arith.addi %0, %c0_i32_12 : i32
    %20 = arith.index_cast %19 : i32 to index
    %c2 = arith.constant 2 : index
    %21 = memref.load %arg1[%20, %c2] : memref<8x8xi32, #tpu.memory_space<smem>>
    %c0_i32_13 = arith.constant 0 : i32
    %c2_i32 = arith.constant 2 : i32
    %c0_i32_14 = arith.constant 0 : i32
    %c2_i32_15 = arith.constant 2 : i32
    %c0_i32_16 = arith.constant 0 : i32
    %22 = tpu.memref_slice %arg2[%21, %c0_i32_16] : memref<50x128xf32, #tpu.memory_space<any>> -> memref<1x128xf32, #tpu.memory_space<any>>
    %23 = tpu.memref_squeeze %22 : memref<1x128xf32, #tpu.memory_space<any>> -> memref<128xf32, #tpu.memory_space<any>>
    %c0_i32_17 = arith.constant 0 : i32
    %24 = tpu.memref_slice %arg6[%c0_i32_13, %c2_i32, %c0_i32_17] : memref<8x8x128xf32, #tpu.memory_space<vmem>> -> memref<1x1x128xf32, #tpu.memory_space<vmem>>
    %25 = tpu.memref_squeeze %24 : memref<1x1x128xf32, #tpu.memory_space<vmem>> -> memref<128xf32, #tpu.memory_space<vmem>>
    %26 = tpu.memref_slice %arg7[%c0_i32_14, %c2_i32_15] : memref<8x8x!tpu.dma_semaphore, #tpu.memory_space<semaphore_mem>> -> memref<1x1x!tpu.dma_semaphore, #tpu.memory_space<semaphore_mem>>
    %27 = tpu.memref_squeeze %26 : memref<1x1x!tpu.dma_semaphore, #tpu.memory_space<semaphore_mem>> -> memref<!tpu.dma_semaphore, #tpu.memory_space<semaphore_mem>>
    tpu.enqueue_dma source(%23 : memref<128xf32, #tpu.memory_space<any>>) target(%25 : memref<128xf32, #tpu.memory_space<vmem>>) target_semaphore(%27 : memref<!tpu.dma_semaphore, #tpu.memory_space<semaphore_mem>>)
    %c0_i32_18 = arith.constant 0 : i32
    %28 = arith.addi %0, %c0_i32_18 : i32
    %29 = arith.index_cast %28 : i32 to index
    %c3 = arith.constant 3 : index
    %30 = memref.load %arg1[%29, %c3] : memref<8x8xi32, #tpu.memory_space<smem>>
    %c0_i32_19 = arith.constant 0 : i32
    %c3_i32 = arith.constant 3 : i32
    %c0_i32_20 = arith.constant 0 : i32
    %c3_i32_21 = arith.constant 3 : i32
    %c0_i32_22 = arith.constant 0 : i32
    %31 = tpu.memref_slice %arg2[%30, %c0_i32_22] : memref<50x128xf32, #tpu.memory_space<any>> -> memref<1x128xf32, #tpu.memory_space<any>>
    %32 = tpu.memref_squeeze %31 : memref<1x128xf32, #tpu.memory_space<any>> -> memref<128xf32, #tpu.memory_space<any>>
    %c0_i32_23 = arith.constant 0 : i32
    %33 = tpu.memref_slice %arg6[%c0_i32_19, %c3_i32, %c0_i32_23] : memref<8x8x128xf32, #tpu.memory_space<vmem>> -> memref<1x1x128xf32, #tpu.memory_space<vmem>>
    %34 = tpu.memref_squeeze %33 : memref<1x1x128xf32, #tpu.memory_space<vmem>> -> memref<128xf32, #tpu.memory_space<vmem>>
    %35 = tpu.memref_slice %arg7[%c0_i32_20, %c3_i32_21] : memref<8x8x!tpu.dma_semaphore, #tpu.memory_space<semaphore_mem>> -> memref<1x1x!tpu.dma_semaphore, #tpu.memory_space<semaphore_mem>>
    %36 = tpu.memref_squeeze %35 : memref<1x1x!tpu.dma_semaphore, #tpu.memory_space<semaphore_mem>> -> memref<!tpu.dma_semaphore, #tpu.memory_space<semaphore_mem>>
    tpu.enqueue_dma source(%32 : memref<128xf32, #tpu.memory_space<any>>) target(%34 : memref<128xf32, #tpu.memory_space<vmem>>) target_semaphore(%36 : memref<!tpu.dma_semaphore, #tpu.memory_space<semaphore_mem>>)
    %c0_i32_24 = arith.constant 0 : i32
    %37 = arith.addi %0, %c0_i32_24 : i32
    %38 = arith.index_cast %37 : i32 to index
    %c4 = arith.constant 4 : index
    %39 = memref.load %arg1[%38, %c4] : memref<8x8xi32, #tpu.memory_space<smem>>
    %c0_i32_25 = arith.constant 0 : i32
    %c4_i32 = arith.constant 4 : i32
    %c0_i32_26 = arith.constant 0 : i32
    %c4_i32_27 = arith.constant 4 : i32
    %c0_i32_28 = arith.constant 0 : i32
    %40 = tpu.memref_slice %arg2[%39, %c0_i32_28] : memref<50x128xf32, #tpu.memory_space<any>> -> memref<1x128xf32, #tpu.memory_space<any>>
    %41 = tpu.memref_squeeze %40 : memref<1x128xf32, #tpu.memory_space<any>> -> memref<128xf32, #tpu.memory_space<any>>
    %c0_i32_29 = arith.constant 0 : i32
    %42 = tpu.memref_slice %arg6[%c0_i32_25, %c4_i32, %c0_i32_29] : memref<8x8x128xf32, #tpu.memory_space<vmem>> -> memref<1x1x128xf32, #tpu.memory_space<vmem>>
    %43 = tpu.memref_squeeze %42 : memref<1x1x128xf32, #tpu.memory_space<vmem>> -> memref<128xf32, #tpu.memory_space<vmem>>
    %44 = tpu.memref_slice %arg7[%c0_i32_26, %c4_i32_27] : memref<8x8x!tpu.dma_semaphore, #tpu.memory_space<semaphore_mem>> -> memref<1x1x!tpu.dma_semaphore, #tpu.memory_space<semaphore_mem>>
    %45 = tpu.memref_squeeze %44 : memref<1x1x!tpu.dma_semaphore, #tpu.memory_space<semaphore_mem>> -> memref<!tpu.dma_semaphore, #tpu.memory_space<semaphore_mem>>
    tpu.enqueue_dma source(%41 : memref<128xf32, #tpu.memory_space<any>>) target(%43 : memref<128xf32, #tpu.memory_space<vmem>>) target_semaphore(%45 : memref<!tpu.dma_semaphore, #tpu.memory_space<semaphore_mem>>)
    %c0_i32_30 = arith.constant 0 : i32
    %46 = arith.addi %0, %c0_i32_30 : i32
    %47 = arith.index_cast %46 : i32 to index
    %c5 = arith.constant 5 : index
    %48 = memref.load %arg1[%47, %c5] : memref<8x8xi32, #tpu.memory_space<smem>>
    %c0_i32_31 = arith.constant 0 : i32
    %c5_i32 = arith.constant 5 : i32
    %c0_i32_32 = arith.constant 0 : i32
    %c5_i32_33 = arith.constant 5 : i32
    %c0_i32_34 = arith.constant 0 : i32
    %49 = tpu.memref_slice %arg2[%48, %c0_i32_34] : memref<50x128xf32, #tpu.memory_space<any>> -> memref<1x128xf32, #tpu.memory_space<any>>
    %50 = tpu.memref_squeeze %49 : memref<1x128xf32, #tpu.memory_space<any>> -> memref<128xf32, #tpu.memory_space<any>>
    %c0_i32_35 = arith.constant 0 : i32
    %51 = tpu.memref_slice %arg6[%c0_i32_31, %c5_i32, %c0_i32_35] : memref<8x8x128xf32, #tpu.memory_space<vmem>> -> memref<1x1x128xf32, #tpu.memory_space<vmem>>
    %52 = tpu.memref_squeeze %51 : memref<1x1x128xf32, #tpu.memory_space<vmem>> -> memref<128xf32, #tpu.memory_space<vmem>>
    %53 = tpu.memref_slice %arg7[%c0_i32_32, %c5_i32_33] : memref<8x8x!tpu.dma_semaphore, #tpu.memory_space<semaphore_mem>> -> memref<1x1x!tpu.dma_semaphore, #tpu.memory_space<semaphore_mem>>
    %54 = tpu.memref_squeeze %53 : memref<1x1x!tpu.dma_semaphore, #tpu.memory_space<semaphore_mem>> -> memref<!tpu.dma_semaphore, #tpu.memory_space<semaphore_mem>>
    tpu.enqueue_dma source(%50 : memref<128xf32, #tpu.memory_space<any>>) target(%52 : memref<128xf32, #tpu.memory_space<vmem>>) target_semaphore(%54 : memref<!tpu.dma_semaphore, #tpu.memory_space<semaphore_mem>>)
    %c0_i32_36 = arith.constant 0 : i32
    %55 = arith.addi %0, %c0_i32_36 : i32
    %56 = arith.index_cast %55 : i32 to index
    %c6 = arith.constant 6 : index
    %57 = memref.load %arg1[%56, %c6] : memref<8x8xi32, #tpu.memory_space<smem>>
    %c0_i32_37 = arith.constant 0 : i32
    %c6_i32 = arith.constant 6 : i32
    %c0_i32_38 = arith.constant 0 : i32
    %c6_i32_39 = arith.constant 6 : i32
    %c0_i32_40 = arith.constant 0 : i32
    %58 = tpu.memref_slice %arg2[%57, %c0_i32_40] : memref<50x128xf32, #tpu.memory_space<any>> -> memref<1x128xf32, #tpu.memory_space<any>>
    %59 = tpu.memref_squeeze %58 : memref<1x128xf32, #tpu.memory_space<any>> -> memref<128xf32, #tpu.memory_space<any>>
    %c0_i32_41 = arith.constant 0 : i32
    %60 = tpu.memref_slice %arg6[%c0_i32_37, %c6_i32, %c0_i32_41] : memref<8x8x128xf32, #tpu.memory_space<vmem>> -> memref<1x1x128xf32, #tpu.memory_space<vmem>>
    %61 = tpu.memref_squeeze %60 : memref<1x1x128xf32, #tpu.memory_space<vmem>> -> memref<128xf32, #tpu.memory_space<vmem>>
    %62 = tpu.memref_slice %arg7[%c0_i32_38, %c6_i32_39] : memref<8x8x!tpu.dma_semaphore, #tpu.memory_space<semaphore_mem>> -> memref<1x1x!tpu.dma_semaphore, #tpu.memory_space<semaphore_mem>>
    %63 = tpu.memref_squeeze %62 : memref<1x1x!tpu.dma_semaphore, #tpu.memory_space<semaphore_mem>> -> memref<!tpu.dma_semaphore, #tpu.memory_space<semaphore_mem>>
    tpu.enqueue_dma source(%59 : memref<128xf32, #tpu.memory_space<any>>) target(%61 : memref<128xf32, #tpu.memory_space<vmem>>) target_semaphore(%63 : memref<!tpu.dma_semaphore, #tpu.memory_space<semaphore_mem>>)
    %c0_i32_42 = arith.constant 0 : i32
    %64 = arith.addi %0, %c0_i32_42 : i32
    %65 = arith.index_cast %64 : i32 to index
    %c7 = arith.constant 7 : index
    %66 = memref.load %arg1[%65, %c7] : memref<8x8xi32, #tpu.memory_space<smem>>
    %c0_i32_43 = arith.constant 0 : i32
    %c7_i32 = arith.constant 7 : i32
    %c0_i32_44 = arith.constant 0 : i32
    %c7_i32_45 = arith.constant 7 : i32
    %c0_i32_46 = arith.constant 0 : i32
    %67 = tpu.memref_slice %arg2[%66, %c0_i32_46] : memref<50x128xf32, #tpu.memory_space<any>> -> memref<1x128xf32, #tpu.memory_space<any>>
    %68 = tpu.memref_squeeze %67 : memref<1x128xf32, #tpu.memory_space<any>> -> memref<128xf32, #tpu.memory_space<any>>
    %c0_i32_47 = arith.constant 0 : i32
    %69 = tpu.memref_slice %arg6[%c0_i32_43, %c7_i32, %c0_i32_47] : memref<8x8x128xf32, #tpu.memory_space<vmem>> -> memref<1x1x128xf32, #tpu.memory_space<vmem>>
    %70 = tpu.memref_squeeze %69 : memref<1x1x128xf32, #tpu.memory_space<vmem>> -> memref<128xf32, #tpu.memory_space<vmem>>
    %71 = tpu.memref_slice %arg7[%c0_i32_44, %c7_i32_45] : memref<8x8x!tpu.dma_semaphore, #tpu.memory_space<semaphore_mem>> -> memref<1x1x!tpu.dma_semaphore, #tpu.memory_space<semaphore_mem>>
    %72 = tpu.memref_squeeze %71 : memref<1x1x!tpu.dma_semaphore, #tpu.memory_space<semaphore_mem>> -> memref<!tpu.dma_semaphore, #tpu.memory_space<semaphore_mem>>
    tpu.enqueue_dma source(%68 : memref<128xf32, #tpu.memory_space<any>>) target(%70 : memref<128xf32, #tpu.memory_space<vmem>>) target_semaphore(%72 : memref<!tpu.dma_semaphore, #tpu.memory_space<semaphore_mem>>)
    %c1_i32_48 = arith.constant 1 : i32
    %73 = arith.addi %0, %c1_i32_48 : i32
    %74 = arith.index_cast %73 : i32 to index
    %c0_49 = arith.constant 0 : index
    %75 = memref.load %arg1[%74, %c0_49] : memref<8x8xi32, #tpu.memory_space<smem>>
    %c1_i32_50 = arith.constant 1 : i32
    %c0_i32_51 = arith.constant 0 : i32
    %c1_i32_52 = arith.constant 1 : i32
    %c0_i32_53 = arith.constant 0 : i32
    %c0_i32_54 = arith.constant 0 : i32
    %76 = tpu.memref_slice %arg2[%75, %c0_i32_54] : memref<50x128xf32, #tpu.memory_space<any>> -> memref<1x128xf32, #tpu.memory_space<any>>
    %77 = tpu.memref_squeeze %76 : memref<1x128xf32, #tpu.memory_space<any>> -> memref<128xf32, #tpu.memory_space<any>>
    %c0_i32_55 = arith.constant 0 : i32
    %78 = tpu.memref_slice %arg6[%c1_i32_50, %c0_i32_51, %c0_i32_55] : memref<8x8x128xf32, #tpu.memory_space<vmem>> -> memref<1x1x128xf32, #tpu.memory_space<vmem>>
    %79 = tpu.memref_squeeze %78 : memref<1x1x128xf32, #tpu.memory_space<vmem>> -> memref<128xf32, #tpu.memory_space<vmem>>
    %80 = tpu.memref_slice %arg7[%c1_i32_52, %c0_i32_53] : memref<8x8x!tpu.dma_semaphore, #tpu.memory_space<semaphore_mem>> -> memref<1x1x!tpu.dma_semaphore, #tpu.memory_space<semaphore_mem>>
    %81 = tpu.memref_squeeze %80 : memref<1x1x!tpu.dma_semaphore, #tpu.memory_space<semaphore_mem>> -> memref<!tpu.dma_semaphore, #tpu.memory_space<semaphore_mem>>
    tpu.enqueue_dma source(%77 : memref<128xf32, #tpu.memory_space<any>>) target(%79 : memref<128xf32, #tpu.memory_space<vmem>>) target_semaphore(%81 : memref<!tpu.dma_semaphore, #tpu.memory_space<semaphore_mem>>)
    %c1_i32_56 = arith.constant 1 : i32
    %82 = arith.addi %0, %c1_i32_56 : i32
    %83 = arith.index_cast %82 : i32 to index
    %c1_57 = arith.constant 1 : index
    %84 = memref.load %arg1[%83, %c1_57] : memref<8x8xi32, #tpu.memory_space<smem>>
    %c1_i32_58 = arith.constant 1 : i32
    %c1_i32_59 = arith.constant 1 : i32
    %c1_i32_60 = arith.constant 1 : i32
    %c1_i32_61 = arith.constant 1 : i32
    %c0_i32_62 = arith.constant 0 : i32
    %85 = tpu.memref_slice %arg2[%84, %c0_i32_62] : memref<50x128xf32, #tpu.memory_space<any>> -> memref<1x128xf32, #tpu.memory_space<any>>
    %86 = tpu.memref_squeeze %85 : memref<1x128xf32, #tpu.memory_space<any>> -> memref<128xf32, #tpu.memory_space<any>>
    %c0_i32_63 = arith.constant 0 : i32
    %87 = tpu.memref_slice %arg6[%c1_i32_58, %c1_i32_59, %c0_i32_63] : memref<8x8x128xf32, #tpu.memory_space<vmem>> -> memref<1x1x128xf32, #tpu.memory_space<vmem>>
    %88 = tpu.memref_squeeze %87 : memref<1x1x128xf32, #tpu.memory_space<vmem>> -> memref<128xf32, #tpu.memory_space<vmem>>
    %89 = tpu.memref_slice %arg7[%c1_i32_60, %c1_i32_61] : memref<8x8x!tpu.dma_semaphore, #tpu.memory_space<semaphore_mem>> -> memref<1x1x!tpu.dma_semaphore, #tpu.memory_space<semaphore_mem>>
    %90 = tpu.memref_squeeze %89 : memref<1x1x!tpu.dma_semaphore, #tpu.memory_space<semaphore_mem>> -> memref<!tpu.dma_semaphore, #tpu.memory_space<semaphore_mem>>
    tpu.enqueue_dma source(%86 : memref<128xf32, #tpu.memory_space<any>>) target(%88 : memref<128xf32, #tpu.memory_space<vmem>>) target_semaphore(%90 : memref<!tpu.dma_semaphore, #tpu.memory_space<semaphore_mem>>)
    %c1_i32_64 = arith.constant 1 : i32
    %91 = arith.addi %0, %c1_i32_64 : i32
    %92 = arith.index_cast %91 : i32 to index
    %c2_65 = arith.constant 2 : index
    %93 = memref.load %arg1[%92, %c2_65] : memref<8x8xi32, #tpu.memory_space<smem>>
    %c1_i32_66 = arith.constant 1 : i32
    %c2_i32_67 = arith.constant 2 : i32
    %c1_i32_68 = arith.constant 1 : i32
    %c2_i32_69 = arith.constant 2 : i32
    %c0_i32_70 = arith.constant 0 : i32
    %94 = tpu.memref_slice %arg2[%93, %c0_i32_70] : memref<50x128xf32, #tpu.memory_space<any>> -> memref<1x128xf32, #tpu.memory_space<any>>
    %95 = tpu.memref_squeeze %94 : memref<1x128xf32, #tpu.memory_space<any>> -> memref<128xf32, #tpu.memory_space<any>>
    %c0_i32_71 = arith.constant 0 : i32
    %96 = tpu.memref_slice %arg6[%c1_i32_66, %c2_i32_67, %c0_i32_71] : memref<8x8x128xf32, #tpu.memory_space<vmem>> -> memref<1x1x128xf32, #tpu.memory_space<vmem>>
    %97 = tpu.memref_squeeze %96 : memref<1x1x128xf32, #tpu.memory_space<vmem>> -> memref<128xf32, #tpu.memory_space<vmem>>
    %98 = tpu.memref_slice %arg7[%c1_i32_68, %c2_i32_69] : memref<8x8x!tpu.dma_semaphore, #tpu.memory_space<semaphore_mem>> -> memref<1x1x!tpu.dma_semaphore, #tpu.memory_space<semaphore_mem>>
    %99 = tpu.memref_squeeze %98 : memref<1x1x!tpu.dma_semaphore, #tpu.memory_space<semaphore_mem>> -> memref<!tpu.dma_semaphore, #tpu.memory_space<semaphore_mem>>
    tpu.enqueue_dma source(%95 : memref<128xf32, #tpu.memory_space<any>>) target(%97 : memref<128xf32, #tpu.memory_space<vmem>>) target_semaphore(%99 : memref<!tpu.dma_semaphore, #tpu.memory_space<semaphore_mem>>)
    %c1_i32_72 = arith.constant 1 : i32
    %100 = arith.addi %0, %c1_i32_72 : i32
    %101 = arith.index_cast %100 : i32 to index
    %c3_73 = arith.constant 3 : index
    %102 = memref.load %arg1[%101, %c3_73] : memref<8x8xi32, #tpu.memory_space<smem>>
    %c1_i32_74 = arith.constant 1 : i32
    %c3_i32_75 = arith.constant 3 : i32
    %c1_i32_76 = arith.constant 1 : i32
    %c3_i32_77 = arith.constant 3 : i32
    %c0_i32_78 = arith.constant 0 : i32
    %103 = tpu.memref_slice %arg2[%102, %c0_i32_78] : memref<50x128xf32, #tpu.memory_space<any>> -> memref<1x128xf32, #tpu.memory_space<any>>
    %104 = tpu.memref_squeeze %103 : memref<1x128xf32, #tpu.memory_space<any>> -> memref<128xf32, #tpu.memory_space<any>>
    %c0_i32_79 = arith.constant 0 : i32
    %105 = tpu.memref_slice %arg6[%c1_i32_74, %c3_i32_75, %c0_i32_79] : memref<8x8x128xf32, #tpu.memory_space<vmem>> -> memref<1x1x128xf32, #tpu.memory_space<vmem>>
    %106 = tpu.memref_squeeze %105 : memref<1x1x128xf32, #tpu.memory_space<vmem>> -> memref<128xf32, #tpu.memory_space<vmem>>
    %107 = tpu.memref_slice %arg7[%c1_i32_76, %c3_i32_77] : memref<8x8x!tpu.dma_semaphore, #tpu.memory_space<semaphore_mem>> -> memref<1x1x!tpu.dma_semaphore, #tpu.memory_space<semaphore_mem>>
    %108 = tpu.memref_squeeze %107 : memref<1x1x!tpu.dma_semaphore, #tpu.memory_space<semaphore_mem>> -> memref<!tpu.dma_semaphore, #tpu.memory_space<semaphore_mem>>
    tpu.enqueue_dma source(%104 : memref<128xf32, #tpu.memory_space<any>>) target(%106 : memref<128xf32, #tpu.memory_space<vmem>>) target_semaphore(%108 : memref<!tpu.dma_semaphore, #tpu.memory_space<semaphore_mem>>)
    %c1_i32_80 = arith.constant 1 : i32
    %109 = arith.addi %0, %c1_i32_80 : i32
    %110 = arith.index_cast %109 : i32 to index
    %c4_81 = arith.constant 4 : index
    %111 = memref.load %arg1[%110, %c4_81] : memref<8x8xi32, #tpu.memory_space<smem>>
    %c1_i32_82 = arith.constant 1 : i32
    %c4_i32_83 = arith.constant 4 : i32
    %c1_i32_84 = arith.constant 1 : i32
    %c4_i32_85 = arith.constant 4 : i32
    %c0_i32_86 = arith.constant 0 : i32
    %112 = tpu.memref_slice %arg2[%111, %c0_i32_86] : memref<50x128xf32, #tpu.memory_space<any>> -> memref<1x128xf32, #tpu.memory_space<any>>
    %113 = tpu.memref_squeeze %112 : memref<1x128xf32, #tpu.memory_space<any>> -> memref<128xf32, #tpu.memory_space<any>>
    %c0_i32_87 = arith.constant 0 : i32
    %114 = tpu.memref_slice %arg6[%c1_i32_82, %c4_i32_83, %c0_i32_87] : memref<8x8x128xf32, #tpu.memory_space<vmem>> -> memref<1x1x128xf32, #tpu.memory_space<vmem>>
    %115 = tpu.memref_squeeze %114 : memref<1x1x128xf32, #tpu.memory_space<vmem>> -> memref<128xf32, #tpu.memory_space<vmem>>
    %116 = tpu.memref_slice %arg7[%c1_i32_84, %c4_i32_85] : memref<8x8x!tpu.dma_semaphore, #tpu.memory_space<semaphore_mem>> -> memref<1x1x!tpu.dma_semaphore, #tpu.memory_space<semaphore_mem>>
    %117 = tpu.memref_squeeze %116 : memref<1x1x!tpu.dma_semaphore, #tpu.memory_space<semaphore_mem>> -> memref<!tpu.dma_semaphore, #tpu.memory_space<semaphore_mem>>
    tpu.enqueue_dma source(%113 : memref<128xf32, #tpu.memory_space<any>>) target(%115 : memref<128xf32, #tpu.memory_space<vmem>>) target_semaphore(%117 : memref<!tpu.dma_semaphore, #tpu.memory_space<semaphore_mem>>)
    %c1_i32_88 = arith.constant 1 : i32
    %118 = arith.addi %0, %c1_i32_88 : i32
    %119 = arith.index_cast %118 : i32 to index
    %c5_89 = arith.constant 5 : index
    %120 = memref.load %arg1[%119, %c5_89] : memref<8x8xi32, #tpu.memory_space<smem>>
    %c1_i32_90 = arith.constant 1 : i32
    %c5_i32_91 = arith.constant 5 : i32
    %c1_i32_92 = arith.constant 1 : i32
    %c5_i32_93 = arith.constant 5 : i32
    %c0_i32_94 = arith.constant 0 : i32
    %121 = tpu.memref_slice %arg2[%120, %c0_i32_94] : memref<50x128xf32, #tpu.memory_space<any>> -> memref<1x128xf32, #tpu.memory_space<any>>
    %122 = tpu.memref_squeeze %121 : memref<1x128xf32, #tpu.memory_space<any>> -> memref<128xf32, #tpu.memory_space<any>>
    %c0_i32_95 = arith.constant 0 : i32
    %123 = tpu.memref_slice %arg6[%c1_i32_90, %c5_i32_91, %c0_i32_95] : memref<8x8x128xf32, #tpu.memory_space<vmem>> -> memref<1x1x128xf32, #tpu.memory_space<vmem>>
    %124 = tpu.memref_squeeze %123 : memref<1x1x128xf32, #tpu.memory_space<vmem>> -> memref<128xf32, #tpu.memory_space<vmem>>
    %125 = tpu.memref_slice %arg7[%c1_i32_92, %c5_i32_93] : memref<8x8x!tpu.dma_semaphore, #tpu.memory_space<semaphore_mem>> -> memref<1x1x!tpu.dma_semaphore, #tpu.memory_space<semaphore_mem>>
    %126 = tpu.memref_squeeze %125 : memref<1x1x!tpu.dma_semaphore, #tpu.memory_space<semaphore_mem>> -> memref<!tpu.dma_semaphore, #tpu.memory_space<semaphore_mem>>
    tpu.enqueue_dma source(%122 : memref<128xf32, #tpu.memory_space<any>>) target(%124 : memref<128xf32, #tpu.memory_space<vmem>>) target_semaphore(%126 : memref<!tpu.dma_semaphore, #tpu.memory_space<semaphore_mem>>)
    %c1_i32_96 = arith.constant 1 : i32
    %127 = arith.addi %0, %c1_i32_96 : i32
    %128 = arith.index_cast %127 : i32 to index
    %c6_97 = arith.constant 6 : index
    %129 = memref.load %arg1[%128, %c6_97] : memref<8x8xi32, #tpu.memory_space<smem>>
    %c1_i32_98 = arith.constant 1 : i32
    %c6_i32_99 = arith.constant 6 : i32
    %c1_i32_100 = arith.constant 1 : i32
    %c6_i32_101 = arith.constant 6 : i32
    %c0_i32_102 = arith.constant 0 : i32
    %130 = tpu.memref_slice %arg2[%129, %c0_i32_102] : memref<50x128xf32, #tpu.memory_space<any>> -> memref<1x128xf32, #tpu.memory_space<any>>
    %131 = tpu.memref_squeeze %130 : memref<1x128xf32, #tpu.memory_space<any>> -> memref<128xf32, #tpu.memory_space<any>>
    %c0_i32_103 = arith.constant 0 : i32
    %132 = tpu.memref_slice %arg6[%c1_i32_98, %c6_i32_99, %c0_i32_103] : memref<8x8x128xf32, #tpu.memory_space<vmem>> -> memref<1x1x128xf32, #tpu.memory_space<vmem>>
    %133 = tpu.memref_squeeze %132 : memref<1x1x128xf32, #tpu.memory_space<vmem>> -> memref<128xf32, #tpu.memory_space<vmem>>
    %134 = tpu.memref_slice %arg7[%c1_i32_100, %c6_i32_101] : memref<8x8x!tpu.dma_semaphore, #tpu.memory_space<semaphore_mem>> -> memref<1x1x!tpu.dma_semaphore, #tpu.memory_space<semaphore_mem>>
    %135 = tpu.memref_squeeze %134 : memref<1x1x!tpu.dma_semaphore, #tpu.memory_space<semaphore_mem>> -> memref<!tpu.dma_semaphore, #tpu.memory_space<semaphore_mem>>
    tpu.enqueue_dma source(%131 : memref<128xf32, #tpu.memory_space<any>>) target(%133 : memref<128xf32, #tpu.memory_space<vmem>>) target_semaphore(%135 : memref<!tpu.dma_semaphore, #tpu.memory_space<semaphore_mem>>)
    %c1_i32_104 = arith.constant 1 : i32
    %136 = arith.addi %0, %c1_i32_104 : i32
    %137 = arith.index_cast %136 : i32 to index
    %c7_105 = arith.constant 7 : index
    %138 = memref.load %arg1[%137, %c7_105] : memref<8x8xi32, #tpu.memory_space<smem>>
    %c1_i32_106 = arith.constant 1 : i32
    %c7_i32_107 = arith.constant 7 : i32
    %c1_i32_108 = arith.constant 1 : i32
    %c7_i32_109 = arith.constant 7 : i32
    %c0_i32_110 = arith.constant 0 : i32
    %139 = tpu.memref_slice %arg2[%138, %c0_i32_110] : memref<50x128xf32, #tpu.memory_space<any>> -> memref<1x128xf32, #tpu.memory_space<any>>
    %140 = tpu.memref_squeeze %139 : memref<1x128xf32, #tpu.memory_space<any>> -> memref<128xf32, #tpu.memory_space<any>>
    %c0_i32_111 = arith.constant 0 : i32
    %141 = tpu.memref_slice %arg6[%c1_i32_106, %c7_i32_107, %c0_i32_111] : memref<8x8x128xf32, #tpu.memory_space<vmem>> -> memref<1x1x128xf32, #tpu.memory_space<vmem>>
    %142 = tpu.memref_squeeze %141 : memref<1x1x128xf32, #tpu.memory_space<vmem>> -> memref<128xf32, #tpu.memory_space<vmem>>
    %143 = tpu.memref_slice %arg7[%c1_i32_108, %c7_i32_109] : memref<8x8x!tpu.dma_semaphore, #tpu.memory_space<semaphore_mem>> -> memref<1x1x!tpu.dma_semaphore, #tpu.memory_space<semaphore_mem>>
    %144 = tpu.memref_squeeze %143 : memref<1x1x!tpu.dma_semaphore, #tpu.memory_space<semaphore_mem>> -> memref<!tpu.dma_semaphore, #tpu.memory_space<semaphore_mem>>
    tpu.enqueue_dma source(%140 : memref<128xf32, #tpu.memory_space<any>>) target(%142 : memref<128xf32, #tpu.memory_space<vmem>>) target_semaphore(%144 : memref<!tpu.dma_semaphore, #tpu.memory_space<semaphore_mem>>)
    %c2_i32_112 = arith.constant 2 : i32
    %145 = arith.addi %0, %c2_i32_112 : i32
    %146 = arith.index_cast %145 : i32 to index
    %c0_113 = arith.constant 0 : index
    %147 = memref.load %arg1[%146, %c0_113] : memref<8x8xi32, #tpu.memory_space<smem>>
    %c2_i32_114 = arith.constant 2 : i32
    %c0_i32_115 = arith.constant 0 : i32
    %c2_i32_116 = arith.constant 2 : i32
    %c0_i32_117 = arith.constant 0 : i32
    %c0_i32_118 = arith.constant 0 : i32
    %148 = tpu.memref_slice %arg2[%147, %c0_i32_118] : memref<50x128xf32, #tpu.memory_space<any>> -> memref<1x128xf32, #tpu.memory_space<any>>
    %149 = tpu.memref_squeeze %148 : memref<1x128xf32, #tpu.memory_space<any>> -> memref<128xf32, #tpu.memory_space<any>>
    %c0_i32_119 = arith.constant 0 : i32
    %150 = tpu.memref_slice %arg6[%c2_i32_114, %c0_i32_115, %c0_i32_119] : memref<8x8x128xf32, #tpu.memory_space<vmem>> -> memref<1x1x128xf32, #tpu.memory_space<vmem>>
    %151 = tpu.memref_squeeze %150 : memref<1x1x128xf32, #tpu.memory_space<vmem>> -> memref<128xf32, #tpu.memory_space<vmem>>
    %152 = tpu.memref_slice %arg7[%c2_i32_116, %c0_i32_117] : memref<8x8x!tpu.dma_semaphore, #tpu.memory_space<semaphore_mem>> -> memref<1x1x!tpu.dma_semaphore, #tpu.memory_space<semaphore_mem>>
    %153 = tpu.memref_squeeze %152 : memref<1x1x!tpu.dma_semaphore, #tpu.memory_space<semaphore_mem>> -> memref<!tpu.dma_semaphore, #tpu.memory_space<semaphore_mem>>
    tpu.enqueue_dma source(%149 : memref<128xf32, #tpu.memory_space<any>>) target(%151 : memref<128xf32, #tpu.memory_space<vmem>>) target_semaphore(%153 : memref<!tpu.dma_semaphore, #tpu.memory_space<semaphore_mem>>)
    %c2_i32_120 = arith.constant 2 : i32
    %154 = arith.addi %0, %c2_i32_120 : i32
    %155 = arith.index_cast %154 : i32 to index
    %c1_121 = arith.constant 1 : index
    %156 = memref.load %arg1[%155, %c1_121] : memref<8x8xi32, #tpu.memory_space<smem>>
    %c2_i32_122 = arith.constant 2 : i32
    %c1_i32_123 = arith.constant 1 : i32
    %c2_i32_124 = arith.constant 2 : i32
    %c1_i32_125 = arith.constant 1 : i32
    %c0_i32_126 = arith.constant 0 : i32
    %157 = tpu.memref_slice %arg2[%156, %c0_i32_126] : memref<50x128xf32, #tpu.memory_space<any>> -> memref<1x128xf32, #tpu.memory_space<any>>
    %158 = tpu.memref_squeeze %157 : memref<1x128xf32, #tpu.memory_space<any>> -> memref<128xf32, #tpu.memory_space<any>>
    %c0_i32_127 = arith.constant 0 : i32
    %159 = tpu.memref_slice %arg6[%c2_i32_122, %c1_i32_123, %c0_i32_127] : memref<8x8x128xf32, #tpu.memory_space<vmem>> -> memref<1x1x128xf32, #tpu.memory_space<vmem>>
    %160 = tpu.memref_squeeze %159 : memref<1x1x128xf32, #tpu.memory_space<vmem>> -> memref<128xf32, #tpu.memory_space<vmem>>
    %161 = tpu.memref_slice %arg7[%c2_i32_124, %c1_i32_125] : memref<8x8x!tpu.dma_semaphore, #tpu.memory_space<semaphore_mem>> -> memref<1x1x!tpu.dma_semaphore, #tpu.memory_space<semaphore_mem>>
    %162 = tpu.memref_squeeze %161 : memref<1x1x!tpu.dma_semaphore, #tpu.memory_space<semaphore_mem>> -> memref<!tpu.dma_semaphore, #tpu.memory_space<semaphore_mem>>
    tpu.enqueue_dma source(%158 : memref<128xf32, #tpu.memory_space<any>>) target(%160 : memref<128xf32, #tpu.memory_space<vmem>>) target_semaphore(%162 : memref<!tpu.dma_semaphore, #tpu.memory_space<semaphore_mem>>)
    %c2_i32_128 = arith.constant 2 : i32
    %163 = arith.addi %0, %c2_i32_128 : i32
    %164 = arith.index_cast %163 : i32 to index
    %c2_129 = arith.constant 2 : index
    %165 = memref.load %arg1[%164, %c2_129] : memref<8x8xi32, #tpu.memory_space<smem>>
    %c2_i32_130 = arith.constant 2 : i32
    %c2_i32_131 = arith.constant 2 : i32
    %c2_i32_132 = arith.constant 2 : i32
    %c2_i32_133 = arith.constant 2 : i32
    %c0_i32_134 = arith.constant 0 : i32
    %166 = tpu.memref_slice %arg2[%165, %c0_i32_134] : memref<50x128xf32, #tpu.memory_space<any>> -> memref<1x128xf32, #tpu.memory_space<any>>
    %167 = tpu.memref_squeeze %166 : memref<1x128xf32, #tpu.memory_space<any>> -> memref<128xf32, #tpu.memory_space<any>>
    %c0_i32_135 = arith.constant 0 : i32
    %168 = tpu.memref_slice %arg6[%c2_i32_130, %c2_i32_131, %c0_i32_135] : memref<8x8x128xf32, #tpu.memory_space<vmem>> -> memref<1x1x128xf32, #tpu.memory_space<vmem>>
    %169 = tpu.memref_squeeze %168 : memref<1x1x128xf32, #tpu.memory_space<vmem>> -> memref<128xf32, #tpu.memory_space<vmem>>
    %170 = tpu.memref_slice %arg7[%c2_i32_132, %c2_i32_133] : memref<8x8x!tpu.dma_semaphore, #tpu.memory_space<semaphore_mem>> -> memref<1x1x!tpu.dma_semaphore, #tpu.memory_space<semaphore_mem>>
    %171 = tpu.memref_squeeze %170 : memref<1x1x!tpu.dma_semaphore, #tpu.memory_space<semaphore_mem>> -> memref<!tpu.dma_semaphore, #tpu.memory_space<semaphore_mem>>
    tpu.enqueue_dma source(%167 : memref<128xf32, #tpu.memory_space<any>>) target(%169 : memref<128xf32, #tpu.memory_space<vmem>>) target_semaphore(%171 : memref<!tpu.dma_semaphore, #tpu.memory_space<semaphore_mem>>)
    %c2_i32_136 = arith.constant 2 : i32
    %172 = arith.addi %0, %c2_i32_136 : i32
    %173 = arith.index_cast %172 : i32 to index
    %c3_137 = arith.constant 3 : index
    %174 = memref.load %arg1[%173, %c3_137] : memref<8x8xi32, #tpu.memory_space<smem>>
    %c2_i32_138 = arith.constant 2 : i32
    %c3_i32_139 = arith.constant 3 : i32
    %c2_i32_140 = arith.constant 2 : i32
    %c3_i32_141 = arith.constant 3 : i32
    %c0_i32_142 = arith.constant 0 : i32
    %175 = tpu.memref_slice %arg2[%174, %c0_i32_142] : memref<50x128xf32, #tpu.memory_space<any>> -> memref<1x128xf32, #tpu.memory_space<any>>
    %176 = tpu.memref_squeeze %175 : memref<1x128xf32, #tpu.memory_space<any>> -> memref<128xf32, #tpu.memory_space<any>>
    %c0_i32_143 = arith.constant 0 : i32
    %177 = tpu.memref_slice %arg6[%c2_i32_138, %c3_i32_139, %c0_i32_143] : memref<8x8x128xf32, #tpu.memory_space<vmem>> -> memref<1x1x128xf32, #tpu.memory_space<vmem>>
    %178 = tpu.memref_squeeze %177 : memref<1x1x128xf32, #tpu.memory_space<vmem>> -> memref<128xf32, #tpu.memory_space<vmem>>
    %179 = tpu.memref_slice %arg7[%c2_i32_140, %c3_i32_141] : memref<8x8x!tpu.dma_semaphore, #tpu.memory_space<semaphore_mem>> -> memref<1x1x!tpu.dma_semaphore, #tpu.memory_space<semaphore_mem>>
    %180 = tpu.memref_squeeze %179 : memref<1x1x!tpu.dma_semaphore, #tpu.memory_space<semaphore_mem>> -> memref<!tpu.dma_semaphore, #tpu.memory_space<semaphore_mem>>
    tpu.enqueue_dma source(%176 : memref<128xf32, #tpu.memory_space<any>>) target(%178 : memref<128xf32, #tpu.memory_space<vmem>>) target_semaphore(%180 : memref<!tpu.dma_semaphore, #tpu.memory_space<semaphore_mem>>)
    %c2_i32_144 = arith.constant 2 : i32
    %181 = arith.addi %0, %c2_i32_144 : i32
    %182 = arith.index_cast %181 : i32 to index
    %c4_145 = arith.constant 4 : index
    %183 = memref.load %arg1[%182, %c4_145] : memref<8x8xi32, #tpu.memory_space<smem>>
    %c2_i32_146 = arith.constant 2 : i32
    %c4_i32_147 = arith.constant 4 : i32
    %c2_i32_148 = arith.constant 2 : i32
    %c4_i32_149 = arith.constant 4 : i32
    %c0_i32_150 = arith.constant 0 : i32
    %184 = tpu.memref_slice %arg2[%183, %c0_i32_150] : memref<50x128xf32, #tpu.memory_space<any>> -> memref<1x128xf32, #tpu.memory_space<any>>
    %185 = tpu.memref_squeeze %184 : memref<1x128xf32, #tpu.memory_space<any>> -> memref<128xf32, #tpu.memory_space<any>>
    %c0_i32_151 = arith.constant 0 : i32
    %186 = tpu.memref_slice %arg6[%c2_i32_146, %c4_i32_147, %c0_i32_151] : memref<8x8x128xf32, #tpu.memory_space<vmem>> -> memref<1x1x128xf32, #tpu.memory_space<vmem>>
    %187 = tpu.memref_squeeze %186 : memref<1x1x128xf32, #tpu.memory_space<vmem>> -> memref<128xf32, #tpu.memory_space<vmem>>
    %188 = tpu.memref_slice %arg7[%c2_i32_148, %c4_i32_149] : memref<8x8x!tpu.dma_semaphore, #tpu.memory_space<semaphore_mem>> -> memref<1x1x!tpu.dma_semaphore, #tpu.memory_space<semaphore_mem>>
    %189 = tpu.memref_squeeze %188 : memref<1x1x!tpu.dma_semaphore, #tpu.memory_space<semaphore_mem>> -> memref<!tpu.dma_semaphore, #tpu.memory_space<semaphore_mem>>
    tpu.enqueue_dma source(%185 : memref<128xf32, #tpu.memory_space<any>>) target(%187 : memref<128xf32, #tpu.memory_space<vmem>>) target_semaphore(%189 : memref<!tpu.dma_semaphore, #tpu.memory_space<semaphore_mem>>)
    %c2_i32_152 = arith.constant 2 : i32
    %190 = arith.addi %0, %c2_i32_152 : i32
    %191 = arith.index_cast %190 : i32 to index
    %c5_153 = arith.constant 5 : index
    %192 = memref.load %arg1[%191, %c5_153] : memref<8x8xi32, #tpu.memory_space<smem>>
    %c2_i32_154 = arith.constant 2 : i32
    %c5_i32_155 = arith.constant 5 : i32
    %c2_i32_156 = arith.constant 2 : i32
    %c5_i32_157 = arith.constant 5 : i32
    %c0_i32_158 = arith.constant 0 : i32
    %193 = tpu.memref_slice %arg2[%192, %c0_i32_158] : memref<50x128xf32, #tpu.memory_space<any>> -> memref<1x128xf32, #tpu.memory_space<any>>
    %194 = tpu.memref_squeeze %193 : memref<1x128xf32, #tpu.memory_space<any>> -> memref<128xf32, #tpu.memory_space<any>>
    %c0_i32_159 = arith.constant 0 : i32
    %195 = tpu.memref_slice %arg6[%c2_i32_154, %c5_i32_155, %c0_i32_159] : memref<8x8x128xf32, #tpu.memory_space<vmem>> -> memref<1x1x128xf32, #tpu.memory_space<vmem>>
    %196 = tpu.memref_squeeze %195 : memref<1x1x128xf32, #tpu.memory_space<vmem>> -> memref<128xf32, #tpu.memory_space<vmem>>
    %197 = tpu.memref_slice %arg7[%c2_i32_156, %c5_i32_157] : memref<8x8x!tpu.dma_semaphore, #tpu.memory_space<semaphore_mem>> -> memref<1x1x!tpu.dma_semaphore, #tpu.memory_space<semaphore_mem>>
    %198 = tpu.memref_squeeze %197 : memref<1x1x!tpu.dma_semaphore, #tpu.memory_space<semaphore_mem>> -> memref<!tpu.dma_semaphore, #tpu.memory_space<semaphore_mem>>
    tpu.enqueue_dma source(%194 : memref<128xf32, #tpu.memory_space<any>>) target(%196 : memref<128xf32, #tpu.memory_space<vmem>>) target_semaphore(%198 : memref<!tpu.dma_semaphore, #tpu.memory_space<semaphore_mem>>)
    %c2_i32_160 = arith.constant 2 : i32
    %199 = arith.addi %0, %c2_i32_160 : i32
    %200 = arith.index_cast %199 : i32 to index
    %c6_161 = arith.constant 6 : index
    %201 = memref.load %arg1[%200, %c6_161] : memref<8x8xi32, #tpu.memory_space<smem>>
    %c2_i32_162 = arith.constant 2 : i32
    %c6_i32_163 = arith.constant 6 : i32
    %c2_i32_164 = arith.constant 2 : i32
    %c6_i32_165 = arith.constant 6 : i32
    %c0_i32_166 = arith.constant 0 : i32
    %202 = tpu.memref_slice %arg2[%201, %c0_i32_166] : memref<50x128xf32, #tpu.memory_space<any>> -> memref<1x128xf32, #tpu.memory_space<any>>
    %203 = tpu.memref_squeeze %202 : memref<1x128xf32, #tpu.memory_space<any>> -> memref<128xf32, #tpu.memory_space<any>>
    %c0_i32_167 = arith.constant 0 : i32
    %204 = tpu.memref_slice %arg6[%c2_i32_162, %c6_i32_163, %c0_i32_167] : memref<8x8x128xf32, #tpu.memory_space<vmem>> -> memref<1x1x128xf32, #tpu.memory_space<vmem>>
    %205 = tpu.memref_squeeze %204 : memref<1x1x128xf32, #tpu.memory_space<vmem>> -> memref<128xf32, #tpu.memory_space<vmem>>
    %206 = tpu.memref_slice %arg7[%c2_i32_164, %c6_i32_165] : memref<8x8x!tpu.dma_semaphore, #tpu.memory_space<semaphore_mem>> -> memref<1x1x!tpu.dma_semaphore, #tpu.memory_space<semaphore_mem>>
    %207 = tpu.memref_squeeze %206 : memref<1x1x!tpu.dma_semaphore, #tpu.memory_space<semaphore_mem>> -> memref<!tpu.dma_semaphore, #tpu.memory_space<semaphore_mem>>
    tpu.enqueue_dma source(%203 : memref<128xf32, #tpu.memory_space<any>>) target(%205 : memref<128xf32, #tpu.memory_space<vmem>>) target_semaphore(%207 : memref<!tpu.dma_semaphore, #tpu.memory_space<semaphore_mem>>)
    %c2_i32_168 = arith.constant 2 : i32
    %208 = arith.addi %0, %c2_i32_168 : i32
    %209 = arith.index_cast %208 : i32 to index
    %c7_169 = arith.constant 7 : index
    %210 = memref.load %arg1[%209, %c7_169] : memref<8x8xi32, #tpu.memory_space<smem>>
    %c2_i32_170 = arith.constant 2 : i32
    %c7_i32_171 = arith.constant 7 : i32
    %c2_i32_172 = arith.constant 2 : i32
    %c7_i32_173 = arith.constant 7 : i32
    %c0_i32_174 = arith.constant 0 : i32
    %211 = tpu.memref_slice %arg2[%210, %c0_i32_174] : memref<50x128xf32, #tpu.memory_space<any>> -> memref<1x128xf32, #tpu.memory_space<any>>
    %212 = tpu.memref_squeeze %211 : memref<1x128xf32, #tpu.memory_space<any>> -> memref<128xf32, #tpu.memory_space<any>>
    %c0_i32_175 = arith.constant 0 : i32
    %213 = tpu.memref_slice %arg6[%c2_i32_170, %c7_i32_171, %c0_i32_175] : memref<8x8x128xf32, #tpu.memory_space<vmem>> -> memref<1x1x128xf32, #tpu.memory_space<vmem>>
    %214 = tpu.memref_squeeze %213 : memref<1x1x128xf32, #tpu.memory_space<vmem>> -> memref<128xf32, #tpu.memory_space<vmem>>
    %215 = tpu.memref_slice %arg7[%c2_i32_172, %c7_i32_173] : memref<8x8x!tpu.dma_semaphore, #tpu.memory_space<semaphore_mem>> -> memref<1x1x!tpu.dma_semaphore, #tpu.memory_space<semaphore_mem>>
    %216 = tpu.memref_squeeze %215 : memref<1x1x!tpu.dma_semaphore, #tpu.memory_space<semaphore_mem>> -> memref<!tpu.dma_semaphore, #tpu.memory_space<semaphore_mem>>
    tpu.enqueue_dma source(%212 : memref<128xf32, #tpu.memory_space<any>>) target(%214 : memref<128xf32, #tpu.memory_space<vmem>>) target_semaphore(%216 : memref<!tpu.dma_semaphore, #tpu.memory_space<semaphore_mem>>)
    %c3_i32_176 = arith.constant 3 : i32
    %217 = arith.addi %0, %c3_i32_176 : i32
    %218 = arith.index_cast %217 : i32 to index
    %c0_177 = arith.constant 0 : index
    %219 = memref.load %arg1[%218, %c0_177] : memref<8x8xi32, #tpu.memory_space<smem>>
    %c3_i32_178 = arith.constant 3 : i32
    %c0_i32_179 = arith.constant 0 : i32
    %c3_i32_180 = arith.constant 3 : i32
    %c0_i32_181 = arith.constant 0 : i32
    %c0_i32_182 = arith.constant 0 : i32
    %220 = tpu.memref_slice %arg2[%219, %c0_i32_182] : memref<50x128xf32, #tpu.memory_space<any>> -> memref<1x128xf32, #tpu.memory_space<any>>
    %221 = tpu.memref_squeeze %220 : memref<1x128xf32, #tpu.memory_space<any>> -> memref<128xf32, #tpu.memory_space<any>>
    %c0_i32_183 = arith.constant 0 : i32
    %222 = tpu.memref_slice %arg6[%c3_i32_178, %c0_i32_179, %c0_i32_183] : memref<8x8x128xf32, #tpu.memory_space<vmem>> -> memref<1x1x128xf32, #tpu.memory_space<vmem>>
    %223 = tpu.memref_squeeze %222 : memref<1x1x128xf32, #tpu.memory_space<vmem>> -> memref<128xf32, #tpu.memory_space<vmem>>
    %224 = tpu.memref_slice %arg7[%c3_i32_180, %c0_i32_181] : memref<8x8x!tpu.dma_semaphore, #tpu.memory_space<semaphore_mem>> -> memref<1x1x!tpu.dma_semaphore, #tpu.memory_space<semaphore_mem>>
    %225 = tpu.memref_squeeze %224 : memref<1x1x!tpu.dma_semaphore, #tpu.memory_space<semaphore_mem>> -> memref<!tpu.dma_semaphore, #tpu.memory_space<semaphore_mem>>
    tpu.enqueue_dma source(%221 : memref<128xf32, #tpu.memory_space<any>>) target(%223 : memref<128xf32, #tpu.memory_space<vmem>>) target_semaphore(%225 : memref<!tpu.dma_semaphore, #tpu.memory_space<semaphore_mem>>)
    %c3_i32_184 = arith.constant 3 : i32
    %226 = arith.addi %0, %c3_i32_184 : i32
    %227 = arith.index_cast %226 : i32 to index
    %c1_185 = arith.constant 1 : index
    %228 = memref.load %arg1[%227, %c1_185] : memref<8x8xi32, #tpu.memory_space<smem>>
    %c3_i32_186 = arith.constant 3 : i32
    %c1_i32_187 = arith.constant 1 : i32
    %c3_i32_188 = arith.constant 3 : i32
    %c1_i32_189 = arith.constant 1 : i32
    %c0_i32_190 = arith.constant 0 : i32
    %229 = tpu.memref_slice %arg2[%228, %c0_i32_190] : memref<50x128xf32, #tpu.memory_space<any>> -> memref<1x128xf32, #tpu.memory_space<any>>
    %230 = tpu.memref_squeeze %229 : memref<1x128xf32, #tpu.memory_space<any>> -> memref<128xf32, #tpu.memory_space<any>>
    %c0_i32_191 = arith.constant 0 : i32
    %231 = tpu.memref_slice %arg6[%c3_i32_186, %c1_i32_187, %c0_i32_191] : memref<8x8x128xf32, #tpu.memory_space<vmem>> -> memref<1x1x128xf32, #tpu.memory_space<vmem>>
    %232 = tpu.memref_squeeze %231 : memref<1x1x128xf32, #tpu.memory_space<vmem>> -> memref<128xf32, #tpu.memory_space<vmem>>
    %233 = tpu.memref_slice %arg7[%c3_i32_188, %c1_i32_189] : memref<8x8x!tpu.dma_semaphore, #tpu.memory_space<semaphore_mem>> -> memref<1x1x!tpu.dma_semaphore, #tpu.memory_space<semaphore_mem>>
    %234 = tpu.memref_squeeze %233 : memref<1x1x!tpu.dma_semaphore, #tpu.memory_space<semaphore_mem>> -> memref<!tpu.dma_semaphore, #tpu.memory_space<semaphore_mem>>
    tpu.enqueue_dma source(%230 : memref<128xf32, #tpu.memory_space<any>>) target(%232 : memref<128xf32, #tpu.memory_space<vmem>>) target_semaphore(%234 : memref<!tpu.dma_semaphore, #tpu.memory_space<semaphore_mem>>)
    %c3_i32_192 = arith.constant 3 : i32
    %235 = arith.addi %0, %c3_i32_192 : i32
    %236 = arith.index_cast %235 : i32 to index
    %c2_193 = arith.constant 2 : index
    %237 = memref.load %arg1[%236, %c2_193] : memref<8x8xi32, #tpu.memory_space<smem>>
    %c3_i32_194 = arith.constant 3 : i32
    %c2_i32_195 = arith.constant 2 : i32
    %c3_i32_196 = arith.constant 3 : i32
    %c2_i32_197 = arith.constant 2 : i32
    %c0_i32_198 = arith.constant 0 : i32
    %238 = tpu.memref_slice %arg2[%237, %c0_i32_198] : memref<50x128xf32, #tpu.memory_space<any>> -> memref<1x128xf32, #tpu.memory_space<any>>
    %239 = tpu.memref_squeeze %238 : memref<1x128xf32, #tpu.memory_space<any>> -> memref<128xf32, #tpu.memory_space<any>>
    %c0_i32_199 = arith.constant 0 : i32
    %240 = tpu.memref_slice %arg6[%c3_i32_194, %c2_i32_195, %c0_i32_199] : memref<8x8x128xf32, #tpu.memory_space<vmem>> -> memref<1x1x128xf32, #tpu.memory_space<vmem>>
    %241 = tpu.memref_squeeze %240 : memref<1x1x128xf32, #tpu.memory_space<vmem>> -> memref<128xf32, #tpu.memory_space<vmem>>
    %242 = tpu.memref_slice %arg7[%c3_i32_196, %c2_i32_197] : memref<8x8x!tpu.dma_semaphore, #tpu.memory_space<semaphore_mem>> -> memref<1x1x!tpu.dma_semaphore, #tpu.memory_space<semaphore_mem>>
    %243 = tpu.memref_squeeze %242 : memref<1x1x!tpu.dma_semaphore, #tpu.memory_space<semaphore_mem>> -> memref<!tpu.dma_semaphore, #tpu.memory_space<semaphore_mem>>
    tpu.enqueue_dma source(%239 : memref<128xf32, #tpu.memory_space<any>>) target(%241 : memref<128xf32, #tpu.memory_space<vmem>>) target_semaphore(%243 : memref<!tpu.dma_semaphore, #tpu.memory_space<semaphore_mem>>)
    %c3_i32_200 = arith.constant 3 : i32
    %244 = arith.addi %0, %c3_i32_200 : i32
    %245 = arith.index_cast %244 : i32 to index
    %c3_201 = arith.constant 3 : index
    %246 = memref.load %arg1[%245, %c3_201] : memref<8x8xi32, #tpu.memory_space<smem>>
    %c3_i32_202 = arith.constant 3 : i32
    %c3_i32_203 = arith.constant 3 : i32
    %c3_i32_204 = arith.constant 3 : i32
    %c3_i32_205 = arith.constant 3 : i32
    %c0_i32_206 = arith.constant 0 : i32
    %247 = tpu.memref_slice %arg2[%246, %c0_i32_206] : memref<50x128xf32, #tpu.memory_space<any>> -> memref<1x128xf32, #tpu.memory_space<any>>
    %248 = tpu.memref_squeeze %247 : memref<1x128xf32, #tpu.memory_space<any>> -> memref<128xf32, #tpu.memory_space<any>>
    %c0_i32_207 = arith.constant 0 : i32
    %249 = tpu.memref_slice %arg6[%c3_i32_202, %c3_i32_203, %c0_i32_207] : memref<8x8x128xf32, #tpu.memory_space<vmem>> -> memref<1x1x128xf32, #tpu.memory_space<vmem>>
    %250 = tpu.memref_squeeze %249 : memref<1x1x128xf32, #tpu.memory_space<vmem>> -> memref<128xf32, #tpu.memory_space<vmem>>
    %251 = tpu.memref_slice %arg7[%c3_i32_204, %c3_i32_205] : memref<8x8x!tpu.dma_semaphore, #tpu.memory_space<semaphore_mem>> -> memref<1x1x!tpu.dma_semaphore, #tpu.memory_space<semaphore_mem>>
    %252 = tpu.memref_squeeze %251 : memref<1x1x!tpu.dma_semaphore, #tpu.memory_space<semaphore_mem>> -> memref<!tpu.dma_semaphore, #tpu.memory_space<semaphore_mem>>
    tpu.enqueue_dma source(%248 : memref<128xf32, #tpu.memory_space<any>>) target(%250 : memref<128xf32, #tpu.memory_space<vmem>>) target_semaphore(%252 : memref<!tpu.dma_semaphore, #tpu.memory_space<semaphore_mem>>)
    %c3_i32_208 = arith.constant 3 : i32
    %253 = arith.addi %0, %c3_i32_208 : i32
    %254 = arith.index_cast %253 : i32 to index
    %c4_209 = arith.constant 4 : index
    %255 = memref.load %arg1[%254, %c4_209] : memref<8x8xi32, #tpu.memory_space<smem>>
    %c3_i32_210 = arith.constant 3 : i32
    %c4_i32_211 = arith.constant 4 : i32
    %c3_i32_212 = arith.constant 3 : i32
    %c4_i32_213 = arith.constant 4 : i32
    %c0_i32_214 = arith.constant 0 : i32
    %256 = tpu.memref_slice %arg2[%255, %c0_i32_214] : memref<50x128xf32, #tpu.memory_space<any>> -> memref<1x128xf32, #tpu.memory_space<any>>
    %257 = tpu.memref_squeeze %256 : memref<1x128xf32, #tpu.memory_space<any>> -> memref<128xf32, #tpu.memory_space<any>>
    %c0_i32_215 = arith.constant 0 : i32
    %258 = tpu.memref_slice %arg6[%c3_i32_210, %c4_i32_211, %c0_i32_215] : memref<8x8x128xf32, #tpu.memory_space<vmem>> -> memref<1x1x128xf32, #tpu.memory_space<vmem>>
    %259 = tpu.memref_squeeze %258 : memref<1x1x128xf32, #tpu.memory_space<vmem>> -> memref<128xf32, #tpu.memory_space<vmem>>
    %260 = tpu.memref_slice %arg7[%c3_i32_212, %c4_i32_213] : memref<8x8x!tpu.dma_semaphore, #tpu.memory_space<semaphore_mem>> -> memref<1x1x!tpu.dma_semaphore, #tpu.memory_space<semaphore_mem>>
    %261 = tpu.memref_squeeze %260 : memref<1x1x!tpu.dma_semaphore, #tpu.memory_space<semaphore_mem>> -> memref<!tpu.dma_semaphore, #tpu.memory_space<semaphore_mem>>
    tpu.enqueue_dma source(%257 : memref<128xf32, #tpu.memory_space<any>>) target(%259 : memref<128xf32, #tpu.memory_space<vmem>>) target_semaphore(%261 : memref<!tpu.dma_semaphore, #tpu.memory_space<semaphore_mem>>)
    %c3_i32_216 = arith.constant 3 : i32
    %262 = arith.addi %0, %c3_i32_216 : i32
    %263 = arith.index_cast %262 : i32 to index
    %c5_217 = arith.constant 5 : index
    %264 = memref.load %arg1[%263, %c5_217] : memref<8x8xi32, #tpu.memory_space<smem>>
    %c3_i32_218 = arith.constant 3 : i32
    %c5_i32_219 = arith.constant 5 : i32
    %c3_i32_220 = arith.constant 3 : i32
    %c5_i32_221 = arith.constant 5 : i32
    %c0_i32_222 = arith.constant 0 : i32
    %265 = tpu.memref_slice %arg2[%264, %c0_i32_222] : memref<50x128xf32, #tpu.memory_space<any>> -> memref<1x128xf32, #tpu.memory_space<any>>
    %266 = tpu.memref_squeeze %265 : memref<1x128xf32, #tpu.memory_space<any>> -> memref<128xf32, #tpu.memory_space<any>>
    %c0_i32_223 = arith.constant 0 : i32
    %267 = tpu.memref_slice %arg6[%c3_i32_218, %c5_i32_219, %c0_i32_223] : memref<8x8x128xf32, #tpu.memory_space<vmem>> -> memref<1x1x128xf32, #tpu.memory_space<vmem>>
    %268 = tpu.memref_squeeze %267 : memref<1x1x128xf32, #tpu.memory_space<vmem>> -> memref<128xf32, #tpu.memory_space<vmem>>
    %269 = tpu.memref_slice %arg7[%c3_i32_220, %c5_i32_221] : memref<8x8x!tpu.dma_semaphore, #tpu.memory_space<semaphore_mem>> -> memref<1x1x!tpu.dma_semaphore, #tpu.memory_space<semaphore_mem>>
    %270 = tpu.memref_squeeze %269 : memref<1x1x!tpu.dma_semaphore, #tpu.memory_space<semaphore_mem>> -> memref<!tpu.dma_semaphore, #tpu.memory_space<semaphore_mem>>
    tpu.enqueue_dma source(%266 : memref<128xf32, #tpu.memory_space<any>>) target(%268 : memref<128xf32, #tpu.memory_space<vmem>>) target_semaphore(%270 : memref<!tpu.dma_semaphore, #tpu.memory_space<semaphore_mem>>)
    %c3_i32_224 = arith.constant 3 : i32
    %271 = arith.addi %0, %c3_i32_224 : i32
    %272 = arith.index_cast %271 : i32 to index
    %c6_225 = arith.constant 6 : index
    %273 = memref.load %arg1[%272, %c6_225] : memref<8x8xi32, #tpu.memory_space<smem>>
    %c3_i32_226 = arith.constant 3 : i32
    %c6_i32_227 = arith.constant 6 : i32
    %c3_i32_228 = arith.constant 3 : i32
    %c6_i32_229 = arith.constant 6 : i32
    %c0_i32_230 = arith.constant 0 : i32
    %274 = tpu.memref_slice %arg2[%273, %c0_i32_230] : memref<50x128xf32, #tpu.memory_space<any>> -> memref<1x128xf32, #tpu.memory_space<any>>
    %275 = tpu.memref_squeeze %274 : memref<1x128xf32, #tpu.memory_space<any>> -> memref<128xf32, #tpu.memory_space<any>>
    %c0_i32_231 = arith.constant 0 : i32
    %276 = tpu.memref_slice %arg6[%c3_i32_226, %c6_i32_227, %c0_i32_231] : memref<8x8x128xf32, #tpu.memory_space<vmem>> -> memref<1x1x128xf32, #tpu.memory_space<vmem>>
    %277 = tpu.memref_squeeze %276 : memref<1x1x128xf32, #tpu.memory_space<vmem>> -> memref<128xf32, #tpu.memory_space<vmem>>
    %278 = tpu.memref_slice %arg7[%c3_i32_228, %c6_i32_229] : memref<8x8x!tpu.dma_semaphore, #tpu.memory_space<semaphore_mem>> -> memref<1x1x!tpu.dma_semaphore, #tpu.memory_space<semaphore_mem>>
    %279 = tpu.memref_squeeze %278 : memref<1x1x!tpu.dma_semaphore, #tpu.memory_space<semaphore_mem>> -> memref<!tpu.dma_semaphore, #tpu.memory_space<semaphore_mem>>
    tpu.enqueue_dma source(%275 : memref<128xf32, #tpu.memory_space<any>>) target(%277 : memref<128xf32, #tpu.memory_space<vmem>>) target_semaphore(%279 : memref<!tpu.dma_semaphore, #tpu.memory_space<semaphore_mem>>)
    %c3_i32_232 = arith.constant 3 : i32
    %280 = arith.addi %0, %c3_i32_232 : i32
    %281 = arith.index_cast %280 : i32 to index
    %c7_233 = arith.constant 7 : index
    %282 = memref.load %arg1[%281, %c7_233] : memref<8x8xi32, #tpu.memory_space<smem>>
    %c3_i32_234 = arith.constant 3 : i32
    %c7_i32_235 = arith.constant 7 : i32
    %c3_i32_236 = arith.constant 3 : i32
    %c7_i32_237 = arith.constant 7 : i32
    %c0_i32_238 = arith.constant 0 : i32
    %283 = tpu.memref_slice %arg2[%282, %c0_i32_238] : memref<50x128xf32, #tpu.memory_space<any>> -> memref<1x128xf32, #tpu.memory_space<any>>
    %284 = tpu.memref_squeeze %283 : memref<1x128xf32, #tpu.memory_space<any>> -> memref<128xf32, #tpu.memory_space<any>>
    %c0_i32_239 = arith.constant 0 : i32
    %285 = tpu.memref_slice %arg6[%c3_i32_234, %c7_i32_235, %c0_i32_239] : memref<8x8x128xf32, #tpu.memory_space<vmem>> -> memref<1x1x128xf32, #tpu.memory_space<vmem>>
    %286 = tpu.memref_squeeze %285 : memref<1x1x128xf32, #tpu.memory_space<vmem>> -> memref<128xf32, #tpu.memory_space<vmem>>
    %287 = tpu.memref_slice %arg7[%c3_i32_236, %c7_i32_237] : memref<8x8x!tpu.dma_semaphore, #tpu.memory_space<semaphore_mem>> -> memref<1x1x!tpu.dma_semaphore, #tpu.memory_space<semaphore_mem>>
    %288 = tpu.memref_squeeze %287 : memref<1x1x!tpu.dma_semaphore, #tpu.memory_space<semaphore_mem>> -> memref<!tpu.dma_semaphore, #tpu.memory_space<semaphore_mem>>
    tpu.enqueue_dma source(%284 : memref<128xf32, #tpu.memory_space<any>>) target(%286 : memref<128xf32, #tpu.memory_space<vmem>>) target_semaphore(%288 : memref<!tpu.dma_semaphore, #tpu.memory_space<semaphore_mem>>)
    %c4_i32_240 = arith.constant 4 : i32
    %289 = arith.addi %0, %c4_i32_240 : i32
    %290 = arith.index_cast %289 : i32 to index
    %c0_241 = arith.constant 0 : index
    %291 = memref.load %arg1[%290, %c0_241] : memref<8x8xi32, #tpu.memory_space<smem>>
    %c4_i32_242 = arith.constant 4 : i32
    %c0_i32_243 = arith.constant 0 : i32
    %c4_i32_244 = arith.constant 4 : i32
    %c0_i32_245 = arith.constant 0 : i32
    %c0_i32_246 = arith.constant 0 : i32
    %292 = tpu.memref_slice %arg2[%291, %c0_i32_246] : memref<50x128xf32, #tpu.memory_space<any>> -> memref<1x128xf32, #tpu.memory_space<any>>
    %293 = tpu.memref_squeeze %292 : memref<1x128xf32, #tpu.memory_space<any>> -> memref<128xf32, #tpu.memory_space<any>>
    %c0_i32_247 = arith.constant 0 : i32
    %294 = tpu.memref_slice %arg6[%c4_i32_242, %c0_i32_243, %c0_i32_247] : memref<8x8x128xf32, #tpu.memory_space<vmem>> -> memref<1x1x128xf32, #tpu.memory_space<vmem>>
    %295 = tpu.memref_squeeze %294 : memref<1x1x128xf32, #tpu.memory_space<vmem>> -> memref<128xf32, #tpu.memory_space<vmem>>
    %296 = tpu.memref_slice %arg7[%c4_i32_244, %c0_i32_245] : memref<8x8x!tpu.dma_semaphore, #tpu.memory_space<semaphore_mem>> -> memref<1x1x!tpu.dma_semaphore, #tpu.memory_space<semaphore_mem>>
    %297 = tpu.memref_squeeze %296 : memref<1x1x!tpu.dma_semaphore, #tpu.memory_space<semaphore_mem>> -> memref<!tpu.dma_semaphore, #tpu.memory_space<semaphore_mem>>
    tpu.enqueue_dma source(%293 : memref<128xf32, #tpu.memory_space<any>>) target(%295 : memref<128xf32, #tpu.memory_space<vmem>>) target_semaphore(%297 : memref<!tpu.dma_semaphore, #tpu.memory_space<semaphore_mem>>)
    %c4_i32_248 = arith.constant 4 : i32
    %298 = arith.addi %0, %c4_i32_248 : i32
    %299 = arith.index_cast %298 : i32 to index
    %c1_249 = arith.constant 1 : index
    %300 = memref.load %arg1[%299, %c1_249] : memref<8x8xi32, #tpu.memory_space<smem>>
    %c4_i32_250 = arith.constant 4 : i32
    %c1_i32_251 = arith.constant 1 : i32
    %c4_i32_252 = arith.constant 4 : i32
    %c1_i32_253 = arith.constant 1 : i32
    %c0_i32_254 = arith.constant 0 : i32
    %301 = tpu.memref_slice %arg2[%300, %c0_i32_254] : memref<50x128xf32, #tpu.memory_space<any>> -> memref<1x128xf32, #tpu.memory_space<any>>
    %302 = tpu.memref_squeeze %301 : memref<1x128xf32, #tpu.memory_space<any>> -> memref<128xf32, #tpu.memory_space<any>>
    %c0_i32_255 = arith.constant 0 : i32
    %303 = tpu.memref_slice %arg6[%c4_i32_250, %c1_i32_251, %c0_i32_255] : memref<8x8x128xf32, #tpu.memory_space<vmem>> -> memref<1x1x128xf32, #tpu.memory_space<vmem>>
    %304 = tpu.memref_squeeze %303 : memref<1x1x128xf32, #tpu.memory_space<vmem>> -> memref<128xf32, #tpu.memory_space<vmem>>
    %305 = tpu.memref_slice %arg7[%c4_i32_252, %c1_i32_253] : memref<8x8x!tpu.dma_semaphore, #tpu.memory_space<semaphore_mem>> -> memref<1x1x!tpu.dma_semaphore, #tpu.memory_space<semaphore_mem>>
    %306 = tpu.memref_squeeze %305 : memref<1x1x!tpu.dma_semaphore, #tpu.memory_space<semaphore_mem>> -> memref<!tpu.dma_semaphore, #tpu.memory_space<semaphore_mem>>
    tpu.enqueue_dma source(%302 : memref<128xf32, #tpu.memory_space<any>>) target(%304 : memref<128xf32, #tpu.memory_space<vmem>>) target_semaphore(%306 : memref<!tpu.dma_semaphore, #tpu.memory_space<semaphore_mem>>)
    %c4_i32_256 = arith.constant 4 : i32
    %307 = arith.addi %0, %c4_i32_256 : i32
    %308 = arith.index_cast %307 : i32 to index
    %c2_257 = arith.constant 2 : index
    %309 = memref.load %arg1[%308, %c2_257] : memref<8x8xi32, #tpu.memory_space<smem>>
    %c4_i32_258 = arith.constant 4 : i32
    %c2_i32_259 = arith.constant 2 : i32
    %c4_i32_260 = arith.constant 4 : i32
    %c2_i32_261 = arith.constant 2 : i32
    %c0_i32_262 = arith.constant 0 : i32
    %310 = tpu.memref_slice %arg2[%309, %c0_i32_262] : memref<50x128xf32, #tpu.memory_space<any>> -> memref<1x128xf32, #tpu.memory_space<any>>
    %311 = tpu.memref_squeeze %310 : memref<1x128xf32, #tpu.memory_space<any>> -> memref<128xf32, #tpu.memory_space<any>>
    %c0_i32_263 = arith.constant 0 : i32
    %312 = tpu.memref_slice %arg6[%c4_i32_258, %c2_i32_259, %c0_i32_263] : memref<8x8x128xf32, #tpu.memory_space<vmem>> -> memref<1x1x128xf32, #tpu.memory_space<vmem>>
    %313 = tpu.memref_squeeze %312 : memref<1x1x128xf32, #tpu.memory_space<vmem>> -> memref<128xf32, #tpu.memory_space<vmem>>
    %314 = tpu.memref_slice %arg7[%c4_i32_260, %c2_i32_261] : memref<8x8x!tpu.dma_semaphore, #tpu.memory_space<semaphore_mem>> -> memref<1x1x!tpu.dma_semaphore, #tpu.memory_space<semaphore_mem>>
    %315 = tpu.memref_squeeze %314 : memref<1x1x!tpu.dma_semaphore, #tpu.memory_space<semaphore_mem>> -> memref<!tpu.dma_semaphore, #tpu.memory_space<semaphore_mem>>
    tpu.enqueue_dma source(%311 : memref<128xf32, #tpu.memory_space<any>>) target(%313 : memref<128xf32, #tpu.memory_space<vmem>>) target_semaphore(%315 : memref<!tpu.dma_semaphore, #tpu.memory_space<semaphore_mem>>)
    %c4_i32_264 = arith.constant 4 : i32
    %316 = arith.addi %0, %c4_i32_264 : i32
    %317 = arith.index_cast %316 : i32 to index
    %c3_265 = arith.constant 3 : index
    %318 = memref.load %arg1[%317, %c3_265] : memref<8x8xi32, #tpu.memory_space<smem>>
    %c4_i32_266 = arith.constant 4 : i32
    %c3_i32_267 = arith.constant 3 : i32
    %c4_i32_268 = arith.constant 4 : i32
    %c3_i32_269 = arith.constant 3 : i32
    %c0_i32_270 = arith.constant 0 : i32
    %319 = tpu.memref_slice %arg2[%318, %c0_i32_270] : memref<50x128xf32, #tpu.memory_space<any>> -> memref<1x128xf32, #tpu.memory_space<any>>
    %320 = tpu.memref_squeeze %319 : memref<1x128xf32, #tpu.memory_space<any>> -> memref<128xf32, #tpu.memory_space<any>>
    %c0_i32_271 = arith.constant 0 : i32
    %321 = tpu.memref_slice %arg6[%c4_i32_266, %c3_i32_267, %c0_i32_271] : memref<8x8x128xf32, #tpu.memory_space<vmem>> -> memref<1x1x128xf32, #tpu.memory_space<vmem>>
    %322 = tpu.memref_squeeze %321 : memref<1x1x128xf32, #tpu.memory_space<vmem>> -> memref<128xf32, #tpu.memory_space<vmem>>
    %323 = tpu.memref_slice %arg7[%c4_i32_268, %c3_i32_269] : memref<8x8x!tpu.dma_semaphore, #tpu.memory_space<semaphore_mem>> -> memref<1x1x!tpu.dma_semaphore, #tpu.memory_space<semaphore_mem>>
    %324 = tpu.memref_squeeze %323 : memref<1x1x!tpu.dma_semaphore, #tpu.memory_space<semaphore_mem>> -> memref<!tpu.dma_semaphore, #tpu.memory_space<semaphore_mem>>
    tpu.enqueue_dma source(%320 : memref<128xf32, #tpu.memory_space<any>>) target(%322 : memref<128xf32, #tpu.memory_space<vmem>>) target_semaphore(%324 : memref<!tpu.dma_semaphore, #tpu.memory_space<semaphore_mem>>)
    %c4_i32_272 = arith.constant 4 : i32
    %325 = arith.addi %0, %c4_i32_272 : i32
    %326 = arith.index_cast %325 : i32 to index
    %c4_273 = arith.constant 4 : index
    %327 = memref.load %arg1[%326, %c4_273] : memref<8x8xi32, #tpu.memory_space<smem>>
    %c4_i32_274 = arith.constant 4 : i32
    %c4_i32_275 = arith.constant 4 : i32
    %c4_i32_276 = arith.constant 4 : i32
    %c4_i32_277 = arith.constant 4 : i32
    %c0_i32_278 = arith.constant 0 : i32
    %328 = tpu.memref_slice %arg2[%327, %c0_i32_278] : memref<50x128xf32, #tpu.memory_space<any>> -> memref<1x128xf32, #tpu.memory_space<any>>
    %329 = tpu.memref_squeeze %328 : memref<1x128xf32, #tpu.memory_space<any>> -> memref<128xf32, #tpu.memory_space<any>>
    %c0_i32_279 = arith.constant 0 : i32
    %330 = tpu.memref_slice %arg6[%c4_i32_274, %c4_i32_275, %c0_i32_279] : memref<8x8x128xf32, #tpu.memory_space<vmem>> -> memref<1x1x128xf32, #tpu.memory_space<vmem>>
    %331 = tpu.memref_squeeze %330 : memref<1x1x128xf32, #tpu.memory_space<vmem>> -> memref<128xf32, #tpu.memory_space<vmem>>
    %332 = tpu.memref_slice %arg7[%c4_i32_276, %c4_i32_277] : memref<8x8x!tpu.dma_semaphore, #tpu.memory_space<semaphore_mem>> -> memref<1x1x!tpu.dma_semaphore, #tpu.memory_space<semaphore_mem>>
    %333 = tpu.memref_squeeze %332 : memref<1x1x!tpu.dma_semaphore, #tpu.memory_space<semaphore_mem>> -> memref<!tpu.dma_semaphore, #tpu.memory_space<semaphore_mem>>
    tpu.enqueue_dma source(%329 : memref<128xf32, #tpu.memory_space<any>>) target(%331 : memref<128xf32, #tpu.memory_space<vmem>>) target_semaphore(%333 : memref<!tpu.dma_semaphore, #tpu.memory_space<semaphore_mem>>)
    %c4_i32_280 = arith.constant 4 : i32
    %334 = arith.addi %0, %c4_i32_280 : i32
    %335 = arith.index_cast %334 : i32 to index
    %c5_281 = arith.constant 5 : index
    %336 = memref.load %arg1[%335, %c5_281] : memref<8x8xi32, #tpu.memory_space<smem>>
    %c4_i32_282 = arith.constant 4 : i32
    %c5_i32_283 = arith.constant 5 : i32
    %c4_i32_284 = arith.constant 4 : i32
    %c5_i32_285 = arith.constant 5 : i32
    %c0_i32_286 = arith.constant 0 : i32
    %337 = tpu.memref_slice %arg2[%336, %c0_i32_286] : memref<50x128xf32, #tpu.memory_space<any>> -> memref<1x128xf32, #tpu.memory_space<any>>
    %338 = tpu.memref_squeeze %337 : memref<1x128xf32, #tpu.memory_space<any>> -> memref<128xf32, #tpu.memory_space<any>>
    %c0_i32_287 = arith.constant 0 : i32
    %339 = tpu.memref_slice %arg6[%c4_i32_282, %c5_i32_283, %c0_i32_287] : memref<8x8x128xf32, #tpu.memory_space<vmem>> -> memref<1x1x128xf32, #tpu.memory_space<vmem>>
    %340 = tpu.memref_squeeze %339 : memref<1x1x128xf32, #tpu.memory_space<vmem>> -> memref<128xf32, #tpu.memory_space<vmem>>
    %341 = tpu.memref_slice %arg7[%c4_i32_284, %c5_i32_285] : memref<8x8x!tpu.dma_semaphore, #tpu.memory_space<semaphore_mem>> -> memref<1x1x!tpu.dma_semaphore, #tpu.memory_space<semaphore_mem>>
    %342 = tpu.memref_squeeze %341 : memref<1x1x!tpu.dma_semaphore, #tpu.memory_space<semaphore_mem>> -> memref<!tpu.dma_semaphore, #tpu.memory_space<semaphore_mem>>
    tpu.enqueue_dma source(%338 : memref<128xf32, #tpu.memory_space<any>>) target(%340 : memref<128xf32, #tpu.memory_space<vmem>>) target_semaphore(%342 : memref<!tpu.dma_semaphore, #tpu.memory_space<semaphore_mem>>)
    %c4_i32_288 = arith.constant 4 : i32
    %343 = arith.addi %0, %c4_i32_288 : i32
    %344 = arith.index_cast %343 : i32 to index
    %c6_289 = arith.constant 6 : index
    %345 = memref.load %arg1[%344, %c6_289] : memref<8x8xi32, #tpu.memory_space<smem>>
    %c4_i32_290 = arith.constant 4 : i32
    %c6_i32_291 = arith.constant 6 : i32
    %c4_i32_292 = arith.constant 4 : i32
    %c6_i32_293 = arith.constant 6 : i32
    %c0_i32_294 = arith.constant 0 : i32
    %346 = tpu.memref_slice %arg2[%345, %c0_i32_294] : memref<50x128xf32, #tpu.memory_space<any>> -> memref<1x128xf32, #tpu.memory_space<any>>
    %347 = tpu.memref_squeeze %346 : memref<1x128xf32, #tpu.memory_space<any>> -> memref<128xf32, #tpu.memory_space<any>>
    %c0_i32_295 = arith.constant 0 : i32
    %348 = tpu.memref_slice %arg6[%c4_i32_290, %c6_i32_291, %c0_i32_295] : memref<8x8x128xf32, #tpu.memory_space<vmem>> -> memref<1x1x128xf32, #tpu.memory_space<vmem>>
    %349 = tpu.memref_squeeze %348 : memref<1x1x128xf32, #tpu.memory_space<vmem>> -> memref<128xf32, #tpu.memory_space<vmem>>
    %350 = tpu.memref_slice %arg7[%c4_i32_292, %c6_i32_293] : memref<8x8x!tpu.dma_semaphore, #tpu.memory_space<semaphore_mem>> -> memref<1x1x!tpu.dma_semaphore, #tpu.memory_space<semaphore_mem>>
    %351 = tpu.memref_squeeze %350 : memref<1x1x!tpu.dma_semaphore, #tpu.memory_space<semaphore_mem>> -> memref<!tpu.dma_semaphore, #tpu.memory_space<semaphore_mem>>
    tpu.enqueue_dma source(%347 : memref<128xf32, #tpu.memory_space<any>>) target(%349 : memref<128xf32, #tpu.memory_space<vmem>>) target_semaphore(%351 : memref<!tpu.dma_semaphore, #tpu.memory_space<semaphore_mem>>)
    %c4_i32_296 = arith.constant 4 : i32
    %352 = arith.addi %0, %c4_i32_296 : i32
    %353 = arith.index_cast %352 : i32 to index
    %c7_297 = arith.constant 7 : index
    %354 = memref.load %arg1[%353, %c7_297] : memref<8x8xi32, #tpu.memory_space<smem>>
    %c4_i32_298 = arith.constant 4 : i32
    %c7_i32_299 = arith.constant 7 : i32
    %c4_i32_300 = arith.constant 4 : i32
    %c7_i32_301 = arith.constant 7 : i32
    %c0_i32_302 = arith.constant 0 : i32
    %355 = tpu.memref_slice %arg2[%354, %c0_i32_302] : memref<50x128xf32, #tpu.memory_space<any>> -> memref<1x128xf32, #tpu.memory_space<any>>
    %356 = tpu.memref_squeeze %355 : memref<1x128xf32, #tpu.memory_space<any>> -> memref<128xf32, #tpu.memory_space<any>>
    %c0_i32_303 = arith.constant 0 : i32
    %357 = tpu.memref_slice %arg6[%c4_i32_298, %c7_i32_299, %c0_i32_303] : memref<8x8x128xf32, #tpu.memory_space<vmem>> -> memref<1x1x128xf32, #tpu.memory_space<vmem>>
    %358 = tpu.memref_squeeze %357 : memref<1x1x128xf32, #tpu.memory_space<vmem>> -> memref<128xf32, #tpu.memory_space<vmem>>
    %359 = tpu.memref_slice %arg7[%c4_i32_300, %c7_i32_301] : memref<8x8x!tpu.dma_semaphore, #tpu.memory_space<semaphore_mem>> -> memref<1x1x!tpu.dma_semaphore, #tpu.memory_space<semaphore_mem>>
    %360 = tpu.memref_squeeze %359 : memref<1x1x!tpu.dma_semaphore, #tpu.memory_space<semaphore_mem>> -> memref<!tpu.dma_semaphore, #tpu.memory_space<semaphore_mem>>
    tpu.enqueue_dma source(%356 : memref<128xf32, #tpu.memory_space<any>>) target(%358 : memref<128xf32, #tpu.memory_space<vmem>>) target_semaphore(%360 : memref<!tpu.dma_semaphore, #tpu.memory_space<semaphore_mem>>)
    %c5_i32_304 = arith.constant 5 : i32
    %361 = arith.addi %0, %c5_i32_304 : i32
    %362 = arith.index_cast %361 : i32 to index
    %c0_305 = arith.constant 0 : index
    %363 = memref.load %arg1[%362, %c0_305] : memref<8x8xi32, #tpu.memory_space<smem>>
    %c5_i32_306 = arith.constant 5 : i32
    %c0_i32_307 = arith.constant 0 : i32
    %c5_i32_308 = arith.constant 5 : i32
    %c0_i32_309 = arith.constant 0 : i32
    %c0_i32_310 = arith.constant 0 : i32
    %364 = tpu.memref_slice %arg2[%363, %c0_i32_310] : memref<50x128xf32, #tpu.memory_space<any>> -> memref<1x128xf32, #tpu.memory_space<any>>
    %365 = tpu.memref_squeeze %364 : memref<1x128xf32, #tpu.memory_space<any>> -> memref<128xf32, #tpu.memory_space<any>>
    %c0_i32_311 = arith.constant 0 : i32
    %366 = tpu.memref_slice %arg6[%c5_i32_306, %c0_i32_307, %c0_i32_311] : memref<8x8x128xf32, #tpu.memory_space<vmem>> -> memref<1x1x128xf32, #tpu.memory_space<vmem>>
    %367 = tpu.memref_squeeze %366 : memref<1x1x128xf32, #tpu.memory_space<vmem>> -> memref<128xf32, #tpu.memory_space<vmem>>
    %368 = tpu.memref_slice %arg7[%c5_i32_308, %c0_i32_309] : memref<8x8x!tpu.dma_semaphore, #tpu.memory_space<semaphore_mem>> -> memref<1x1x!tpu.dma_semaphore, #tpu.memory_space<semaphore_mem>>
    %369 = tpu.memref_squeeze %368 : memref<1x1x!tpu.dma_semaphore, #tpu.memory_space<semaphore_mem>> -> memref<!tpu.dma_semaphore, #tpu.memory_space<semaphore_mem>>
    tpu.enqueue_dma source(%365 : memref<128xf32, #tpu.memory_space<any>>) target(%367 : memref<128xf32, #tpu.memory_space<vmem>>) target_semaphore(%369 : memref<!tpu.dma_semaphore, #tpu.memory_space<semaphore_mem>>)
    %c5_i32_312 = arith.constant 5 : i32
    %370 = arith.addi %0, %c5_i32_312 : i32
    %371 = arith.index_cast %370 : i32 to index
    %c1_313 = arith.constant 1 : index
    %372 = memref.load %arg1[%371, %c1_313] : memref<8x8xi32, #tpu.memory_space<smem>>
    %c5_i32_314 = arith.constant 5 : i32
    %c1_i32_315 = arith.constant 1 : i32
    %c5_i32_316 = arith.constant 5 : i32
    %c1_i32_317 = arith.constant 1 : i32
    %c0_i32_318 = arith.constant 0 : i32
    %373 = tpu.memref_slice %arg2[%372, %c0_i32_318] : memref<50x128xf32, #tpu.memory_space<any>> -> memref<1x128xf32, #tpu.memory_space<any>>
    %374 = tpu.memref_squeeze %373 : memref<1x128xf32, #tpu.memory_space<any>> -> memref<128xf32, #tpu.memory_space<any>>
    %c0_i32_319 = arith.constant 0 : i32
    %375 = tpu.memref_slice %arg6[%c5_i32_314, %c1_i32_315, %c0_i32_319] : memref<8x8x128xf32, #tpu.memory_space<vmem>> -> memref<1x1x128xf32, #tpu.memory_space<vmem>>
    %376 = tpu.memref_squeeze %375 : memref<1x1x128xf32, #tpu.memory_space<vmem>> -> memref<128xf32, #tpu.memory_space<vmem>>
    %377 = tpu.memref_slice %arg7[%c5_i32_316, %c1_i32_317] : memref<8x8x!tpu.dma_semaphore, #tpu.memory_space<semaphore_mem>> -> memref<1x1x!tpu.dma_semaphore, #tpu.memory_space<semaphore_mem>>
    %378 = tpu.memref_squeeze %377 : memref<1x1x!tpu.dma_semaphore, #tpu.memory_space<semaphore_mem>> -> memref<!tpu.dma_semaphore, #tpu.memory_space<semaphore_mem>>
    tpu.enqueue_dma source(%374 : memref<128xf32, #tpu.memory_space<any>>) target(%376 : memref<128xf32, #tpu.memory_space<vmem>>) target_semaphore(%378 : memref<!tpu.dma_semaphore, #tpu.memory_space<semaphore_mem>>)
    %c5_i32_320 = arith.constant 5 : i32
    %379 = arith.addi %0, %c5_i32_320 : i32
    %380 = arith.index_cast %379 : i32 to index
    %c2_321 = arith.constant 2 : index
    %381 = memref.load %arg1[%380, %c2_321] : memref<8x8xi32, #tpu.memory_space<smem>>
    %c5_i32_322 = arith.constant 5 : i32
    %c2_i32_323 = arith.constant 2 : i32
    %c5_i32_324 = arith.constant 5 : i32
    %c2_i32_325 = arith.constant 2 : i32
    %c0_i32_326 = arith.constant 0 : i32
    %382 = tpu.memref_slice %arg2[%381, %c0_i32_326] : memref<50x128xf32, #tpu.memory_space<any>> -> memref<1x128xf32, #tpu.memory_space<any>>
    %383 = tpu.memref_squeeze %382 : memref<1x128xf32, #tpu.memory_space<any>> -> memref<128xf32, #tpu.memory_space<any>>
    %c0_i32_327 = arith.constant 0 : i32
    %384 = tpu.memref_slice %arg6[%c5_i32_322, %c2_i32_323, %c0_i32_327] : memref<8x8x128xf32, #tpu.memory_space<vmem>> -> memref<1x1x128xf32, #tpu.memory_space<vmem>>
    %385 = tpu.memref_squeeze %384 : memref<1x1x128xf32, #tpu.memory_space<vmem>> -> memref<128xf32, #tpu.memory_space<vmem>>
    %386 = tpu.memref_slice %arg7[%c5_i32_324, %c2_i32_325] : memref<8x8x!tpu.dma_semaphore, #tpu.memory_space<semaphore_mem>> -> memref<1x1x!tpu.dma_semaphore, #tpu.memory_space<semaphore_mem>>
    %387 = tpu.memref_squeeze %386 : memref<1x1x!tpu.dma_semaphore, #tpu.memory_space<semaphore_mem>> -> memref<!tpu.dma_semaphore, #tpu.memory_space<semaphore_mem>>
    tpu.enqueue_dma source(%383 : memref<128xf32, #tpu.memory_space<any>>) target(%385 : memref<128xf32, #tpu.memory_space<vmem>>) target_semaphore(%387 : memref<!tpu.dma_semaphore, #tpu.memory_space<semaphore_mem>>)
    %c5_i32_328 = arith.constant 5 : i32
    %388 = arith.addi %0, %c5_i32_328 : i32
    %389 = arith.index_cast %388 : i32 to index
    %c3_329 = arith.constant 3 : index
    %390 = memref.load %arg1[%389, %c3_329] : memref<8x8xi32, #tpu.memory_space<smem>>
    %c5_i32_330 = arith.constant 5 : i32
    %c3_i32_331 = arith.constant 3 : i32
    %c5_i32_332 = arith.constant 5 : i32
    %c3_i32_333 = arith.constant 3 : i32
    %c0_i32_334 = arith.constant 0 : i32
    %391 = tpu.memref_slice %arg2[%390, %c0_i32_334] : memref<50x128xf32, #tpu.memory_space<any>> -> memref<1x128xf32, #tpu.memory_space<any>>
    %392 = tpu.memref_squeeze %391 : memref<1x128xf32, #tpu.memory_space<any>> -> memref<128xf32, #tpu.memory_space<any>>
    %c0_i32_335 = arith.constant 0 : i32
    %393 = tpu.memref_slice %arg6[%c5_i32_330, %c3_i32_331, %c0_i32_335] : memref<8x8x128xf32, #tpu.memory_space<vmem>> -> memref<1x1x128xf32, #tpu.memory_space<vmem>>
    %394 = tpu.memref_squeeze %393 : memref<1x1x128xf32, #tpu.memory_space<vmem>> -> memref<128xf32, #tpu.memory_space<vmem>>
    %395 = tpu.memref_slice %arg7[%c5_i32_332, %c3_i32_333] : memref<8x8x!tpu.dma_semaphore, #tpu.memory_space<semaphore_mem>> -> memref<1x1x!tpu.dma_semaphore, #tpu.memory_space<semaphore_mem>>
    %396 = tpu.memref_squeeze %395 : memref<1x1x!tpu.dma_semaphore, #tpu.memory_space<semaphore_mem>> -> memref<!tpu.dma_semaphore, #tpu.memory_space<semaphore_mem>>
    tpu.enqueue_dma source(%392 : memref<128xf32, #tpu.memory_space<any>>) target(%394 : memref<128xf32, #tpu.memory_space<vmem>>) target_semaphore(%396 : memref<!tpu.dma_semaphore, #tpu.memory_space<semaphore_mem>>)
    %c5_i32_336 = arith.constant 5 : i32
    %397 = arith.addi %0, %c5_i32_336 : i32
    %398 = arith.index_cast %397 : i32 to index
    %c4_337 = arith.constant 4 : index
    %399 = memref.load %arg1[%398, %c4_337] : memref<8x8xi32, #tpu.memory_space<smem>>
    %c5_i32_338 = arith.constant 5 : i32
    %c4_i32_339 = arith.constant 4 : i32
    %c5_i32_340 = arith.constant 5 : i32
    %c4_i32_341 = arith.constant 4 : i32
    %c0_i32_342 = arith.constant 0 : i32
    %400 = tpu.memref_slice %arg2[%399, %c0_i32_342] : memref<50x128xf32, #tpu.memory_space<any>> -> memref<1x128xf32, #tpu.memory_space<any>>
    %401 = tpu.memref_squeeze %400 : memref<1x128xf32, #tpu.memory_space<any>> -> memref<128xf32, #tpu.memory_space<any>>
    %c0_i32_343 = arith.constant 0 : i32
    %402 = tpu.memref_slice %arg6[%c5_i32_338, %c4_i32_339, %c0_i32_343] : memref<8x8x128xf32, #tpu.memory_space<vmem>> -> memref<1x1x128xf32, #tpu.memory_space<vmem>>
    %403 = tpu.memref_squeeze %402 : memref<1x1x128xf32, #tpu.memory_space<vmem>> -> memref<128xf32, #tpu.memory_space<vmem>>
    %404 = tpu.memref_slice %arg7[%c5_i32_340, %c4_i32_341] : memref<8x8x!tpu.dma_semaphore, #tpu.memory_space<semaphore_mem>> -> memref<1x1x!tpu.dma_semaphore, #tpu.memory_space<semaphore_mem>>
    %405 = tpu.memref_squeeze %404 : memref<1x1x!tpu.dma_semaphore, #tpu.memory_space<semaphore_mem>> -> memref<!tpu.dma_semaphore, #tpu.memory_space<semaphore_mem>>
    tpu.enqueue_dma source(%401 : memref<128xf32, #tpu.memory_space<any>>) target(%403 : memref<128xf32, #tpu.memory_space<vmem>>) target_semaphore(%405 : memref<!tpu.dma_semaphore, #tpu.memory_space<semaphore_mem>>)
    %c5_i32_344 = arith.constant 5 : i32
    %406 = arith.addi %0, %c5_i32_344 : i32
    %407 = arith.index_cast %406 : i32 to index
    %c5_345 = arith.constant 5 : index
    %408 = memref.load %arg1[%407, %c5_345] : memref<8x8xi32, #tpu.memory_space<smem>>
    %c5_i32_346 = arith.constant 5 : i32
    %c5_i32_347 = arith.constant 5 : i32
    %c5_i32_348 = arith.constant 5 : i32
    %c5_i32_349 = arith.constant 5 : i32
    %c0_i32_350 = arith.constant 0 : i32
    %409 = tpu.memref_slice %arg2[%408, %c0_i32_350] : memref<50x128xf32, #tpu.memory_space<any>> -> memref<1x128xf32, #tpu.memory_space<any>>
    %410 = tpu.memref_squeeze %409 : memref<1x128xf32, #tpu.memory_space<any>> -> memref<128xf32, #tpu.memory_space<any>>
    %c0_i32_351 = arith.constant 0 : i32
    %411 = tpu.memref_slice %arg6[%c5_i32_346, %c5_i32_347, %c0_i32_351] : memref<8x8x128xf32, #tpu.memory_space<vmem>> -> memref<1x1x128xf32, #tpu.memory_space<vmem>>
    %412 = tpu.memref_squeeze %411 : memref<1x1x128xf32, #tpu.memory_space<vmem>> -> memref<128xf32, #tpu.memory_space<vmem>>
    %413 = tpu.memref_slice %arg7[%c5_i32_348, %c5_i32_349] : memref<8x8x!tpu.dma_semaphore, #tpu.memory_space<semaphore_mem>> -> memref<1x1x!tpu.dma_semaphore, #tpu.memory_space<semaphore_mem>>
    %414 = tpu.memref_squeeze %413 : memref<1x1x!tpu.dma_semaphore, #tpu.memory_space<semaphore_mem>> -> memref<!tpu.dma_semaphore, #tpu.memory_space<semaphore_mem>>
    tpu.enqueue_dma source(%410 : memref<128xf32, #tpu.memory_space<any>>) target(%412 : memref<128xf32, #tpu.memory_space<vmem>>) target_semaphore(%414 : memref<!tpu.dma_semaphore, #tpu.memory_space<semaphore_mem>>)
    %c5_i32_352 = arith.constant 5 : i32
    %415 = arith.addi %0, %c5_i32_352 : i32
    %416 = arith.index_cast %415 : i32 to index
    %c6_353 = arith.constant 6 : index
    %417 = memref.load %arg1[%416, %c6_353] : memref<8x8xi32, #tpu.memory_space<smem>>
    %c5_i32_354 = arith.constant 5 : i32
    %c6_i32_355 = arith.constant 6 : i32
    %c5_i32_356 = arith.constant 5 : i32
    %c6_i32_357 = arith.constant 6 : i32
    %c0_i32_358 = arith.constant 0 : i32
    %418 = tpu.memref_slice %arg2[%417, %c0_i32_358] : memref<50x128xf32, #tpu.memory_space<any>> -> memref<1x128xf32, #tpu.memory_space<any>>
    %419 = tpu.memref_squeeze %418 : memref<1x128xf32, #tpu.memory_space<any>> -> memref<128xf32, #tpu.memory_space<any>>
    %c0_i32_359 = arith.constant 0 : i32
    %420 = tpu.memref_slice %arg6[%c5_i32_354, %c6_i32_355, %c0_i32_359] : memref<8x8x128xf32, #tpu.memory_space<vmem>> -> memref<1x1x128xf32, #tpu.memory_space<vmem>>
    %421 = tpu.memref_squeeze %420 : memref<1x1x128xf32, #tpu.memory_space<vmem>> -> memref<128xf32, #tpu.memory_space<vmem>>
    %422 = tpu.memref_slice %arg7[%c5_i32_356, %c6_i32_357] : memref<8x8x!tpu.dma_semaphore, #tpu.memory_space<semaphore_mem>> -> memref<1x1x!tpu.dma_semaphore, #tpu.memory_space<semaphore_mem>>
    %423 = tpu.memref_squeeze %422 : memref<1x1x!tpu.dma_semaphore, #tpu.memory_space<semaphore_mem>> -> memref<!tpu.dma_semaphore, #tpu.memory_space<semaphore_mem>>
    tpu.enqueue_dma source(%419 : memref<128xf32, #tpu.memory_space<any>>) target(%421 : memref<128xf32, #tpu.memory_space<vmem>>) target_semaphore(%423 : memref<!tpu.dma_semaphore, #tpu.memory_space<semaphore_mem>>)
    %c5_i32_360 = arith.constant 5 : i32
    %424 = arith.addi %0, %c5_i32_360 : i32
    %425 = arith.index_cast %424 : i32 to index
    %c7_361 = arith.constant 7 : index
    %426 = memref.load %arg1[%425, %c7_361] : memref<8x8xi32, #tpu.memory_space<smem>>
    %c5_i32_362 = arith.constant 5 : i32
    %c7_i32_363 = arith.constant 7 : i32
    %c5_i32_364 = arith.constant 5 : i32
    %c7_i32_365 = arith.constant 7 : i32
    %c0_i32_366 = arith.constant 0 : i32
    %427 = tpu.memref_slice %arg2[%426, %c0_i32_366] : memref<50x128xf32, #tpu.memory_space<any>> -> memref<1x128xf32, #tpu.memory_space<any>>
    %428 = tpu.memref_squeeze %427 : memref<1x128xf32, #tpu.memory_space<any>> -> memref<128xf32, #tpu.memory_space<any>>
    %c0_i32_367 = arith.constant 0 : i32
    %429 = tpu.memref_slice %arg6[%c5_i32_362, %c7_i32_363, %c0_i32_367] : memref<8x8x128xf32, #tpu.memory_space<vmem>> -> memref<1x1x128xf32, #tpu.memory_space<vmem>>
    %430 = tpu.memref_squeeze %429 : memref<1x1x128xf32, #tpu.memory_space<vmem>> -> memref<128xf32, #tpu.memory_space<vmem>>
    %431 = tpu.memref_slice %arg7[%c5_i32_364, %c7_i32_365] : memref<8x8x!tpu.dma_semaphore, #tpu.memory_space<semaphore_mem>> -> memref<1x1x!tpu.dma_semaphore, #tpu.memory_space<semaphore_mem>>
    %432 = tpu.memref_squeeze %431 : memref<1x1x!tpu.dma_semaphore, #tpu.memory_space<semaphore_mem>> -> memref<!tpu.dma_semaphore, #tpu.memory_space<semaphore_mem>>
    tpu.enqueue_dma source(%428 : memref<128xf32, #tpu.memory_space<any>>) target(%430 : memref<128xf32, #tpu.memory_space<vmem>>) target_semaphore(%432 : memref<!tpu.dma_semaphore, #tpu.memory_space<semaphore_mem>>)
    %c6_i32_368 = arith.constant 6 : i32
    %433 = arith.addi %0, %c6_i32_368 : i32
    %434 = arith.index_cast %433 : i32 to index
    %c0_369 = arith.constant 0 : index
    %435 = memref.load %arg1[%434, %c0_369] : memref<8x8xi32, #tpu.memory_space<smem>>
    %c6_i32_370 = arith.constant 6 : i32
    %c0_i32_371 = arith.constant 0 : i32
    %c6_i32_372 = arith.constant 6 : i32
    %c0_i32_373 = arith.constant 0 : i32
    %c0_i32_374 = arith.constant 0 : i32
    %436 = tpu.memref_slice %arg2[%435, %c0_i32_374] : memref<50x128xf32, #tpu.memory_space<any>> -> memref<1x128xf32, #tpu.memory_space<any>>
    %437 = tpu.memref_squeeze %436 : memref<1x128xf32, #tpu.memory_space<any>> -> memref<128xf32, #tpu.memory_space<any>>
    %c0_i32_375 = arith.constant 0 : i32
    %438 = tpu.memref_slice %arg6[%c6_i32_370, %c0_i32_371, %c0_i32_375] : memref<8x8x128xf32, #tpu.memory_space<vmem>> -> memref<1x1x128xf32, #tpu.memory_space<vmem>>
    %439 = tpu.memref_squeeze %438 : memref<1x1x128xf32, #tpu.memory_space<vmem>> -> memref<128xf32, #tpu.memory_space<vmem>>
    %440 = tpu.memref_slice %arg7[%c6_i32_372, %c0_i32_373] : memref<8x8x!tpu.dma_semaphore, #tpu.memory_space<semaphore_mem>> -> memref<1x1x!tpu.dma_semaphore, #tpu.memory_space<semaphore_mem>>
    %441 = tpu.memref_squeeze %440 : memref<1x1x!tpu.dma_semaphore, #tpu.memory_space<semaphore_mem>> -> memref<!tpu.dma_semaphore, #tpu.memory_space<semaphore_mem>>
    tpu.enqueue_dma source(%437 : memref<128xf32, #tpu.memory_space<any>>) target(%439 : memref<128xf32, #tpu.memory_space<vmem>>) target_semaphore(%441 : memref<!tpu.dma_semaphore, #tpu.memory_space<semaphore_mem>>)
    %c6_i32_376 = arith.constant 6 : i32
    %442 = arith.addi %0, %c6_i32_376 : i32
    %443 = arith.index_cast %442 : i32 to index
    %c1_377 = arith.constant 1 : index
    %444 = memref.load %arg1[%443, %c1_377] : memref<8x8xi32, #tpu.memory_space<smem>>
    %c6_i32_378 = arith.constant 6 : i32
    %c1_i32_379 = arith.constant 1 : i32
    %c6_i32_380 = arith.constant 6 : i32
    %c1_i32_381 = arith.constant 1 : i32
    %c0_i32_382 = arith.constant 0 : i32
    %445 = tpu.memref_slice %arg2[%444, %c0_i32_382] : memref<50x128xf32, #tpu.memory_space<any>> -> memref<1x128xf32, #tpu.memory_space<any>>
    %446 = tpu.memref_squeeze %445 : memref<1x128xf32, #tpu.memory_space<any>> -> memref<128xf32, #tpu.memory_space<any>>
    %c0_i32_383 = arith.constant 0 : i32
    %447 = tpu.memref_slice %arg6[%c6_i32_378, %c1_i32_379, %c0_i32_383] : memref<8x8x128xf32, #tpu.memory_space<vmem>> -> memref<1x1x128xf32, #tpu.memory_space<vmem>>
    %448 = tpu.memref_squeeze %447 : memref<1x1x128xf32, #tpu.memory_space<vmem>> -> memref<128xf32, #tpu.memory_space<vmem>>
    %449 = tpu.memref_slice %arg7[%c6_i32_380, %c1_i32_381] : memref<8x8x!tpu.dma_semaphore, #tpu.memory_space<semaphore_mem>> -> memref<1x1x!tpu.dma_semaphore, #tpu.memory_space<semaphore_mem>>
    %450 = tpu.memref_squeeze %449 : memref<1x1x!tpu.dma_semaphore, #tpu.memory_space<semaphore_mem>> -> memref<!tpu.dma_semaphore, #tpu.memory_space<semaphore_mem>>
    tpu.enqueue_dma source(%446 : memref<128xf32, #tpu.memory_space<any>>) target(%448 : memref<128xf32, #tpu.memory_space<vmem>>) target_semaphore(%450 : memref<!tpu.dma_semaphore, #tpu.memory_space<semaphore_mem>>)
    %c6_i32_384 = arith.constant 6 : i32
    %451 = arith.addi %0, %c6_i32_384 : i32
    %452 = arith.index_cast %451 : i32 to index
    %c2_385 = arith.constant 2 : index
    %453 = memref.load %arg1[%452, %c2_385] : memref<8x8xi32, #tpu.memory_space<smem>>
    %c6_i32_386 = arith.constant 6 : i32
    %c2_i32_387 = arith.constant 2 : i32
    %c6_i32_388 = arith.constant 6 : i32
    %c2_i32_389 = arith.constant 2 : i32
    %c0_i32_390 = arith.constant 0 : i32
    %454 = tpu.memref_slice %arg2[%453, %c0_i32_390] : memref<50x128xf32, #tpu.memory_space<any>> -> memref<1x128xf32, #tpu.memory_space<any>>
    %455 = tpu.memref_squeeze %454 : memref<1x128xf32, #tpu.memory_space<any>> -> memref<128xf32, #tpu.memory_space<any>>
    %c0_i32_391 = arith.constant 0 : i32
    %456 = tpu.memref_slice %arg6[%c6_i32_386, %c2_i32_387, %c0_i32_391] : memref<8x8x128xf32, #tpu.memory_space<vmem>> -> memref<1x1x128xf32, #tpu.memory_space<vmem>>
    %457 = tpu.memref_squeeze %456 : memref<1x1x128xf32, #tpu.memory_space<vmem>> -> memref<128xf32, #tpu.memory_space<vmem>>
    %458 = tpu.memref_slice %arg7[%c6_i32_388, %c2_i32_389] : memref<8x8x!tpu.dma_semaphore, #tpu.memory_space<semaphore_mem>> -> memref<1x1x!tpu.dma_semaphore, #tpu.memory_space<semaphore_mem>>
    %459 = tpu.memref_squeeze %458 : memref<1x1x!tpu.dma_semaphore, #tpu.memory_space<semaphore_mem>> -> memref<!tpu.dma_semaphore, #tpu.memory_space<semaphore_mem>>
    tpu.enqueue_dma source(%455 : memref<128xf32, #tpu.memory_space<any>>) target(%457 : memref<128xf32, #tpu.memory_space<vmem>>) target_semaphore(%459 : memref<!tpu.dma_semaphore, #tpu.memory_space<semaphore_mem>>)
    %c6_i32_392 = arith.constant 6 : i32
    %460 = arith.addi %0, %c6_i32_392 : i32
    %461 = arith.index_cast %460 : i32 to index
    %c3_393 = arith.constant 3 : index
    %462 = memref.load %arg1[%461, %c3_393] : memref<8x8xi32, #tpu.memory_space<smem>>
    %c6_i32_394 = arith.constant 6 : i32
    %c3_i32_395 = arith.constant 3 : i32
    %c6_i32_396 = arith.constant 6 : i32
    %c3_i32_397 = arith.constant 3 : i32
    %c0_i32_398 = arith.constant 0 : i32
    %463 = tpu.memref_slice %arg2[%462, %c0_i32_398] : memref<50x128xf32, #tpu.memory_space<any>> -> memref<1x128xf32, #tpu.memory_space<any>>
    %464 = tpu.memref_squeeze %463 : memref<1x128xf32, #tpu.memory_space<any>> -> memref<128xf32, #tpu.memory_space<any>>
    %c0_i32_399 = arith.constant 0 : i32
    %465 = tpu.memref_slice %arg6[%c6_i32_394, %c3_i32_395, %c0_i32_399] : memref<8x8x128xf32, #tpu.memory_space<vmem>> -> memref<1x1x128xf32, #tpu.memory_space<vmem>>
    %466 = tpu.memref_squeeze %465 : memref<1x1x128xf32, #tpu.memory_space<vmem>> -> memref<128xf32, #tpu.memory_space<vmem>>
    %467 = tpu.memref_slice %arg7[%c6_i32_396, %c3_i32_397] : memref<8x8x!tpu.dma_semaphore, #tpu.memory_space<semaphore_mem>> -> memref<1x1x!tpu.dma_semaphore, #tpu.memory_space<semaphore_mem>>
    %468 = tpu.memref_squeeze %467 : memref<1x1x!tpu.dma_semaphore, #tpu.memory_space<semaphore_mem>> -> memref<!tpu.dma_semaphore, #tpu.memory_space<semaphore_mem>>
    tpu.enqueue_dma source(%464 : memref<128xf32, #tpu.memory_space<any>>) target(%466 : memref<128xf32, #tpu.memory_space<vmem>>) target_semaphore(%468 : memref<!tpu.dma_semaphore, #tpu.memory_space<semaphore_mem>>)
    %c6_i32_400 = arith.constant 6 : i32
    %469 = arith.addi %0, %c6_i32_400 : i32
    %470 = arith.index_cast %469 : i32 to index
    %c4_401 = arith.constant 4 : index
    %471 = memref.load %arg1[%470, %c4_401] : memref<8x8xi32, #tpu.memory_space<smem>>
    %c6_i32_402 = arith.constant 6 : i32
    %c4_i32_403 = arith.constant 4 : i32
    %c6_i32_404 = arith.constant 6 : i32
    %c4_i32_405 = arith.constant 4 : i32
    %c0_i32_406 = arith.constant 0 : i32
    %472 = tpu.memref_slice %arg2[%471, %c0_i32_406] : memref<50x128xf32, #tpu.memory_space<any>> -> memref<1x128xf32, #tpu.memory_space<any>>
    %473 = tpu.memref_squeeze %472 : memref<1x128xf32, #tpu.memory_space<any>> -> memref<128xf32, #tpu.memory_space<any>>
    %c0_i32_407 = arith.constant 0 : i32
    %474 = tpu.memref_slice %arg6[%c6_i32_402, %c4_i32_403, %c0_i32_407] : memref<8x8x128xf32, #tpu.memory_space<vmem>> -> memref<1x1x128xf32, #tpu.memory_space<vmem>>
    %475 = tpu.memref_squeeze %474 : memref<1x1x128xf32, #tpu.memory_space<vmem>> -> memref<128xf32, #tpu.memory_space<vmem>>
    %476 = tpu.memref_slice %arg7[%c6_i32_404, %c4_i32_405] : memref<8x8x!tpu.dma_semaphore, #tpu.memory_space<semaphore_mem>> -> memref<1x1x!tpu.dma_semaphore, #tpu.memory_space<semaphore_mem>>
    %477 = tpu.memref_squeeze %476 : memref<1x1x!tpu.dma_semaphore, #tpu.memory_space<semaphore_mem>> -> memref<!tpu.dma_semaphore, #tpu.memory_space<semaphore_mem>>
    tpu.enqueue_dma source(%473 : memref<128xf32, #tpu.memory_space<any>>) target(%475 : memref<128xf32, #tpu.memory_space<vmem>>) target_semaphore(%477 : memref<!tpu.dma_semaphore, #tpu.memory_space<semaphore_mem>>)
    %c6_i32_408 = arith.constant 6 : i32
    %478 = arith.addi %0, %c6_i32_408 : i32
    %479 = arith.index_cast %478 : i32 to index
    %c5_409 = arith.constant 5 : index
    %480 = memref.load %arg1[%479, %c5_409] : memref<8x8xi32, #tpu.memory_space<smem>>
    %c6_i32_410 = arith.constant 6 : i32
    %c5_i32_411 = arith.constant 5 : i32
    %c6_i32_412 = arith.constant 6 : i32
    %c5_i32_413 = arith.constant 5 : i32
    %c0_i32_414 = arith.constant 0 : i32
    %481 = tpu.memref_slice %arg2[%480, %c0_i32_414] : memref<50x128xf32, #tpu.memory_space<any>> -> memref<1x128xf32, #tpu.memory_space<any>>
    %482 = tpu.memref_squeeze %481 : memref<1x128xf32, #tpu.memory_space<any>> -> memref<128xf32, #tpu.memory_space<any>>
    %c0_i32_415 = arith.constant 0 : i32
    %483 = tpu.memref_slice %arg6[%c6_i32_410, %c5_i32_411, %c0_i32_415] : memref<8x8x128xf32, #tpu.memory_space<vmem>> -> memref<1x1x128xf32, #tpu.memory_space<vmem>>
    %484 = tpu.memref_squeeze %483 : memref<1x1x128xf32, #tpu.memory_space<vmem>> -> memref<128xf32, #tpu.memory_space<vmem>>
    %485 = tpu.memref_slice %arg7[%c6_i32_412, %c5_i32_413] : memref<8x8x!tpu.dma_semaphore, #tpu.memory_space<semaphore_mem>> -> memref<1x1x!tpu.dma_semaphore, #tpu.memory_space<semaphore_mem>>
    %486 = tpu.memref_squeeze %485 : memref<1x1x!tpu.dma_semaphore, #tpu.memory_space<semaphore_mem>> -> memref<!tpu.dma_semaphore, #tpu.memory_space<semaphore_mem>>
    tpu.enqueue_dma source(%482 : memref<128xf32, #tpu.memory_space<any>>) target(%484 : memref<128xf32, #tpu.memory_space<vmem>>) target_semaphore(%486 : memref<!tpu.dma_semaphore, #tpu.memory_space<semaphore_mem>>)
    %c6_i32_416 = arith.constant 6 : i32
    %487 = arith.addi %0, %c6_i32_416 : i32
    %488 = arith.index_cast %487 : i32 to index
    %c6_417 = arith.constant 6 : index
    %489 = memref.load %arg1[%488, %c6_417] : memref<8x8xi32, #tpu.memory_space<smem>>
    %c6_i32_418 = arith.constant 6 : i32
    %c6_i32_419 = arith.constant 6 : i32
    %c6_i32_420 = arith.constant 6 : i32
    %c6_i32_421 = arith.constant 6 : i32
    %c0_i32_422 = arith.constant 0 : i32
    %490 = tpu.memref_slice %arg2[%489, %c0_i32_422] : memref<50x128xf32, #tpu.memory_space<any>> -> memref<1x128xf32, #tpu.memory_space<any>>
    %491 = tpu.memref_squeeze %490 : memref<1x128xf32, #tpu.memory_space<any>> -> memref<128xf32, #tpu.memory_space<any>>
    %c0_i32_423 = arith.constant 0 : i32
    %492 = tpu.memref_slice %arg6[%c6_i32_418, %c6_i32_419, %c0_i32_423] : memref<8x8x128xf32, #tpu.memory_space<vmem>> -> memref<1x1x128xf32, #tpu.memory_space<vmem>>
    %493 = tpu.memref_squeeze %492 : memref<1x1x128xf32, #tpu.memory_space<vmem>> -> memref<128xf32, #tpu.memory_space<vmem>>
    %494 = tpu.memref_slice %arg7[%c6_i32_420, %c6_i32_421] : memref<8x8x!tpu.dma_semaphore, #tpu.memory_space<semaphore_mem>> -> memref<1x1x!tpu.dma_semaphore, #tpu.memory_space<semaphore_mem>>
    %495 = tpu.memref_squeeze %494 : memref<1x1x!tpu.dma_semaphore, #tpu.memory_space<semaphore_mem>> -> memref<!tpu.dma_semaphore, #tpu.memory_space<semaphore_mem>>
    tpu.enqueue_dma source(%491 : memref<128xf32, #tpu.memory_space<any>>) target(%493 : memref<128xf32, #tpu.memory_space<vmem>>) target_semaphore(%495 : memref<!tpu.dma_semaphore, #tpu.memory_space<semaphore_mem>>)
    %c6_i32_424 = arith.constant 6 : i32
    %496 = arith.addi %0, %c6_i32_424 : i32
    %497 = arith.index_cast %496 : i32 to index
    %c7_425 = arith.constant 7 : index
    %498 = memref.load %arg1[%497, %c7_425] : memref<8x8xi32, #tpu.memory_space<smem>>
    %c6_i32_426 = arith.constant 6 : i32
    %c7_i32_427 = arith.constant 7 : i32
    %c6_i32_428 = arith.constant 6 : i32
    %c7_i32_429 = arith.constant 7 : i32
    %c0_i32_430 = arith.constant 0 : i32
    %499 = tpu.memref_slice %arg2[%498, %c0_i32_430] : memref<50x128xf32, #tpu.memory_space<any>> -> memref<1x128xf32, #tpu.memory_space<any>>
    %500 = tpu.memref_squeeze %499 : memref<1x128xf32, #tpu.memory_space<any>> -> memref<128xf32, #tpu.memory_space<any>>
    %c0_i32_431 = arith.constant 0 : i32
    %501 = tpu.memref_slice %arg6[%c6_i32_426, %c7_i32_427, %c0_i32_431] : memref<8x8x128xf32, #tpu.memory_space<vmem>> -> memref<1x1x128xf32, #tpu.memory_space<vmem>>
    %502 = tpu.memref_squeeze %501 : memref<1x1x128xf32, #tpu.memory_space<vmem>> -> memref<128xf32, #tpu.memory_space<vmem>>
    %503 = tpu.memref_slice %arg7[%c6_i32_428, %c7_i32_429] : memref<8x8x!tpu.dma_semaphore, #tpu.memory_space<semaphore_mem>> -> memref<1x1x!tpu.dma_semaphore, #tpu.memory_space<semaphore_mem>>
    %504 = tpu.memref_squeeze %503 : memref<1x1x!tpu.dma_semaphore, #tpu.memory_space<semaphore_mem>> -> memref<!tpu.dma_semaphore, #tpu.memory_space<semaphore_mem>>
    tpu.enqueue_dma source(%500 : memref<128xf32, #tpu.memory_space<any>>) target(%502 : memref<128xf32, #tpu.memory_space<vmem>>) target_semaphore(%504 : memref<!tpu.dma_semaphore, #tpu.memory_space<semaphore_mem>>)
    %c7_i32_432 = arith.constant 7 : i32
    %505 = arith.addi %0, %c7_i32_432 : i32
    %506 = arith.index_cast %505 : i32 to index
    %c0_433 = arith.constant 0 : index
    %507 = memref.load %arg1[%506, %c0_433] : memref<8x8xi32, #tpu.memory_space<smem>>
    %c7_i32_434 = arith.constant 7 : i32
    %c0_i32_435 = arith.constant 0 : i32
    %c7_i32_436 = arith.constant 7 : i32
    %c0_i32_437 = arith.constant 0 : i32
    %c0_i32_438 = arith.constant 0 : i32
    %508 = tpu.memref_slice %arg2[%507, %c0_i32_438] : memref<50x128xf32, #tpu.memory_space<any>> -> memref<1x128xf32, #tpu.memory_space<any>>
    %509 = tpu.memref_squeeze %508 : memref<1x128xf32, #tpu.memory_space<any>> -> memref<128xf32, #tpu.memory_space<any>>
    %c0_i32_439 = arith.constant 0 : i32
    %510 = tpu.memref_slice %arg6[%c7_i32_434, %c0_i32_435, %c0_i32_439] : memref<8x8x128xf32, #tpu.memory_space<vmem>> -> memref<1x1x128xf32, #tpu.memory_space<vmem>>
    %511 = tpu.memref_squeeze %510 : memref<1x1x128xf32, #tpu.memory_space<vmem>> -> memref<128xf32, #tpu.memory_space<vmem>>
    %512 = tpu.memref_slice %arg7[%c7_i32_436, %c0_i32_437] : memref<8x8x!tpu.dma_semaphore, #tpu.memory_space<semaphore_mem>> -> memref<1x1x!tpu.dma_semaphore, #tpu.memory_space<semaphore_mem>>
    %513 = tpu.memref_squeeze %512 : memref<1x1x!tpu.dma_semaphore, #tpu.memory_space<semaphore_mem>> -> memref<!tpu.dma_semaphore, #tpu.memory_space<semaphore_mem>>
    tpu.enqueue_dma source(%509 : memref<128xf32, #tpu.memory_space<any>>) target(%511 : memref<128xf32, #tpu.memory_space<vmem>>) target_semaphore(%513 : memref<!tpu.dma_semaphore, #tpu.memory_space<semaphore_mem>>)
    %c7_i32_440 = arith.constant 7 : i32
    %514 = arith.addi %0, %c7_i32_440 : i32
    %515 = arith.index_cast %514 : i32 to index
    %c1_441 = arith.constant 1 : index
    %516 = memref.load %arg1[%515, %c1_441] : memref<8x8xi32, #tpu.memory_space<smem>>
    %c7_i32_442 = arith.constant 7 : i32
    %c1_i32_443 = arith.constant 1 : i32
    %c7_i32_444 = arith.constant 7 : i32
    %c1_i32_445 = arith.constant 1 : i32
    %c0_i32_446 = arith.constant 0 : i32
    %517 = tpu.memref_slice %arg2[%516, %c0_i32_446] : memref<50x128xf32, #tpu.memory_space<any>> -> memref<1x128xf32, #tpu.memory_space<any>>
    %518 = tpu.memref_squeeze %517 : memref<1x128xf32, #tpu.memory_space<any>> -> memref<128xf32, #tpu.memory_space<any>>
    %c0_i32_447 = arith.constant 0 : i32
    %519 = tpu.memref_slice %arg6[%c7_i32_442, %c1_i32_443, %c0_i32_447] : memref<8x8x128xf32, #tpu.memory_space<vmem>> -> memref<1x1x128xf32, #tpu.memory_space<vmem>>
    %520 = tpu.memref_squeeze %519 : memref<1x1x128xf32, #tpu.memory_space<vmem>> -> memref<128xf32, #tpu.memory_space<vmem>>
    %521 = tpu.memref_slice %arg7[%c7_i32_444, %c1_i32_445] : memref<8x8x!tpu.dma_semaphore, #tpu.memory_space<semaphore_mem>> -> memref<1x1x!tpu.dma_semaphore, #tpu.memory_space<semaphore_mem>>
    %522 = tpu.memref_squeeze %521 : memref<1x1x!tpu.dma_semaphore, #tpu.memory_space<semaphore_mem>> -> memref<!tpu.dma_semaphore, #tpu.memory_space<semaphore_mem>>
    tpu.enqueue_dma source(%518 : memref<128xf32, #tpu.memory_space<any>>) target(%520 : memref<128xf32, #tpu.memory_space<vmem>>) target_semaphore(%522 : memref<!tpu.dma_semaphore, #tpu.memory_space<semaphore_mem>>)
    %c7_i32_448 = arith.constant 7 : i32
    %523 = arith.addi %0, %c7_i32_448 : i32
    %524 = arith.index_cast %523 : i32 to index
    %c2_449 = arith.constant 2 : index
    %525 = memref.load %arg1[%524, %c2_449] : memref<8x8xi32, #tpu.memory_space<smem>>
    %c7_i32_450 = arith.constant 7 : i32
    %c2_i32_451 = arith.constant 2 : i32
    %c7_i32_452 = arith.constant 7 : i32
    %c2_i32_453 = arith.constant 2 : i32
    %c0_i32_454 = arith.constant 0 : i32
    %526 = tpu.memref_slice %arg2[%525, %c0_i32_454] : memref<50x128xf32, #tpu.memory_space<any>> -> memref<1x128xf32, #tpu.memory_space<any>>
    %527 = tpu.memref_squeeze %526 : memref<1x128xf32, #tpu.memory_space<any>> -> memref<128xf32, #tpu.memory_space<any>>
    %c0_i32_455 = arith.constant 0 : i32
    %528 = tpu.memref_slice %arg6[%c7_i32_450, %c2_i32_451, %c0_i32_455] : memref<8x8x128xf32, #tpu.memory_space<vmem>> -> memref<1x1x128xf32, #tpu.memory_space<vmem>>
    %529 = tpu.memref_squeeze %528 : memref<1x1x128xf32, #tpu.memory_space<vmem>> -> memref<128xf32, #tpu.memory_space<vmem>>
    %530 = tpu.memref_slice %arg7[%c7_i32_452, %c2_i32_453] : memref<8x8x!tpu.dma_semaphore, #tpu.memory_space<semaphore_mem>> -> memref<1x1x!tpu.dma_semaphore, #tpu.memory_space<semaphore_mem>>
    %531 = tpu.memref_squeeze %530 : memref<1x1x!tpu.dma_semaphore, #tpu.memory_space<semaphore_mem>> -> memref<!tpu.dma_semaphore, #tpu.memory_space<semaphore_mem>>
    tpu.enqueue_dma source(%527 : memref<128xf32, #tpu.memory_space<any>>) target(%529 : memref<128xf32, #tpu.memory_space<vmem>>) target_semaphore(%531 : memref<!tpu.dma_semaphore, #tpu.memory_space<semaphore_mem>>)
    %c7_i32_456 = arith.constant 7 : i32
    %532 = arith.addi %0, %c7_i32_456 : i32
    %533 = arith.index_cast %532 : i32 to index
    %c3_457 = arith.constant 3 : index
    %534 = memref.load %arg1[%533, %c3_457] : memref<8x8xi32, #tpu.memory_space<smem>>
    %c7_i32_458 = arith.constant 7 : i32
    %c3_i32_459 = arith.constant 3 : i32
    %c7_i32_460 = arith.constant 7 : i32
    %c3_i32_461 = arith.constant 3 : i32
    %c0_i32_462 = arith.constant 0 : i32
    %535 = tpu.memref_slice %arg2[%534, %c0_i32_462] : memref<50x128xf32, #tpu.memory_space<any>> -> memref<1x128xf32, #tpu.memory_space<any>>
    %536 = tpu.memref_squeeze %535 : memref<1x128xf32, #tpu.memory_space<any>> -> memref<128xf32, #tpu.memory_space<any>>
    %c0_i32_463 = arith.constant 0 : i32
    %537 = tpu.memref_slice %arg6[%c7_i32_458, %c3_i32_459, %c0_i32_463] : memref<8x8x128xf32, #tpu.memory_space<vmem>> -> memref<1x1x128xf32, #tpu.memory_space<vmem>>
    %538 = tpu.memref_squeeze %537 : memref<1x1x128xf32, #tpu.memory_space<vmem>> -> memref<128xf32, #tpu.memory_space<vmem>>
    %539 = tpu.memref_slice %arg7[%c7_i32_460, %c3_i32_461] : memref<8x8x!tpu.dma_semaphore, #tpu.memory_space<semaphore_mem>> -> memref<1x1x!tpu.dma_semaphore, #tpu.memory_space<semaphore_mem>>
    %540 = tpu.memref_squeeze %539 : memref<1x1x!tpu.dma_semaphore, #tpu.memory_space<semaphore_mem>> -> memref<!tpu.dma_semaphore, #tpu.memory_space<semaphore_mem>>
    tpu.enqueue_dma source(%536 : memref<128xf32, #tpu.memory_space<any>>) target(%538 : memref<128xf32, #tpu.memory_space<vmem>>) target_semaphore(%540 : memref<!tpu.dma_semaphore, #tpu.memory_space<semaphore_mem>>)
    %c7_i32_464 = arith.constant 7 : i32
    %541 = arith.addi %0, %c7_i32_464 : i32
    %542 = arith.index_cast %541 : i32 to index
    %c4_465 = arith.constant 4 : index
    %543 = memref.load %arg1[%542, %c4_465] : memref<8x8xi32, #tpu.memory_space<smem>>
    %c7_i32_466 = arith.constant 7 : i32
    %c4_i32_467 = arith.constant 4 : i32
    %c7_i32_468 = arith.constant 7 : i32
    %c4_i32_469 = arith.constant 4 : i32
    %c0_i32_470 = arith.constant 0 : i32
    %544 = tpu.memref_slice %arg2[%543, %c0_i32_470] : memref<50x128xf32, #tpu.memory_space<any>> -> memref<1x128xf32, #tpu.memory_space<any>>
    %545 = tpu.memref_squeeze %544 : memref<1x128xf32, #tpu.memory_space<any>> -> memref<128xf32, #tpu.memory_space<any>>
    %c0_i32_471 = arith.constant 0 : i32
    %546 = tpu.memref_slice %arg6[%c7_i32_466, %c4_i32_467, %c0_i32_471] : memref<8x8x128xf32, #tpu.memory_space<vmem>> -> memref<1x1x128xf32, #tpu.memory_space<vmem>>
    %547 = tpu.memref_squeeze %546 : memref<1x1x128xf32, #tpu.memory_space<vmem>> -> memref<128xf32, #tpu.memory_space<vmem>>
    %548 = tpu.memref_slice %arg7[%c7_i32_468, %c4_i32_469] : memref<8x8x!tpu.dma_semaphore, #tpu.memory_space<semaphore_mem>> -> memref<1x1x!tpu.dma_semaphore, #tpu.memory_space<semaphore_mem>>
    %549 = tpu.memref_squeeze %548 : memref<1x1x!tpu.dma_semaphore, #tpu.memory_space<semaphore_mem>> -> memref<!tpu.dma_semaphore, #tpu.memory_space<semaphore_mem>>
    tpu.enqueue_dma source(%545 : memref<128xf32, #tpu.memory_space<any>>) target(%547 : memref<128xf32, #tpu.memory_space<vmem>>) target_semaphore(%549 : memref<!tpu.dma_semaphore, #tpu.memory_space<semaphore_mem>>)
    %c7_i32_472 = arith.constant 7 : i32
    %550 = arith.addi %0, %c7_i32_472 : i32
    %551 = arith.index_cast %550 : i32 to index
    %c5_473 = arith.constant 5 : index
    %552 = memref.load %arg1[%551, %c5_473] : memref<8x8xi32, #tpu.memory_space<smem>>
    %c7_i32_474 = arith.constant 7 : i32
    %c5_i32_475 = arith.constant 5 : i32
    %c7_i32_476 = arith.constant 7 : i32
    %c5_i32_477 = arith.constant 5 : i32
    %c0_i32_478 = arith.constant 0 : i32
    %553 = tpu.memref_slice %arg2[%552, %c0_i32_478] : memref<50x128xf32, #tpu.memory_space<any>> -> memref<1x128xf32, #tpu.memory_space<any>>
    %554 = tpu.memref_squeeze %553 : memref<1x128xf32, #tpu.memory_space<any>> -> memref<128xf32, #tpu.memory_space<any>>
    %c0_i32_479 = arith.constant 0 : i32
    %555 = tpu.memref_slice %arg6[%c7_i32_474, %c5_i32_475, %c0_i32_479] : memref<8x8x128xf32, #tpu.memory_space<vmem>> -> memref<1x1x128xf32, #tpu.memory_space<vmem>>
    %556 = tpu.memref_squeeze %555 : memref<1x1x128xf32, #tpu.memory_space<vmem>> -> memref<128xf32, #tpu.memory_space<vmem>>
    %557 = tpu.memref_slice %arg7[%c7_i32_476, %c5_i32_477] : memref<8x8x!tpu.dma_semaphore, #tpu.memory_space<semaphore_mem>> -> memref<1x1x!tpu.dma_semaphore, #tpu.memory_space<semaphore_mem>>
    %558 = tpu.memref_squeeze %557 : memref<1x1x!tpu.dma_semaphore, #tpu.memory_space<semaphore_mem>> -> memref<!tpu.dma_semaphore, #tpu.memory_space<semaphore_mem>>
    tpu.enqueue_dma source(%554 : memref<128xf32, #tpu.memory_space<any>>) target(%556 : memref<128xf32, #tpu.memory_space<vmem>>) target_semaphore(%558 : memref<!tpu.dma_semaphore, #tpu.memory_space<semaphore_mem>>)
    %c7_i32_480 = arith.constant 7 : i32
    %559 = arith.addi %0, %c7_i32_480 : i32
    %560 = arith.index_cast %559 : i32 to index
    %c6_481 = arith.constant 6 : index
    %561 = memref.load %arg1[%560, %c6_481] : memref<8x8xi32, #tpu.memory_space<smem>>
    %c7_i32_482 = arith.constant 7 : i32
    %c6_i32_483 = arith.constant 6 : i32
    %c7_i32_484 = arith.constant 7 : i32
    %c6_i32_485 = arith.constant 6 : i32
    %c0_i32_486 = arith.constant 0 : i32
    %562 = tpu.memref_slice %arg2[%561, %c0_i32_486] : memref<50x128xf32, #tpu.memory_space<any>> -> memref<1x128xf32, #tpu.memory_space<any>>
    %563 = tpu.memref_squeeze %562 : memref<1x128xf32, #tpu.memory_space<any>> -> memref<128xf32, #tpu.memory_space<any>>
    %c0_i32_487 = arith.constant 0 : i32
    %564 = tpu.memref_slice %arg6[%c7_i32_482, %c6_i32_483, %c0_i32_487] : memref<8x8x128xf32, #tpu.memory_space<vmem>> -> memref<1x1x128xf32, #tpu.memory_space<vmem>>
    %565 = tpu.memref_squeeze %564 : memref<1x1x128xf32, #tpu.memory_space<vmem>> -> memref<128xf32, #tpu.memory_space<vmem>>
    %566 = tpu.memref_slice %arg7[%c7_i32_484, %c6_i32_485] : memref<8x8x!tpu.dma_semaphore, #tpu.memory_space<semaphore_mem>> -> memref<1x1x!tpu.dma_semaphore, #tpu.memory_space<semaphore_mem>>
    %567 = tpu.memref_squeeze %566 : memref<1x1x!tpu.dma_semaphore, #tpu.memory_space<semaphore_mem>> -> memref<!tpu.dma_semaphore, #tpu.memory_space<semaphore_mem>>
    tpu.enqueue_dma source(%563 : memref<128xf32, #tpu.memory_space<any>>) target(%565 : memref<128xf32, #tpu.memory_space<vmem>>) target_semaphore(%567 : memref<!tpu.dma_semaphore, #tpu.memory_space<semaphore_mem>>)
    %c7_i32_488 = arith.constant 7 : i32
    %568 = arith.addi %0, %c7_i32_488 : i32
    %569 = arith.index_cast %568 : i32 to index
    %c7_489 = arith.constant 7 : index
    %570 = memref.load %arg1[%569, %c7_489] : memref<8x8xi32, #tpu.memory_space<smem>>
    %c7_i32_490 = arith.constant 7 : i32
    %c7_i32_491 = arith.constant 7 : i32
    %c7_i32_492 = arith.constant 7 : i32
    %c7_i32_493 = arith.constant 7 : i32
    %c0_i32_494 = arith.constant 0 : i32
    %571 = tpu.memref_slice %arg2[%570, %c0_i32_494] : memref<50x128xf32, #tpu.memory_space<any>> -> memref<1x128xf32, #tpu.memory_space<any>>
    %572 = tpu.memref_squeeze %571 : memref<1x128xf32, #tpu.memory_space<any>> -> memref<128xf32, #tpu.memory_space<any>>
    %c0_i32_495 = arith.constant 0 : i32
    %573 = tpu.memref_slice %arg6[%c7_i32_490, %c7_i32_491, %c0_i32_495] : memref<8x8x128xf32, #tpu.memory_space<vmem>> -> memref<1x1x128xf32, #tpu.memory_space<vmem>>
    %574 = tpu.memref_squeeze %573 : memref<1x1x128xf32, #tpu.memory_space<vmem>> -> memref<128xf32, #tpu.memory_space<vmem>>
    %575 = tpu.memref_slice %arg7[%c7_i32_492, %c7_i32_493] : memref<8x8x!tpu.dma_semaphore, #tpu.memory_space<semaphore_mem>> -> memref<1x1x!tpu.dma_semaphore, #tpu.memory_space<semaphore_mem>>
    %576 = tpu.memref_squeeze %575 : memref<1x1x!tpu.dma_semaphore, #tpu.memory_space<semaphore_mem>> -> memref<!tpu.dma_semaphore, #tpu.memory_space<semaphore_mem>>
    tpu.enqueue_dma source(%572 : memref<128xf32, #tpu.memory_space<any>>) target(%574 : memref<128xf32, #tpu.memory_space<vmem>>) target_semaphore(%576 : memref<!tpu.dma_semaphore, #tpu.memory_space<semaphore_mem>>)
    %c0_i32_496 = arith.constant 0 : i32
    %c0_i32_497 = arith.constant 0 : i32
    %c0_i32_498 = arith.constant 0 : i32
    %c0_i32_499 = arith.constant 0 : i32
    %c0_i32_500 = arith.constant 0 : i32
    %c0_i32_501 = arith.constant 0 : i32
    %577 = tpu.memref_slice %arg2[%c0_i32_496, %c0_i32_501] : memref<50x128xf32, #tpu.memory_space<any>> -> memref<1x128xf32, #tpu.memory_space<any>>
    %578 = tpu.memref_squeeze %577 : memref<1x128xf32, #tpu.memory_space<any>> -> memref<128xf32, #tpu.memory_space<any>>
    %c0_i32_502 = arith.constant 0 : i32
    %579 = tpu.memref_slice %arg6[%c0_i32_497, %c0_i32_498, %c0_i32_502] : memref<8x8x128xf32, #tpu.memory_space<vmem>> -> memref<1x1x128xf32, #tpu.memory_space<vmem>>
    %580 = tpu.memref_squeeze %579 : memref<1x1x128xf32, #tpu.memory_space<vmem>> -> memref<128xf32, #tpu.memory_space<vmem>>
    %581 = tpu.memref_slice %arg7[%c0_i32_499, %c0_i32_500] : memref<8x8x!tpu.dma_semaphore, #tpu.memory_space<semaphore_mem>> -> memref<1x1x!tpu.dma_semaphore, #tpu.memory_space<semaphore_mem>>
    %582 = tpu.memref_squeeze %581 : memref<1x1x!tpu.dma_semaphore, #tpu.memory_space<semaphore_mem>> -> memref<!tpu.dma_semaphore, #tpu.memory_space<semaphore_mem>>
    tpu.wait_dma2 semaphore(%582 : memref<!tpu.dma_semaphore, #tpu.memory_space<semaphore_mem>>) src(%578 : memref<128xf32, #tpu.memory_space<any>>) dst(%580 : memref<128xf32, #tpu.memory_space<vmem>>)
    %c0_i32_503 = arith.constant 0 : i32
    %c0_i32_504 = arith.constant 0 : i32
    %c1_i32_505 = arith.constant 1 : i32
    %c0_i32_506 = arith.constant 0 : i32
    %c1_i32_507 = arith.constant 1 : i32
    %c0_i32_508 = arith.constant 0 : i32
    %583 = tpu.memref_slice %arg2[%c0_i32_503, %c0_i32_508] : memref<50x128xf32, #tpu.memory_space<any>> -> memref<1x128xf32, #tpu.memory_space<any>>
    %584 = tpu.memref_squeeze %583 : memref<1x128xf32, #tpu.memory_space<any>> -> memref<128xf32, #tpu.memory_space<any>>
    %c0_i32_509 = arith.constant 0 : i32
    %585 = tpu.memref_slice %arg6[%c0_i32_504, %c1_i32_505, %c0_i32_509] : memref<8x8x128xf32, #tpu.memory_space<vmem>> -> memref<1x1x128xf32, #tpu.memory_space<vmem>>
    %586 = tpu.memref_squeeze %585 : memref<1x1x128xf32, #tpu.memory_space<vmem>> -> memref<128xf32, #tpu.memory_space<vmem>>
    %587 = tpu.memref_slice %arg7[%c0_i32_506, %c1_i32_507] : memref<8x8x!tpu.dma_semaphore, #tpu.memory_space<semaphore_mem>> -> memref<1x1x!tpu.dma_semaphore, #tpu.memory_space<semaphore_mem>>
    %588 = tpu.memref_squeeze %587 : memref<1x1x!tpu.dma_semaphore, #tpu.memory_space<semaphore_mem>> -> memref<!tpu.dma_semaphore, #tpu.memory_space<semaphore_mem>>
    tpu.wait_dma2 semaphore(%588 : memref<!tpu.dma_semaphore, #tpu.memory_space<semaphore_mem>>) src(%584 : memref<128xf32, #tpu.memory_space<any>>) dst(%586 : memref<128xf32, #tpu.memory_space<vmem>>)
    %c0_i32_510 = arith.constant 0 : i32
    %c0_i32_511 = arith.constant 0 : i32
    %c2_i32_512 = arith.constant 2 : i32
    %c0_i32_513 = arith.constant 0 : i32
    %c2_i32_514 = arith.constant 2 : i32
    %c0_i32_515 = arith.constant 0 : i32
    %589 = tpu.memref_slice %arg2[%c0_i32_510, %c0_i32_515] : memref<50x128xf32, #tpu.memory_space<any>> -> memref<1x128xf32, #tpu.memory_space<any>>
    %590 = tpu.memref_squeeze %589 : memref<1x128xf32, #tpu.memory_space<any>> -> memref<128xf32, #tpu.memory_space<any>>
    %c0_i32_516 = arith.constant 0 : i32
    %591 = tpu.memref_slice %arg6[%c0_i32_511, %c2_i32_512, %c0_i32_516] : memref<8x8x128xf32, #tpu.memory_space<vmem>> -> memref<1x1x128xf32, #tpu.memory_space<vmem>>
    %592 = tpu.memref_squeeze %591 : memref<1x1x128xf32, #tpu.memory_space<vmem>> -> memref<128xf32, #tpu.memory_space<vmem>>
    %593 = tpu.memref_slice %arg7[%c0_i32_513, %c2_i32_514] : memref<8x8x!tpu.dma_semaphore, #tpu.memory_space<semaphore_mem>> -> memref<1x1x!tpu.dma_semaphore, #tpu.memory_space<semaphore_mem>>
    %594 = tpu.memref_squeeze %593 : memref<1x1x!tpu.dma_semaphore, #tpu.memory_space<semaphore_mem>> -> memref<!tpu.dma_semaphore, #tpu.memory_space<semaphore_mem>>
    tpu.wait_dma2 semaphore(%594 : memref<!tpu.dma_semaphore, #tpu.memory_space<semaphore_mem>>) src(%590 : memref<128xf32, #tpu.memory_space<any>>) dst(%592 : memref<128xf32, #tpu.memory_space<vmem>>)
    %c0_i32_517 = arith.constant 0 : i32
    %c0_i32_518 = arith.constant 0 : i32
    %c3_i32_519 = arith.constant 3 : i32
    %c0_i32_520 = arith.constant 0 : i32
    %c3_i32_521 = arith.constant 3 : i32
    %c0_i32_522 = arith.constant 0 : i32
    %595 = tpu.memref_slice %arg2[%c0_i32_517, %c0_i32_522] : memref<50x128xf32, #tpu.memory_space<any>> -> memref<1x128xf32, #tpu.memory_space<any>>
    %596 = tpu.memref_squeeze %595 : memref<1x128xf32, #tpu.memory_space<any>> -> memref<128xf32, #tpu.memory_space<any>>
    %c0_i32_523 = arith.constant 0 : i32
    %597 = tpu.memref_slice %arg6[%c0_i32_518, %c3_i32_519, %c0_i32_523] : memref<8x8x128xf32, #tpu.memory_space<vmem>> -> memref<1x1x128xf32, #tpu.memory_space<vmem>>
    %598 = tpu.memref_squeeze %597 : memref<1x1x128xf32, #tpu.memory_space<vmem>> -> memref<128xf32, #tpu.memory_space<vmem>>
    %599 = tpu.memref_slice %arg7[%c0_i32_520, %c3_i32_521] : memref<8x8x!tpu.dma_semaphore, #tpu.memory_space<semaphore_mem>> -> memref<1x1x!tpu.dma_semaphore, #tpu.memory_space<semaphore_mem>>
    %600 = tpu.memref_squeeze %599 : memref<1x1x!tpu.dma_semaphore, #tpu.memory_space<semaphore_mem>> -> memref<!tpu.dma_semaphore, #tpu.memory_space<semaphore_mem>>
    tpu.wait_dma2 semaphore(%600 : memref<!tpu.dma_semaphore, #tpu.memory_space<semaphore_mem>>) src(%596 : memref<128xf32, #tpu.memory_space<any>>) dst(%598 : memref<128xf32, #tpu.memory_space<vmem>>)
    %c0_i32_524 = arith.constant 0 : i32
    %c0_i32_525 = arith.constant 0 : i32
    %c4_i32_526 = arith.constant 4 : i32
    %c0_i32_527 = arith.constant 0 : i32
    %c4_i32_528 = arith.constant 4 : i32
    %c0_i32_529 = arith.constant 0 : i32
    %601 = tpu.memref_slice %arg2[%c0_i32_524, %c0_i32_529] : memref<50x128xf32, #tpu.memory_space<any>> -> memref<1x128xf32, #tpu.memory_space<any>>
    %602 = tpu.memref_squeeze %601 : memref<1x128xf32, #tpu.memory_space<any>> -> memref<128xf32, #tpu.memory_space<any>>
    %c0_i32_530 = arith.constant 0 : i32
    %603 = tpu.memref_slice %arg6[%c0_i32_525, %c4_i32_526, %c0_i32_530] : memref<8x8x128xf32, #tpu.memory_space<vmem>> -> memref<1x1x128xf32, #tpu.memory_space<vmem>>
    %604 = tpu.memref_squeeze %603 : memref<1x1x128xf32, #tpu.memory_space<vmem>> -> memref<128xf32, #tpu.memory_space<vmem>>
    %605 = tpu.memref_slice %arg7[%c0_i32_527, %c4_i32_528] : memref<8x8x!tpu.dma_semaphore, #tpu.memory_space<semaphore_mem>> -> memref<1x1x!tpu.dma_semaphore, #tpu.memory_space<semaphore_mem>>
    %606 = tpu.memref_squeeze %605 : memref<1x1x!tpu.dma_semaphore, #tpu.memory_space<semaphore_mem>> -> memref<!tpu.dma_semaphore, #tpu.memory_space<semaphore_mem>>
    tpu.wait_dma2 semaphore(%606 : memref<!tpu.dma_semaphore, #tpu.memory_space<semaphore_mem>>) src(%602 : memref<128xf32, #tpu.memory_space<any>>) dst(%604 : memref<128xf32, #tpu.memory_space<vmem>>)
    %c0_i32_531 = arith.constant 0 : i32
    %c0_i32_532 = arith.constant 0 : i32
    %c5_i32_533 = arith.constant 5 : i32
    %c0_i32_534 = arith.constant 0 : i32
    %c5_i32_535 = arith.constant 5 : i32
    %c0_i32_536 = arith.constant 0 : i32
    %607 = tpu.memref_slice %arg2[%c0_i32_531, %c0_i32_536] : memref<50x128xf32, #tpu.memory_space<any>> -> memref<1x128xf32, #tpu.memory_space<any>>
    %608 = tpu.memref_squeeze %607 : memref<1x128xf32, #tpu.memory_space<any>> -> memref<128xf32, #tpu.memory_space<any>>
    %c0_i32_537 = arith.constant 0 : i32
    %609 = tpu.memref_slice %arg6[%c0_i32_532, %c5_i32_533, %c0_i32_537] : memref<8x8x128xf32, #tpu.memory_space<vmem>> -> memref<1x1x128xf32, #tpu.memory_space<vmem>>
    %610 = tpu.memref_squeeze %609 : memref<1x1x128xf32, #tpu.memory_space<vmem>> -> memref<128xf32, #tpu.memory_space<vmem>>
    %611 = tpu.memref_slice %arg7[%c0_i32_534, %c5_i32_535] : memref<8x8x!tpu.dma_semaphore, #tpu.memory_space<semaphore_mem>> -> memref<1x1x!tpu.dma_semaphore, #tpu.memory_space<semaphore_mem>>
    %612 = tpu.memref_squeeze %611 : memref<1x1x!tpu.dma_semaphore, #tpu.memory_space<semaphore_mem>> -> memref<!tpu.dma_semaphore, #tpu.memory_space<semaphore_mem>>
    tpu.wait_dma2 semaphore(%612 : memref<!tpu.dma_semaphore, #tpu.memory_space<semaphore_mem>>) src(%608 : memref<128xf32, #tpu.memory_space<any>>) dst(%610 : memref<128xf32, #tpu.memory_space<vmem>>)
    %c0_i32_538 = arith.constant 0 : i32
    %c0_i32_539 = arith.constant 0 : i32
    %c6_i32_540 = arith.constant 6 : i32
    %c0_i32_541 = arith.constant 0 : i32
    %c6_i32_542 = arith.constant 6 : i32
    %c0_i32_543 = arith.constant 0 : i32
    %613 = tpu.memref_slice %arg2[%c0_i32_538, %c0_i32_543] : memref<50x128xf32, #tpu.memory_space<any>> -> memref<1x128xf32, #tpu.memory_space<any>>
    %614 = tpu.memref_squeeze %613 : memref<1x128xf32, #tpu.memory_space<any>> -> memref<128xf32, #tpu.memory_space<any>>
    %c0_i32_544 = arith.constant 0 : i32
    %615 = tpu.memref_slice %arg6[%c0_i32_539, %c6_i32_540, %c0_i32_544] : memref<8x8x128xf32, #tpu.memory_space<vmem>> -> memref<1x1x128xf32, #tpu.memory_space<vmem>>
    %616 = tpu.memref_squeeze %615 : memref<1x1x128xf32, #tpu.memory_space<vmem>> -> memref<128xf32, #tpu.memory_space<vmem>>
    %617 = tpu.memref_slice %arg7[%c0_i32_541, %c6_i32_542] : memref<8x8x!tpu.dma_semaphore, #tpu.memory_space<semaphore_mem>> -> memref<1x1x!tpu.dma_semaphore, #tpu.memory_space<semaphore_mem>>
    %618 = tpu.memref_squeeze %617 : memref<1x1x!tpu.dma_semaphore, #tpu.memory_space<semaphore_mem>> -> memref<!tpu.dma_semaphore, #tpu.memory_space<semaphore_mem>>
    tpu.wait_dma2 semaphore(%618 : memref<!tpu.dma_semaphore, #tpu.memory_space<semaphore_mem>>) src(%614 : memref<128xf32, #tpu.memory_space<any>>) dst(%616 : memref<128xf32, #tpu.memory_space<vmem>>)
    %c0_i32_545 = arith.constant 0 : i32
    %c0_i32_546 = arith.constant 0 : i32
    %c7_i32_547 = arith.constant 7 : i32
    %c0_i32_548 = arith.constant 0 : i32
    %c7_i32_549 = arith.constant 7 : i32
    %c0_i32_550 = arith.constant 0 : i32
    %619 = tpu.memref_slice %arg2[%c0_i32_545, %c0_i32_550] : memref<50x128xf32, #tpu.memory_space<any>> -> memref<1x128xf32, #tpu.memory_space<any>>
    %620 = tpu.memref_squeeze %619 : memref<1x128xf32, #tpu.memory_space<any>> -> memref<128xf32, #tpu.memory_space<any>>
    %c0_i32_551 = arith.constant 0 : i32
    %621 = tpu.memref_slice %arg6[%c0_i32_546, %c7_i32_547, %c0_i32_551] : memref<8x8x128xf32, #tpu.memory_space<vmem>> -> memref<1x1x128xf32, #tpu.memory_space<vmem>>
    %622 = tpu.memref_squeeze %621 : memref<1x1x128xf32, #tpu.memory_space<vmem>> -> memref<128xf32, #tpu.memory_space<vmem>>
    %623 = tpu.memref_slice %arg7[%c0_i32_548, %c7_i32_549] : memref<8x8x!tpu.dma_semaphore, #tpu.memory_space<semaphore_mem>> -> memref<1x1x!tpu.dma_semaphore, #tpu.memory_space<semaphore_mem>>
    %624 = tpu.memref_squeeze %623 : memref<1x1x!tpu.dma_semaphore, #tpu.memory_space<semaphore_mem>> -> memref<!tpu.dma_semaphore, #tpu.memory_space<semaphore_mem>>
    tpu.wait_dma2 semaphore(%624 : memref<!tpu.dma_semaphore, #tpu.memory_space<semaphore_mem>>) src(%620 : memref<128xf32, #tpu.memory_space<any>>) dst(%622 : memref<128xf32, #tpu.memory_space<vmem>>)
    %c0_i32_552 = arith.constant 0 : i32
    %c1_i32_553 = arith.constant 1 : i32
    %c0_i32_554 = arith.constant 0 : i32
    %c1_i32_555 = arith.constant 1 : i32
    %c0_i32_556 = arith.constant 0 : i32
    %c0_i32_557 = arith.constant 0 : i32
    %625 = tpu.memref_slice %arg2[%c0_i32_552, %c0_i32_557] : memref<50x128xf32, #tpu.memory_space<any>> -> memref<1x128xf32, #tpu.memory_space<any>>
    %626 = tpu.memref_squeeze %625 : memref<1x128xf32, #tpu.memory_space<any>> -> memref<128xf32, #tpu.memory_space<any>>
    %c0_i32_558 = arith.constant 0 : i32
    %627 = tpu.memref_slice %arg6[%c1_i32_553, %c0_i32_554, %c0_i32_558] : memref<8x8x128xf32, #tpu.memory_space<vmem>> -> memref<1x1x128xf32, #tpu.memory_space<vmem>>
    %628 = tpu.memref_squeeze %627 : memref<1x1x128xf32, #tpu.memory_space<vmem>> -> memref<128xf32, #tpu.memory_space<vmem>>
    %629 = tpu.memref_slice %arg7[%c1_i32_555, %c0_i32_556] : memref<8x8x!tpu.dma_semaphore, #tpu.memory_space<semaphore_mem>> -> memref<1x1x!tpu.dma_semaphore, #tpu.memory_space<semaphore_mem>>
    %630 = tpu.memref_squeeze %629 : memref<1x1x!tpu.dma_semaphore, #tpu.memory_space<semaphore_mem>> -> memref<!tpu.dma_semaphore, #tpu.memory_space<semaphore_mem>>
    tpu.wait_dma2 semaphore(%630 : memref<!tpu.dma_semaphore, #tpu.memory_space<semaphore_mem>>) src(%626 : memref<128xf32, #tpu.memory_space<any>>) dst(%628 : memref<128xf32, #tpu.memory_space<vmem>>)
    %c0_i32_559 = arith.constant 0 : i32
    %c1_i32_560 = arith.constant 1 : i32
    %c1_i32_561 = arith.constant 1 : i32
    %c1_i32_562 = arith.constant 1 : i32
    %c1_i32_563 = arith.constant 1 : i32
    %c0_i32_564 = arith.constant 0 : i32
    %631 = tpu.memref_slice %arg2[%c0_i32_559, %c0_i32_564] : memref<50x128xf32, #tpu.memory_space<any>> -> memref<1x128xf32, #tpu.memory_space<any>>
    %632 = tpu.memref_squeeze %631 : memref<1x128xf32, #tpu.memory_space<any>> -> memref<128xf32, #tpu.memory_space<any>>
    %c0_i32_565 = arith.constant 0 : i32
    %633 = tpu.memref_slice %arg6[%c1_i32_560, %c1_i32_561, %c0_i32_565] : memref<8x8x128xf32, #tpu.memory_space<vmem>> -> memref<1x1x128xf32, #tpu.memory_space<vmem>>
    %634 = tpu.memref_squeeze %633 : memref<1x1x128xf32, #tpu.memory_space<vmem>> -> memref<128xf32, #tpu.memory_space<vmem>>
    %635 = tpu.memref_slice %arg7[%c1_i32_562, %c1_i32_563] : memref<8x8x!tpu.dma_semaphore, #tpu.memory_space<semaphore_mem>> -> memref<1x1x!tpu.dma_semaphore, #tpu.memory_space<semaphore_mem>>
    %636 = tpu.memref_squeeze %635 : memref<1x1x!tpu.dma_semaphore, #tpu.memory_space<semaphore_mem>> -> memref<!tpu.dma_semaphore, #tpu.memory_space<semaphore_mem>>
    tpu.wait_dma2 semaphore(%636 : memref<!tpu.dma_semaphore, #tpu.memory_space<semaphore_mem>>) src(%632 : memref<128xf32, #tpu.memory_space<any>>) dst(%634 : memref<128xf32, #tpu.memory_space<vmem>>)
    %c0_i32_566 = arith.constant 0 : i32
    %c1_i32_567 = arith.constant 1 : i32
    %c2_i32_568 = arith.constant 2 : i32
    %c1_i32_569 = arith.constant 1 : i32
    %c2_i32_570 = arith.constant 2 : i32
    %c0_i32_571 = arith.constant 0 : i32
    %637 = tpu.memref_slice %arg2[%c0_i32_566, %c0_i32_571] : memref<50x128xf32, #tpu.memory_space<any>> -> memref<1x128xf32, #tpu.memory_space<any>>
    %638 = tpu.memref_squeeze %637 : memref<1x128xf32, #tpu.memory_space<any>> -> memref<128xf32, #tpu.memory_space<any>>
    %c0_i32_572 = arith.constant 0 : i32
    %639 = tpu.memref_slice %arg6[%c1_i32_567, %c2_i32_568, %c0_i32_572] : memref<8x8x128xf32, #tpu.memory_space<vmem>> -> memref<1x1x128xf32, #tpu.memory_space<vmem>>
    %640 = tpu.memref_squeeze %639 : memref<1x1x128xf32, #tpu.memory_space<vmem>> -> memref<128xf32, #tpu.memory_space<vmem>>
    %641 = tpu.memref_slice %arg7[%c1_i32_569, %c2_i32_570] : memref<8x8x!tpu.dma_semaphore, #tpu.memory_space<semaphore_mem>> -> memref<1x1x!tpu.dma_semaphore, #tpu.memory_space<semaphore_mem>>
    %642 = tpu.memref_squeeze %641 : memref<1x1x!tpu.dma_semaphore, #tpu.memory_space<semaphore_mem>> -> memref<!tpu.dma_semaphore, #tpu.memory_space<semaphore_mem>>
    tpu.wait_dma2 semaphore(%642 : memref<!tpu.dma_semaphore, #tpu.memory_space<semaphore_mem>>) src(%638 : memref<128xf32, #tpu.memory_space<any>>) dst(%640 : memref<128xf32, #tpu.memory_space<vmem>>)
    %c0_i32_573 = arith.constant 0 : i32
    %c1_i32_574 = arith.constant 1 : i32
    %c3_i32_575 = arith.constant 3 : i32
    %c1_i32_576 = arith.constant 1 : i32
    %c3_i32_577 = arith.constant 3 : i32
    %c0_i32_578 = arith.constant 0 : i32
    %643 = tpu.memref_slice %arg2[%c0_i32_573, %c0_i32_578] : memref<50x128xf32, #tpu.memory_space<any>> -> memref<1x128xf32, #tpu.memory_space<any>>
    %644 = tpu.memref_squeeze %643 : memref<1x128xf32, #tpu.memory_space<any>> -> memref<128xf32, #tpu.memory_space<any>>
    %c0_i32_579 = arith.constant 0 : i32
    %645 = tpu.memref_slice %arg6[%c1_i32_574, %c3_i32_575, %c0_i32_579] : memref<8x8x128xf32, #tpu.memory_space<vmem>> -> memref<1x1x128xf32, #tpu.memory_space<vmem>>
    %646 = tpu.memref_squeeze %645 : memref<1x1x128xf32, #tpu.memory_space<vmem>> -> memref<128xf32, #tpu.memory_space<vmem>>
    %647 = tpu.memref_slice %arg7[%c1_i32_576, %c3_i32_577] : memref<8x8x!tpu.dma_semaphore, #tpu.memory_space<semaphore_mem>> -> memref<1x1x!tpu.dma_semaphore, #tpu.memory_space<semaphore_mem>>
    %648 = tpu.memref_squeeze %647 : memref<1x1x!tpu.dma_semaphore, #tpu.memory_space<semaphore_mem>> -> memref<!tpu.dma_semaphore, #tpu.memory_space<semaphore_mem>>
    tpu.wait_dma2 semaphore(%648 : memref<!tpu.dma_semaphore, #tpu.memory_space<semaphore_mem>>) src(%644 : memref<128xf32, #tpu.memory_space<any>>) dst(%646 : memref<128xf32, #tpu.memory_space<vmem>>)
    %c0_i32_580 = arith.constant 0 : i32
    %c1_i32_581 = arith.constant 1 : i32
    %c4_i32_582 = arith.constant 4 : i32
    %c1_i32_583 = arith.constant 1 : i32
    %c4_i32_584 = arith.constant 4 : i32
    %c0_i32_585 = arith.constant 0 : i32
    %649 = tpu.memref_slice %arg2[%c0_i32_580, %c0_i32_585] : memref<50x128xf32, #tpu.memory_space<any>> -> memref<1x128xf32, #tpu.memory_space<any>>
    %650 = tpu.memref_squeeze %649 : memref<1x128xf32, #tpu.memory_space<any>> -> memref<128xf32, #tpu.memory_space<any>>
    %c0_i32_586 = arith.constant 0 : i32
    %651 = tpu.memref_slice %arg6[%c1_i32_581, %c4_i32_582, %c0_i32_586] : memref<8x8x128xf32, #tpu.memory_space<vmem>> -> memref<1x1x128xf32, #tpu.memory_space<vmem>>
    %652 = tpu.memref_squeeze %651 : memref<1x1x128xf32, #tpu.memory_space<vmem>> -> memref<128xf32, #tpu.memory_space<vmem>>
    %653 = tpu.memref_slice %arg7[%c1_i32_583, %c4_i32_584] : memref<8x8x!tpu.dma_semaphore, #tpu.memory_space<semaphore_mem>> -> memref<1x1x!tpu.dma_semaphore, #tpu.memory_space<semaphore_mem>>
    %654 = tpu.memref_squeeze %653 : memref<1x1x!tpu.dma_semaphore, #tpu.memory_space<semaphore_mem>> -> memref<!tpu.dma_semaphore, #tpu.memory_space<semaphore_mem>>
    tpu.wait_dma2 semaphore(%654 : memref<!tpu.dma_semaphore, #tpu.memory_space<semaphore_mem>>) src(%650 : memref<128xf32, #tpu.memory_space<any>>) dst(%652 : memref<128xf32, #tpu.memory_space<vmem>>)
    %c0_i32_587 = arith.constant 0 : i32
    %c1_i32_588 = arith.constant 1 : i32
    %c5_i32_589 = arith.constant 5 : i32
    %c1_i32_590 = arith.constant 1 : i32
    %c5_i32_591 = arith.constant 5 : i32
    %c0_i32_592 = arith.constant 0 : i32
    %655 = tpu.memref_slice %arg2[%c0_i32_587, %c0_i32_592] : memref<50x128xf32, #tpu.memory_space<any>> -> memref<1x128xf32, #tpu.memory_space<any>>
    %656 = tpu.memref_squeeze %655 : memref<1x128xf32, #tpu.memory_space<any>> -> memref<128xf32, #tpu.memory_space<any>>
    %c0_i32_593 = arith.constant 0 : i32
    %657 = tpu.memref_slice %arg6[%c1_i32_588, %c5_i32_589, %c0_i32_593] : memref<8x8x128xf32, #tpu.memory_space<vmem>> -> memref<1x1x128xf32, #tpu.memory_space<vmem>>
    %658 = tpu.memref_squeeze %657 : memref<1x1x128xf32, #tpu.memory_space<vmem>> -> memref<128xf32, #tpu.memory_space<vmem>>
    %659 = tpu.memref_slice %arg7[%c1_i32_590, %c5_i32_591] : memref<8x8x!tpu.dma_semaphore, #tpu.memory_space<semaphore_mem>> -> memref<1x1x!tpu.dma_semaphore, #tpu.memory_space<semaphore_mem>>
    %660 = tpu.memref_squeeze %659 : memref<1x1x!tpu.dma_semaphore, #tpu.memory_space<semaphore_mem>> -> memref<!tpu.dma_semaphore, #tpu.memory_space<semaphore_mem>>
    tpu.wait_dma2 semaphore(%660 : memref<!tpu.dma_semaphore, #tpu.memory_space<semaphore_mem>>) src(%656 : memref<128xf32, #tpu.memory_space<any>>) dst(%658 : memref<128xf32, #tpu.memory_space<vmem>>)
    %c0_i32_594 = arith.constant 0 : i32
    %c1_i32_595 = arith.constant 1 : i32
    %c6_i32_596 = arith.constant 6 : i32
    %c1_i32_597 = arith.constant 1 : i32
    %c6_i32_598 = arith.constant 6 : i32
    %c0_i32_599 = arith.constant 0 : i32
    %661 = tpu.memref_slice %arg2[%c0_i32_594, %c0_i32_599] : memref<50x128xf32, #tpu.memory_space<any>> -> memref<1x128xf32, #tpu.memory_space<any>>
    %662 = tpu.memref_squeeze %661 : memref<1x128xf32, #tpu.memory_space<any>> -> memref<128xf32, #tpu.memory_space<any>>
    %c0_i32_600 = arith.constant 0 : i32
    %663 = tpu.memref_slice %arg6[%c1_i32_595, %c6_i32_596, %c0_i32_600] : memref<8x8x128xf32, #tpu.memory_space<vmem>> -> memref<1x1x128xf32, #tpu.memory_space<vmem>>
    %664 = tpu.memref_squeeze %663 : memref<1x1x128xf32, #tpu.memory_space<vmem>> -> memref<128xf32, #tpu.memory_space<vmem>>
    %665 = tpu.memref_slice %arg7[%c1_i32_597, %c6_i32_598] : memref<8x8x!tpu.dma_semaphore, #tpu.memory_space<semaphore_mem>> -> memref<1x1x!tpu.dma_semaphore, #tpu.memory_space<semaphore_mem>>
    %666 = tpu.memref_squeeze %665 : memref<1x1x!tpu.dma_semaphore, #tpu.memory_space<semaphore_mem>> -> memref<!tpu.dma_semaphore, #tpu.memory_space<semaphore_mem>>
    tpu.wait_dma2 semaphore(%666 : memref<!tpu.dma_semaphore, #tpu.memory_space<semaphore_mem>>) src(%662 : memref<128xf32, #tpu.memory_space<any>>) dst(%664 : memref<128xf32, #tpu.memory_space<vmem>>)
    %c0_i32_601 = arith.constant 0 : i32
    %c1_i32_602 = arith.constant 1 : i32
    %c7_i32_603 = arith.constant 7 : i32
    %c1_i32_604 = arith.constant 1 : i32
    %c7_i32_605 = arith.constant 7 : i32
    %c0_i32_606 = arith.constant 0 : i32
    %667 = tpu.memref_slice %arg2[%c0_i32_601, %c0_i32_606] : memref<50x128xf32, #tpu.memory_space<any>> -> memref<1x128xf32, #tpu.memory_space<any>>
    %668 = tpu.memref_squeeze %667 : memref<1x128xf32, #tpu.memory_space<any>> -> memref<128xf32, #tpu.memory_space<any>>
    %c0_i32_607 = arith.constant 0 : i32
    %669 = tpu.memref_slice %arg6[%c1_i32_602, %c7_i32_603, %c0_i32_607] : memref<8x8x128xf32, #tpu.memory_space<vmem>> -> memref<1x1x128xf32, #tpu.memory_space<vmem>>
    %670 = tpu.memref_squeeze %669 : memref<1x1x128xf32, #tpu.memory_space<vmem>> -> memref<128xf32, #tpu.memory_space<vmem>>
    %671 = tpu.memref_slice %arg7[%c1_i32_604, %c7_i32_605] : memref<8x8x!tpu.dma_semaphore, #tpu.memory_space<semaphore_mem>> -> memref<1x1x!tpu.dma_semaphore, #tpu.memory_space<semaphore_mem>>
    %672 = tpu.memref_squeeze %671 : memref<1x1x!tpu.dma_semaphore, #tpu.memory_space<semaphore_mem>> -> memref<!tpu.dma_semaphore, #tpu.memory_space<semaphore_mem>>
    tpu.wait_dma2 semaphore(%672 : memref<!tpu.dma_semaphore, #tpu.memory_space<semaphore_mem>>) src(%668 : memref<128xf32, #tpu.memory_space<any>>) dst(%670 : memref<128xf32, #tpu.memory_space<vmem>>)
    %c0_i32_608 = arith.constant 0 : i32
    %c2_i32_609 = arith.constant 2 : i32
    %c0_i32_610 = arith.constant 0 : i32
    %c2_i32_611 = arith.constant 2 : i32
    %c0_i32_612 = arith.constant 0 : i32
    %c0_i32_613 = arith.constant 0 : i32
    %673 = tpu.memref_slice %arg2[%c0_i32_608, %c0_i32_613] : memref<50x128xf32, #tpu.memory_space<any>> -> memref<1x128xf32, #tpu.memory_space<any>>
    %674 = tpu.memref_squeeze %673 : memref<1x128xf32, #tpu.memory_space<any>> -> memref<128xf32, #tpu.memory_space<any>>
    %c0_i32_614 = arith.constant 0 : i32
    %675 = tpu.memref_slice %arg6[%c2_i32_609, %c0_i32_610, %c0_i32_614] : memref<8x8x128xf32, #tpu.memory_space<vmem>> -> memref<1x1x128xf32, #tpu.memory_space<vmem>>
    %676 = tpu.memref_squeeze %675 : memref<1x1x128xf32, #tpu.memory_space<vmem>> -> memref<128xf32, #tpu.memory_space<vmem>>
    %677 = tpu.memref_slice %arg7[%c2_i32_611, %c0_i32_612] : memref<8x8x!tpu.dma_semaphore, #tpu.memory_space<semaphore_mem>> -> memref<1x1x!tpu.dma_semaphore, #tpu.memory_space<semaphore_mem>>
    %678 = tpu.memref_squeeze %677 : memref<1x1x!tpu.dma_semaphore, #tpu.memory_space<semaphore_mem>> -> memref<!tpu.dma_semaphore, #tpu.memory_space<semaphore_mem>>
    tpu.wait_dma2 semaphore(%678 : memref<!tpu.dma_semaphore, #tpu.memory_space<semaphore_mem>>) src(%674 : memref<128xf32, #tpu.memory_space<any>>) dst(%676 : memref<128xf32, #tpu.memory_space<vmem>>)
    %c0_i32_615 = arith.constant 0 : i32
    %c2_i32_616 = arith.constant 2 : i32
    %c1_i32_617 = arith.constant 1 : i32
    %c2_i32_618 = arith.constant 2 : i32
    %c1_i32_619 = arith.constant 1 : i32
    %c0_i32_620 = arith.constant 0 : i32
    %679 = tpu.memref_slice %arg2[%c0_i32_615, %c0_i32_620] : memref<50x128xf32, #tpu.memory_space<any>> -> memref<1x128xf32, #tpu.memory_space<any>>
    %680 = tpu.memref_squeeze %679 : memref<1x128xf32, #tpu.memory_space<any>> -> memref<128xf32, #tpu.memory_space<any>>
    %c0_i32_621 = arith.constant 0 : i32
    %681 = tpu.memref_slice %arg6[%c2_i32_616, %c1_i32_617, %c0_i32_621] : memref<8x8x128xf32, #tpu.memory_space<vmem>> -> memref<1x1x128xf32, #tpu.memory_space<vmem>>
    %682 = tpu.memref_squeeze %681 : memref<1x1x128xf32, #tpu.memory_space<vmem>> -> memref<128xf32, #tpu.memory_space<vmem>>
    %683 = tpu.memref_slice %arg7[%c2_i32_618, %c1_i32_619] : memref<8x8x!tpu.dma_semaphore, #tpu.memory_space<semaphore_mem>> -> memref<1x1x!tpu.dma_semaphore, #tpu.memory_space<semaphore_mem>>
    %684 = tpu.memref_squeeze %683 : memref<1x1x!tpu.dma_semaphore, #tpu.memory_space<semaphore_mem>> -> memref<!tpu.dma_semaphore, #tpu.memory_space<semaphore_mem>>
    tpu.wait_dma2 semaphore(%684 : memref<!tpu.dma_semaphore, #tpu.memory_space<semaphore_mem>>) src(%680 : memref<128xf32, #tpu.memory_space<any>>) dst(%682 : memref<128xf32, #tpu.memory_space<vmem>>)
    %c0_i32_622 = arith.constant 0 : i32
    %c2_i32_623 = arith.constant 2 : i32
    %c2_i32_624 = arith.constant 2 : i32
    %c2_i32_625 = arith.constant 2 : i32
    %c2_i32_626 = arith.constant 2 : i32
    %c0_i32_627 = arith.constant 0 : i32
    %685 = tpu.memref_slice %arg2[%c0_i32_622, %c0_i32_627] : memref<50x128xf32, #tpu.memory_space<any>> -> memref<1x128xf32, #tpu.memory_space<any>>
    %686 = tpu.memref_squeeze %685 : memref<1x128xf32, #tpu.memory_space<any>> -> memref<128xf32, #tpu.memory_space<any>>
    %c0_i32_628 = arith.constant 0 : i32
    %687 = tpu.memref_slice %arg6[%c2_i32_623, %c2_i32_624, %c0_i32_628] : memref<8x8x128xf32, #tpu.memory_space<vmem>> -> memref<1x1x128xf32, #tpu.memory_space<vmem>>
    %688 = tpu.memref_squeeze %687 : memref<1x1x128xf32, #tpu.memory_space<vmem>> -> memref<128xf32, #tpu.memory_space<vmem>>
    %689 = tpu.memref_slice %arg7[%c2_i32_625, %c2_i32_626] : memref<8x8x!tpu.dma_semaphore, #tpu.memory_space<semaphore_mem>> -> memref<1x1x!tpu.dma_semaphore, #tpu.memory_space<semaphore_mem>>
    %690 = tpu.memref_squeeze %689 : memref<1x1x!tpu.dma_semaphore, #tpu.memory_space<semaphore_mem>> -> memref<!tpu.dma_semaphore, #tpu.memory_space<semaphore_mem>>
    tpu.wait_dma2 semaphore(%690 : memref<!tpu.dma_semaphore, #tpu.memory_space<semaphore_mem>>) src(%686 : memref<128xf32, #tpu.memory_space<any>>) dst(%688 : memref<128xf32, #tpu.memory_space<vmem>>)
    %c0_i32_629 = arith.constant 0 : i32
    %c2_i32_630 = arith.constant 2 : i32
    %c3_i32_631 = arith.constant 3 : i32
    %c2_i32_632 = arith.constant 2 : i32
    %c3_i32_633 = arith.constant 3 : i32
    %c0_i32_634 = arith.constant 0 : i32
    %691 = tpu.memref_slice %arg2[%c0_i32_629, %c0_i32_634] : memref<50x128xf32, #tpu.memory_space<any>> -> memref<1x128xf32, #tpu.memory_space<any>>
    %692 = tpu.memref_squeeze %691 : memref<1x128xf32, #tpu.memory_space<any>> -> memref<128xf32, #tpu.memory_space<any>>
    %c0_i32_635 = arith.constant 0 : i32
    %693 = tpu.memref_slice %arg6[%c2_i32_630, %c3_i32_631, %c0_i32_635] : memref<8x8x128xf32, #tpu.memory_space<vmem>> -> memref<1x1x128xf32, #tpu.memory_space<vmem>>
    %694 = tpu.memref_squeeze %693 : memref<1x1x128xf32, #tpu.memory_space<vmem>> -> memref<128xf32, #tpu.memory_space<vmem>>
    %695 = tpu.memref_slice %arg7[%c2_i32_632, %c3_i32_633] : memref<8x8x!tpu.dma_semaphore, #tpu.memory_space<semaphore_mem>> -> memref<1x1x!tpu.dma_semaphore, #tpu.memory_space<semaphore_mem>>
    %696 = tpu.memref_squeeze %695 : memref<1x1x!tpu.dma_semaphore, #tpu.memory_space<semaphore_mem>> -> memref<!tpu.dma_semaphore, #tpu.memory_space<semaphore_mem>>
    tpu.wait_dma2 semaphore(%696 : memref<!tpu.dma_semaphore, #tpu.memory_space<semaphore_mem>>) src(%692 : memref<128xf32, #tpu.memory_space<any>>) dst(%694 : memref<128xf32, #tpu.memory_space<vmem>>)
    %c0_i32_636 = arith.constant 0 : i32
    %c2_i32_637 = arith.constant 2 : i32
    %c4_i32_638 = arith.constant 4 : i32
    %c2_i32_639 = arith.constant 2 : i32
    %c4_i32_640 = arith.constant 4 : i32
    %c0_i32_641 = arith.constant 0 : i32
    %697 = tpu.memref_slice %arg2[%c0_i32_636, %c0_i32_641] : memref<50x128xf32, #tpu.memory_space<any>> -> memref<1x128xf32, #tpu.memory_space<any>>
    %698 = tpu.memref_squeeze %697 : memref<1x128xf32, #tpu.memory_space<any>> -> memref<128xf32, #tpu.memory_space<any>>
    %c0_i32_642 = arith.constant 0 : i32
    %699 = tpu.memref_slice %arg6[%c2_i32_637, %c4_i32_638, %c0_i32_642] : memref<8x8x128xf32, #tpu.memory_space<vmem>> -> memref<1x1x128xf32, #tpu.memory_space<vmem>>
    %700 = tpu.memref_squeeze %699 : memref<1x1x128xf32, #tpu.memory_space<vmem>> -> memref<128xf32, #tpu.memory_space<vmem>>
    %701 = tpu.memref_slice %arg7[%c2_i32_639, %c4_i32_640] : memref<8x8x!tpu.dma_semaphore, #tpu.memory_space<semaphore_mem>> -> memref<1x1x!tpu.dma_semaphore, #tpu.memory_space<semaphore_mem>>
    %702 = tpu.memref_squeeze %701 : memref<1x1x!tpu.dma_semaphore, #tpu.memory_space<semaphore_mem>> -> memref<!tpu.dma_semaphore, #tpu.memory_space<semaphore_mem>>
    tpu.wait_dma2 semaphore(%702 : memref<!tpu.dma_semaphore, #tpu.memory_space<semaphore_mem>>) src(%698 : memref<128xf32, #tpu.memory_space<any>>) dst(%700 : memref<128xf32, #tpu.memory_space<vmem>>)
    %c0_i32_643 = arith.constant 0 : i32
    %c2_i32_644 = arith.constant 2 : i32
    %c5_i32_645 = arith.constant 5 : i32
    %c2_i32_646 = arith.constant 2 : i32
    %c5_i32_647 = arith.constant 5 : i32
    %c0_i32_648 = arith.constant 0 : i32
    %703 = tpu.memref_slice %arg2[%c0_i32_643, %c0_i32_648] : memref<50x128xf32, #tpu.memory_space<any>> -> memref<1x128xf32, #tpu.memory_space<any>>
    %704 = tpu.memref_squeeze %703 : memref<1x128xf32, #tpu.memory_space<any>> -> memref<128xf32, #tpu.memory_space<any>>
    %c0_i32_649 = arith.constant 0 : i32
    %705 = tpu.memref_slice %arg6[%c2_i32_644, %c5_i32_645, %c0_i32_649] : memref<8x8x128xf32, #tpu.memory_space<vmem>> -> memref<1x1x128xf32, #tpu.memory_space<vmem>>
    %706 = tpu.memref_squeeze %705 : memref<1x1x128xf32, #tpu.memory_space<vmem>> -> memref<128xf32, #tpu.memory_space<vmem>>
    %707 = tpu.memref_slice %arg7[%c2_i32_646, %c5_i32_647] : memref<8x8x!tpu.dma_semaphore, #tpu.memory_space<semaphore_mem>> -> memref<1x1x!tpu.dma_semaphore, #tpu.memory_space<semaphore_mem>>
    %708 = tpu.memref_squeeze %707 : memref<1x1x!tpu.dma_semaphore, #tpu.memory_space<semaphore_mem>> -> memref<!tpu.dma_semaphore, #tpu.memory_space<semaphore_mem>>
    tpu.wait_dma2 semaphore(%708 : memref<!tpu.dma_semaphore, #tpu.memory_space<semaphore_mem>>) src(%704 : memref<128xf32, #tpu.memory_space<any>>) dst(%706 : memref<128xf32, #tpu.memory_space<vmem>>)
    %c0_i32_650 = arith.constant 0 : i32
    %c2_i32_651 = arith.constant 2 : i32
    %c6_i32_652 = arith.constant 6 : i32
    %c2_i32_653 = arith.constant 2 : i32
    %c6_i32_654 = arith.constant 6 : i32
    %c0_i32_655 = arith.constant 0 : i32
    %709 = tpu.memref_slice %arg2[%c0_i32_650, %c0_i32_655] : memref<50x128xf32, #tpu.memory_space<any>> -> memref<1x128xf32, #tpu.memory_space<any>>
    %710 = tpu.memref_squeeze %709 : memref<1x128xf32, #tpu.memory_space<any>> -> memref<128xf32, #tpu.memory_space<any>>
    %c0_i32_656 = arith.constant 0 : i32
    %711 = tpu.memref_slice %arg6[%c2_i32_651, %c6_i32_652, %c0_i32_656] : memref<8x8x128xf32, #tpu.memory_space<vmem>> -> memref<1x1x128xf32, #tpu.memory_space<vmem>>
    %712 = tpu.memref_squeeze %711 : memref<1x1x128xf32, #tpu.memory_space<vmem>> -> memref<128xf32, #tpu.memory_space<vmem>>
    %713 = tpu.memref_slice %arg7[%c2_i32_653, %c6_i32_654] : memref<8x8x!tpu.dma_semaphore, #tpu.memory_space<semaphore_mem>> -> memref<1x1x!tpu.dma_semaphore, #tpu.memory_space<semaphore_mem>>
    %714 = tpu.memref_squeeze %713 : memref<1x1x!tpu.dma_semaphore, #tpu.memory_space<semaphore_mem>> -> memref<!tpu.dma_semaphore, #tpu.memory_space<semaphore_mem>>
    tpu.wait_dma2 semaphore(%714 : memref<!tpu.dma_semaphore, #tpu.memory_space<semaphore_mem>>) src(%710 : memref<128xf32, #tpu.memory_space<any>>) dst(%712 : memref<128xf32, #tpu.memory_space<vmem>>)
    %c0_i32_657 = arith.constant 0 : i32
    %c2_i32_658 = arith.constant 2 : i32
    %c7_i32_659 = arith.constant 7 : i32
    %c2_i32_660 = arith.constant 2 : i32
    %c7_i32_661 = arith.constant 7 : i32
    %c0_i32_662 = arith.constant 0 : i32
    %715 = tpu.memref_slice %arg2[%c0_i32_657, %c0_i32_662] : memref<50x128xf32, #tpu.memory_space<any>> -> memref<1x128xf32, #tpu.memory_space<any>>
    %716 = tpu.memref_squeeze %715 : memref<1x128xf32, #tpu.memory_space<any>> -> memref<128xf32, #tpu.memory_space<any>>
    %c0_i32_663 = arith.constant 0 : i32
    %717 = tpu.memref_slice %arg6[%c2_i32_658, %c7_i32_659, %c0_i32_663] : memref<8x8x128xf32, #tpu.memory_space<vmem>> -> memref<1x1x128xf32, #tpu.memory_space<vmem>>
    %718 = tpu.memref_squeeze %717 : memref<1x1x128xf32, #tpu.memory_space<vmem>> -> memref<128xf32, #tpu.memory_space<vmem>>
    %719 = tpu.memref_slice %arg7[%c2_i32_660, %c7_i32_661] : memref<8x8x!tpu.dma_semaphore, #tpu.memory_space<semaphore_mem>> -> memref<1x1x!tpu.dma_semaphore, #tpu.memory_space<semaphore_mem>>
    %720 = tpu.memref_squeeze %719 : memref<1x1x!tpu.dma_semaphore, #tpu.memory_space<semaphore_mem>> -> memref<!tpu.dma_semaphore, #tpu.memory_space<semaphore_mem>>
    tpu.wait_dma2 semaphore(%720 : memref<!tpu.dma_semaphore, #tpu.memory_space<semaphore_mem>>) src(%716 : memref<128xf32, #tpu.memory_space<any>>) dst(%718 : memref<128xf32, #tpu.memory_space<vmem>>)
    %c0_i32_664 = arith.constant 0 : i32
    %c3_i32_665 = arith.constant 3 : i32
    %c0_i32_666 = arith.constant 0 : i32
    %c3_i32_667 = arith.constant 3 : i32
    %c0_i32_668 = arith.constant 0 : i32
    %c0_i32_669 = arith.constant 0 : i32
    %721 = tpu.memref_slice %arg2[%c0_i32_664, %c0_i32_669] : memref<50x128xf32, #tpu.memory_space<any>> -> memref<1x128xf32, #tpu.memory_space<any>>
    %722 = tpu.memref_squeeze %721 : memref<1x128xf32, #tpu.memory_space<any>> -> memref<128xf32, #tpu.memory_space<any>>
    %c0_i32_670 = arith.constant 0 : i32
    %723 = tpu.memref_slice %arg6[%c3_i32_665, %c0_i32_666, %c0_i32_670] : memref<8x8x128xf32, #tpu.memory_space<vmem>> -> memref<1x1x128xf32, #tpu.memory_space<vmem>>
    %724 = tpu.memref_squeeze %723 : memref<1x1x128xf32, #tpu.memory_space<vmem>> -> memref<128xf32, #tpu.memory_space<vmem>>
    %725 = tpu.memref_slice %arg7[%c3_i32_667, %c0_i32_668] : memref<8x8x!tpu.dma_semaphore, #tpu.memory_space<semaphore_mem>> -> memref<1x1x!tpu.dma_semaphore, #tpu.memory_space<semaphore_mem>>
    %726 = tpu.memref_squeeze %725 : memref<1x1x!tpu.dma_semaphore, #tpu.memory_space<semaphore_mem>> -> memref<!tpu.dma_semaphore, #tpu.memory_space<semaphore_mem>>
    tpu.wait_dma2 semaphore(%726 : memref<!tpu.dma_semaphore, #tpu.memory_space<semaphore_mem>>) src(%722 : memref<128xf32, #tpu.memory_space<any>>) dst(%724 : memref<128xf32, #tpu.memory_space<vmem>>)
    %c0_i32_671 = arith.constant 0 : i32
    %c3_i32_672 = arith.constant 3 : i32
    %c1_i32_673 = arith.constant 1 : i32
    %c3_i32_674 = arith.constant 3 : i32
    %c1_i32_675 = arith.constant 1 : i32
    %c0_i32_676 = arith.constant 0 : i32
    %727 = tpu.memref_slice %arg2[%c0_i32_671, %c0_i32_676] : memref<50x128xf32, #tpu.memory_space<any>> -> memref<1x128xf32, #tpu.memory_space<any>>
    %728 = tpu.memref_squeeze %727 : memref<1x128xf32, #tpu.memory_space<any>> -> memref<128xf32, #tpu.memory_space<any>>
    %c0_i32_677 = arith.constant 0 : i32
    %729 = tpu.memref_slice %arg6[%c3_i32_672, %c1_i32_673, %c0_i32_677] : memref<8x8x128xf32, #tpu.memory_space<vmem>> -> memref<1x1x128xf32, #tpu.memory_space<vmem>>
    %730 = tpu.memref_squeeze %729 : memref<1x1x128xf32, #tpu.memory_space<vmem>> -> memref<128xf32, #tpu.memory_space<vmem>>
    %731 = tpu.memref_slice %arg7[%c3_i32_674, %c1_i32_675] : memref<8x8x!tpu.dma_semaphore, #tpu.memory_space<semaphore_mem>> -> memref<1x1x!tpu.dma_semaphore, #tpu.memory_space<semaphore_mem>>
    %732 = tpu.memref_squeeze %731 : memref<1x1x!tpu.dma_semaphore, #tpu.memory_space<semaphore_mem>> -> memref<!tpu.dma_semaphore, #tpu.memory_space<semaphore_mem>>
    tpu.wait_dma2 semaphore(%732 : memref<!tpu.dma_semaphore, #tpu.memory_space<semaphore_mem>>) src(%728 : memref<128xf32, #tpu.memory_space<any>>) dst(%730 : memref<128xf32, #tpu.memory_space<vmem>>)
    %c0_i32_678 = arith.constant 0 : i32
    %c3_i32_679 = arith.constant 3 : i32
    %c2_i32_680 = arith.constant 2 : i32
    %c3_i32_681 = arith.constant 3 : i32
    %c2_i32_682 = arith.constant 2 : i32
    %c0_i32_683 = arith.constant 0 : i32
    %733 = tpu.memref_slice %arg2[%c0_i32_678, %c0_i32_683] : memref<50x128xf32, #tpu.memory_space<any>> -> memref<1x128xf32, #tpu.memory_space<any>>
    %734 = tpu.memref_squeeze %733 : memref<1x128xf32, #tpu.memory_space<any>> -> memref<128xf32, #tpu.memory_space<any>>
    %c0_i32_684 = arith.constant 0 : i32
    %735 = tpu.memref_slice %arg6[%c3_i32_679, %c2_i32_680, %c0_i32_684] : memref<8x8x128xf32, #tpu.memory_space<vmem>> -> memref<1x1x128xf32, #tpu.memory_space<vmem>>
    %736 = tpu.memref_squeeze %735 : memref<1x1x128xf32, #tpu.memory_space<vmem>> -> memref<128xf32, #tpu.memory_space<vmem>>
    %737 = tpu.memref_slice %arg7[%c3_i32_681, %c2_i32_682] : memref<8x8x!tpu.dma_semaphore, #tpu.memory_space<semaphore_mem>> -> memref<1x1x!tpu.dma_semaphore, #tpu.memory_space<semaphore_mem>>
    %738 = tpu.memref_squeeze %737 : memref<1x1x!tpu.dma_semaphore, #tpu.memory_space<semaphore_mem>> -> memref<!tpu.dma_semaphore, #tpu.memory_space<semaphore_mem>>
    tpu.wait_dma2 semaphore(%738 : memref<!tpu.dma_semaphore, #tpu.memory_space<semaphore_mem>>) src(%734 : memref<128xf32, #tpu.memory_space<any>>) dst(%736 : memref<128xf32, #tpu.memory_space<vmem>>)
    %c0_i32_685 = arith.constant 0 : i32
    %c3_i32_686 = arith.constant 3 : i32
    %c3_i32_687 = arith.constant 3 : i32
    %c3_i32_688 = arith.constant 3 : i32
    %c3_i32_689 = arith.constant 3 : i32
    %c0_i32_690 = arith.constant 0 : i32
    %739 = tpu.memref_slice %arg2[%c0_i32_685, %c0_i32_690] : memref<50x128xf32, #tpu.memory_space<any>> -> memref<1x128xf32, #tpu.memory_space<any>>
    %740 = tpu.memref_squeeze %739 : memref<1x128xf32, #tpu.memory_space<any>> -> memref<128xf32, #tpu.memory_space<any>>
    %c0_i32_691 = arith.constant 0 : i32
    %741 = tpu.memref_slice %arg6[%c3_i32_686, %c3_i32_687, %c0_i32_691] : memref<8x8x128xf32, #tpu.memory_space<vmem>> -> memref<1x1x128xf32, #tpu.memory_space<vmem>>
    %742 = tpu.memref_squeeze %741 : memref<1x1x128xf32, #tpu.memory_space<vmem>> -> memref<128xf32, #tpu.memory_space<vmem>>
    %743 = tpu.memref_slice %arg7[%c3_i32_688, %c3_i32_689] : memref<8x8x!tpu.dma_semaphore, #tpu.memory_space<semaphore_mem>> -> memref<1x1x!tpu.dma_semaphore, #tpu.memory_space<semaphore_mem>>
    %744 = tpu.memref_squeeze %743 : memref<1x1x!tpu.dma_semaphore, #tpu.memory_space<semaphore_mem>> -> memref<!tpu.dma_semaphore, #tpu.memory_space<semaphore_mem>>
    tpu.wait_dma2 semaphore(%744 : memref<!tpu.dma_semaphore, #tpu.memory_space<semaphore_mem>>) src(%740 : memref<128xf32, #tpu.memory_space<any>>) dst(%742 : memref<128xf32, #tpu.memory_space<vmem>>)
    %c0_i32_692 = arith.constant 0 : i32
    %c3_i32_693 = arith.constant 3 : i32
    %c4_i32_694 = arith.constant 4 : i32
    %c3_i32_695 = arith.constant 3 : i32
    %c4_i32_696 = arith.constant 4 : i32
    %c0_i32_697 = arith.constant 0 : i32
    %745 = tpu.memref_slice %arg2[%c0_i32_692, %c0_i32_697] : memref<50x128xf32, #tpu.memory_space<any>> -> memref<1x128xf32, #tpu.memory_space<any>>
    %746 = tpu.memref_squeeze %745 : memref<1x128xf32, #tpu.memory_space<any>> -> memref<128xf32, #tpu.memory_space<any>>
    %c0_i32_698 = arith.constant 0 : i32
    %747 = tpu.memref_slice %arg6[%c3_i32_693, %c4_i32_694, %c0_i32_698] : memref<8x8x128xf32, #tpu.memory_space<vmem>> -> memref<1x1x128xf32, #tpu.memory_space<vmem>>
    %748 = tpu.memref_squeeze %747 : memref<1x1x128xf32, #tpu.memory_space<vmem>> -> memref<128xf32, #tpu.memory_space<vmem>>
    %749 = tpu.memref_slice %arg7[%c3_i32_695, %c4_i32_696] : memref<8x8x!tpu.dma_semaphore, #tpu.memory_space<semaphore_mem>> -> memref<1x1x!tpu.dma_semaphore, #tpu.memory_space<semaphore_mem>>
    %750 = tpu.memref_squeeze %749 : memref<1x1x!tpu.dma_semaphore, #tpu.memory_space<semaphore_mem>> -> memref<!tpu.dma_semaphore, #tpu.memory_space<semaphore_mem>>
    tpu.wait_dma2 semaphore(%750 : memref<!tpu.dma_semaphore, #tpu.memory_space<semaphore_mem>>) src(%746 : memref<128xf32, #tpu.memory_space<any>>) dst(%748 : memref<128xf32, #tpu.memory_space<vmem>>)
    %c0_i32_699 = arith.constant 0 : i32
    %c3_i32_700 = arith.constant 3 : i32
    %c5_i32_701 = arith.constant 5 : i32
    %c3_i32_702 = arith.constant 3 : i32
    %c5_i32_703 = arith.constant 5 : i32
    %c0_i32_704 = arith.constant 0 : i32
    %751 = tpu.memref_slice %arg2[%c0_i32_699, %c0_i32_704] : memref<50x128xf32, #tpu.memory_space<any>> -> memref<1x128xf32, #tpu.memory_space<any>>
    %752 = tpu.memref_squeeze %751 : memref<1x128xf32, #tpu.memory_space<any>> -> memref<128xf32, #tpu.memory_space<any>>
    %c0_i32_705 = arith.constant 0 : i32
    %753 = tpu.memref_slice %arg6[%c3_i32_700, %c5_i32_701, %c0_i32_705] : memref<8x8x128xf32, #tpu.memory_space<vmem>> -> memref<1x1x128xf32, #tpu.memory_space<vmem>>
    %754 = tpu.memref_squeeze %753 : memref<1x1x128xf32, #tpu.memory_space<vmem>> -> memref<128xf32, #tpu.memory_space<vmem>>
    %755 = tpu.memref_slice %arg7[%c3_i32_702, %c5_i32_703] : memref<8x8x!tpu.dma_semaphore, #tpu.memory_space<semaphore_mem>> -> memref<1x1x!tpu.dma_semaphore, #tpu.memory_space<semaphore_mem>>
    %756 = tpu.memref_squeeze %755 : memref<1x1x!tpu.dma_semaphore, #tpu.memory_space<semaphore_mem>> -> memref<!tpu.dma_semaphore, #tpu.memory_space<semaphore_mem>>
    tpu.wait_dma2 semaphore(%756 : memref<!tpu.dma_semaphore, #tpu.memory_space<semaphore_mem>>) src(%752 : memref<128xf32, #tpu.memory_space<any>>) dst(%754 : memref<128xf32, #tpu.memory_space<vmem>>)
    %c0_i32_706 = arith.constant 0 : i32
    %c3_i32_707 = arith.constant 3 : i32
    %c6_i32_708 = arith.constant 6 : i32
    %c3_i32_709 = arith.constant 3 : i32
    %c6_i32_710 = arith.constant 6 : i32
    %c0_i32_711 = arith.constant 0 : i32
    %757 = tpu.memref_slice %arg2[%c0_i32_706, %c0_i32_711] : memref<50x128xf32, #tpu.memory_space<any>> -> memref<1x128xf32, #tpu.memory_space<any>>
    %758 = tpu.memref_squeeze %757 : memref<1x128xf32, #tpu.memory_space<any>> -> memref<128xf32, #tpu.memory_space<any>>
    %c0_i32_712 = arith.constant 0 : i32
    %759 = tpu.memref_slice %arg6[%c3_i32_707, %c6_i32_708, %c0_i32_712] : memref<8x8x128xf32, #tpu.memory_space<vmem>> -> memref<1x1x128xf32, #tpu.memory_space<vmem>>
    %760 = tpu.memref_squeeze %759 : memref<1x1x128xf32, #tpu.memory_space<vmem>> -> memref<128xf32, #tpu.memory_space<vmem>>
    %761 = tpu.memref_slice %arg7[%c3_i32_709, %c6_i32_710] : memref<8x8x!tpu.dma_semaphore, #tpu.memory_space<semaphore_mem>> -> memref<1x1x!tpu.dma_semaphore, #tpu.memory_space<semaphore_mem>>
    %762 = tpu.memref_squeeze %761 : memref<1x1x!tpu.dma_semaphore, #tpu.memory_space<semaphore_mem>> -> memref<!tpu.dma_semaphore, #tpu.memory_space<semaphore_mem>>
    tpu.wait_dma2 semaphore(%762 : memref<!tpu.dma_semaphore, #tpu.memory_space<semaphore_mem>>) src(%758 : memref<128xf32, #tpu.memory_space<any>>) dst(%760 : memref<128xf32, #tpu.memory_space<vmem>>)
    %c0_i32_713 = arith.constant 0 : i32
    %c3_i32_714 = arith.constant 3 : i32
    %c7_i32_715 = arith.constant 7 : i32
    %c3_i32_716 = arith.constant 3 : i32
    %c7_i32_717 = arith.constant 7 : i32
    %c0_i32_718 = arith.constant 0 : i32
    %763 = tpu.memref_slice %arg2[%c0_i32_713, %c0_i32_718] : memref<50x128xf32, #tpu.memory_space<any>> -> memref<1x128xf32, #tpu.memory_space<any>>
    %764 = tpu.memref_squeeze %763 : memref<1x128xf32, #tpu.memory_space<any>> -> memref<128xf32, #tpu.memory_space<any>>
    %c0_i32_719 = arith.constant 0 : i32
    %765 = tpu.memref_slice %arg6[%c3_i32_714, %c7_i32_715, %c0_i32_719] : memref<8x8x128xf32, #tpu.memory_space<vmem>> -> memref<1x1x128xf32, #tpu.memory_space<vmem>>
    %766 = tpu.memref_squeeze %765 : memref<1x1x128xf32, #tpu.memory_space<vmem>> -> memref<128xf32, #tpu.memory_space<vmem>>
    %767 = tpu.memref_slice %arg7[%c3_i32_716, %c7_i32_717] : memref<8x8x!tpu.dma_semaphore, #tpu.memory_space<semaphore_mem>> -> memref<1x1x!tpu.dma_semaphore, #tpu.memory_space<semaphore_mem>>
    %768 = tpu.memref_squeeze %767 : memref<1x1x!tpu.dma_semaphore, #tpu.memory_space<semaphore_mem>> -> memref<!tpu.dma_semaphore, #tpu.memory_space<semaphore_mem>>
    tpu.wait_dma2 semaphore(%768 : memref<!tpu.dma_semaphore, #tpu.memory_space<semaphore_mem>>) src(%764 : memref<128xf32, #tpu.memory_space<any>>) dst(%766 : memref<128xf32, #tpu.memory_space<vmem>>)
    %c0_i32_720 = arith.constant 0 : i32
    %c4_i32_721 = arith.constant 4 : i32
    %c0_i32_722 = arith.constant 0 : i32
    %c4_i32_723 = arith.constant 4 : i32
    %c0_i32_724 = arith.constant 0 : i32
    %c0_i32_725 = arith.constant 0 : i32
    %769 = tpu.memref_slice %arg2[%c0_i32_720, %c0_i32_725] : memref<50x128xf32, #tpu.memory_space<any>> -> memref<1x128xf32, #tpu.memory_space<any>>
    %770 = tpu.memref_squeeze %769 : memref<1x128xf32, #tpu.memory_space<any>> -> memref<128xf32, #tpu.memory_space<any>>
    %c0_i32_726 = arith.constant 0 : i32
    %771 = tpu.memref_slice %arg6[%c4_i32_721, %c0_i32_722, %c0_i32_726] : memref<8x8x128xf32, #tpu.memory_space<vmem>> -> memref<1x1x128xf32, #tpu.memory_space<vmem>>
    %772 = tpu.memref_squeeze %771 : memref<1x1x128xf32, #tpu.memory_space<vmem>> -> memref<128xf32, #tpu.memory_space<vmem>>
    %773 = tpu.memref_slice %arg7[%c4_i32_723, %c0_i32_724] : memref<8x8x!tpu.dma_semaphore, #tpu.memory_space<semaphore_mem>> -> memref<1x1x!tpu.dma_semaphore, #tpu.memory_space<semaphore_mem>>
    %774 = tpu.memref_squeeze %773 : memref<1x1x!tpu.dma_semaphore, #tpu.memory_space<semaphore_mem>> -> memref<!tpu.dma_semaphore, #tpu.memory_space<semaphore_mem>>
    tpu.wait_dma2 semaphore(%774 : memref<!tpu.dma_semaphore, #tpu.memory_space<semaphore_mem>>) src(%770 : memref<128xf32, #tpu.memory_space<any>>) dst(%772 : memref<128xf32, #tpu.memory_space<vmem>>)
    %c0_i32_727 = arith.constant 0 : i32
    %c4_i32_728 = arith.constant 4 : i32
    %c1_i32_729 = arith.constant 1 : i32
    %c4_i32_730 = arith.constant 4 : i32
    %c1_i32_731 = arith.constant 1 : i32
    %c0_i32_732 = arith.constant 0 : i32
    %775 = tpu.memref_slice %arg2[%c0_i32_727, %c0_i32_732] : memref<50x128xf32, #tpu.memory_space<any>> -> memref<1x128xf32, #tpu.memory_space<any>>
    %776 = tpu.memref_squeeze %775 : memref<1x128xf32, #tpu.memory_space<any>> -> memref<128xf32, #tpu.memory_space<any>>
    %c0_i32_733 = arith.constant 0 : i32
    %777 = tpu.memref_slice %arg6[%c4_i32_728, %c1_i32_729, %c0_i32_733] : memref<8x8x128xf32, #tpu.memory_space<vmem>> -> memref<1x1x128xf32, #tpu.memory_space<vmem>>
    %778 = tpu.memref_squeeze %777 : memref<1x1x128xf32, #tpu.memory_space<vmem>> -> memref<128xf32, #tpu.memory_space<vmem>>
    %779 = tpu.memref_slice %arg7[%c4_i32_730, %c1_i32_731] : memref<8x8x!tpu.dma_semaphore, #tpu.memory_space<semaphore_mem>> -> memref<1x1x!tpu.dma_semaphore, #tpu.memory_space<semaphore_mem>>
    %780 = tpu.memref_squeeze %779 : memref<1x1x!tpu.dma_semaphore, #tpu.memory_space<semaphore_mem>> -> memref<!tpu.dma_semaphore, #tpu.memory_space<semaphore_mem>>
    tpu.wait_dma2 semaphore(%780 : memref<!tpu.dma_semaphore, #tpu.memory_space<semaphore_mem>>) src(%776 : memref<128xf32, #tpu.memory_space<any>>) dst(%778 : memref<128xf32, #tpu.memory_space<vmem>>)
    %c0_i32_734 = arith.constant 0 : i32
    %c4_i32_735 = arith.constant 4 : i32
    %c2_i32_736 = arith.constant 2 : i32
    %c4_i32_737 = arith.constant 4 : i32
    %c2_i32_738 = arith.constant 2 : i32
    %c0_i32_739 = arith.constant 0 : i32
    %781 = tpu.memref_slice %arg2[%c0_i32_734, %c0_i32_739] : memref<50x128xf32, #tpu.memory_space<any>> -> memref<1x128xf32, #tpu.memory_space<any>>
    %782 = tpu.memref_squeeze %781 : memref<1x128xf32, #tpu.memory_space<any>> -> memref<128xf32, #tpu.memory_space<any>>
    %c0_i32_740 = arith.constant 0 : i32
    %783 = tpu.memref_slice %arg6[%c4_i32_735, %c2_i32_736, %c0_i32_740] : memref<8x8x128xf32, #tpu.memory_space<vmem>> -> memref<1x1x128xf32, #tpu.memory_space<vmem>>
    %784 = tpu.memref_squeeze %783 : memref<1x1x128xf32, #tpu.memory_space<vmem>> -> memref<128xf32, #tpu.memory_space<vmem>>
    %785 = tpu.memref_slice %arg7[%c4_i32_737, %c2_i32_738] : memref<8x8x!tpu.dma_semaphore, #tpu.memory_space<semaphore_mem>> -> memref<1x1x!tpu.dma_semaphore, #tpu.memory_space<semaphore_mem>>
    %786 = tpu.memref_squeeze %785 : memref<1x1x!tpu.dma_semaphore, #tpu.memory_space<semaphore_mem>> -> memref<!tpu.dma_semaphore, #tpu.memory_space<semaphore_mem>>
    tpu.wait_dma2 semaphore(%786 : memref<!tpu.dma_semaphore, #tpu.memory_space<semaphore_mem>>) src(%782 : memref<128xf32, #tpu.memory_space<any>>) dst(%784 : memref<128xf32, #tpu.memory_space<vmem>>)
    %c0_i32_741 = arith.constant 0 : i32
    %c4_i32_742 = arith.constant 4 : i32
    %c3_i32_743 = arith.constant 3 : i32
    %c4_i32_744 = arith.constant 4 : i32
    %c3_i32_745 = arith.constant 3 : i32
    %c0_i32_746 = arith.constant 0 : i32
    %787 = tpu.memref_slice %arg2[%c0_i32_741, %c0_i32_746] : memref<50x128xf32, #tpu.memory_space<any>> -> memref<1x128xf32, #tpu.memory_space<any>>
    %788 = tpu.memref_squeeze %787 : memref<1x128xf32, #tpu.memory_space<any>> -> memref<128xf32, #tpu.memory_space<any>>
    %c0_i32_747 = arith.constant 0 : i32
    %789 = tpu.memref_slice %arg6[%c4_i32_742, %c3_i32_743, %c0_i32_747] : memref<8x8x128xf32, #tpu.memory_space<vmem>> -> memref<1x1x128xf32, #tpu.memory_space<vmem>>
    %790 = tpu.memref_squeeze %789 : memref<1x1x128xf32, #tpu.memory_space<vmem>> -> memref<128xf32, #tpu.memory_space<vmem>>
    %791 = tpu.memref_slice %arg7[%c4_i32_744, %c3_i32_745] : memref<8x8x!tpu.dma_semaphore, #tpu.memory_space<semaphore_mem>> -> memref<1x1x!tpu.dma_semaphore, #tpu.memory_space<semaphore_mem>>
    %792 = tpu.memref_squeeze %791 : memref<1x1x!tpu.dma_semaphore, #tpu.memory_space<semaphore_mem>> -> memref<!tpu.dma_semaphore, #tpu.memory_space<semaphore_mem>>
    tpu.wait_dma2 semaphore(%792 : memref<!tpu.dma_semaphore, #tpu.memory_space<semaphore_mem>>) src(%788 : memref<128xf32, #tpu.memory_space<any>>) dst(%790 : memref<128xf32, #tpu.memory_space<vmem>>)
    %c0_i32_748 = arith.constant 0 : i32
    %c4_i32_749 = arith.constant 4 : i32
    %c4_i32_750 = arith.constant 4 : i32
    %c4_i32_751 = arith.constant 4 : i32
    %c4_i32_752 = arith.constant 4 : i32
    %c0_i32_753 = arith.constant 0 : i32
    %793 = tpu.memref_slice %arg2[%c0_i32_748, %c0_i32_753] : memref<50x128xf32, #tpu.memory_space<any>> -> memref<1x128xf32, #tpu.memory_space<any>>
    %794 = tpu.memref_squeeze %793 : memref<1x128xf32, #tpu.memory_space<any>> -> memref<128xf32, #tpu.memory_space<any>>
    %c0_i32_754 = arith.constant 0 : i32
    %795 = tpu.memref_slice %arg6[%c4_i32_749, %c4_i32_750, %c0_i32_754] : memref<8x8x128xf32, #tpu.memory_space<vmem>> -> memref<1x1x128xf32, #tpu.memory_space<vmem>>
    %796 = tpu.memref_squeeze %795 : memref<1x1x128xf32, #tpu.memory_space<vmem>> -> memref<128xf32, #tpu.memory_space<vmem>>
    %797 = tpu.memref_slice %arg7[%c4_i32_751, %c4_i32_752] : memref<8x8x!tpu.dma_semaphore, #tpu.memory_space<semaphore_mem>> -> memref<1x1x!tpu.dma_semaphore, #tpu.memory_space<semaphore_mem>>
    %798 = tpu.memref_squeeze %797 : memref<1x1x!tpu.dma_semaphore, #tpu.memory_space<semaphore_mem>> -> memref<!tpu.dma_semaphore, #tpu.memory_space<semaphore_mem>>
    tpu.wait_dma2 semaphore(%798 : memref<!tpu.dma_semaphore, #tpu.memory_space<semaphore_mem>>) src(%794 : memref<128xf32, #tpu.memory_space<any>>) dst(%796 : memref<128xf32, #tpu.memory_space<vmem>>)
    %c0_i32_755 = arith.constant 0 : i32
    %c4_i32_756 = arith.constant 4 : i32
    %c5_i32_757 = arith.constant 5 : i32
    %c4_i32_758 = arith.constant 4 : i32
    %c5_i32_759 = arith.constant 5 : i32
    %c0_i32_760 = arith.constant 0 : i32
    %799 = tpu.memref_slice %arg2[%c0_i32_755, %c0_i32_760] : memref<50x128xf32, #tpu.memory_space<any>> -> memref<1x128xf32, #tpu.memory_space<any>>
    %800 = tpu.memref_squeeze %799 : memref<1x128xf32, #tpu.memory_space<any>> -> memref<128xf32, #tpu.memory_space<any>>
    %c0_i32_761 = arith.constant 0 : i32
    %801 = tpu.memref_slice %arg6[%c4_i32_756, %c5_i32_757, %c0_i32_761] : memref<8x8x128xf32, #tpu.memory_space<vmem>> -> memref<1x1x128xf32, #tpu.memory_space<vmem>>
    %802 = tpu.memref_squeeze %801 : memref<1x1x128xf32, #tpu.memory_space<vmem>> -> memref<128xf32, #tpu.memory_space<vmem>>
    %803 = tpu.memref_slice %arg7[%c4_i32_758, %c5_i32_759] : memref<8x8x!tpu.dma_semaphore, #tpu.memory_space<semaphore_mem>> -> memref<1x1x!tpu.dma_semaphore, #tpu.memory_space<semaphore_mem>>
    %804 = tpu.memref_squeeze %803 : memref<1x1x!tpu.dma_semaphore, #tpu.memory_space<semaphore_mem>> -> memref<!tpu.dma_semaphore, #tpu.memory_space<semaphore_mem>>
    tpu.wait_dma2 semaphore(%804 : memref<!tpu.dma_semaphore, #tpu.memory_space<semaphore_mem>>) src(%800 : memref<128xf32, #tpu.memory_space<any>>) dst(%802 : memref<128xf32, #tpu.memory_space<vmem>>)
    %c0_i32_762 = arith.constant 0 : i32
    %c4_i32_763 = arith.constant 4 : i32
    %c6_i32_764 = arith.constant 6 : i32
    %c4_i32_765 = arith.constant 4 : i32
    %c6_i32_766 = arith.constant 6 : i32
    %c0_i32_767 = arith.constant 0 : i32
    %805 = tpu.memref_slice %arg2[%c0_i32_762, %c0_i32_767] : memref<50x128xf32, #tpu.memory_space<any>> -> memref<1x128xf32, #tpu.memory_space<any>>
    %806 = tpu.memref_squeeze %805 : memref<1x128xf32, #tpu.memory_space<any>> -> memref<128xf32, #tpu.memory_space<any>>
    %c0_i32_768 = arith.constant 0 : i32
    %807 = tpu.memref_slice %arg6[%c4_i32_763, %c6_i32_764, %c0_i32_768] : memref<8x8x128xf32, #tpu.memory_space<vmem>> -> memref<1x1x128xf32, #tpu.memory_space<vmem>>
    %808 = tpu.memref_squeeze %807 : memref<1x1x128xf32, #tpu.memory_space<vmem>> -> memref<128xf32, #tpu.memory_space<vmem>>
    %809 = tpu.memref_slice %arg7[%c4_i32_765, %c6_i32_766] : memref<8x8x!tpu.dma_semaphore, #tpu.memory_space<semaphore_mem>> -> memref<1x1x!tpu.dma_semaphore, #tpu.memory_space<semaphore_mem>>
    %810 = tpu.memref_squeeze %809 : memref<1x1x!tpu.dma_semaphore, #tpu.memory_space<semaphore_mem>> -> memref<!tpu.dma_semaphore, #tpu.memory_space<semaphore_mem>>
    tpu.wait_dma2 semaphore(%810 : memref<!tpu.dma_semaphore, #tpu.memory_space<semaphore_mem>>) src(%806 : memref<128xf32, #tpu.memory_space<any>>) dst(%808 : memref<128xf32, #tpu.memory_space<vmem>>)
    %c0_i32_769 = arith.constant 0 : i32
    %c4_i32_770 = arith.constant 4 : i32
    %c7_i32_771 = arith.constant 7 : i32
    %c4_i32_772 = arith.constant 4 : i32
    %c7_i32_773 = arith.constant 7 : i32
    %c0_i32_774 = arith.constant 0 : i32
    %811 = tpu.memref_slice %arg2[%c0_i32_769, %c0_i32_774] : memref<50x128xf32, #tpu.memory_space<any>> -> memref<1x128xf32, #tpu.memory_space<any>>
    %812 = tpu.memref_squeeze %811 : memref<1x128xf32, #tpu.memory_space<any>> -> memref<128xf32, #tpu.memory_space<any>>
    %c0_i32_775 = arith.constant 0 : i32
    %813 = tpu.memref_slice %arg6[%c4_i32_770, %c7_i32_771, %c0_i32_775] : memref<8x8x128xf32, #tpu.memory_space<vmem>> -> memref<1x1x128xf32, #tpu.memory_space<vmem>>
    %814 = tpu.memref_squeeze %813 : memref<1x1x128xf32, #tpu.memory_space<vmem>> -> memref<128xf32, #tpu.memory_space<vmem>>
    %815 = tpu.memref_slice %arg7[%c4_i32_772, %c7_i32_773] : memref<8x8x!tpu.dma_semaphore, #tpu.memory_space<semaphore_mem>> -> memref<1x1x!tpu.dma_semaphore, #tpu.memory_space<semaphore_mem>>
    %816 = tpu.memref_squeeze %815 : memref<1x1x!tpu.dma_semaphore, #tpu.memory_space<semaphore_mem>> -> memref<!tpu.dma_semaphore, #tpu.memory_space<semaphore_mem>>
    tpu.wait_dma2 semaphore(%816 : memref<!tpu.dma_semaphore, #tpu.memory_space<semaphore_mem>>) src(%812 : memref<128xf32, #tpu.memory_space<any>>) dst(%814 : memref<128xf32, #tpu.memory_space<vmem>>)
    %c0_i32_776 = arith.constant 0 : i32
    %c5_i32_777 = arith.constant 5 : i32
    %c0_i32_778 = arith.constant 0 : i32
    %c5_i32_779 = arith.constant 5 : i32
    %c0_i32_780 = arith.constant 0 : i32
    %c0_i32_781 = arith.constant 0 : i32
    %817 = tpu.memref_slice %arg2[%c0_i32_776, %c0_i32_781] : memref<50x128xf32, #tpu.memory_space<any>> -> memref<1x128xf32, #tpu.memory_space<any>>
    %818 = tpu.memref_squeeze %817 : memref<1x128xf32, #tpu.memory_space<any>> -> memref<128xf32, #tpu.memory_space<any>>
    %c0_i32_782 = arith.constant 0 : i32
    %819 = tpu.memref_slice %arg6[%c5_i32_777, %c0_i32_778, %c0_i32_782] : memref<8x8x128xf32, #tpu.memory_space<vmem>> -> memref<1x1x128xf32, #tpu.memory_space<vmem>>
    %820 = tpu.memref_squeeze %819 : memref<1x1x128xf32, #tpu.memory_space<vmem>> -> memref<128xf32, #tpu.memory_space<vmem>>
    %821 = tpu.memref_slice %arg7[%c5_i32_779, %c0_i32_780] : memref<8x8x!tpu.dma_semaphore, #tpu.memory_space<semaphore_mem>> -> memref<1x1x!tpu.dma_semaphore, #tpu.memory_space<semaphore_mem>>
    %822 = tpu.memref_squeeze %821 : memref<1x1x!tpu.dma_semaphore, #tpu.memory_space<semaphore_mem>> -> memref<!tpu.dma_semaphore, #tpu.memory_space<semaphore_mem>>
    tpu.wait_dma2 semaphore(%822 : memref<!tpu.dma_semaphore, #tpu.memory_space<semaphore_mem>>) src(%818 : memref<128xf32, #tpu.memory_space<any>>) dst(%820 : memref<128xf32, #tpu.memory_space<vmem>>)
    %c0_i32_783 = arith.constant 0 : i32
    %c5_i32_784 = arith.constant 5 : i32
    %c1_i32_785 = arith.constant 1 : i32
    %c5_i32_786 = arith.constant 5 : i32
    %c1_i32_787 = arith.constant 1 : i32
    %c0_i32_788 = arith.constant 0 : i32
    %823 = tpu.memref_slice %arg2[%c0_i32_783, %c0_i32_788] : memref<50x128xf32, #tpu.memory_space<any>> -> memref<1x128xf32, #tpu.memory_space<any>>
    %824 = tpu.memref_squeeze %823 : memref<1x128xf32, #tpu.memory_space<any>> -> memref<128xf32, #tpu.memory_space<any>>
    %c0_i32_789 = arith.constant 0 : i32
    %825 = tpu.memref_slice %arg6[%c5_i32_784, %c1_i32_785, %c0_i32_789] : memref<8x8x128xf32, #tpu.memory_space<vmem>> -> memref<1x1x128xf32, #tpu.memory_space<vmem>>
    %826 = tpu.memref_squeeze %825 : memref<1x1x128xf32, #tpu.memory_space<vmem>> -> memref<128xf32, #tpu.memory_space<vmem>>
    %827 = tpu.memref_slice %arg7[%c5_i32_786, %c1_i32_787] : memref<8x8x!tpu.dma_semaphore, #tpu.memory_space<semaphore_mem>> -> memref<1x1x!tpu.dma_semaphore, #tpu.memory_space<semaphore_mem>>
    %828 = tpu.memref_squeeze %827 : memref<1x1x!tpu.dma_semaphore, #tpu.memory_space<semaphore_mem>> -> memref<!tpu.dma_semaphore, #tpu.memory_space<semaphore_mem>>
    tpu.wait_dma2 semaphore(%828 : memref<!tpu.dma_semaphore, #tpu.memory_space<semaphore_mem>>) src(%824 : memref<128xf32, #tpu.memory_space<any>>) dst(%826 : memref<128xf32, #tpu.memory_space<vmem>>)
    %c0_i32_790 = arith.constant 0 : i32
    %c5_i32_791 = arith.constant 5 : i32
    %c2_i32_792 = arith.constant 2 : i32
    %c5_i32_793 = arith.constant 5 : i32
    %c2_i32_794 = arith.constant 2 : i32
    %c0_i32_795 = arith.constant 0 : i32
    %829 = tpu.memref_slice %arg2[%c0_i32_790, %c0_i32_795] : memref<50x128xf32, #tpu.memory_space<any>> -> memref<1x128xf32, #tpu.memory_space<any>>
    %830 = tpu.memref_squeeze %829 : memref<1x128xf32, #tpu.memory_space<any>> -> memref<128xf32, #tpu.memory_space<any>>
    %c0_i32_796 = arith.constant 0 : i32
    %831 = tpu.memref_slice %arg6[%c5_i32_791, %c2_i32_792, %c0_i32_796] : memref<8x8x128xf32, #tpu.memory_space<vmem>> -> memref<1x1x128xf32, #tpu.memory_space<vmem>>
    %832 = tpu.memref_squeeze %831 : memref<1x1x128xf32, #tpu.memory_space<vmem>> -> memref<128xf32, #tpu.memory_space<vmem>>
    %833 = tpu.memref_slice %arg7[%c5_i32_793, %c2_i32_794] : memref<8x8x!tpu.dma_semaphore, #tpu.memory_space<semaphore_mem>> -> memref<1x1x!tpu.dma_semaphore, #tpu.memory_space<semaphore_mem>>
    %834 = tpu.memref_squeeze %833 : memref<1x1x!tpu.dma_semaphore, #tpu.memory_space<semaphore_mem>> -> memref<!tpu.dma_semaphore, #tpu.memory_space<semaphore_mem>>
    tpu.wait_dma2 semaphore(%834 : memref<!tpu.dma_semaphore, #tpu.memory_space<semaphore_mem>>) src(%830 : memref<128xf32, #tpu.memory_space<any>>) dst(%832 : memref<128xf32, #tpu.memory_space<vmem>>)
    %c0_i32_797 = arith.constant 0 : i32
    %c5_i32_798 = arith.constant 5 : i32
    %c3_i32_799 = arith.constant 3 : i32
    %c5_i32_800 = arith.constant 5 : i32
    %c3_i32_801 = arith.constant 3 : i32
    %c0_i32_802 = arith.constant 0 : i32
    %835 = tpu.memref_slice %arg2[%c0_i32_797, %c0_i32_802] : memref<50x128xf32, #tpu.memory_space<any>> -> memref<1x128xf32, #tpu.memory_space<any>>
    %836 = tpu.memref_squeeze %835 : memref<1x128xf32, #tpu.memory_space<any>> -> memref<128xf32, #tpu.memory_space<any>>
    %c0_i32_803 = arith.constant 0 : i32
    %837 = tpu.memref_slice %arg6[%c5_i32_798, %c3_i32_799, %c0_i32_803] : memref<8x8x128xf32, #tpu.memory_space<vmem>> -> memref<1x1x128xf32, #tpu.memory_space<vmem>>
    %838 = tpu.memref_squeeze %837 : memref<1x1x128xf32, #tpu.memory_space<vmem>> -> memref<128xf32, #tpu.memory_space<vmem>>
    %839 = tpu.memref_slice %arg7[%c5_i32_800, %c3_i32_801] : memref<8x8x!tpu.dma_semaphore, #tpu.memory_space<semaphore_mem>> -> memref<1x1x!tpu.dma_semaphore, #tpu.memory_space<semaphore_mem>>
    %840 = tpu.memref_squeeze %839 : memref<1x1x!tpu.dma_semaphore, #tpu.memory_space<semaphore_mem>> -> memref<!tpu.dma_semaphore, #tpu.memory_space<semaphore_mem>>
    tpu.wait_dma2 semaphore(%840 : memref<!tpu.dma_semaphore, #tpu.memory_space<semaphore_mem>>) src(%836 : memref<128xf32, #tpu.memory_space<any>>) dst(%838 : memref<128xf32, #tpu.memory_space<vmem>>)
    %c0_i32_804 = arith.constant 0 : i32
    %c5_i32_805 = arith.constant 5 : i32
    %c4_i32_806 = arith.constant 4 : i32
    %c5_i32_807 = arith.constant 5 : i32
    %c4_i32_808 = arith.constant 4 : i32
    %c0_i32_809 = arith.constant 0 : i32
    %841 = tpu.memref_slice %arg2[%c0_i32_804, %c0_i32_809] : memref<50x128xf32, #tpu.memory_space<any>> -> memref<1x128xf32, #tpu.memory_space<any>>
    %842 = tpu.memref_squeeze %841 : memref<1x128xf32, #tpu.memory_space<any>> -> memref<128xf32, #tpu.memory_space<any>>
    %c0_i32_810 = arith.constant 0 : i32
    %843 = tpu.memref_slice %arg6[%c5_i32_805, %c4_i32_806, %c0_i32_810] : memref<8x8x128xf32, #tpu.memory_space<vmem>> -> memref<1x1x128xf32, #tpu.memory_space<vmem>>
    %844 = tpu.memref_squeeze %843 : memref<1x1x128xf32, #tpu.memory_space<vmem>> -> memref<128xf32, #tpu.memory_space<vmem>>
    %845 = tpu.memref_slice %arg7[%c5_i32_807, %c4_i32_808] : memref<8x8x!tpu.dma_semaphore, #tpu.memory_space<semaphore_mem>> -> memref<1x1x!tpu.dma_semaphore, #tpu.memory_space<semaphore_mem>>
    %846 = tpu.memref_squeeze %845 : memref<1x1x!tpu.dma_semaphore, #tpu.memory_space<semaphore_mem>> -> memref<!tpu.dma_semaphore, #tpu.memory_space<semaphore_mem>>
    tpu.wait_dma2 semaphore(%846 : memref<!tpu.dma_semaphore, #tpu.memory_space<semaphore_mem>>) src(%842 : memref<128xf32, #tpu.memory_space<any>>) dst(%844 : memref<128xf32, #tpu.memory_space<vmem>>)
    %c0_i32_811 = arith.constant 0 : i32
    %c5_i32_812 = arith.constant 5 : i32
    %c5_i32_813 = arith.constant 5 : i32
    %c5_i32_814 = arith.constant 5 : i32
    %c5_i32_815 = arith.constant 5 : i32
    %c0_i32_816 = arith.constant 0 : i32
    %847 = tpu.memref_slice %arg2[%c0_i32_811, %c0_i32_816] : memref<50x128xf32, #tpu.memory_space<any>> -> memref<1x128xf32, #tpu.memory_space<any>>
    %848 = tpu.memref_squeeze %847 : memref<1x128xf32, #tpu.memory_space<any>> -> memref<128xf32, #tpu.memory_space<any>>
    %c0_i32_817 = arith.constant 0 : i32
    %849 = tpu.memref_slice %arg6[%c5_i32_812, %c5_i32_813, %c0_i32_817] : memref<8x8x128xf32, #tpu.memory_space<vmem>> -> memref<1x1x128xf32, #tpu.memory_space<vmem>>
    %850 = tpu.memref_squeeze %849 : memref<1x1x128xf32, #tpu.memory_space<vmem>> -> memref<128xf32, #tpu.memory_space<vmem>>
    %851 = tpu.memref_slice %arg7[%c5_i32_814, %c5_i32_815] : memref<8x8x!tpu.dma_semaphore, #tpu.memory_space<semaphore_mem>> -> memref<1x1x!tpu.dma_semaphore, #tpu.memory_space<semaphore_mem>>
    %852 = tpu.memref_squeeze %851 : memref<1x1x!tpu.dma_semaphore, #tpu.memory_space<semaphore_mem>> -> memref<!tpu.dma_semaphore, #tpu.memory_space<semaphore_mem>>
    tpu.wait_dma2 semaphore(%852 : memref<!tpu.dma_semaphore, #tpu.memory_space<semaphore_mem>>) src(%848 : memref<128xf32, #tpu.memory_space<any>>) dst(%850 : memref<128xf32, #tpu.memory_space<vmem>>)
    %c0_i32_818 = arith.constant 0 : i32
    %c5_i32_819 = arith.constant 5 : i32
    %c6_i32_820 = arith.constant 6 : i32
    %c5_i32_821 = arith.constant 5 : i32
    %c6_i32_822 = arith.constant 6 : i32
    %c0_i32_823 = arith.constant 0 : i32
    %853 = tpu.memref_slice %arg2[%c0_i32_818, %c0_i32_823] : memref<50x128xf32, #tpu.memory_space<any>> -> memref<1x128xf32, #tpu.memory_space<any>>
    %854 = tpu.memref_squeeze %853 : memref<1x128xf32, #tpu.memory_space<any>> -> memref<128xf32, #tpu.memory_space<any>>
    %c0_i32_824 = arith.constant 0 : i32
    %855 = tpu.memref_slice %arg6[%c5_i32_819, %c6_i32_820, %c0_i32_824] : memref<8x8x128xf32, #tpu.memory_space<vmem>> -> memref<1x1x128xf32, #tpu.memory_space<vmem>>
    %856 = tpu.memref_squeeze %855 : memref<1x1x128xf32, #tpu.memory_space<vmem>> -> memref<128xf32, #tpu.memory_space<vmem>>
    %857 = tpu.memref_slice %arg7[%c5_i32_821, %c6_i32_822] : memref<8x8x!tpu.dma_semaphore, #tpu.memory_space<semaphore_mem>> -> memref<1x1x!tpu.dma_semaphore, #tpu.memory_space<semaphore_mem>>
    %858 = tpu.memref_squeeze %857 : memref<1x1x!tpu.dma_semaphore, #tpu.memory_space<semaphore_mem>> -> memref<!tpu.dma_semaphore, #tpu.memory_space<semaphore_mem>>
    tpu.wait_dma2 semaphore(%858 : memref<!tpu.dma_semaphore, #tpu.memory_space<semaphore_mem>>) src(%854 : memref<128xf32, #tpu.memory_space<any>>) dst(%856 : memref<128xf32, #tpu.memory_space<vmem>>)
    %c0_i32_825 = arith.constant 0 : i32
    %c5_i32_826 = arith.constant 5 : i32
    %c7_i32_827 = arith.constant 7 : i32
    %c5_i32_828 = arith.constant 5 : i32
    %c7_i32_829 = arith.constant 7 : i32
    %c0_i32_830 = arith.constant 0 : i32
    %859 = tpu.memref_slice %arg2[%c0_i32_825, %c0_i32_830] : memref<50x128xf32, #tpu.memory_space<any>> -> memref<1x128xf32, #tpu.memory_space<any>>
    %860 = tpu.memref_squeeze %859 : memref<1x128xf32, #tpu.memory_space<any>> -> memref<128xf32, #tpu.memory_space<any>>
    %c0_i32_831 = arith.constant 0 : i32
    %861 = tpu.memref_slice %arg6[%c5_i32_826, %c7_i32_827, %c0_i32_831] : memref<8x8x128xf32, #tpu.memory_space<vmem>> -> memref<1x1x128xf32, #tpu.memory_space<vmem>>
    %862 = tpu.memref_squeeze %861 : memref<1x1x128xf32, #tpu.memory_space<vmem>> -> memref<128xf32, #tpu.memory_space<vmem>>
    %863 = tpu.memref_slice %arg7[%c5_i32_828, %c7_i32_829] : memref<8x8x!tpu.dma_semaphore, #tpu.memory_space<semaphore_mem>> -> memref<1x1x!tpu.dma_semaphore, #tpu.memory_space<semaphore_mem>>
    %864 = tpu.memref_squeeze %863 : memref<1x1x!tpu.dma_semaphore, #tpu.memory_space<semaphore_mem>> -> memref<!tpu.dma_semaphore, #tpu.memory_space<semaphore_mem>>
    tpu.wait_dma2 semaphore(%864 : memref<!tpu.dma_semaphore, #tpu.memory_space<semaphore_mem>>) src(%860 : memref<128xf32, #tpu.memory_space<any>>) dst(%862 : memref<128xf32, #tpu.memory_space<vmem>>)
    %c0_i32_832 = arith.constant 0 : i32
    %c6_i32_833 = arith.constant 6 : i32
    %c0_i32_834 = arith.constant 0 : i32
    %c6_i32_835 = arith.constant 6 : i32
    %c0_i32_836 = arith.constant 0 : i32
    %c0_i32_837 = arith.constant 0 : i32
    %865 = tpu.memref_slice %arg2[%c0_i32_832, %c0_i32_837] : memref<50x128xf32, #tpu.memory_space<any>> -> memref<1x128xf32, #tpu.memory_space<any>>
    %866 = tpu.memref_squeeze %865 : memref<1x128xf32, #tpu.memory_space<any>> -> memref<128xf32, #tpu.memory_space<any>>
    %c0_i32_838 = arith.constant 0 : i32
    %867 = tpu.memref_slice %arg6[%c6_i32_833, %c0_i32_834, %c0_i32_838] : memref<8x8x128xf32, #tpu.memory_space<vmem>> -> memref<1x1x128xf32, #tpu.memory_space<vmem>>
    %868 = tpu.memref_squeeze %867 : memref<1x1x128xf32, #tpu.memory_space<vmem>> -> memref<128xf32, #tpu.memory_space<vmem>>
    %869 = tpu.memref_slice %arg7[%c6_i32_835, %c0_i32_836] : memref<8x8x!tpu.dma_semaphore, #tpu.memory_space<semaphore_mem>> -> memref<1x1x!tpu.dma_semaphore, #tpu.memory_space<semaphore_mem>>
    %870 = tpu.memref_squeeze %869 : memref<1x1x!tpu.dma_semaphore, #tpu.memory_space<semaphore_mem>> -> memref<!tpu.dma_semaphore, #tpu.memory_space<semaphore_mem>>
    tpu.wait_dma2 semaphore(%870 : memref<!tpu.dma_semaphore, #tpu.memory_space<semaphore_mem>>) src(%866 : memref<128xf32, #tpu.memory_space<any>>) dst(%868 : memref<128xf32, #tpu.memory_space<vmem>>)
    %c0_i32_839 = arith.constant 0 : i32
    %c6_i32_840 = arith.constant 6 : i32
    %c1_i32_841 = arith.constant 1 : i32
    %c6_i32_842 = arith.constant 6 : i32
    %c1_i32_843 = arith.constant 1 : i32
    %c0_i32_844 = arith.constant 0 : i32
    %871 = tpu.memref_slice %arg2[%c0_i32_839, %c0_i32_844] : memref<50x128xf32, #tpu.memory_space<any>> -> memref<1x128xf32, #tpu.memory_space<any>>
    %872 = tpu.memref_squeeze %871 : memref<1x128xf32, #tpu.memory_space<any>> -> memref<128xf32, #tpu.memory_space<any>>
    %c0_i32_845 = arith.constant 0 : i32
    %873 = tpu.memref_slice %arg6[%c6_i32_840, %c1_i32_841, %c0_i32_845] : memref<8x8x128xf32, #tpu.memory_space<vmem>> -> memref<1x1x128xf32, #tpu.memory_space<vmem>>
    %874 = tpu.memref_squeeze %873 : memref<1x1x128xf32, #tpu.memory_space<vmem>> -> memref<128xf32, #tpu.memory_space<vmem>>
    %875 = tpu.memref_slice %arg7[%c6_i32_842, %c1_i32_843] : memref<8x8x!tpu.dma_semaphore, #tpu.memory_space<semaphore_mem>> -> memref<1x1x!tpu.dma_semaphore, #tpu.memory_space<semaphore_mem>>
    %876 = tpu.memref_squeeze %875 : memref<1x1x!tpu.dma_semaphore, #tpu.memory_space<semaphore_mem>> -> memref<!tpu.dma_semaphore, #tpu.memory_space<semaphore_mem>>
    tpu.wait_dma2 semaphore(%876 : memref<!tpu.dma_semaphore, #tpu.memory_space<semaphore_mem>>) src(%872 : memref<128xf32, #tpu.memory_space<any>>) dst(%874 : memref<128xf32, #tpu.memory_space<vmem>>)
    %c0_i32_846 = arith.constant 0 : i32
    %c6_i32_847 = arith.constant 6 : i32
    %c2_i32_848 = arith.constant 2 : i32
    %c6_i32_849 = arith.constant 6 : i32
    %c2_i32_850 = arith.constant 2 : i32
    %c0_i32_851 = arith.constant 0 : i32
    %877 = tpu.memref_slice %arg2[%c0_i32_846, %c0_i32_851] : memref<50x128xf32, #tpu.memory_space<any>> -> memref<1x128xf32, #tpu.memory_space<any>>
    %878 = tpu.memref_squeeze %877 : memref<1x128xf32, #tpu.memory_space<any>> -> memref<128xf32, #tpu.memory_space<any>>
    %c0_i32_852 = arith.constant 0 : i32
    %879 = tpu.memref_slice %arg6[%c6_i32_847, %c2_i32_848, %c0_i32_852] : memref<8x8x128xf32, #tpu.memory_space<vmem>> -> memref<1x1x128xf32, #tpu.memory_space<vmem>>
    %880 = tpu.memref_squeeze %879 : memref<1x1x128xf32, #tpu.memory_space<vmem>> -> memref<128xf32, #tpu.memory_space<vmem>>
    %881 = tpu.memref_slice %arg7[%c6_i32_849, %c2_i32_850] : memref<8x8x!tpu.dma_semaphore, #tpu.memory_space<semaphore_mem>> -> memref<1x1x!tpu.dma_semaphore, #tpu.memory_space<semaphore_mem>>
    %882 = tpu.memref_squeeze %881 : memref<1x1x!tpu.dma_semaphore, #tpu.memory_space<semaphore_mem>> -> memref<!tpu.dma_semaphore, #tpu.memory_space<semaphore_mem>>
    tpu.wait_dma2 semaphore(%882 : memref<!tpu.dma_semaphore, #tpu.memory_space<semaphore_mem>>) src(%878 : memref<128xf32, #tpu.memory_space<any>>) dst(%880 : memref<128xf32, #tpu.memory_space<vmem>>)
    %c0_i32_853 = arith.constant 0 : i32
    %c6_i32_854 = arith.constant 6 : i32
    %c3_i32_855 = arith.constant 3 : i32
    %c6_i32_856 = arith.constant 6 : i32
    %c3_i32_857 = arith.constant 3 : i32
    %c0_i32_858 = arith.constant 0 : i32
    %883 = tpu.memref_slice %arg2[%c0_i32_853, %c0_i32_858] : memref<50x128xf32, #tpu.memory_space<any>> -> memref<1x128xf32, #tpu.memory_space<any>>
    %884 = tpu.memref_squeeze %883 : memref<1x128xf32, #tpu.memory_space<any>> -> memref<128xf32, #tpu.memory_space<any>>
    %c0_i32_859 = arith.constant 0 : i32
    %885 = tpu.memref_slice %arg6[%c6_i32_854, %c3_i32_855, %c0_i32_859] : memref<8x8x128xf32, #tpu.memory_space<vmem>> -> memref<1x1x128xf32, #tpu.memory_space<vmem>>
    %886 = tpu.memref_squeeze %885 : memref<1x1x128xf32, #tpu.memory_space<vmem>> -> memref<128xf32, #tpu.memory_space<vmem>>
    %887 = tpu.memref_slice %arg7[%c6_i32_856, %c3_i32_857] : memref<8x8x!tpu.dma_semaphore, #tpu.memory_space<semaphore_mem>> -> memref<1x1x!tpu.dma_semaphore, #tpu.memory_space<semaphore_mem>>
    %888 = tpu.memref_squeeze %887 : memref<1x1x!tpu.dma_semaphore, #tpu.memory_space<semaphore_mem>> -> memref<!tpu.dma_semaphore, #tpu.memory_space<semaphore_mem>>
    tpu.wait_dma2 semaphore(%888 : memref<!tpu.dma_semaphore, #tpu.memory_space<semaphore_mem>>) src(%884 : memref<128xf32, #tpu.memory_space<any>>) dst(%886 : memref<128xf32, #tpu.memory_space<vmem>>)
    %c0_i32_860 = arith.constant 0 : i32
    %c6_i32_861 = arith.constant 6 : i32
    %c4_i32_862 = arith.constant 4 : i32
    %c6_i32_863 = arith.constant 6 : i32
    %c4_i32_864 = arith.constant 4 : i32
    %c0_i32_865 = arith.constant 0 : i32
    %889 = tpu.memref_slice %arg2[%c0_i32_860, %c0_i32_865] : memref<50x128xf32, #tpu.memory_space<any>> -> memref<1x128xf32, #tpu.memory_space<any>>
    %890 = tpu.memref_squeeze %889 : memref<1x128xf32, #tpu.memory_space<any>> -> memref<128xf32, #tpu.memory_space<any>>
    %c0_i32_866 = arith.constant 0 : i32
    %891 = tpu.memref_slice %arg6[%c6_i32_861, %c4_i32_862, %c0_i32_866] : memref<8x8x128xf32, #tpu.memory_space<vmem>> -> memref<1x1x128xf32, #tpu.memory_space<vmem>>
    %892 = tpu.memref_squeeze %891 : memref<1x1x128xf32, #tpu.memory_space<vmem>> -> memref<128xf32, #tpu.memory_space<vmem>>
    %893 = tpu.memref_slice %arg7[%c6_i32_863, %c4_i32_864] : memref<8x8x!tpu.dma_semaphore, #tpu.memory_space<semaphore_mem>> -> memref<1x1x!tpu.dma_semaphore, #tpu.memory_space<semaphore_mem>>
    %894 = tpu.memref_squeeze %893 : memref<1x1x!tpu.dma_semaphore, #tpu.memory_space<semaphore_mem>> -> memref<!tpu.dma_semaphore, #tpu.memory_space<semaphore_mem>>
    tpu.wait_dma2 semaphore(%894 : memref<!tpu.dma_semaphore, #tpu.memory_space<semaphore_mem>>) src(%890 : memref<128xf32, #tpu.memory_space<any>>) dst(%892 : memref<128xf32, #tpu.memory_space<vmem>>)
    %c0_i32_867 = arith.constant 0 : i32
    %c6_i32_868 = arith.constant 6 : i32
    %c5_i32_869 = arith.constant 5 : i32
    %c6_i32_870 = arith.constant 6 : i32
    %c5_i32_871 = arith.constant 5 : i32
    %c0_i32_872 = arith.constant 0 : i32
    %895 = tpu.memref_slice %arg2[%c0_i32_867, %c0_i32_872] : memref<50x128xf32, #tpu.memory_space<any>> -> memref<1x128xf32, #tpu.memory_space<any>>
    %896 = tpu.memref_squeeze %895 : memref<1x128xf32, #tpu.memory_space<any>> -> memref<128xf32, #tpu.memory_space<any>>
    %c0_i32_873 = arith.constant 0 : i32
    %897 = tpu.memref_slice %arg6[%c6_i32_868, %c5_i32_869, %c0_i32_873] : memref<8x8x128xf32, #tpu.memory_space<vmem>> -> memref<1x1x128xf32, #tpu.memory_space<vmem>>
    %898 = tpu.memref_squeeze %897 : memref<1x1x128xf32, #tpu.memory_space<vmem>> -> memref<128xf32, #tpu.memory_space<vmem>>
    %899 = tpu.memref_slice %arg7[%c6_i32_870, %c5_i32_871] : memref<8x8x!tpu.dma_semaphore, #tpu.memory_space<semaphore_mem>> -> memref<1x1x!tpu.dma_semaphore, #tpu.memory_space<semaphore_mem>>
    %900 = tpu.memref_squeeze %899 : memref<1x1x!tpu.dma_semaphore, #tpu.memory_space<semaphore_mem>> -> memref<!tpu.dma_semaphore, #tpu.memory_space<semaphore_mem>>
    tpu.wait_dma2 semaphore(%900 : memref<!tpu.dma_semaphore, #tpu.memory_space<semaphore_mem>>) src(%896 : memref<128xf32, #tpu.memory_space<any>>) dst(%898 : memref<128xf32, #tpu.memory_space<vmem>>)
    %c0_i32_874 = arith.constant 0 : i32
    %c6_i32_875 = arith.constant 6 : i32
    %c6_i32_876 = arith.constant 6 : i32
    %c6_i32_877 = arith.constant 6 : i32
    %c6_i32_878 = arith.constant 6 : i32
    %c0_i32_879 = arith.constant 0 : i32
    %901 = tpu.memref_slice %arg2[%c0_i32_874, %c0_i32_879] : memref<50x128xf32, #tpu.memory_space<any>> -> memref<1x128xf32, #tpu.memory_space<any>>
    %902 = tpu.memref_squeeze %901 : memref<1x128xf32, #tpu.memory_space<any>> -> memref<128xf32, #tpu.memory_space<any>>
    %c0_i32_880 = arith.constant 0 : i32
    %903 = tpu.memref_slice %arg6[%c6_i32_875, %c6_i32_876, %c0_i32_880] : memref<8x8x128xf32, #tpu.memory_space<vmem>> -> memref<1x1x128xf32, #tpu.memory_space<vmem>>
    %904 = tpu.memref_squeeze %903 : memref<1x1x128xf32, #tpu.memory_space<vmem>> -> memref<128xf32, #tpu.memory_space<vmem>>
    %905 = tpu.memref_slice %arg7[%c6_i32_877, %c6_i32_878] : memref<8x8x!tpu.dma_semaphore, #tpu.memory_space<semaphore_mem>> -> memref<1x1x!tpu.dma_semaphore, #tpu.memory_space<semaphore_mem>>
    %906 = tpu.memref_squeeze %905 : memref<1x1x!tpu.dma_semaphore, #tpu.memory_space<semaphore_mem>> -> memref<!tpu.dma_semaphore, #tpu.memory_space<semaphore_mem>>
    tpu.wait_dma2 semaphore(%906 : memref<!tpu.dma_semaphore, #tpu.memory_space<semaphore_mem>>) src(%902 : memref<128xf32, #tpu.memory_space<any>>) dst(%904 : memref<128xf32, #tpu.memory_space<vmem>>)
    %c0_i32_881 = arith.constant 0 : i32
    %c6_i32_882 = arith.constant 6 : i32
    %c7_i32_883 = arith.constant 7 : i32
    %c6_i32_884 = arith.constant 6 : i32
    %c7_i32_885 = arith.constant 7 : i32
    %c0_i32_886 = arith.constant 0 : i32
    %907 = tpu.memref_slice %arg2[%c0_i32_881, %c0_i32_886] : memref<50x128xf32, #tpu.memory_space<any>> -> memref<1x128xf32, #tpu.memory_space<any>>
    %908 = tpu.memref_squeeze %907 : memref<1x128xf32, #tpu.memory_space<any>> -> memref<128xf32, #tpu.memory_space<any>>
    %c0_i32_887 = arith.constant 0 : i32
    %909 = tpu.memref_slice %arg6[%c6_i32_882, %c7_i32_883, %c0_i32_887] : memref<8x8x128xf32, #tpu.memory_space<vmem>> -> memref<1x1x128xf32, #tpu.memory_space<vmem>>
    %910 = tpu.memref_squeeze %909 : memref<1x1x128xf32, #tpu.memory_space<vmem>> -> memref<128xf32, #tpu.memory_space<vmem>>
    %911 = tpu.memref_slice %arg7[%c6_i32_884, %c7_i32_885] : memref<8x8x!tpu.dma_semaphore, #tpu.memory_space<semaphore_mem>> -> memref<1x1x!tpu.dma_semaphore, #tpu.memory_space<semaphore_mem>>
    %912 = tpu.memref_squeeze %911 : memref<1x1x!tpu.dma_semaphore, #tpu.memory_space<semaphore_mem>> -> memref<!tpu.dma_semaphore, #tpu.memory_space<semaphore_mem>>
    tpu.wait_dma2 semaphore(%912 : memref<!tpu.dma_semaphore, #tpu.memory_space<semaphore_mem>>) src(%908 : memref<128xf32, #tpu.memory_space<any>>) dst(%910 : memref<128xf32, #tpu.memory_space<vmem>>)
    %c0_i32_888 = arith.constant 0 : i32
    %c7_i32_889 = arith.constant 7 : i32
    %c0_i32_890 = arith.constant 0 : i32
    %c7_i32_891 = arith.constant 7 : i32
    %c0_i32_892 = arith.constant 0 : i32
    %c0_i32_893 = arith.constant 0 : i32
    %913 = tpu.memref_slice %arg2[%c0_i32_888, %c0_i32_893] : memref<50x128xf32, #tpu.memory_space<any>> -> memref<1x128xf32, #tpu.memory_space<any>>
    %914 = tpu.memref_squeeze %913 : memref<1x128xf32, #tpu.memory_space<any>> -> memref<128xf32, #tpu.memory_space<any>>
    %c0_i32_894 = arith.constant 0 : i32
    %915 = tpu.memref_slice %arg6[%c7_i32_889, %c0_i32_890, %c0_i32_894] : memref<8x8x128xf32, #tpu.memory_space<vmem>> -> memref<1x1x128xf32, #tpu.memory_space<vmem>>
    %916 = tpu.memref_squeeze %915 : memref<1x1x128xf32, #tpu.memory_space<vmem>> -> memref<128xf32, #tpu.memory_space<vmem>>
    %917 = tpu.memref_slice %arg7[%c7_i32_891, %c0_i32_892] : memref<8x8x!tpu.dma_semaphore, #tpu.memory_space<semaphore_mem>> -> memref<1x1x!tpu.dma_semaphore, #tpu.memory_space<semaphore_mem>>
    %918 = tpu.memref_squeeze %917 : memref<1x1x!tpu.dma_semaphore, #tpu.memory_space<semaphore_mem>> -> memref<!tpu.dma_semaphore, #tpu.memory_space<semaphore_mem>>
    tpu.wait_dma2 semaphore(%918 : memref<!tpu.dma_semaphore, #tpu.memory_space<semaphore_mem>>) src(%914 : memref<128xf32, #tpu.memory_space<any>>) dst(%916 : memref<128xf32, #tpu.memory_space<vmem>>)
    %c0_i32_895 = arith.constant 0 : i32
    %c7_i32_896 = arith.constant 7 : i32
    %c1_i32_897 = arith.constant 1 : i32
    %c7_i32_898 = arith.constant 7 : i32
    %c1_i32_899 = arith.constant 1 : i32
    %c0_i32_900 = arith.constant 0 : i32
    %919 = tpu.memref_slice %arg2[%c0_i32_895, %c0_i32_900] : memref<50x128xf32, #tpu.memory_space<any>> -> memref<1x128xf32, #tpu.memory_space<any>>
    %920 = tpu.memref_squeeze %919 : memref<1x128xf32, #tpu.memory_space<any>> -> memref<128xf32, #tpu.memory_space<any>>
    %c0_i32_901 = arith.constant 0 : i32
    %921 = tpu.memref_slice %arg6[%c7_i32_896, %c1_i32_897, %c0_i32_901] : memref<8x8x128xf32, #tpu.memory_space<vmem>> -> memref<1x1x128xf32, #tpu.memory_space<vmem>>
    %922 = tpu.memref_squeeze %921 : memref<1x1x128xf32, #tpu.memory_space<vmem>> -> memref<128xf32, #tpu.memory_space<vmem>>
    %923 = tpu.memref_slice %arg7[%c7_i32_898, %c1_i32_899] : memref<8x8x!tpu.dma_semaphore, #tpu.memory_space<semaphore_mem>> -> memref<1x1x!tpu.dma_semaphore, #tpu.memory_space<semaphore_mem>>
    %924 = tpu.memref_squeeze %923 : memref<1x1x!tpu.dma_semaphore, #tpu.memory_space<semaphore_mem>> -> memref<!tpu.dma_semaphore, #tpu.memory_space<semaphore_mem>>
    tpu.wait_dma2 semaphore(%924 : memref<!tpu.dma_semaphore, #tpu.memory_space<semaphore_mem>>) src(%920 : memref<128xf32, #tpu.memory_space<any>>) dst(%922 : memref<128xf32, #tpu.memory_space<vmem>>)
    %c0_i32_902 = arith.constant 0 : i32
    %c7_i32_903 = arith.constant 7 : i32
    %c2_i32_904 = arith.constant 2 : i32
    %c7_i32_905 = arith.constant 7 : i32
    %c2_i32_906 = arith.constant 2 : i32
    %c0_i32_907 = arith.constant 0 : i32
    %925 = tpu.memref_slice %arg2[%c0_i32_902, %c0_i32_907] : memref<50x128xf32, #tpu.memory_space<any>> -> memref<1x128xf32, #tpu.memory_space<any>>
    %926 = tpu.memref_squeeze %925 : memref<1x128xf32, #tpu.memory_space<any>> -> memref<128xf32, #tpu.memory_space<any>>
    %c0_i32_908 = arith.constant 0 : i32
    %927 = tpu.memref_slice %arg6[%c7_i32_903, %c2_i32_904, %c0_i32_908] : memref<8x8x128xf32, #tpu.memory_space<vmem>> -> memref<1x1x128xf32, #tpu.memory_space<vmem>>
    %928 = tpu.memref_squeeze %927 : memref<1x1x128xf32, #tpu.memory_space<vmem>> -> memref<128xf32, #tpu.memory_space<vmem>>
    %929 = tpu.memref_slice %arg7[%c7_i32_905, %c2_i32_906] : memref<8x8x!tpu.dma_semaphore, #tpu.memory_space<semaphore_mem>> -> memref<1x1x!tpu.dma_semaphore, #tpu.memory_space<semaphore_mem>>
    %930 = tpu.memref_squeeze %929 : memref<1x1x!tpu.dma_semaphore, #tpu.memory_space<semaphore_mem>> -> memref<!tpu.dma_semaphore, #tpu.memory_space<semaphore_mem>>
    tpu.wait_dma2 semaphore(%930 : memref<!tpu.dma_semaphore, #tpu.memory_space<semaphore_mem>>) src(%926 : memref<128xf32, #tpu.memory_space<any>>) dst(%928 : memref<128xf32, #tpu.memory_space<vmem>>)
    %c0_i32_909 = arith.constant 0 : i32
    %c7_i32_910 = arith.constant 7 : i32
    %c3_i32_911 = arith.constant 3 : i32
    %c7_i32_912 = arith.constant 7 : i32
    %c3_i32_913 = arith.constant 3 : i32
    %c0_i32_914 = arith.constant 0 : i32
    %931 = tpu.memref_slice %arg2[%c0_i32_909, %c0_i32_914] : memref<50x128xf32, #tpu.memory_space<any>> -> memref<1x128xf32, #tpu.memory_space<any>>
    %932 = tpu.memref_squeeze %931 : memref<1x128xf32, #tpu.memory_space<any>> -> memref<128xf32, #tpu.memory_space<any>>
    %c0_i32_915 = arith.constant 0 : i32
    %933 = tpu.memref_slice %arg6[%c7_i32_910, %c3_i32_911, %c0_i32_915] : memref<8x8x128xf32, #tpu.memory_space<vmem>> -> memref<1x1x128xf32, #tpu.memory_space<vmem>>
    %934 = tpu.memref_squeeze %933 : memref<1x1x128xf32, #tpu.memory_space<vmem>> -> memref<128xf32, #tpu.memory_space<vmem>>
    %935 = tpu.memref_slice %arg7[%c7_i32_912, %c3_i32_913] : memref<8x8x!tpu.dma_semaphore, #tpu.memory_space<semaphore_mem>> -> memref<1x1x!tpu.dma_semaphore, #tpu.memory_space<semaphore_mem>>
    %936 = tpu.memref_squeeze %935 : memref<1x1x!tpu.dma_semaphore, #tpu.memory_space<semaphore_mem>> -> memref<!tpu.dma_semaphore, #tpu.memory_space<semaphore_mem>>
    tpu.wait_dma2 semaphore(%936 : memref<!tpu.dma_semaphore, #tpu.memory_space<semaphore_mem>>) src(%932 : memref<128xf32, #tpu.memory_space<any>>) dst(%934 : memref<128xf32, #tpu.memory_space<vmem>>)
    %c0_i32_916 = arith.constant 0 : i32
    %c7_i32_917 = arith.constant 7 : i32
    %c4_i32_918 = arith.constant 4 : i32
    %c7_i32_919 = arith.constant 7 : i32
    %c4_i32_920 = arith.constant 4 : i32
    %c0_i32_921 = arith.constant 0 : i32
    %937 = tpu.memref_slice %arg2[%c0_i32_916, %c0_i32_921] : memref<50x128xf32, #tpu.memory_space<any>> -> memref<1x128xf32, #tpu.memory_space<any>>
    %938 = tpu.memref_squeeze %937 : memref<1x128xf32, #tpu.memory_space<any>> -> memref<128xf32, #tpu.memory_space<any>>
    %c0_i32_922 = arith.constant 0 : i32
    %939 = tpu.memref_slice %arg6[%c7_i32_917, %c4_i32_918, %c0_i32_922] : memref<8x8x128xf32, #tpu.memory_space<vmem>> -> memref<1x1x128xf32, #tpu.memory_space<vmem>>
    %940 = tpu.memref_squeeze %939 : memref<1x1x128xf32, #tpu.memory_space<vmem>> -> memref<128xf32, #tpu.memory_space<vmem>>
    %941 = tpu.memref_slice %arg7[%c7_i32_919, %c4_i32_920] : memref<8x8x!tpu.dma_semaphore, #tpu.memory_space<semaphore_mem>> -> memref<1x1x!tpu.dma_semaphore, #tpu.memory_space<semaphore_mem>>
    %942 = tpu.memref_squeeze %941 : memref<1x1x!tpu.dma_semaphore, #tpu.memory_space<semaphore_mem>> -> memref<!tpu.dma_semaphore, #tpu.memory_space<semaphore_mem>>
    tpu.wait_dma2 semaphore(%942 : memref<!tpu.dma_semaphore, #tpu.memory_space<semaphore_mem>>) src(%938 : memref<128xf32, #tpu.memory_space<any>>) dst(%940 : memref<128xf32, #tpu.memory_space<vmem>>)
    %c0_i32_923 = arith.constant 0 : i32
    %c7_i32_924 = arith.constant 7 : i32
    %c5_i32_925 = arith.constant 5 : i32
    %c7_i32_926 = arith.constant 7 : i32
    %c5_i32_927 = arith.constant 5 : i32
    %c0_i32_928 = arith.constant 0 : i32
    %943 = tpu.memref_slice %arg2[%c0_i32_923, %c0_i32_928] : memref<50x128xf32, #tpu.memory_space<any>> -> memref<1x128xf32, #tpu.memory_space<any>>
    %944 = tpu.memref_squeeze %943 : memref<1x128xf32, #tpu.memory_space<any>> -> memref<128xf32, #tpu.memory_space<any>>
    %c0_i32_929 = arith.constant 0 : i32
    %945 = tpu.memref_slice %arg6[%c7_i32_924, %c5_i32_925, %c0_i32_929] : memref<8x8x128xf32, #tpu.memory_space<vmem>> -> memref<1x1x128xf32, #tpu.memory_space<vmem>>
    %946 = tpu.memref_squeeze %945 : memref<1x1x128xf32, #tpu.memory_space<vmem>> -> memref<128xf32, #tpu.memory_space<vmem>>
    %947 = tpu.memref_slice %arg7[%c7_i32_926, %c5_i32_927] : memref<8x8x!tpu.dma_semaphore, #tpu.memory_space<semaphore_mem>> -> memref<1x1x!tpu.dma_semaphore, #tpu.memory_space<semaphore_mem>>
    %948 = tpu.memref_squeeze %947 : memref<1x1x!tpu.dma_semaphore, #tpu.memory_space<semaphore_mem>> -> memref<!tpu.dma_semaphore, #tpu.memory_space<semaphore_mem>>
    tpu.wait_dma2 semaphore(%948 : memref<!tpu.dma_semaphore, #tpu.memory_space<semaphore_mem>>) src(%944 : memref<128xf32, #tpu.memory_space<any>>) dst(%946 : memref<128xf32, #tpu.memory_space<vmem>>)
    %c0_i32_930 = arith.constant 0 : i32
    %c7_i32_931 = arith.constant 7 : i32
    %c6_i32_932 = arith.constant 6 : i32
    %c7_i32_933 = arith.constant 7 : i32
    %c6_i32_934 = arith.constant 6 : i32
    %c0_i32_935 = arith.constant 0 : i32
    %949 = tpu.memref_slice %arg2[%c0_i32_930, %c0_i32_935] : memref<50x128xf32, #tpu.memory_space<any>> -> memref<1x128xf32, #tpu.memory_space<any>>
    %950 = tpu.memref_squeeze %949 : memref<1x128xf32, #tpu.memory_space<any>> -> memref<128xf32, #tpu.memory_space<any>>
    %c0_i32_936 = arith.constant 0 : i32
    %951 = tpu.memref_slice %arg6[%c7_i32_931, %c6_i32_932, %c0_i32_936] : memref<8x8x128xf32, #tpu.memory_space<vmem>> -> memref<1x1x128xf32, #tpu.memory_space<vmem>>
    %952 = tpu.memref_squeeze %951 : memref<1x1x128xf32, #tpu.memory_space<vmem>> -> memref<128xf32, #tpu.memory_space<vmem>>
    %953 = tpu.memref_slice %arg7[%c7_i32_933, %c6_i32_934] : memref<8x8x!tpu.dma_semaphore, #tpu.memory_space<semaphore_mem>> -> memref<1x1x!tpu.dma_semaphore, #tpu.memory_space<semaphore_mem>>
    %954 = tpu.memref_squeeze %953 : memref<1x1x!tpu.dma_semaphore, #tpu.memory_space<semaphore_mem>> -> memref<!tpu.dma_semaphore, #tpu.memory_space<semaphore_mem>>
    tpu.wait_dma2 semaphore(%954 : memref<!tpu.dma_semaphore, #tpu.memory_space<semaphore_mem>>) src(%950 : memref<128xf32, #tpu.memory_space<any>>) dst(%952 : memref<128xf32, #tpu.memory_space<vmem>>)
    %c0_i32_937 = arith.constant 0 : i32
    %c7_i32_938 = arith.constant 7 : i32
    %c7_i32_939 = arith.constant 7 : i32
    %c7_i32_940 = arith.constant 7 : i32
    %c7_i32_941 = arith.constant 7 : i32
    %c0_i32_942 = arith.constant 0 : i32
    %955 = tpu.memref_slice %arg2[%c0_i32_937, %c0_i32_942] : memref<50x128xf32, #tpu.memory_space<any>> -> memref<1x128xf32, #tpu.memory_space<any>>
    %956 = tpu.memref_squeeze %955 : memref<1x128xf32, #tpu.memory_space<any>> -> memref<128xf32, #tpu.memory_space<any>>
    %c0_i32_943 = arith.constant 0 : i32
    %957 = tpu.memref_slice %arg6[%c7_i32_938, %c7_i32_939, %c0_i32_943] : memref<8x8x128xf32, #tpu.memory_space<vmem>> -> memref<1x1x128xf32, #tpu.memory_space<vmem>>
    %958 = tpu.memref_squeeze %957 : memref<1x1x128xf32, #tpu.memory_space<vmem>> -> memref<128xf32, #tpu.memory_space<vmem>>
    %959 = tpu.memref_slice %arg7[%c7_i32_940, %c7_i32_941] : memref<8x8x!tpu.dma_semaphore, #tpu.memory_space<semaphore_mem>> -> memref<1x1x!tpu.dma_semaphore, #tpu.memory_space<semaphore_mem>>
    %960 = tpu.memref_squeeze %959 : memref<1x1x!tpu.dma_semaphore, #tpu.memory_space<semaphore_mem>> -> memref<!tpu.dma_semaphore, #tpu.memory_space<semaphore_mem>>
    tpu.wait_dma2 semaphore(%960 : memref<!tpu.dma_semaphore, #tpu.memory_space<semaphore_mem>>) src(%956 : memref<128xf32, #tpu.memory_space<any>>) dst(%958 : memref<128xf32, #tpu.memory_space<vmem>>)
    %c0_944 = arith.constant 0 : index
    %c0_945 = arith.constant 0 : index
    %c0_946 = arith.constant 0 : index
    %961 = vector.load %arg6[%c0_944, %c0_945, %c0_946] : memref<8x8x128xf32, #tpu.memory_space<vmem>>, vector<8x8x128xf32>
    %cst = arith.constant dense<0.000000e+00> : vector<8x128xf32>
    %962 = vector.multi_reduction <add>, %961, %cst [1] : vector<8x8x128xf32> to vector<8x128xf32>
    %c0_947 = arith.constant 0 : index
    %c0_948 = arith.constant 0 : index
    %963 = vector.load %arg3[%c0_947, %c0_948] : memref<128x2xf32, #tpu.memory_space<vmem>>, vector<128x2xf32>
    %cst_949 = arith.constant dense<0.000000e+00> : vector<8x2xf32>
    %964 = tpu.matmul %962, %963, %cst_949 {dimension_numbers = #tpu.dot_dimension_numbers<[1], [0], [0], [1], [0, 0, 1, 1], [], []>} : vector<8x128xf32>, vector<128x2xf32>, vector<8x2xf32> -> vector<8x2xf32>
    %c0_950 = arith.constant 0 : index
    %c0_951 = arith.constant 0 : index
    %965 = vector.load %arg4[%c0_950, %c0_951] : memref<1x2xf32, #tpu.memory_space<vmem>>, vector<1x2xf32>
    %966 = vector.broadcast %965 : vector<1x2xf32> to vector<8x2xf32>
    %967 = arith.addf %964, %966 : vector<8x2xf32>
    %c0_952 = arith.constant 0 : index
    %c0_953 = arith.constant 0 : index
    %968 = vector.load %arg5[%c0_952, %c0_953] : memref<8x2xf32, #tpu.memory_space<vmem>>, vector<8x2xf32>
    tpu.vector_store %arg5[%c0_952, %c0_953], %967 {strides = array<i32>} : memref<8x2xf32, #tpu.memory_space<vmem>>, vector<8x2xf32>,
    return
  }
  func.func @transform_1(%arg0: i32, %arg1: memref<8x8xi32, #tpu.memory_space<smem>>) -> (i32, i32) {
    %c0_i32 = arith.constant 0 : i32
    %c0_i32_0 = arith.constant 0 : i32
    %c0_i32_1 = arith.constant 0 : i32
    return %c0_i32, %c0_i32_0 : i32, i32
  }
  func.func @transform_2(%arg0: i32, %arg1: memref<8x8xi32, #tpu.memory_space<smem>>) -> (i32, i32) {
    %c0_i32 = arith.constant 0 : i32
    %c0_i32_0 = arith.constant 0 : i32
    %c0_i32_1 = arith.constant 0 : i32
    return %c0_i32, %c0_i32_0 : i32, i32
  }
  func.func @transform_3(%arg0: i32, %arg1: memref<8x8xi32, #tpu.memory_space<smem>>) -> (i32, i32) {
    %c0_i32 = arith.constant 0 : i32
    %c0_i32_0 = arith.constant 0 : i32
    return %arg0, %c0_i32 : i32, i32
  }
}

</mosaic_0001>

<llo_original>
// kernel: tpu_custom_call.1
$region0: #{tpu_custom_call.1}
  #allocation0 [shape = 'u32[]', space=smem, size = 0x4, offset = 0x4, fixed_abs, tag = 'smem constant byte address 0x4 - core index']
  #allocation1 [shape = 'u32[72,128]{1,0:T(1,128)}', space=vmem, size = 0x9000, scoped, tag = 'internal scratch']
  #allocation2 [shape = 'f32[8,8,128]{2,1,0:T(8,128)}', space=vmem, size = 0x8000, scoped, tag = 'scratch operand']
  #allocation3 [shape = 's32[64]{0}', space=sflag, size = 0x100, scoped, tag = 'scratch operand']
  #allocation4 [shape = 's32[1]{0}', space=sflag, size = 0x4, scoped, tag = 'scoped memory for tpu_custom_call.1']
  #allocation5 [shape = 'u8[4096]{0}', space=smem, size = 0x1000, scoped, tag = 'prefetched SMEM operand 0']
  #allocation6 [shape = 's32[]', space=sflag, size = 0x4, offset = 0, fixed_abs, tag = 'sflag constant byte address 0x0 - dummy sync flag']
  #allocation7 [shape = 's32[]', space=sflag, size = 0x4, offset = 0, fixed_abs, tag = 'sflag constant byte address 0x0 - dummy sync flag']
  #allocation8 [shape = 's32[]', space=sflag, size = 0x4, offset = 0, fixed_abs, tag = 'sflag constant byte address 0x0 - dummy sync flag']
  #allocation9 [shape = 's32[]', space=sflag, size = 0x4, offset = 0, fixed_abs, tag = 'sflag constant byte address 0x0 - dummy sync flag']
  #allocation10 [shape = 's32[]', space=sflag, size = 0x4, offset = 0, fixed_abs, tag = 'sflag constant byte address 0x0 - dummy sync flag']
  #allocation11 [shape = 's32[]', space=sflag, size = 0x4, offset = 0, fixed_abs, tag = 'sflag constant byte address 0x0 - dummy sync flag']
  #allocation12 [shape = 's32[]', space=sflag, size = 0x4, offset = 0, fixed_abs, tag = 'sflag constant byte address 0x0 - dummy sync flag']
  #allocation13 [shape = 's32[]', space=sflag, size = 0x4, offset = 0, fixed_abs, tag = 'sflag constant byte address 0x0 - dummy sync flag']
  #allocation14 [shape = 's32[]', space=sflag, size = 0x4, offset = 0, fixed_abs, tag = 'sflag constant byte address 0x0 - dummy sync flag']
  #allocation15 [shape = 's32[]', space=sflag, size = 0x4, offset = 0, fixed_abs, tag = 'sflag constant byte address 0x0 - dummy sync flag']
  #allocation16 [shape = 's32[]', space=sflag, size = 0x4, offset = 0, fixed_abs, tag = 'sflag constant byte address 0x0 - dummy sync flag']
  #allocation17 [shape = 's32[]', space=sflag, size = 0x4, offset = 0, fixed_abs, tag = 'sflag constant byte address 0x0 - dummy sync flag']
  #allocation18 [shape = 's32[]', space=sflag, size = 0x4, offset = 0, fixed_abs, tag = 'sflag constant byte address 0x0 - dummy sync flag']
  #allocation19 [shape = 's32[]', space=sflag, size = 0x4, offset = 0, fixed_abs, tag = 'sflag constant byte address 0x0 - dummy sync flag']
  #allocation20 [shape = 's32[]', space=sflag, size = 0x4, offset = 0, fixed_abs, tag = 'sflag constant byte address 0x0 - dummy sync flag']
  #allocation21 [shape = 's32[]', space=sflag, size = 0x4, offset = 0, fixed_abs, tag = 'sflag constant byte address 0x0 - dummy sync flag']
  #allocation22 [shape = 's32[]', space=sflag, size = 0x4, offset = 0, fixed_abs, tag = 'sflag constant byte address 0x0 - dummy sync flag']
  #allocation23 [shape = 's32[]', space=sflag, size = 0x4, offset = 0, fixed_abs, tag = 'sflag constant byte address 0x0 - dummy sync flag']
  #allocation24 [shape = 's32[]', space=sflag, size = 0x4, offset = 0, fixed_abs, tag = 'sflag constant byte address 0x0 - dummy sync flag']
  #allocation25 [shape = 's32[]', space=sflag, size = 0x4, offset = 0, fixed_abs, tag = 'sflag constant byte address 0x0 - dummy sync flag']
  #allocation26 [shape = 's32[]', space=sflag, size = 0x4, offset = 0, fixed_abs, tag = 'sflag constant byte address 0x0 - dummy sync flag']
  #allocation27 [shape = 's32[]', space=sflag, size = 0x4, offset = 0, fixed_abs, tag = 'sflag constant byte address 0x0 - dummy sync flag']
  #allocation28 [shape = 's32[]', space=sflag, size = 0x4, offset = 0, fixed_abs, tag = 'sflag constant byte address 0x0 - dummy sync flag']
  #allocation29 [shape = 's32[]', space=sflag, size = 0x4, offset = 0, fixed_abs, tag = 'sflag constant byte address 0x0 - dummy sync flag']
  #allocation30 [shape = 's32[]', space=sflag, size = 0x4, offset = 0, fixed_abs, tag = 'sflag constant byte address 0x0 - dummy sync flag']
  #allocation31 [shape = 's32[]', space=sflag, size = 0x4, offset = 0, fixed_abs, tag = 'sflag constant byte address 0x0 - dummy sync flag']
  #allocation32 [shape = 's32[]', space=sflag, size = 0x4, offset = 0, fixed_abs, tag = 'sflag constant byte address 0x0 - dummy sync flag']
  #allocation33 [shape = 's32[]', space=sflag, size = 0x4, offset = 0, fixed_abs, tag = 'sflag constant byte address 0x0 - dummy sync flag']
  #allocation34 [shape = 's32[]', space=sflag, size = 0x4, offset = 0, fixed_abs, tag = 'sflag constant byte address 0x0 - dummy sync flag']
  #allocation35 [shape = 's32[]', space=sflag, size = 0x4, offset = 0, fixed_abs, tag = 'sflag constant byte address 0x0 - dummy sync flag']
  #allocation36 [shape = 's32[]', space=sflag, size = 0x4, offset = 0, fixed_abs, tag = 'sflag constant byte address 0x0 - dummy sync flag']
  #allocation37 [shape = 's32[]', space=sflag, size = 0x4, offset = 0, fixed_abs, tag = 'sflag constant byte address 0x0 - dummy sync flag']
  #allocation38 [shape = 's32[]', space=sflag, size = 0x4, offset = 0, fixed_abs, tag = 'sflag constant byte address 0x0 - dummy sync flag']
  #allocation39 [shape = 's32[]', space=sflag, size = 0x4, offset = 0, fixed_abs, tag = 'sflag constant byte address 0x0 - dummy sync flag']
  #allocation40 [shape = 's32[]', space=sflag, size = 0x4, offset = 0, fixed_abs, tag = 'sflag constant byte address 0x0 - dummy sync flag']
  #allocation41 [shape = 's32[]', space=sflag, size = 0x4, offset = 0, fixed_abs, tag = 'sflag constant byte address 0x0 - dummy sync flag']
  #allocation42 [shape = 's32[]', space=sflag, size = 0x4, offset = 0, fixed_abs, tag = 'sflag constant byte address 0x0 - dummy sync flag']
  #allocation43 [shape = 's32[]', space=sflag, size = 0x4, offset = 0, fixed_abs, tag = 'sflag constant byte address 0x0 - dummy sync flag']
  #allocation44 [shape = 's32[]', space=sflag, size = 0x4, offset = 0, fixed_abs, tag = 'sflag constant byte address 0x0 - dummy sync flag']
  #allocation45 [shape = 's32[]', space=sflag, size = 0x4, offset = 0, fixed_abs, tag = 'sflag constant byte address 0x0 - dummy sync flag']
  #allocation46 [shape = 's32[]', space=sflag, size = 0x4, offset = 0, fixed_abs, tag = 'sflag constant byte address 0x0 - dummy sync flag']
  #allocation47 [shape = 's32[]', space=sflag, size = 0x4, offset = 0, fixed_abs, tag = 'sflag constant byte address 0x0 - dummy sync flag']
  #allocation48 [shape = 's32[]', space=sflag, size = 0x4, offset = 0, fixed_abs, tag = 'sflag constant byte address 0x0 - dummy sync flag']
  #allocation49 [shape = 's32[]', space=sflag, size = 0x4, offset = 0, fixed_abs, tag = 'sflag constant byte address 0x0 - dummy sync flag']
  #allocation50 [shape = 's32[]', space=sflag, size = 0x4, offset = 0, fixed_abs, tag = 'sflag constant byte address 0x0 - dummy sync flag']
  #allocation51 [shape = 's32[]', space=sflag, size = 0x4, offset = 0, fixed_abs, tag = 'sflag constant byte address 0x0 - dummy sync flag']
  #allocation52 [shape = 's32[]', space=sflag, size = 0x4, offset = 0, fixed_abs, tag = 'sflag constant byte address 0x0 - dummy sync flag']
  #allocation53 [shape = 's32[]', space=sflag, size = 0x4, offset = 0, fixed_abs, tag = 'sflag constant byte address 0x0 - dummy sync flag']
  #allocation54 [shape = 's32[]', space=sflag, size = 0x4, offset = 0, fixed_abs, tag = 'sflag constant byte address 0x0 - dummy sync flag']
  #allocation55 [shape = 's32[]', space=sflag, size = 0x4, offset = 0, fixed_abs, tag = 'sflag constant byte address 0x0 - dummy sync flag']
  #allocation56 [shape = 's32[]', space=sflag, size = 0x4, offset = 0, fixed_abs, tag = 'sflag constant byte address 0x0 - dummy sync flag']
  #allocation57 [shape = 's32[]', space=sflag, size = 0x4, offset = 0, fixed_abs, tag = 'sflag constant byte address 0x0 - dummy sync flag']
  #allocation58 [shape = 's32[]', space=sflag, size = 0x4, offset = 0, fixed_abs, tag = 'sflag constant byte address 0x0 - dummy sync flag']
  #allocation59 [shape = 's32[]', space=sflag, size = 0x4, offset = 0, fixed_abs, tag = 'sflag constant byte address 0x0 - dummy sync flag']
  #allocation60 [shape = 's32[]', space=sflag, size = 0x4, offset = 0, fixed_abs, tag = 'sflag constant byte address 0x0 - dummy sync flag']
  #allocation61 [shape = 's32[]', space=sflag, size = 0x4, offset = 0, fixed_abs, tag = 'sflag constant byte address 0x0 - dummy sync flag']
  #allocation62 [shape = 's32[]', space=sflag, size = 0x4, offset = 0, fixed_abs, tag = 'sflag constant byte address 0x0 - dummy sync flag']
  #allocation63 [shape = 's32[]', space=sflag, size = 0x4, offset = 0, fixed_abs, tag = 'sflag constant byte address 0x0 - dummy sync flag']
  #allocation64 [shape = 's32[]', space=sflag, size = 0x4, offset = 0, fixed_abs, tag = 'sflag constant byte address 0x0 - dummy sync flag']
  #allocation65 [shape = 's32[]', space=sflag, size = 0x4, offset = 0, fixed_abs, tag = 'sflag constant byte address 0x0 - dummy sync flag']
  #allocation66 [shape = 's32[]', space=sflag, size = 0x4, offset = 0, fixed_abs, tag = 'sflag constant byte address 0x0 - dummy sync flag']
  #allocation67 [shape = 's32[]', space=sflag, size = 0x4, offset = 0, fixed_abs, tag = 'sflag constant byte address 0x0 - dummy sync flag']
  #allocation68 [shape = 's32[]', space=sflag, size = 0x4, offset = 0, fixed_abs, tag = 'sflag constant byte address 0x0 - dummy sync flag']
  #allocation69 [shape = 's32[]', space=sflag, size = 0x4, offset = 0, fixed_abs, tag = 'sflag constant byte address 0x0 - dummy sync flag']
  %s0 = inlined_call_operand.vmem [shape: s32[8,8], index: 0, kind: input, shape index: {}]
  %s1 = inlined_call_operand.vmem [shape: f32[50,128], index: 1, kind: input, shape index: {}]
  %s2 = inlined_call_operand.vmem [shape: f32[128,2], index: 2, kind: input, shape index: {}]
  %s3 = inlined_call_operand.vmem [shape: f32[1,2], index: 3, kind: input, shape index: {}]
  %s4 = inlined_call_operand.vmem [shape: f32[8,2], index: 4, kind: output, shape index: {}]
  %s5 = sld [smem:[#allocation0]]
  $region1938: #{tpu_custom_call.1} parent=0
    _
  %s7 = ssub.s32 1, %s5
  %s8 = scalar_select 0, %s7, %s5
  %s10 = sshll.u32 %s0, 4
  %s11 = int_to_ptr.vmem [resolvable:$true] %s10
  %13 = dma.vmem_to_smem %s11, 128, [#allocation5], [#allocation4]
  %15 = dma.done [#allocation4], 128
  %16 = sfence
  // Predicated region
  $region2: #{tpu_custom_call.1} parent=0 // pred_check
    _
  $region3: #{tpu_custom_call.1} parent=0 // pred_check_branch
    %18 = sbr.rel (0) target = $region5
  $region4: #{tpu_custom_call.1} parent=0 // pred_region
    _
  $region5: #{tpu_custom_call.1} parent=0 // pred_fallthru
    _
  // Predicated region
  $region6: #{tpu_custom_call.1} parent=0 // pred_check
    _
  $region7: #{tpu_custom_call.1} parent=0 // pred_check_branch
    %20 = sbr.rel (0) target = $region9
  $region8: #{tpu_custom_call.1} parent=0 // pred_region
    _
  $region9: #{tpu_custom_call.1} parent=0 // pred_fallthru
    _
  %s21 = smul.u32 0, 8
  %s22 = smul.u32 %s21, 128
  %s23 = sld [smem:[#allocation5 + %s22]]
  %s24 = scalar_lea.vmem %s1, %s23
  // Predicated region
  $region10: #{tpu_custom_call.1} parent=0 // pred_check
    _
  $region11: #{tpu_custom_call.1} parent=0 // pred_check_branch
    %26 = sbr.rel target = $region13
  $region12: #{tpu_custom_call.1} parent=0 // pred_region
    // Predicated region
    $region25: #{tpu_custom_call.1} parent=12 // pred_check
      _
    $region26: #{tpu_custom_call.1} parent=12 // pred_check_branch
      %42 = sbr.rel (0) target = $region28
    $region27: #{tpu_custom_call.1} parent=12 // pred_region
      %s44 = ssub.s32 2, 1
      loop: start=0, step=1, limit=1
      $region29: #{tpu_custom_call.1} parent=27 // loop_pre_header
        _
      $region30: #{tpu_custom_call.1} parent=27 // loop_header
        %s46 = sphi 0, %s50
        %p47 = scmp.ge.s32.totalorder %s46, 1
        %s51 = sphi %s24, %s24
        %s52 = sphi [#allocation2], [#allocation2]
      $region31: #{tpu_custom_call.1} parent=27 // loop_header_branch
        %49 = sbr.rel (%p47) target = $region35
      $region32: #{tpu_custom_call.1} parent=27 // loop_body
        %v53 = vld [vmem:[%s51] sm:%s44]
        %54 = vst [vmem:[%s52] sm:%s44] %v53
      $region33: #{tpu_custom_call.1} parent=27 // loop_footer
        %s50 = sadd.s32 1, %s46
      $region34: #{tpu_custom_call.1} parent=27 // loop_footer_branch
        %45 = sbr.rel target = $region30
      $region35: #{tpu_custom_call.1} parent=27 // loop_exit
        _
    $region28: #{tpu_custom_call.1} parent=12 // pred_fallthru
      _
  $region13: #{tpu_custom_call.1} parent=0 // pred_fallthru
    _
  // Predicated region
  $region14: #{tpu_custom_call.1} parent=0 // pred_check
    _
  $region15: #{tpu_custom_call.1} parent=0 // pred_check_branch
    %28 = sbr.rel (0) target = $region17
  $region16: #{tpu_custom_call.1} parent=0 // pred_region
    %s30 = ssub.s32 2, 1
    loop: start=0, step=1, limit=1
    $region18: #{tpu_custom_call.1} parent=16 // loop_pre_header
      _
    $region19: #{tpu_custom_call.1} parent=16 // loop_header
      %s32 = sphi 0, %s36
      %p33 = scmp.ge.s32.totalorder %s32, 1
      %s37 = sphi %s24, %s24
      %s38 = sphi [#allocation2], [#allocation2]
    $region20: #{tpu_custom_call.1} parent=16 // loop_header_branch
      %35 = sbr.rel (%p33) target = $region24
    $region21: #{tpu_custom_call.1} parent=16 // loop_body
      %v39 = vld [vmem:[%s37] sm:%s30]
      %40 = vst [vmem:[%s38] sm:%s30] %v39
    $region22: #{tpu_custom_call.1} parent=16 // loop_footer
      %s36 = sadd.s32 1, %s32
    $region23: #{tpu_custom_call.1} parent=16 // loop_footer_branch
      %31 = sbr.rel target = $region19
    $region24: #{tpu_custom_call.1} parent=16 // loop_exit
      _
  $region17: #{tpu_custom_call.1} parent=0 // pred_fallthru
    _
  // Predicated region
  $region36: #{tpu_custom_call.1} parent=0 // pred_check
    _
  $region37: #{tpu_custom_call.1} parent=0 // pred_check_branch
    %57 = sbr.rel (0) target = $region39
  $region38: #{tpu_custom_call.1} parent=0 // pred_region
    %58 = vsyncadd [#allocation3], 16
  $region39: #{tpu_custom_call.1} parent=0 // pred_fallthru
    _
  %s59 = sadd.s32 %s22, 1
  %s60 = sld [smem:[#allocation5 + %s59]]
  %s61 = scalar_lea.vmem %s1, %s60
  %s62 = scalar_lea.vmem [#allocation2], 1
  %s63 = scalar_lea.sflag [#allocation3], 1
  // Predicated region
  $region40: #{tpu_custom_call.1} parent=0 // pred_check
    _
  $region41: #{tpu_custom_call.1} parent=0 // pred_check_branch
    %65 = sbr.rel target = $region43
  $region42: #{tpu_custom_call.1} parent=0 // pred_region
    // Predicated region
    $region55: #{tpu_custom_call.1} parent=42 // pred_check
      _
    $region56: #{tpu_custom_call.1} parent=42 // pred_check_branch
      %81 = sbr.rel (0) target = $region58
    $region57: #{tpu_custom_call.1} parent=42 // pred_region
      %s83 = ssub.s32 2, 1
      loop: start=0, step=1, limit=1
      $region59: #{tpu_custom_call.1} parent=57 // loop_pre_header
        _
      $region60: #{tpu_custom_call.1} parent=57 // loop_header
        %s85 = sphi 0, %s89
        %p86 = scmp.ge.s32.totalorder %s85, 1
        %s90 = sphi %s61, %s61
        %s91 = sphi %s62, %s62
      $region61: #{tpu_custom_call.1} parent=57 // loop_header_branch
        %88 = sbr.rel (%p86) target = $region65
      $region62: #{tpu_custom_call.1} parent=57 // loop_body
        %v92 = vld [vmem:[%s90] sm:%s83]
        %93 = vst [vmem:[%s91] sm:%s83] %v92
      $region63: #{tpu_custom_call.1} parent=57 // loop_footer
        %s89 = sadd.s32 1, %s85
      $region64: #{tpu_custom_call.1} parent=57 // loop_footer_branch
        %84 = sbr.rel target = $region60
      $region65: #{tpu_custom_call.1} parent=57 // loop_exit
        _
    $region58: #{tpu_custom_call.1} parent=42 // pred_fallthru
      _
  $region43: #{tpu_custom_call.1} parent=0 // pred_fallthru
    _
  // Predicated region
  $region44: #{tpu_custom_call.1} parent=0 // pred_check
    _
  $region45: #{tpu_custom_call.1} parent=0 // pred_check_branch
    %67 = sbr.rel (0) target = $region47
  $region46: #{tpu_custom_call.1} parent=0 // pred_region
    %s69 = ssub.s32 2, 1
    loop: start=0, step=1, limit=1
    $region48: #{tpu_custom_call.1} parent=46 // loop_pre_header
      _
    $region49: #{tpu_custom_call.1} parent=46 // loop_header
      %s71 = sphi 0, %s75
      %p72 = scmp.ge.s32.totalorder %s71, 1
      %s76 = sphi %s61, %s61
      %s77 = sphi %s62, %s62
    $region50: #{tpu_custom_call.1} parent=46 // loop_header_branch
      %74 = sbr.rel (%p72) target = $region54
    $region51: #{tpu_custom_call.1} parent=46 // loop_body
      %v78 = vld [vmem:[%s76] sm:%s69]
      %79 = vst [vmem:[%s77] sm:%s69] %v78
    $region52: #{tpu_custom_call.1} parent=46 // loop_footer
      %s75 = sadd.s32 1, %s71
    $region53: #{tpu_custom_call.1} parent=46 // loop_footer_branch
      %70 = sbr.rel target = $region49
    $region54: #{tpu_custom_call.1} parent=46 // loop_exit
      _
  $region47: #{tpu_custom_call.1} parent=0 // pred_fallthru
    _
  // Predicated region
  $region66: #{tpu_custom_call.1} parent=0 // pred_check
    _
  $region67: #{tpu_custom_call.1} parent=0 // pred_check_branch
    %96 = sbr.rel (0) target = $region69
  $region68: #{tpu_custom_call.1} parent=0 // pred_region
    %97 = vsyncadd %s63, 16
  $region69: #{tpu_custom_call.1} parent=0 // pred_fallthru
    _
  %s98 = sadd.s32 %s22, 2
  %s99 = sld [smem:[#allocation5 + %s98]]
  %s100 = scalar_lea.vmem %s1, %s99
  %s101 = scalar_lea.vmem [#allocation2], 2
  %s102 = scalar_lea.sflag [#allocation3], 2
  // Predicated region
  $region70: #{tpu_custom_call.1} parent=0 // pred_check
    _
  $region71: #{tpu_custom_call.1} parent=0 // pred_check_branch
    %104 = sbr.rel target = $region73
  $region72: #{tpu_custom_call.1} parent=0 // pred_region
    // Predicated region
    $region85: #{tpu_custom_call.1} parent=72 // pred_check
      _
    $region86: #{tpu_custom_call.1} parent=72 // pred_check_branch
      %120 = sbr.rel (0) target = $region88
    $region87: #{tpu_custom_call.1} parent=72 // pred_region
      %s122 = ssub.s32 2, 1
      loop: start=0, step=1, limit=1
      $region89: #{tpu_custom_call.1} parent=87 // loop_pre_header
        _
      $region90: #{tpu_custom_call.1} parent=87 // loop_header
        %s124 = sphi 0, %s128
        %p125 = scmp.ge.s32.totalorder %s124, 1
        %s129 = sphi %s100, %s100
        %s130 = sphi %s101, %s101
      $region91: #{tpu_custom_call.1} parent=87 // loop_header_branch
        %127 = sbr.rel (%p125) target = $region95
      $region92: #{tpu_custom_call.1} parent=87 // loop_body
        %v131 = vld [vmem:[%s129] sm:%s122]
        %132 = vst [vmem:[%s130] sm:%s122] %v131
      $region93: #{tpu_custom_call.1} parent=87 // loop_footer
        %s128 = sadd.s32 1, %s124
      $region94: #{tpu_custom_call.1} parent=87 // loop_footer_branch
        %123 = sbr.rel target = $region90
      $region95: #{tpu_custom_call.1} parent=87 // loop_exit
        _
    $region88: #{tpu_custom_call.1} parent=72 // pred_fallthru
      _
  $region73: #{tpu_custom_call.1} parent=0 // pred_fallthru
    _
  // Predicated region
  $region74: #{tpu_custom_call.1} parent=0 // pred_check
    _
  $region75: #{tpu_custom_call.1} parent=0 // pred_check_branch
    %106 = sbr.rel (0) target = $region77
  $region76: #{tpu_custom_call.1} parent=0 // pred_region
    %s108 = ssub.s32 2, 1
    loop: start=0, step=1, limit=1
    $region78: #{tpu_custom_call.1} parent=76 // loop_pre_header
      _
    $region79: #{tpu_custom_call.1} parent=76 // loop_header
      %s110 = sphi 0, %s114
      %p111 = scmp.ge.s32.totalorder %s110, 1
      %s115 = sphi %s100, %s100
      %s116 = sphi %s101, %s101
    $region80: #{tpu_custom_call.1} parent=76 // loop_header_branch
      %113 = sbr.rel (%p111) target = $region84
    $region81: #{tpu_custom_call.1} parent=76 // loop_body
      %v117 = vld [vmem:[%s115] sm:%s108]
      %118 = vst [vmem:[%s116] sm:%s108] %v117
    $region82: #{tpu_custom_call.1} parent=76 // loop_footer
      %s114 = sadd.s32 1, %s110
    $region83: #{tpu_custom_call.1} parent=76 // loop_footer_branch
      %109 = sbr.rel target = $region79
    $region84: #{tpu_custom_call.1} parent=76 // loop_exit
      _
  $region77: #{tpu_custom_call.1} parent=0 // pred_fallthru
    _
  // Predicated region
  $region96: #{tpu_custom_call.1} parent=0 // pred_check
    _
  $region97: #{tpu_custom_call.1} parent=0 // pred_check_branch
    %135 = sbr.rel (0) target = $region99
  $region98: #{tpu_custom_call.1} parent=0 // pred_region
    %136 = vsyncadd %s102, 16
  $region99: #{tpu_custom_call.1} parent=0 // pred_fallthru
    _
  %s137 = sadd.s32 %s22, 3
  %s138 = sld [smem:[#allocation5 + %s137]]
  %s139 = scalar_lea.vmem %s1, %s138
  %s140 = scalar_lea.vmem [#allocation2], 3
  %s141 = scalar_lea.sflag [#allocation3], 3
  // Predicated region
  $region100: #{tpu_custom_call.1} parent=0 // pred_check
    _
  $region101: #{tpu_custom_call.1} parent=0 // pred_check_branch
    %143 = sbr.rel target = $region103
  $region102: #{tpu_custom_call.1} parent=0 // pred_region
    // Predicated region
    $region115: #{tpu_custom_call.1} parent=102 // pred_check
      _
    $region116: #{tpu_custom_call.1} parent=102 // pred_check_branch
      %159 = sbr.rel (0) target = $region118
    $region117: #{tpu_custom_call.1} parent=102 // pred_region
      %s161 = ssub.s32 2, 1
      loop: start=0, step=1, limit=1
      $region119: #{tpu_custom_call.1} parent=117 // loop_pre_header
        _
      $region120: #{tpu_custom_call.1} parent=117 // loop_header
        %s163 = sphi 0, %s167
        %p164 = scmp.ge.s32.totalorder %s163, 1
        %s168 = sphi %s139, %s139
        %s169 = sphi %s140, %s140
      $region121: #{tpu_custom_call.1} parent=117 // loop_header_branch
        %166 = sbr.rel (%p164) target = $region125
      $region122: #{tpu_custom_call.1} parent=117 // loop_body
        %v170 = vld [vmem:[%s168] sm:%s161]
        %171 = vst [vmem:[%s169] sm:%s161] %v170
      $region123: #{tpu_custom_call.1} parent=117 // loop_footer
        %s167 = sadd.s32 1, %s163
      $region124: #{tpu_custom_call.1} parent=117 // loop_footer_branch
        %162 = sbr.rel target = $region120
      $region125: #{tpu_custom_call.1} parent=117 // loop_exit
        _
    $region118: #{tpu_custom_call.1} parent=102 // pred_fallthru
      _
  $region103: #{tpu_custom_call.1} parent=0 // pred_fallthru
    _
  // Predicated region
  $region104: #{tpu_custom_call.1} parent=0 // pred_check
    _
  $region105: #{tpu_custom_call.1} parent=0 // pred_check_branch
    %145 = sbr.rel (0) target = $region107
  $region106: #{tpu_custom_call.1} parent=0 // pred_region
    %s147 = ssub.s32 2, 1
    loop: start=0, step=1, limit=1
    $region108: #{tpu_custom_call.1} parent=106 // loop_pre_header
      _
    $region109: #{tpu_custom_call.1} parent=106 // loop_header
      %s149 = sphi 0, %s153
      %p150 = scmp.ge.s32.totalorder %s149, 1
      %s154 = sphi %s139, %s139
      %s155 = sphi %s140, %s140
    $region110: #{tpu_custom_call.1} parent=106 // loop_header_branch
      %152 = sbr.rel (%p150) target = $region114
    $region111: #{tpu_custom_call.1} parent=106 // loop_body
      %v156 = vld [vmem:[%s154] sm:%s147]
      %157 = vst [vmem:[%s155] sm:%s147] %v156
    $region112: #{tpu_custom_call.1} parent=106 // loop_footer
      %s153 = sadd.s32 1, %s149
    $region113: #{tpu_custom_call.1} parent=106 // loop_footer_branch
      %148 = sbr.rel target = $region109
    $region114: #{tpu_custom_call.1} parent=106 // loop_exit
      _
  $region107: #{tpu_custom_call.1} parent=0 // pred_fallthru
    _
  // Predicated region
  $region126: #{tpu_custom_call.1} parent=0 // pred_check
    _
  $region127: #{tpu_custom_call.1} parent=0 // pred_check_branch
    %174 = sbr.rel (0) target = $region129
  $region128: #{tpu_custom_call.1} parent=0 // pred_region
    %175 = vsyncadd %s141, 16
  $region129: #{tpu_custom_call.1} parent=0 // pred_fallthru
    _
  %s176 = sadd.s32 %s22, 4
  %s177 = sld [smem:[#allocation5 + %s176]]
  %s178 = scalar_lea.vmem %s1, %s177
  %s179 = scalar_lea.vmem [#allocation2], 4
  %s180 = scalar_lea.sflag [#allocation3], 4
  // Predicated region
  $region130: #{tpu_custom_call.1} parent=0 // pred_check
    _
  $region131: #{tpu_custom_call.1} parent=0 // pred_check_branch
    %182 = sbr.rel target = $region133
  $region132: #{tpu_custom_call.1} parent=0 // pred_region
    // Predicated region
    $region145: #{tpu_custom_call.1} parent=132 // pred_check
      _
    $region146: #{tpu_custom_call.1} parent=132 // pred_check_branch
      %198 = sbr.rel (0) target = $region148
    $region147: #{tpu_custom_call.1} parent=132 // pred_region
      %s200 = ssub.s32 2, 1
      loop: start=0, step=1, limit=1
      $region149: #{tpu_custom_call.1} parent=147 // loop_pre_header
        _
      $region150: #{tpu_custom_call.1} parent=147 // loop_header
        %s202 = sphi 0, %s206
        %p203 = scmp.ge.s32.totalorder %s202, 1
        %s207 = sphi %s178, %s178
        %s208 = sphi %s179, %s179
      $region151: #{tpu_custom_call.1} parent=147 // loop_header_branch
        %205 = sbr.rel (%p203) target = $region155
      $region152: #{tpu_custom_call.1} parent=147 // loop_body
        %v209 = vld [vmem:[%s207] sm:%s200]
        %210 = vst [vmem:[%s208] sm:%s200] %v209
      $region153: #{tpu_custom_call.1} parent=147 // loop_footer
        %s206 = sadd.s32 1, %s202
      $region154: #{tpu_custom_call.1} parent=147 // loop_footer_branch
        %201 = sbr.rel target = $region150
      $region155: #{tpu_custom_call.1} parent=147 // loop_exit
        _
    $region148: #{tpu_custom_call.1} parent=132 // pred_fallthru
      _
  $region133: #{tpu_custom_call.1} parent=0 // pred_fallthru
    _
  // Predicated region
  $region134: #{tpu_custom_call.1} parent=0 // pred_check
    _
  $region135: #{tpu_custom_call.1} parent=0 // pred_check_branch
    %184 = sbr.rel (0) target = $region137
  $region136: #{tpu_custom_call.1} parent=0 // pred_region
    %s186 = ssub.s32 2, 1
    loop: start=0, step=1, limit=1
    $region138: #{tpu_custom_call.1} parent=136 // loop_pre_header
      _
    $region139: #{tpu_custom_call.1} parent=136 // loop_header
      %s188 = sphi 0, %s192
      %p189 = scmp.ge.s32.totalorder %s188, 1
      %s193 = sphi %s178, %s178
      %s194 = sphi %s179, %s179
    $region140: #{tpu_custom_call.1} parent=136 // loop_header_branch
      %191 = sbr.rel (%p189) target = $region144
    $region141: #{tpu_custom_call.1} parent=136 // loop_body
      %v195 = vld [vmem:[%s193] sm:%s186]
      %196 = vst [vmem:[%s194] sm:%s186] %v195
    $region142: #{tpu_custom_call.1} parent=136 // loop_footer
      %s192 = sadd.s32 1, %s188
    $region143: #{tpu_custom_call.1} parent=136 // loop_footer_branch
      %187 = sbr.rel target = $region139
    $region144: #{tpu_custom_call.1} parent=136 // loop_exit
      _
  $region137: #{tpu_custom_call.1} parent=0 // pred_fallthru
    _
  // Predicated region
  $region156: #{tpu_custom_call.1} parent=0 // pred_check
    _
  $region157: #{tpu_custom_call.1} parent=0 // pred_check_branch
    %213 = sbr.rel (0) target = $region159
  $region158: #{tpu_custom_call.1} parent=0 // pred_region
    %214 = vsyncadd %s180, 16
  $region159: #{tpu_custom_call.1} parent=0 // pred_fallthru
    _
  %s215 = sadd.s32 %s22, 5
  %s216 = sld [smem:[#allocation5 + %s215]]
  %s217 = scalar_lea.vmem %s1, %s216
  %s218 = scalar_lea.vmem [#allocation2], 5
  %s219 = scalar_lea.sflag [#allocation3], 5
  // Predicated region
  $region160: #{tpu_custom_call.1} parent=0 // pred_check
    _
  $region161: #{tpu_custom_call.1} parent=0 // pred_check_branch
    %221 = sbr.rel target = $region163
  $region162: #{tpu_custom_call.1} parent=0 // pred_region
    // Predicated region
    $region175: #{tpu_custom_call.1} parent=162 // pred_check
      _
    $region176: #{tpu_custom_call.1} parent=162 // pred_check_branch
      %237 = sbr.rel (0) target = $region178
    $region177: #{tpu_custom_call.1} parent=162 // pred_region
      %s239 = ssub.s32 2, 1
      loop: start=0, step=1, limit=1
      $region179: #{tpu_custom_call.1} parent=177 // loop_pre_header
        _
      $region180: #{tpu_custom_call.1} parent=177 // loop_header
        %s241 = sphi 0, %s245
        %p242 = scmp.ge.s32.totalorder %s241, 1
        %s246 = sphi %s217, %s217
        %s247 = sphi %s218, %s218
      $region181: #{tpu_custom_call.1} parent=177 // loop_header_branch
        %244 = sbr.rel (%p242) target = $region185
      $region182: #{tpu_custom_call.1} parent=177 // loop_body
        %v248 = vld [vmem:[%s246] sm:%s239]
        %249 = vst [vmem:[%s247] sm:%s239] %v248
      $region183: #{tpu_custom_call.1} parent=177 // loop_footer
        %s245 = sadd.s32 1, %s241
      $region184: #{tpu_custom_call.1} parent=177 // loop_footer_branch
        %240 = sbr.rel target = $region180
      $region185: #{tpu_custom_call.1} parent=177 // loop_exit
        _
    $region178: #{tpu_custom_call.1} parent=162 // pred_fallthru
      _
  $region163: #{tpu_custom_call.1} parent=0 // pred_fallthru
    _
  // Predicated region
  $region164: #{tpu_custom_call.1} parent=0 // pred_check
    _
  $region165: #{tpu_custom_call.1} parent=0 // pred_check_branch
    %223 = sbr.rel (0) target = $region167
  $region166: #{tpu_custom_call.1} parent=0 // pred_region
    %s225 = ssub.s32 2, 1
    loop: start=0, step=1, limit=1
    $region168: #{tpu_custom_call.1} parent=166 // loop_pre_header
      _
    $region169: #{tpu_custom_call.1} parent=166 // loop_header
      %s227 = sphi 0, %s231
      %p228 = scmp.ge.s32.totalorder %s227, 1
      %s232 = sphi %s217, %s217
      %s233 = sphi %s218, %s218
    $region170: #{tpu_custom_call.1} parent=166 // loop_header_branch
      %230 = sbr.rel (%p228) target = $region174
    $region171: #{tpu_custom_call.1} parent=166 // loop_body
      %v234 = vld [vmem:[%s232] sm:%s225]
      %235 = vst [vmem:[%s233] sm:%s225] %v234
    $region172: #{tpu_custom_call.1} parent=166 // loop_footer
      %s231 = sadd.s32 1, %s227
    $region173: #{tpu_custom_call.1} parent=166 // loop_footer_branch
      %226 = sbr.rel target = $region169
    $region174: #{tpu_custom_call.1} parent=166 // loop_exit
      _
  $region167: #{tpu_custom_call.1} parent=0 // pred_fallthru
    _
  // Predicated region
  $region186: #{tpu_custom_call.1} parent=0 // pred_check
    _
  $region187: #{tpu_custom_call.1} parent=0 // pred_check_branch
    %252 = sbr.rel (0) target = $region189
  $region188: #{tpu_custom_call.1} parent=0 // pred_region
    %253 = vsyncadd %s219, 16
  $region189: #{tpu_custom_call.1} parent=0 // pred_fallthru
    _
  %s254 = sadd.s32 %s22, 6
  %s255 = sld [smem:[#allocation5 + %s254]]
  %s256 = scalar_lea.vmem %s1, %s255
  %s257 = scalar_lea.vmem [#allocation2], 6
  %s258 = scalar_lea.sflag [#allocation3], 6
  // Predicated region
  $region190: #{tpu_custom_call.1} parent=0 // pred_check
    _
  $region191: #{tpu_custom_call.1} parent=0 // pred_check_branch
    %260 = sbr.rel target = $region193
  $region192: #{tpu_custom_call.1} parent=0 // pred_region
    // Predicated region
    $region205: #{tpu_custom_call.1} parent=192 // pred_check
      _
    $region206: #{tpu_custom_call.1} parent=192 // pred_check_branch
      %276 = sbr.rel (0) target = $region208
    $region207: #{tpu_custom_call.1} parent=192 // pred_region
      %s278 = ssub.s32 2, 1
      loop: start=0, step=1, limit=1
      $region209: #{tpu_custom_call.1} parent=207 // loop_pre_header
        _
      $region210: #{tpu_custom_call.1} parent=207 // loop_header
        %s280 = sphi 0, %s284
        %p281 = scmp.ge.s32.totalorder %s280, 1
        %s285 = sphi %s256, %s256
        %s286 = sphi %s257, %s257
      $region211: #{tpu_custom_call.1} parent=207 // loop_header_branch
        %283 = sbr.rel (%p281) target = $region215
      $region212: #{tpu_custom_call.1} parent=207 // loop_body
        %v287 = vld [vmem:[%s285] sm:%s278]
        %288 = vst [vmem:[%s286] sm:%s278] %v287
      $region213: #{tpu_custom_call.1} parent=207 // loop_footer
        %s284 = sadd.s32 1, %s280
      $region214: #{tpu_custom_call.1} parent=207 // loop_footer_branch
        %279 = sbr.rel target = $region210
      $region215: #{tpu_custom_call.1} parent=207 // loop_exit
        _
    $region208: #{tpu_custom_call.1} parent=192 // pred_fallthru
      _
  $region193: #{tpu_custom_call.1} parent=0 // pred_fallthru
    _
  // Predicated region
  $region194: #{tpu_custom_call.1} parent=0 // pred_check
    _
  $region195: #{tpu_custom_call.1} parent=0 // pred_check_branch
    %262 = sbr.rel (0) target = $region197
  $region196: #{tpu_custom_call.1} parent=0 // pred_region
    %s264 = ssub.s32 2, 1
    loop: start=0, step=1, limit=1
    $region198: #{tpu_custom_call.1} parent=196 // loop_pre_header
      _
    $region199: #{tpu_custom_call.1} parent=196 // loop_header
      %s266 = sphi 0, %s270
      %p267 = scmp.ge.s32.totalorder %s266, 1
      %s271 = sphi %s256, %s256
      %s272 = sphi %s257, %s257
    $region200: #{tpu_custom_call.1} parent=196 // loop_header_branch
      %269 = sbr.rel (%p267) target = $region204
    $region201: #{tpu_custom_call.1} parent=196 // loop_body
      %v273 = vld [vmem:[%s271] sm:%s264]
      %274 = vst [vmem:[%s272] sm:%s264] %v273
    $region202: #{tpu_custom_call.1} parent=196 // loop_footer
      %s270 = sadd.s32 1, %s266
    $region203: #{tpu_custom_call.1} parent=196 // loop_footer_branch
      %265 = sbr.rel target = $region199
    $region204: #{tpu_custom_call.1} parent=196 // loop_exit
      _
  $region197: #{tpu_custom_call.1} parent=0 // pred_fallthru
    _
  // Predicated region
  $region216: #{tpu_custom_call.1} parent=0 // pred_check
    _
  $region217: #{tpu_custom_call.1} parent=0 // pred_check_branch
    %291 = sbr.rel (0) target = $region219
  $region218: #{tpu_custom_call.1} parent=0 // pred_region
    %292 = vsyncadd %s258, 16
  $region219: #{tpu_custom_call.1} parent=0 // pred_fallthru
    _
  %s293 = sadd.s32 %s22, 7
  %s294 = sld [smem:[#allocation5 + %s293]]
  %s295 = scalar_lea.vmem %s1, %s294
  %s296 = scalar_lea.vmem [#allocation2], 7
  %s297 = scalar_lea.sflag [#allocation3], 7
  // Predicated region
  $region220: #{tpu_custom_call.1} parent=0 // pred_check
    _
  $region221: #{tpu_custom_call.1} parent=0 // pred_check_branch
    %299 = sbr.rel target = $region223
  $region222: #{tpu_custom_call.1} parent=0 // pred_region
    // Predicated region
    $region235: #{tpu_custom_call.1} parent=222 // pred_check
      _
    $region236: #{tpu_custom_call.1} parent=222 // pred_check_branch
      %315 = sbr.rel (0) target = $region238
    $region237: #{tpu_custom_call.1} parent=222 // pred_region
      %s317 = ssub.s32 2, 1
      loop: start=0, step=1, limit=1
      $region239: #{tpu_custom_call.1} parent=237 // loop_pre_header
        _
      $region240: #{tpu_custom_call.1} parent=237 // loop_header
        %s319 = sphi 0, %s323
        %p320 = scmp.ge.s32.totalorder %s319, 1
        %s324 = sphi %s295, %s295
        %s325 = sphi %s296, %s296
      $region241: #{tpu_custom_call.1} parent=237 // loop_header_branch
        %322 = sbr.rel (%p320) target = $region245
      $region242: #{tpu_custom_call.1} parent=237 // loop_body
        %v326 = vld [vmem:[%s324] sm:%s317]
        %327 = vst [vmem:[%s325] sm:%s317] %v326
      $region243: #{tpu_custom_call.1} parent=237 // loop_footer
        %s323 = sadd.s32 1, %s319
      $region244: #{tpu_custom_call.1} parent=237 // loop_footer_branch
        %318 = sbr.rel target = $region240
      $region245: #{tpu_custom_call.1} parent=237 // loop_exit
        _
    $region238: #{tpu_custom_call.1} parent=222 // pred_fallthru
      _
  $region223: #{tpu_custom_call.1} parent=0 // pred_fallthru
    _
  // Predicated region
  $region224: #{tpu_custom_call.1} parent=0 // pred_check
    _
  $region225: #{tpu_custom_call.1} parent=0 // pred_check_branch
    %301 = sbr.rel (0) target = $region227
  $region226: #{tpu_custom_call.1} parent=0 // pred_region
    %s303 = ssub.s32 2, 1
    loop: start=0, step=1, limit=1
    $region228: #{tpu_custom_call.1} parent=226 // loop_pre_header
      _
    $region229: #{tpu_custom_call.1} parent=226 // loop_header
      %s305 = sphi 0, %s309
      %p306 = scmp.ge.s32.totalorder %s305, 1
      %s310 = sphi %s295, %s295
      %s311 = sphi %s296, %s296
    $region230: #{tpu_custom_call.1} parent=226 // loop_header_branch
      %308 = sbr.rel (%p306) target = $region234
    $region231: #{tpu_custom_call.1} parent=226 // loop_body
      %v312 = vld [vmem:[%s310] sm:%s303]
      %313 = vst [vmem:[%s311] sm:%s303] %v312
    $region232: #{tpu_custom_call.1} parent=226 // loop_footer
      %s309 = sadd.s32 1, %s305
    $region233: #{tpu_custom_call.1} parent=226 // loop_footer_branch
      %304 = sbr.rel target = $region229
    $region234: #{tpu_custom_call.1} parent=226 // loop_exit
      _
  $region227: #{tpu_custom_call.1} parent=0 // pred_fallthru
    _
  // Predicated region
  $region246: #{tpu_custom_call.1} parent=0 // pred_check
    _
  $region247: #{tpu_custom_call.1} parent=0 // pred_check_branch
    %330 = sbr.rel (0) target = $region249
  $region248: #{tpu_custom_call.1} parent=0 // pred_region
    %331 = vsyncadd %s297, 16
  $region249: #{tpu_custom_call.1} parent=0 // pred_fallthru
    _
  %s332 = sadd.s32 %s21, 1
  %s333 = smul.u32 %s332, 128
  %s334 = sld [smem:[#allocation5 + %s333]]
  %s335 = scalar_lea.vmem %s1, %s334
  %s336 = scalar_lea.vmem [#allocation2], 8
  %s337 = scalar_lea.sflag [#allocation3], 8
  // Predicated region
  $region250: #{tpu_custom_call.1} parent=0 // pred_check
    _
  $region251: #{tpu_custom_call.1} parent=0 // pred_check_branch
    %339 = sbr.rel target = $region253
  $region252: #{tpu_custom_call.1} parent=0 // pred_region
    // Predicated region
    $region265: #{tpu_custom_call.1} parent=252 // pred_check
      _
    $region266: #{tpu_custom_call.1} parent=252 // pred_check_branch
      %355 = sbr.rel (0) target = $region268
    $region267: #{tpu_custom_call.1} parent=252 // pred_region
      %s357 = ssub.s32 2, 1
      loop: start=0, step=1, limit=1
      $region269: #{tpu_custom_call.1} parent=267 // loop_pre_header
        _
      $region270: #{tpu_custom_call.1} parent=267 // loop_header
        %s359 = sphi 0, %s363
        %p360 = scmp.ge.s32.totalorder %s359, 1
        %s364 = sphi %s335, %s335
        %s365 = sphi %s336, %s336
      $region271: #{tpu_custom_call.1} parent=267 // loop_header_branch
        %362 = sbr.rel (%p360) target = $region275
      $region272: #{tpu_custom_call.1} parent=267 // loop_body
        %v366 = vld [vmem:[%s364] sm:%s357]
        %367 = vst [vmem:[%s365] sm:%s357] %v366
      $region273: #{tpu_custom_call.1} parent=267 // loop_footer
        %s363 = sadd.s32 1, %s359
      $region274: #{tpu_custom_call.1} parent=267 // loop_footer_branch
        %358 = sbr.rel target = $region270
      $region275: #{tpu_custom_call.1} parent=267 // loop_exit
        _
    $region268: #{tpu_custom_call.1} parent=252 // pred_fallthru
      _
  $region253: #{tpu_custom_call.1} parent=0 // pred_fallthru
    _
  // Predicated region
  $region254: #{tpu_custom_call.1} parent=0 // pred_check
    _
  $region255: #{tpu_custom_call.1} parent=0 // pred_check_branch
    %341 = sbr.rel (0) target = $region257
  $region256: #{tpu_custom_call.1} parent=0 // pred_region
    %s343 = ssub.s32 2, 1
    loop: start=0, step=1, limit=1
    $region258: #{tpu_custom_call.1} parent=256 // loop_pre_header
      _
    $region259: #{tpu_custom_call.1} parent=256 // loop_header
      %s345 = sphi 0, %s349
      %p346 = scmp.ge.s32.totalorder %s345, 1
      %s350 = sphi %s335, %s335
      %s351 = sphi %s336, %s336
    $region260: #{tpu_custom_call.1} parent=256 // loop_header_branch
      %348 = sbr.rel (%p346) target = $region264
    $region261: #{tpu_custom_call.1} parent=256 // loop_body
      %v352 = vld [vmem:[%s350] sm:%s343]
      %353 = vst [vmem:[%s351] sm:%s343] %v352
    $region262: #{tpu_custom_call.1} parent=256 // loop_footer
      %s349 = sadd.s32 1, %s345
    $region263: #{tpu_custom_call.1} parent=256 // loop_footer_branch
      %344 = sbr.rel target = $region259
    $region264: #{tpu_custom_call.1} parent=256 // loop_exit
      _
  $region257: #{tpu_custom_call.1} parent=0 // pred_fallthru
    _
  // Predicated region
  $region276: #{tpu_custom_call.1} parent=0 // pred_check
    _
  $region277: #{tpu_custom_call.1} parent=0 // pred_check_branch
    %370 = sbr.rel (0) target = $region279
  $region278: #{tpu_custom_call.1} parent=0 // pred_region
    %371 = vsyncadd %s337, 16
  $region279: #{tpu_custom_call.1} parent=0 // pred_fallthru
    _
  %s372 = sadd.s32 %s333, 1
  %s373 = sld [smem:[#allocation5 + %s372]]
  %s374 = scalar_lea.vmem %s1, %s373
  %s375 = scalar_lea.vmem [#allocation2], 9
  %s376 = scalar_lea.sflag [#allocation3], 9
  // Predicated region
  $region280: #{tpu_custom_call.1} parent=0 // pred_check
    _
  $region281: #{tpu_custom_call.1} parent=0 // pred_check_branch
    %378 = sbr.rel target = $region283
  $region282: #{tpu_custom_call.1} parent=0 // pred_region
    // Predicated region
    $region295: #{tpu_custom_call.1} parent=282 // pred_check
      _
    $region296: #{tpu_custom_call.1} parent=282 // pred_check_branch
      %394 = sbr.rel (0) target = $region298
    $region297: #{tpu_custom_call.1} parent=282 // pred_region
      %s396 = ssub.s32 2, 1
      loop: start=0, step=1, limit=1
      $region299: #{tpu_custom_call.1} parent=297 // loop_pre_header
        _
      $region300: #{tpu_custom_call.1} parent=297 // loop_header
        %s398 = sphi 0, %s402
        %p399 = scmp.ge.s32.totalorder %s398, 1
        %s403 = sphi %s374, %s374
        %s404 = sphi %s375, %s375
      $region301: #{tpu_custom_call.1} parent=297 // loop_header_branch
        %401 = sbr.rel (%p399) target = $region305
      $region302: #{tpu_custom_call.1} parent=297 // loop_body
        %v405 = vld [vmem:[%s403] sm:%s396]
        %406 = vst [vmem:[%s404] sm:%s396] %v405
      $region303: #{tpu_custom_call.1} parent=297 // loop_footer
        %s402 = sadd.s32 1, %s398
      $region304: #{tpu_custom_call.1} parent=297 // loop_footer_branch
        %397 = sbr.rel target = $region300
      $region305: #{tpu_custom_call.1} parent=297 // loop_exit
        _
    $region298: #{tpu_custom_call.1} parent=282 // pred_fallthru
      _
  $region283: #{tpu_custom_call.1} parent=0 // pred_fallthru
    _
  // Predicated region
  $region284: #{tpu_custom_call.1} parent=0 // pred_check
    _
  $region285: #{tpu_custom_call.1} parent=0 // pred_check_branch
    %380 = sbr.rel (0) target = $region287
  $region286: #{tpu_custom_call.1} parent=0 // pred_region
    %s382 = ssub.s32 2, 1
    loop: start=0, step=1, limit=1
    $region288: #{tpu_custom_call.1} parent=286 // loop_pre_header
      _
    $region289: #{tpu_custom_call.1} parent=286 // loop_header
      %s384 = sphi 0, %s388
      %p385 = scmp.ge.s32.totalorder %s384, 1
      %s389 = sphi %s374, %s374
      %s390 = sphi %s375, %s375
    $region290: #{tpu_custom_call.1} parent=286 // loop_header_branch
      %387 = sbr.rel (%p385) target = $region294
    $region291: #{tpu_custom_call.1} parent=286 // loop_body
      %v391 = vld [vmem:[%s389] sm:%s382]
      %392 = vst [vmem:[%s390] sm:%s382] %v391
    $region292: #{tpu_custom_call.1} parent=286 // loop_footer
      %s388 = sadd.s32 1, %s384
    $region293: #{tpu_custom_call.1} parent=286 // loop_footer_branch
      %383 = sbr.rel target = $region289
    $region294: #{tpu_custom_call.1} parent=286 // loop_exit
      _
  $region287: #{tpu_custom_call.1} parent=0 // pred_fallthru
    _
  // Predicated region
  $region306: #{tpu_custom_call.1} parent=0 // pred_check
    _
  $region307: #{tpu_custom_call.1} parent=0 // pred_check_branch
    %409 = sbr.rel (0) target = $region309
  $region308: #{tpu_custom_call.1} parent=0 // pred_region
    %410 = vsyncadd %s376, 16
  $region309: #{tpu_custom_call.1} parent=0 // pred_fallthru
    _
  %s411 = sadd.s32 %s333, 2
  %s412 = sld [smem:[#allocation5 + %s411]]
  %s413 = scalar_lea.vmem %s1, %s412
  %s414 = scalar_lea.vmem [#allocation2], 10
  %s415 = scalar_lea.sflag [#allocation3], 10
  // Predicated region
  $region310: #{tpu_custom_call.1} parent=0 // pred_check
    _
  $region311: #{tpu_custom_call.1} parent=0 // pred_check_branch
    %417 = sbr.rel target = $region313
  $region312: #{tpu_custom_call.1} parent=0 // pred_region
    // Predicated region
    $region325: #{tpu_custom_call.1} parent=312 // pred_check
      _
    $region326: #{tpu_custom_call.1} parent=312 // pred_check_branch
      %433 = sbr.rel (0) target = $region328
    $region327: #{tpu_custom_call.1} parent=312 // pred_region
      %s435 = ssub.s32 2, 1
      loop: start=0, step=1, limit=1
      $region329: #{tpu_custom_call.1} parent=327 // loop_pre_header
        _
      $region330: #{tpu_custom_call.1} parent=327 // loop_header
        %s437 = sphi 0, %s441
        %p438 = scmp.ge.s32.totalorder %s437, 1
        %s442 = sphi %s413, %s413
        %s443 = sphi %s414, %s414
      $region331: #{tpu_custom_call.1} parent=327 // loop_header_branch
        %440 = sbr.rel (%p438) target = $region335
      $region332: #{tpu_custom_call.1} parent=327 // loop_body
        %v444 = vld [vmem:[%s442] sm:%s435]
        %445 = vst [vmem:[%s443] sm:%s435] %v444
      $region333: #{tpu_custom_call.1} parent=327 // loop_footer
        %s441 = sadd.s32 1, %s437
      $region334: #{tpu_custom_call.1} parent=327 // loop_footer_branch
        %436 = sbr.rel target = $region330
      $region335: #{tpu_custom_call.1} parent=327 // loop_exit
        _
    $region328: #{tpu_custom_call.1} parent=312 // pred_fallthru
      _
  $region313: #{tpu_custom_call.1} parent=0 // pred_fallthru
    _
  // Predicated region
  $region314: #{tpu_custom_call.1} parent=0 // pred_check
    _
  $region315: #{tpu_custom_call.1} parent=0 // pred_check_branch
    %419 = sbr.rel (0) target = $region317
  $region316: #{tpu_custom_call.1} parent=0 // pred_region
    %s421 = ssub.s32 2, 1
    loop: start=0, step=1, limit=1
    $region318: #{tpu_custom_call.1} parent=316 // loop_pre_header
      _
    $region319: #{tpu_custom_call.1} parent=316 // loop_header
      %s423 = sphi 0, %s427
      %p424 = scmp.ge.s32.totalorder %s423, 1
      %s428 = sphi %s413, %s413
      %s429 = sphi %s414, %s414
    $region320: #{tpu_custom_call.1} parent=316 // loop_header_branch
      %426 = sbr.rel (%p424) target = $region324
    $region321: #{tpu_custom_call.1} parent=316 // loop_body
      %v430 = vld [vmem:[%s428] sm:%s421]
      %431 = vst [vmem:[%s429] sm:%s421] %v430
    $region322: #{tpu_custom_call.1} parent=316 // loop_footer
      %s427 = sadd.s32 1, %s423
    $region323: #{tpu_custom_call.1} parent=316 // loop_footer_branch
      %422 = sbr.rel target = $region319
    $region324: #{tpu_custom_call.1} parent=316 // loop_exit
      _
  $region317: #{tpu_custom_call.1} parent=0 // pred_fallthru
    _
  // Predicated region
  $region336: #{tpu_custom_call.1} parent=0 // pred_check
    _
  $region337: #{tpu_custom_call.1} parent=0 // pred_check_branch
    %448 = sbr.rel (0) target = $region339
  $region338: #{tpu_custom_call.1} parent=0 // pred_region
    %449 = vsyncadd %s415, 16
  $region339: #{tpu_custom_call.1} parent=0 // pred_fallthru
    _
  %s450 = sadd.s32 %s333, 3
  %s451 = sld [smem:[#allocation5 + %s450]]
  %s452 = scalar_lea.vmem %s1, %s451
  %s453 = scalar_lea.vmem [#allocation2], 11
  %s454 = scalar_lea.sflag [#allocation3], 11
  // Predicated region
  $region340: #{tpu_custom_call.1} parent=0 // pred_check
    _
  $region341: #{tpu_custom_call.1} parent=0 // pred_check_branch
    %456 = sbr.rel target = $region343
  $region342: #{tpu_custom_call.1} parent=0 // pred_region
    // Predicated region
    $region355: #{tpu_custom_call.1} parent=342 // pred_check
      _
    $region356: #{tpu_custom_call.1} parent=342 // pred_check_branch
      %472 = sbr.rel (0) target = $region358
    $region357: #{tpu_custom_call.1} parent=342 // pred_region
      %s474 = ssub.s32 2, 1
      loop: start=0, step=1, limit=1
      $region359: #{tpu_custom_call.1} parent=357 // loop_pre_header
        _
      $region360: #{tpu_custom_call.1} parent=357 // loop_header
        %s476 = sphi 0, %s480
        %p477 = scmp.ge.s32.totalorder %s476, 1
        %s481 = sphi %s452, %s452
        %s482 = sphi %s453, %s453
      $region361: #{tpu_custom_call.1} parent=357 // loop_header_branch
        %479 = sbr.rel (%p477) target = $region365
      $region362: #{tpu_custom_call.1} parent=357 // loop_body
        %v483 = vld [vmem:[%s481] sm:%s474]
        %484 = vst [vmem:[%s482] sm:%s474] %v483
      $region363: #{tpu_custom_call.1} parent=357 // loop_footer
        %s480 = sadd.s32 1, %s476
      $region364: #{tpu_custom_call.1} parent=357 // loop_footer_branch
        %475 = sbr.rel target = $region360
      $region365: #{tpu_custom_call.1} parent=357 // loop_exit
        _
    $region358: #{tpu_custom_call.1} parent=342 // pred_fallthru
      _
  $region343: #{tpu_custom_call.1} parent=0 // pred_fallthru
    _
  // Predicated region
  $region344: #{tpu_custom_call.1} parent=0 // pred_check
    _
  $region345: #{tpu_custom_call.1} parent=0 // pred_check_branch
    %458 = sbr.rel (0) target = $region347
  $region346: #{tpu_custom_call.1} parent=0 // pred_region
    %s460 = ssub.s32 2, 1
    loop: start=0, step=1, limit=1
    $region348: #{tpu_custom_call.1} parent=346 // loop_pre_header
      _
    $region349: #{tpu_custom_call.1} parent=346 // loop_header
      %s462 = sphi 0, %s466
      %p463 = scmp.ge.s32.totalorder %s462, 1
      %s467 = sphi %s452, %s452
      %s468 = sphi %s453, %s453
    $region350: #{tpu_custom_call.1} parent=346 // loop_header_branch
      %465 = sbr.rel (%p463) target = $region354
    $region351: #{tpu_custom_call.1} parent=346 // loop_body
      %v469 = vld [vmem:[%s467] sm:%s460]
      %470 = vst [vmem:[%s468] sm:%s460] %v469
    $region352: #{tpu_custom_call.1} parent=346 // loop_footer
      %s466 = sadd.s32 1, %s462
    $region353: #{tpu_custom_call.1} parent=346 // loop_footer_branch
      %461 = sbr.rel target = $region349
    $region354: #{tpu_custom_call.1} parent=346 // loop_exit
      _
  $region347: #{tpu_custom_call.1} parent=0 // pred_fallthru
    _
  // Predicated region
  $region366: #{tpu_custom_call.1} parent=0 // pred_check
    _
  $region367: #{tpu_custom_call.1} parent=0 // pred_check_branch
    %487 = sbr.rel (0) target = $region369
  $region368: #{tpu_custom_call.1} parent=0 // pred_region
    %488 = vsyncadd %s454, 16
  $region369: #{tpu_custom_call.1} parent=0 // pred_fallthru
    _
  %s489 = sadd.s32 %s333, 4
  %s490 = sld [smem:[#allocation5 + %s489]]
  %s491 = scalar_lea.vmem %s1, %s490
  %s492 = scalar_lea.vmem [#allocation2], 12
  %s493 = scalar_lea.sflag [#allocation3], 12
  // Predicated region
  $region370: #{tpu_custom_call.1} parent=0 // pred_check
    _
  $region371: #{tpu_custom_call.1} parent=0 // pred_check_branch
    %495 = sbr.rel target = $region373
  $region372: #{tpu_custom_call.1} parent=0 // pred_region
    // Predicated region
    $region385: #{tpu_custom_call.1} parent=372 // pred_check
      _
    $region386: #{tpu_custom_call.1} parent=372 // pred_check_branch
      %511 = sbr.rel (0) target = $region388
    $region387: #{tpu_custom_call.1} parent=372 // pred_region
      %s513 = ssub.s32 2, 1
      loop: start=0, step=1, limit=1
      $region389: #{tpu_custom_call.1} parent=387 // loop_pre_header
        _
      $region390: #{tpu_custom_call.1} parent=387 // loop_header
        %s515 = sphi 0, %s519
        %p516 = scmp.ge.s32.totalorder %s515, 1
        %s520 = sphi %s491, %s491
        %s521 = sphi %s492, %s492
      $region391: #{tpu_custom_call.1} parent=387 // loop_header_branch
        %518 = sbr.rel (%p516) target = $region395
      $region392: #{tpu_custom_call.1} parent=387 // loop_body
        %v522 = vld [vmem:[%s520] sm:%s513]
        %523 = vst [vmem:[%s521] sm:%s513] %v522
      $region393: #{tpu_custom_call.1} parent=387 // loop_footer
        %s519 = sadd.s32 1, %s515
      $region394: #{tpu_custom_call.1} parent=387 // loop_footer_branch
        %514 = sbr.rel target = $region390
      $region395: #{tpu_custom_call.1} parent=387 // loop_exit
        _
    $region388: #{tpu_custom_call.1} parent=372 // pred_fallthru
      _
  $region373: #{tpu_custom_call.1} parent=0 // pred_fallthru
    _
  // Predicated region
  $region374: #{tpu_custom_call.1} parent=0 // pred_check
    _
  $region375: #{tpu_custom_call.1} parent=0 // pred_check_branch
    %497 = sbr.rel (0) target = $region377
  $region376: #{tpu_custom_call.1} parent=0 // pred_region
    %s499 = ssub.s32 2, 1
    loop: start=0, step=1, limit=1
    $region378: #{tpu_custom_call.1} parent=376 // loop_pre_header
      _
    $region379: #{tpu_custom_call.1} parent=376 // loop_header
      %s501 = sphi 0, %s505
      %p502 = scmp.ge.s32.totalorder %s501, 1
      %s506 = sphi %s491, %s491
      %s507 = sphi %s492, %s492
    $region380: #{tpu_custom_call.1} parent=376 // loop_header_branch
      %504 = sbr.rel (%p502) target = $region384
    $region381: #{tpu_custom_call.1} parent=376 // loop_body
      %v508 = vld [vmem:[%s506] sm:%s499]
      %509 = vst [vmem:[%s507] sm:%s499] %v508
    $region382: #{tpu_custom_call.1} parent=376 // loop_footer
      %s505 = sadd.s32 1, %s501
    $region383: #{tpu_custom_call.1} parent=376 // loop_footer_branch
      %500 = sbr.rel target = $region379
    $region384: #{tpu_custom_call.1} parent=376 // loop_exit
      _
  $region377: #{tpu_custom_call.1} parent=0 // pred_fallthru
    _
  // Predicated region
  $region396: #{tpu_custom_call.1} parent=0 // pred_check
    _
  $region397: #{tpu_custom_call.1} parent=0 // pred_check_branch
    %526 = sbr.rel (0) target = $region399
  $region398: #{tpu_custom_call.1} parent=0 // pred_region
    %527 = vsyncadd %s493, 16
  $region399: #{tpu_custom_call.1} parent=0 // pred_fallthru
    _
  %s528 = sadd.s32 %s333, 5
  %s529 = sld [smem:[#allocation5 + %s528]]
  %s530 = scalar_lea.vmem %s1, %s529
  %s531 = scalar_lea.vmem [#allocation2], 13
  %s532 = scalar_lea.sflag [#allocation3], 13
  // Predicated region
  $region400: #{tpu_custom_call.1} parent=0 // pred_check
    _
  $region401: #{tpu_custom_call.1} parent=0 // pred_check_branch
    %534 = sbr.rel target = $region403
  $region402: #{tpu_custom_call.1} parent=0 // pred_region
    // Predicated region
    $region415: #{tpu_custom_call.1} parent=402 // pred_check
      _
    $region416: #{tpu_custom_call.1} parent=402 // pred_check_branch
      %550 = sbr.rel (0) target = $region418
    $region417: #{tpu_custom_call.1} parent=402 // pred_region
      %s552 = ssub.s32 2, 1
      loop: start=0, step=1, limit=1
      $region419: #{tpu_custom_call.1} parent=417 // loop_pre_header
        _
      $region420: #{tpu_custom_call.1} parent=417 // loop_header
        %s554 = sphi 0, %s558
        %p555 = scmp.ge.s32.totalorder %s554, 1
        %s559 = sphi %s530, %s530
        %s560 = sphi %s531, %s531
      $region421: #{tpu_custom_call.1} parent=417 // loop_header_branch
        %557 = sbr.rel (%p555) target = $region425
      $region422: #{tpu_custom_call.1} parent=417 // loop_body
        %v561 = vld [vmem:[%s559] sm:%s552]
        %562 = vst [vmem:[%s560] sm:%s552] %v561
      $region423: #{tpu_custom_call.1} parent=417 // loop_footer
        %s558 = sadd.s32 1, %s554
      $region424: #{tpu_custom_call.1} parent=417 // loop_footer_branch
        %553 = sbr.rel target = $region420
      $region425: #{tpu_custom_call.1} parent=417 // loop_exit
        _
    $region418: #{tpu_custom_call.1} parent=402 // pred_fallthru
      _
  $region403: #{tpu_custom_call.1} parent=0 // pred_fallthru
    _
  // Predicated region
  $region404: #{tpu_custom_call.1} parent=0 // pred_check
    _
  $region405: #{tpu_custom_call.1} parent=0 // pred_check_branch
    %536 = sbr.rel (0) target = $region407
  $region406: #{tpu_custom_call.1} parent=0 // pred_region
    %s538 = ssub.s32 2, 1
    loop: start=0, step=1, limit=1
    $region408: #{tpu_custom_call.1} parent=406 // loop_pre_header
      _
    $region409: #{tpu_custom_call.1} parent=406 // loop_header
      %s540 = sphi 0, %s544
      %p541 = scmp.ge.s32.totalorder %s540, 1
      %s545 = sphi %s530, %s530
      %s546 = sphi %s531, %s531
    $region410: #{tpu_custom_call.1} parent=406 // loop_header_branch
      %543 = sbr.rel (%p541) target = $region414
    $region411: #{tpu_custom_call.1} parent=406 // loop_body
      %v547 = vld [vmem:[%s545] sm:%s538]
      %548 = vst [vmem:[%s546] sm:%s538] %v547
    $region412: #{tpu_custom_call.1} parent=406 // loop_footer
      %s544 = sadd.s32 1, %s540
    $region413: #{tpu_custom_call.1} parent=406 // loop_footer_branch
      %539 = sbr.rel target = $region409
    $region414: #{tpu_custom_call.1} parent=406 // loop_exit
      _
  $region407: #{tpu_custom_call.1} parent=0 // pred_fallthru
    _
  // Predicated region
  $region426: #{tpu_custom_call.1} parent=0 // pred_check
    _
  $region427: #{tpu_custom_call.1} parent=0 // pred_check_branch
    %565 = sbr.rel (0) target = $region429
  $region428: #{tpu_custom_call.1} parent=0 // pred_region
    %566 = vsyncadd %s532, 16
  $region429: #{tpu_custom_call.1} parent=0 // pred_fallthru
    _
  %s567 = sadd.s32 %s333, 6
  %s568 = sld [smem:[#allocation5 + %s567]]
  %s569 = scalar_lea.vmem %s1, %s568
  %s570 = scalar_lea.vmem [#allocation2], 14
  %s571 = scalar_lea.sflag [#allocation3], 14
  // Predicated region
  $region430: #{tpu_custom_call.1} parent=0 // pred_check
    _
  $region431: #{tpu_custom_call.1} parent=0 // pred_check_branch
    %573 = sbr.rel target = $region433
  $region432: #{tpu_custom_call.1} parent=0 // pred_region
    // Predicated region
    $region445: #{tpu_custom_call.1} parent=432 // pred_check
      _
    $region446: #{tpu_custom_call.1} parent=432 // pred_check_branch
      %589 = sbr.rel (0) target = $region448
    $region447: #{tpu_custom_call.1} parent=432 // pred_region
      %s591 = ssub.s32 2, 1
      loop: start=0, step=1, limit=1
      $region449: #{tpu_custom_call.1} parent=447 // loop_pre_header
        _
      $region450: #{tpu_custom_call.1} parent=447 // loop_header
        %s593 = sphi 0, %s597
        %p594 = scmp.ge.s32.totalorder %s593, 1
        %s598 = sphi %s569, %s569
        %s599 = sphi %s570, %s570
      $region451: #{tpu_custom_call.1} parent=447 // loop_header_branch
        %596 = sbr.rel (%p594) target = $region455
      $region452: #{tpu_custom_call.1} parent=447 // loop_body
        %v600 = vld [vmem:[%s598] sm:%s591]
        %601 = vst [vmem:[%s599] sm:%s591] %v600
      $region453: #{tpu_custom_call.1} parent=447 // loop_footer
        %s597 = sadd.s32 1, %s593
      $region454: #{tpu_custom_call.1} parent=447 // loop_footer_branch
        %592 = sbr.rel target = $region450
      $region455: #{tpu_custom_call.1} parent=447 // loop_exit
        _
    $region448: #{tpu_custom_call.1} parent=432 // pred_fallthru
      _
  $region433: #{tpu_custom_call.1} parent=0 // pred_fallthru
    _
  // Predicated region
  $region434: #{tpu_custom_call.1} parent=0 // pred_check
    _
  $region435: #{tpu_custom_call.1} parent=0 // pred_check_branch
    %575 = sbr.rel (0) target = $region437
  $region436: #{tpu_custom_call.1} parent=0 // pred_region
    %s577 = ssub.s32 2, 1
    loop: start=0, step=1, limit=1
    $region438: #{tpu_custom_call.1} parent=436 // loop_pre_header
      _
    $region439: #{tpu_custom_call.1} parent=436 // loop_header
      %s579 = sphi 0, %s583
      %p580 = scmp.ge.s32.totalorder %s579, 1
      %s584 = sphi %s569, %s569
      %s585 = sphi %s570, %s570
    $region440: #{tpu_custom_call.1} parent=436 // loop_header_branch
      %582 = sbr.rel (%p580) target = $region444
    $region441: #{tpu_custom_call.1} parent=436 // loop_body
      %v586 = vld [vmem:[%s584] sm:%s577]
      %587 = vst [vmem:[%s585] sm:%s577] %v586
    $region442: #{tpu_custom_call.1} parent=436 // loop_footer
      %s583 = sadd.s32 1, %s579
    $region443: #{tpu_custom_call.1} parent=436 // loop_footer_branch
      %578 = sbr.rel target = $region439
    $region444: #{tpu_custom_call.1} parent=436 // loop_exit
      _
  $region437: #{tpu_custom_call.1} parent=0 // pred_fallthru
    _
  // Predicated region
  $region456: #{tpu_custom_call.1} parent=0 // pred_check
    _
  $region457: #{tpu_custom_call.1} parent=0 // pred_check_branch
    %604 = sbr.rel (0) target = $region459
  $region458: #{tpu_custom_call.1} parent=0 // pred_region
    %605 = vsyncadd %s571, 16
  $region459: #{tpu_custom_call.1} parent=0 // pred_fallthru
    _
  %s606 = sadd.s32 %s333, 7
  %s607 = sld [smem:[#allocation5 + %s606]]
  %s608 = scalar_lea.vmem %s1, %s607
  %s609 = scalar_lea.vmem [#allocation2], 15
  %s610 = scalar_lea.sflag [#allocation3], 15
  // Predicated region
  $region460: #{tpu_custom_call.1} parent=0 // pred_check
    _
  $region461: #{tpu_custom_call.1} parent=0 // pred_check_branch
    %612 = sbr.rel target = $region463
  $region462: #{tpu_custom_call.1} parent=0 // pred_region
    // Predicated region
    $region475: #{tpu_custom_call.1} parent=462 // pred_check
      _
    $region476: #{tpu_custom_call.1} parent=462 // pred_check_branch
      %628 = sbr.rel (0) target = $region478
    $region477: #{tpu_custom_call.1} parent=462 // pred_region
      %s630 = ssub.s32 2, 1
      loop: start=0, step=1, limit=1
      $region479: #{tpu_custom_call.1} parent=477 // loop_pre_header
        _
      $region480: #{tpu_custom_call.1} parent=477 // loop_header
        %s632 = sphi 0, %s636
        %p633 = scmp.ge.s32.totalorder %s632, 1
        %s637 = sphi %s608, %s608
        %s638 = sphi %s609, %s609
      $region481: #{tpu_custom_call.1} parent=477 // loop_header_branch
        %635 = sbr.rel (%p633) target = $region485
      $region482: #{tpu_custom_call.1} parent=477 // loop_body
        %v639 = vld [vmem:[%s637] sm:%s630]
        %640 = vst [vmem:[%s638] sm:%s630] %v639
      $region483: #{tpu_custom_call.1} parent=477 // loop_footer
        %s636 = sadd.s32 1, %s632
      $region484: #{tpu_custom_call.1} parent=477 // loop_footer_branch
        %631 = sbr.rel target = $region480
      $region485: #{tpu_custom_call.1} parent=477 // loop_exit
        _
    $region478: #{tpu_custom_call.1} parent=462 // pred_fallthru
      _
  $region463: #{tpu_custom_call.1} parent=0 // pred_fallthru
    _
  // Predicated region
  $region464: #{tpu_custom_call.1} parent=0 // pred_check
    _
  $region465: #{tpu_custom_call.1} parent=0 // pred_check_branch
    %614 = sbr.rel (0) target = $region467
  $region466: #{tpu_custom_call.1} parent=0 // pred_region
    %s616 = ssub.s32 2, 1
    loop: start=0, step=1, limit=1
    $region468: #{tpu_custom_call.1} parent=466 // loop_pre_header
      _
    $region469: #{tpu_custom_call.1} parent=466 // loop_header
      %s618 = sphi 0, %s622
      %p619 = scmp.ge.s32.totalorder %s618, 1
      %s623 = sphi %s608, %s608
      %s624 = sphi %s609, %s609
    $region470: #{tpu_custom_call.1} parent=466 // loop_header_branch
      %621 = sbr.rel (%p619) target = $region474
    $region471: #{tpu_custom_call.1} parent=466 // loop_body
      %v625 = vld [vmem:[%s623] sm:%s616]
      %626 = vst [vmem:[%s624] sm:%s616] %v625
    $region472: #{tpu_custom_call.1} parent=466 // loop_footer
      %s622 = sadd.s32 1, %s618
    $region473: #{tpu_custom_call.1} parent=466 // loop_footer_branch
      %617 = sbr.rel target = $region469
    $region474: #{tpu_custom_call.1} parent=466 // loop_exit
      _
  $region467: #{tpu_custom_call.1} parent=0 // pred_fallthru
    _
  // Predicated region
  $region486: #{tpu_custom_call.1} parent=0 // pred_check
    _
  $region487: #{tpu_custom_call.1} parent=0 // pred_check_branch
    %643 = sbr.rel (0) target = $region489
  $region488: #{tpu_custom_call.1} parent=0 // pred_region
    %644 = vsyncadd %s610, 16
  $region489: #{tpu_custom_call.1} parent=0 // pred_fallthru
    _
  %s645 = sadd.s32 %s21, 2
  %s646 = smul.u32 %s645, 128
  %s647 = sld [smem:[#allocation5 + %s646]]
  %s648 = scalar_lea.vmem %s1, %s647
  %s649 = scalar_lea.vmem [#allocation2], 16
  %s650 = scalar_lea.sflag [#allocation3], 16
  // Predicated region
  $region490: #{tpu_custom_call.1} parent=0 // pred_check
    _
  $region491: #{tpu_custom_call.1} parent=0 // pred_check_branch
    %652 = sbr.rel target = $region493
  $region492: #{tpu_custom_call.1} parent=0 // pred_region
    // Predicated region
    $region505: #{tpu_custom_call.1} parent=492 // pred_check
      _
    $region506: #{tpu_custom_call.1} parent=492 // pred_check_branch
      %668 = sbr.rel (0) target = $region508
    $region507: #{tpu_custom_call.1} parent=492 // pred_region
      %s670 = ssub.s32 2, 1
      loop: start=0, step=1, limit=1
      $region509: #{tpu_custom_call.1} parent=507 // loop_pre_header
        _
      $region510: #{tpu_custom_call.1} parent=507 // loop_header
        %s672 = sphi 0, %s676
        %p673 = scmp.ge.s32.totalorder %s672, 1
        %s677 = sphi %s648, %s648
        %s678 = sphi %s649, %s649
      $region511: #{tpu_custom_call.1} parent=507 // loop_header_branch
        %675 = sbr.rel (%p673) target = $region515
      $region512: #{tpu_custom_call.1} parent=507 // loop_body
        %v679 = vld [vmem:[%s677] sm:%s670]
        %680 = vst [vmem:[%s678] sm:%s670] %v679
      $region513: #{tpu_custom_call.1} parent=507 // loop_footer
        %s676 = sadd.s32 1, %s672
      $region514: #{tpu_custom_call.1} parent=507 // loop_footer_branch
        %671 = sbr.rel target = $region510
      $region515: #{tpu_custom_call.1} parent=507 // loop_exit
        _
    $region508: #{tpu_custom_call.1} parent=492 // pred_fallthru
      _
  $region493: #{tpu_custom_call.1} parent=0 // pred_fallthru
    _
  // Predicated region
  $region494: #{tpu_custom_call.1} parent=0 // pred_check
    _
  $region495: #{tpu_custom_call.1} parent=0 // pred_check_branch
    %654 = sbr.rel (0) target = $region497
  $region496: #{tpu_custom_call.1} parent=0 // pred_region
    %s656 = ssub.s32 2, 1
    loop: start=0, step=1, limit=1
    $region498: #{tpu_custom_call.1} parent=496 // loop_pre_header
      _
    $region499: #{tpu_custom_call.1} parent=496 // loop_header
      %s658 = sphi 0, %s662
      %p659 = scmp.ge.s32.totalorder %s658, 1
      %s663 = sphi %s648, %s648
      %s664 = sphi %s649, %s649
    $region500: #{tpu_custom_call.1} parent=496 // loop_header_branch
      %661 = sbr.rel (%p659) target = $region504
    $region501: #{tpu_custom_call.1} parent=496 // loop_body
      %v665 = vld [vmem:[%s663] sm:%s656]
      %666 = vst [vmem:[%s664] sm:%s656] %v665
    $region502: #{tpu_custom_call.1} parent=496 // loop_footer
      %s662 = sadd.s32 1, %s658
    $region503: #{tpu_custom_call.1} parent=496 // loop_footer_branch
      %657 = sbr.rel target = $region499
    $region504: #{tpu_custom_call.1} parent=496 // loop_exit
      _
  $region497: #{tpu_custom_call.1} parent=0 // pred_fallthru
    _
  // Predicated region
  $region516: #{tpu_custom_call.1} parent=0 // pred_check
    _
  $region517: #{tpu_custom_call.1} parent=0 // pred_check_branch
    %683 = sbr.rel (0) target = $region519
  $region518: #{tpu_custom_call.1} parent=0 // pred_region
    %684 = vsyncadd %s650, 16
  $region519: #{tpu_custom_call.1} parent=0 // pred_fallthru
    _
  %s685 = sadd.s32 %s646, 1
  %s686 = sld [smem:[#allocation5 + %s685]]
  %s687 = scalar_lea.vmem %s1, %s686
  %s688 = scalar_lea.vmem [#allocation2], 17
  %s689 = scalar_lea.sflag [#allocation3], 17
  // Predicated region
  $region520: #{tpu_custom_call.1} parent=0 // pred_check
    _
  $region521: #{tpu_custom_call.1} parent=0 // pred_check_branch
    %691 = sbr.rel target = $region523
  $region522: #{tpu_custom_call.1} parent=0 // pred_region
    // Predicated region
    $region535: #{tpu_custom_call.1} parent=522 // pred_check
      _
    $region536: #{tpu_custom_call.1} parent=522 // pred_check_branch
      %707 = sbr.rel (0) target = $region538
    $region537: #{tpu_custom_call.1} parent=522 // pred_region
      %s709 = ssub.s32 2, 1
      loop: start=0, step=1, limit=1
      $region539: #{tpu_custom_call.1} parent=537 // loop_pre_header
        _
      $region540: #{tpu_custom_call.1} parent=537 // loop_header
        %s711 = sphi 0, %s715
        %p712 = scmp.ge.s32.totalorder %s711, 1
        %s716 = sphi %s687, %s687
        %s717 = sphi %s688, %s688
      $region541: #{tpu_custom_call.1} parent=537 // loop_header_branch
        %714 = sbr.rel (%p712) target = $region545
      $region542: #{tpu_custom_call.1} parent=537 // loop_body
        %v718 = vld [vmem:[%s716] sm:%s709]
        %719 = vst [vmem:[%s717] sm:%s709] %v718
      $region543: #{tpu_custom_call.1} parent=537 // loop_footer
        %s715 = sadd.s32 1, %s711
      $region544: #{tpu_custom_call.1} parent=537 // loop_footer_branch
        %710 = sbr.rel target = $region540
      $region545: #{tpu_custom_call.1} parent=537 // loop_exit
        _
    $region538: #{tpu_custom_call.1} parent=522 // pred_fallthru
      _
  $region523: #{tpu_custom_call.1} parent=0 // pred_fallthru
    _
  // Predicated region
  $region524: #{tpu_custom_call.1} parent=0 // pred_check
    _
  $region525: #{tpu_custom_call.1} parent=0 // pred_check_branch
    %693 = sbr.rel (0) target = $region527
  $region526: #{tpu_custom_call.1} parent=0 // pred_region
    %s695 = ssub.s32 2, 1
    loop: start=0, step=1, limit=1
    $region528: #{tpu_custom_call.1} parent=526 // loop_pre_header
      _
    $region529: #{tpu_custom_call.1} parent=526 // loop_header
      %s697 = sphi 0, %s701
      %p698 = scmp.ge.s32.totalorder %s697, 1
      %s702 = sphi %s687, %s687
      %s703 = sphi %s688, %s688
    $region530: #{tpu_custom_call.1} parent=526 // loop_header_branch
      %700 = sbr.rel (%p698) target = $region534
    $region531: #{tpu_custom_call.1} parent=526 // loop_body
      %v704 = vld [vmem:[%s702] sm:%s695]
      %705 = vst [vmem:[%s703] sm:%s695] %v704
    $region532: #{tpu_custom_call.1} parent=526 // loop_footer
      %s701 = sadd.s32 1, %s697
    $region533: #{tpu_custom_call.1} parent=526 // loop_footer_branch
      %696 = sbr.rel target = $region529
    $region534: #{tpu_custom_call.1} parent=526 // loop_exit
      _
  $region527: #{tpu_custom_call.1} parent=0 // pred_fallthru
    _
  // Predicated region
  $region546: #{tpu_custom_call.1} parent=0 // pred_check
    _
  $region547: #{tpu_custom_call.1} parent=0 // pred_check_branch
    %722 = sbr.rel (0) target = $region549
  $region548: #{tpu_custom_call.1} parent=0 // pred_region
    %723 = vsyncadd %s689, 16
  $region549: #{tpu_custom_call.1} parent=0 // pred_fallthru
    _
  %s724 = sadd.s32 %s646, 2
  %s725 = sld [smem:[#allocation5 + %s724]]
  %s726 = scalar_lea.vmem %s1, %s725
  %s727 = scalar_lea.vmem [#allocation2], 18
  %s728 = scalar_lea.sflag [#allocation3], 18
  // Predicated region
  $region550: #{tpu_custom_call.1} parent=0 // pred_check
    _
  $region551: #{tpu_custom_call.1} parent=0 // pred_check_branch
    %730 = sbr.rel target = $region553
  $region552: #{tpu_custom_call.1} parent=0 // pred_region
    // Predicated region
    $region565: #{tpu_custom_call.1} parent=552 // pred_check
      _
    $region566: #{tpu_custom_call.1} parent=552 // pred_check_branch
      %746 = sbr.rel (0) target = $region568
    $region567: #{tpu_custom_call.1} parent=552 // pred_region
      %s748 = ssub.s32 2, 1
      loop: start=0, step=1, limit=1
      $region569: #{tpu_custom_call.1} parent=567 // loop_pre_header
        _
      $region570: #{tpu_custom_call.1} parent=567 // loop_header
        %s750 = sphi 0, %s754
        %p751 = scmp.ge.s32.totalorder %s750, 1
        %s755 = sphi %s726, %s726
        %s756 = sphi %s727, %s727
      $region571: #{tpu_custom_call.1} parent=567 // loop_header_branch
        %753 = sbr.rel (%p751) target = $region575
      $region572: #{tpu_custom_call.1} parent=567 // loop_body
        %v757 = vld [vmem:[%s755] sm:%s748]
        %758 = vst [vmem:[%s756] sm:%s748] %v757
      $region573: #{tpu_custom_call.1} parent=567 // loop_footer
        %s754 = sadd.s32 1, %s750
      $region574: #{tpu_custom_call.1} parent=567 // loop_footer_branch
        %749 = sbr.rel target = $region570
      $region575: #{tpu_custom_call.1} parent=567 // loop_exit
        _
    $region568: #{tpu_custom_call.1} parent=552 // pred_fallthru
      _
  $region553: #{tpu_custom_call.1} parent=0 // pred_fallthru
    _
  // Predicated region
  $region554: #{tpu_custom_call.1} parent=0 // pred_check
    _
  $region555: #{tpu_custom_call.1} parent=0 // pred_check_branch
    %732 = sbr.rel (0) target = $region557
  $region556: #{tpu_custom_call.1} parent=0 // pred_region
    %s734 = ssub.s32 2, 1
    loop: start=0, step=1, limit=1
    $region558: #{tpu_custom_call.1} parent=556 // loop_pre_header
      _
    $region559: #{tpu_custom_call.1} parent=556 // loop_header
      %s736 = sphi 0, %s740
      %p737 = scmp.ge.s32.totalorder %s736, 1
      %s741 = sphi %s726, %s726
      %s742 = sphi %s727, %s727
    $region560: #{tpu_custom_call.1} parent=556 // loop_header_branch
      %739 = sbr.rel (%p737) target = $region564
    $region561: #{tpu_custom_call.1} parent=556 // loop_body
      %v743 = vld [vmem:[%s741] sm:%s734]
      %744 = vst [vmem:[%s742] sm:%s734] %v743
    $region562: #{tpu_custom_call.1} parent=556 // loop_footer
      %s740 = sadd.s32 1, %s736
    $region563: #{tpu_custom_call.1} parent=556 // loop_footer_branch
      %735 = sbr.rel target = $region559
    $region564: #{tpu_custom_call.1} parent=556 // loop_exit
      _
  $region557: #{tpu_custom_call.1} parent=0 // pred_fallthru
    _
  // Predicated region
  $region576: #{tpu_custom_call.1} parent=0 // pred_check
    _
  $region577: #{tpu_custom_call.1} parent=0 // pred_check_branch
    %761 = sbr.rel (0) target = $region579
  $region578: #{tpu_custom_call.1} parent=0 // pred_region
    %762 = vsyncadd %s728, 16
  $region579: #{tpu_custom_call.1} parent=0 // pred_fallthru
    _
  %s763 = sadd.s32 %s646, 3
  %s764 = sld [smem:[#allocation5 + %s763]]
  %s765 = scalar_lea.vmem %s1, %s764
  %s766 = scalar_lea.vmem [#allocation2], 19
  %s767 = scalar_lea.sflag [#allocation3], 19
  // Predicated region
  $region580: #{tpu_custom_call.1} parent=0 // pred_check
    _
  $region581: #{tpu_custom_call.1} parent=0 // pred_check_branch
    %769 = sbr.rel target = $region583
  $region582: #{tpu_custom_call.1} parent=0 // pred_region
    // Predicated region
    $region595: #{tpu_custom_call.1} parent=582 // pred_check
      _
    $region596: #{tpu_custom_call.1} parent=582 // pred_check_branch
      %785 = sbr.rel (0) target = $region598
    $region597: #{tpu_custom_call.1} parent=582 // pred_region
      %s787 = ssub.s32 2, 1
      loop: start=0, step=1, limit=1
      $region599: #{tpu_custom_call.1} parent=597 // loop_pre_header
        _
      $region600: #{tpu_custom_call.1} parent=597 // loop_header
        %s789 = sphi 0, %s793
        %p790 = scmp.ge.s32.totalorder %s789, 1
        %s794 = sphi %s765, %s765
        %s795 = sphi %s766, %s766
      $region601: #{tpu_custom_call.1} parent=597 // loop_header_branch
        %792 = sbr.rel (%p790) target = $region605
      $region602: #{tpu_custom_call.1} parent=597 // loop_body
        %v796 = vld [vmem:[%s794] sm:%s787]
        %797 = vst [vmem:[%s795] sm:%s787] %v796
      $region603: #{tpu_custom_call.1} parent=597 // loop_footer
        %s793 = sadd.s32 1, %s789
      $region604: #{tpu_custom_call.1} parent=597 // loop_footer_branch
        %788 = sbr.rel target = $region600
      $region605: #{tpu_custom_call.1} parent=597 // loop_exit
        _
    $region598: #{tpu_custom_call.1} parent=582 // pred_fallthru
      _
  $region583: #{tpu_custom_call.1} parent=0 // pred_fallthru
    _
  // Predicated region
  $region584: #{tpu_custom_call.1} parent=0 // pred_check
    _
  $region585: #{tpu_custom_call.1} parent=0 // pred_check_branch
    %771 = sbr.rel (0) target = $region587
  $region586: #{tpu_custom_call.1} parent=0 // pred_region
    %s773 = ssub.s32 2, 1
    loop: start=0, step=1, limit=1
    $region588: #{tpu_custom_call.1} parent=586 // loop_pre_header
      _
    $region589: #{tpu_custom_call.1} parent=586 // loop_header
      %s775 = sphi 0, %s779
      %p776 = scmp.ge.s32.totalorder %s775, 1
      %s780 = sphi %s765, %s765
      %s781 = sphi %s766, %s766
    $region590: #{tpu_custom_call.1} parent=586 // loop_header_branch
      %778 = sbr.rel (%p776) target = $region594
    $region591: #{tpu_custom_call.1} parent=586 // loop_body
      %v782 = vld [vmem:[%s780] sm:%s773]
      %783 = vst [vmem:[%s781] sm:%s773] %v782
    $region592: #{tpu_custom_call.1} parent=586 // loop_footer
      %s779 = sadd.s32 1, %s775
    $region593: #{tpu_custom_call.1} parent=586 // loop_footer_branch
      %774 = sbr.rel target = $region589
    $region594: #{tpu_custom_call.1} parent=586 // loop_exit
      _
  $region587: #{tpu_custom_call.1} parent=0 // pred_fallthru
    _
  // Predicated region
  $region606: #{tpu_custom_call.1} parent=0 // pred_check
    _
  $region607: #{tpu_custom_call.1} parent=0 // pred_check_branch
    %800 = sbr.rel (0) target = $region609
  $region608: #{tpu_custom_call.1} parent=0 // pred_region
    %801 = vsyncadd %s767, 16
  $region609: #{tpu_custom_call.1} parent=0 // pred_fallthru
    _
  %s802 = sadd.s32 %s646, 4
  %s803 = sld [smem:[#allocation5 + %s802]]
  %s804 = scalar_lea.vmem %s1, %s803
  %s805 = scalar_lea.vmem [#allocation2], 20
  %s806 = scalar_lea.sflag [#allocation3], 20
  // Predicated region
  $region610: #{tpu_custom_call.1} parent=0 // pred_check
    _
  $region611: #{tpu_custom_call.1} parent=0 // pred_check_branch
    %808 = sbr.rel target = $region613
  $region612: #{tpu_custom_call.1} parent=0 // pred_region
    // Predicated region
    $region625: #{tpu_custom_call.1} parent=612 // pred_check
      _
    $region626: #{tpu_custom_call.1} parent=612 // pred_check_branch
      %824 = sbr.rel (0) target = $region628
    $region627: #{tpu_custom_call.1} parent=612 // pred_region
      %s826 = ssub.s32 2, 1
      loop: start=0, step=1, limit=1
      $region629: #{tpu_custom_call.1} parent=627 // loop_pre_header
        _
      $region630: #{tpu_custom_call.1} parent=627 // loop_header
        %s828 = sphi 0, %s832
        %p829 = scmp.ge.s32.totalorder %s828, 1
        %s833 = sphi %s804, %s804
        %s834 = sphi %s805, %s805
      $region631: #{tpu_custom_call.1} parent=627 // loop_header_branch
        %831 = sbr.rel (%p829) target = $region635
      $region632: #{tpu_custom_call.1} parent=627 // loop_body
        %v835 = vld [vmem:[%s833] sm:%s826]
        %836 = vst [vmem:[%s834] sm:%s826] %v835
      $region633: #{tpu_custom_call.1} parent=627 // loop_footer
        %s832 = sadd.s32 1, %s828
      $region634: #{tpu_custom_call.1} parent=627 // loop_footer_branch
        %827 = sbr.rel target = $region630
      $region635: #{tpu_custom_call.1} parent=627 // loop_exit
        _
    $region628: #{tpu_custom_call.1} parent=612 // pred_fallthru
      _
  $region613: #{tpu_custom_call.1} parent=0 // pred_fallthru
    _
  // Predicated region
  $region614: #{tpu_custom_call.1} parent=0 // pred_check
    _
  $region615: #{tpu_custom_call.1} parent=0 // pred_check_branch
    %810 = sbr.rel (0) target = $region617
  $region616: #{tpu_custom_call.1} parent=0 // pred_region
    %s812 = ssub.s32 2, 1
    loop: start=0, step=1, limit=1
    $region618: #{tpu_custom_call.1} parent=616 // loop_pre_header
      _
    $region619: #{tpu_custom_call.1} parent=616 // loop_header
      %s814 = sphi 0, %s818
      %p815 = scmp.ge.s32.totalorder %s814, 1
      %s819 = sphi %s804, %s804
      %s820 = sphi %s805, %s805
    $region620: #{tpu_custom_call.1} parent=616 // loop_header_branch
      %817 = sbr.rel (%p815) target = $region624
    $region621: #{tpu_custom_call.1} parent=616 // loop_body
      %v821 = vld [vmem:[%s819] sm:%s812]
      %822 = vst [vmem:[%s820] sm:%s812] %v821
    $region622: #{tpu_custom_call.1} parent=616 // loop_footer
      %s818 = sadd.s32 1, %s814
    $region623: #{tpu_custom_call.1} parent=616 // loop_footer_branch
      %813 = sbr.rel target = $region619
    $region624: #{tpu_custom_call.1} parent=616 // loop_exit
      _
  $region617: #{tpu_custom_call.1} parent=0 // pred_fallthru
    _
  // Predicated region
  $region636: #{tpu_custom_call.1} parent=0 // pred_check
    _
  $region637: #{tpu_custom_call.1} parent=0 // pred_check_branch
    %839 = sbr.rel (0) target = $region639
  $region638: #{tpu_custom_call.1} parent=0 // pred_region
    %840 = vsyncadd %s806, 16
  $region639: #{tpu_custom_call.1} parent=0 // pred_fallthru
    _
  %s841 = sadd.s32 %s646, 5
  %s842 = sld [smem:[#allocation5 + %s841]]
  %s843 = scalar_lea.vmem %s1, %s842
  %s844 = scalar_lea.vmem [#allocation2], 21
  %s845 = scalar_lea.sflag [#allocation3], 21
  // Predicated region
  $region640: #{tpu_custom_call.1} parent=0 // pred_check
    _
  $region641: #{tpu_custom_call.1} parent=0 // pred_check_branch
    %847 = sbr.rel target = $region643
  $region642: #{tpu_custom_call.1} parent=0 // pred_region
    // Predicated region
    $region655: #{tpu_custom_call.1} parent=642 // pred_check
      _
    $region656: #{tpu_custom_call.1} parent=642 // pred_check_branch
      %863 = sbr.rel (0) target = $region658
    $region657: #{tpu_custom_call.1} parent=642 // pred_region
      %s865 = ssub.s32 2, 1
      loop: start=0, step=1, limit=1
      $region659: #{tpu_custom_call.1} parent=657 // loop_pre_header
        _
      $region660: #{tpu_custom_call.1} parent=657 // loop_header
        %s867 = sphi 0, %s871
        %p868 = scmp.ge.s32.totalorder %s867, 1
        %s872 = sphi %s843, %s843
        %s873 = sphi %s844, %s844
      $region661: #{tpu_custom_call.1} parent=657 // loop_header_branch
        %870 = sbr.rel (%p868) target = $region665
      $region662: #{tpu_custom_call.1} parent=657 // loop_body
        %v874 = vld [vmem:[%s872] sm:%s865]
        %875 = vst [vmem:[%s873] sm:%s865] %v874
      $region663: #{tpu_custom_call.1} parent=657 // loop_footer
        %s871 = sadd.s32 1, %s867
      $region664: #{tpu_custom_call.1} parent=657 // loop_footer_branch
        %866 = sbr.rel target = $region660
      $region665: #{tpu_custom_call.1} parent=657 // loop_exit
        _
    $region658: #{tpu_custom_call.1} parent=642 // pred_fallthru
      _
  $region643: #{tpu_custom_call.1} parent=0 // pred_fallthru
    _
  // Predicated region
  $region644: #{tpu_custom_call.1} parent=0 // pred_check
    _
  $region645: #{tpu_custom_call.1} parent=0 // pred_check_branch
    %849 = sbr.rel (0) target = $region647
  $region646: #{tpu_custom_call.1} parent=0 // pred_region
    %s851 = ssub.s32 2, 1
    loop: start=0, step=1, limit=1
    $region648: #{tpu_custom_call.1} parent=646 // loop_pre_header
      _
    $region649: #{tpu_custom_call.1} parent=646 // loop_header
      %s853 = sphi 0, %s857
      %p854 = scmp.ge.s32.totalorder %s853, 1
      %s858 = sphi %s843, %s843
      %s859 = sphi %s844, %s844
    $region650: #{tpu_custom_call.1} parent=646 // loop_header_branch
      %856 = sbr.rel (%p854) target = $region654
    $region651: #{tpu_custom_call.1} parent=646 // loop_body
      %v860 = vld [vmem:[%s858] sm:%s851]
      %861 = vst [vmem:[%s859] sm:%s851] %v860
    $region652: #{tpu_custom_call.1} parent=646 // loop_footer
      %s857 = sadd.s32 1, %s853
    $region653: #{tpu_custom_call.1} parent=646 // loop_footer_branch
      %852 = sbr.rel target = $region649
    $region654: #{tpu_custom_call.1} parent=646 // loop_exit
      _
  $region647: #{tpu_custom_call.1} parent=0 // pred_fallthru
    _
  // Predicated region
  $region666: #{tpu_custom_call.1} parent=0 // pred_check
    _
  $region667: #{tpu_custom_call.1} parent=0 // pred_check_branch
    %878 = sbr.rel (0) target = $region669
  $region668: #{tpu_custom_call.1} parent=0 // pred_region
    %879 = vsyncadd %s845, 16
  $region669: #{tpu_custom_call.1} parent=0 // pred_fallthru
    _
  %s880 = sadd.s32 %s646, 6
  %s881 = sld [smem:[#allocation5 + %s880]]
  %s882 = scalar_lea.vmem %s1, %s881
  %s883 = scalar_lea.vmem [#allocation2], 22
  %s884 = scalar_lea.sflag [#allocation3], 22
  // Predicated region
  $region670: #{tpu_custom_call.1} parent=0 // pred_check
    _
  $region671: #{tpu_custom_call.1} parent=0 // pred_check_branch
    %886 = sbr.rel target = $region673
  $region672: #{tpu_custom_call.1} parent=0 // pred_region
    // Predicated region
    $region685: #{tpu_custom_call.1} parent=672 // pred_check
      _
    $region686: #{tpu_custom_call.1} parent=672 // pred_check_branch
      %902 = sbr.rel (0) target = $region688
    $region687: #{tpu_custom_call.1} parent=672 // pred_region
      %s904 = ssub.s32 2, 1
      loop: start=0, step=1, limit=1
      $region689: #{tpu_custom_call.1} parent=687 // loop_pre_header
        _
      $region690: #{tpu_custom_call.1} parent=687 // loop_header
        %s906 = sphi 0, %s910
        %p907 = scmp.ge.s32.totalorder %s906, 1
        %s911 = sphi %s882, %s882
        %s912 = sphi %s883, %s883
      $region691: #{tpu_custom_call.1} parent=687 // loop_header_branch
        %909 = sbr.rel (%p907) target = $region695
      $region692: #{tpu_custom_call.1} parent=687 // loop_body
        %v913 = vld [vmem:[%s911] sm:%s904]
        %914 = vst [vmem:[%s912] sm:%s904] %v913
      $region693: #{tpu_custom_call.1} parent=687 // loop_footer
        %s910 = sadd.s32 1, %s906
      $region694: #{tpu_custom_call.1} parent=687 // loop_footer_branch
        %905 = sbr.rel target = $region690
      $region695: #{tpu_custom_call.1} parent=687 // loop_exit
        _
    $region688: #{tpu_custom_call.1} parent=672 // pred_fallthru
      _
  $region673: #{tpu_custom_call.1} parent=0 // pred_fallthru
    _
  // Predicated region
  $region674: #{tpu_custom_call.1} parent=0 // pred_check
    _
  $region675: #{tpu_custom_call.1} parent=0 // pred_check_branch
    %888 = sbr.rel (0) target = $region677
  $region676: #{tpu_custom_call.1} parent=0 // pred_region
    %s890 = ssub.s32 2, 1
    loop: start=0, step=1, limit=1
    $region678: #{tpu_custom_call.1} parent=676 // loop_pre_header
      _
    $region679: #{tpu_custom_call.1} parent=676 // loop_header
      %s892 = sphi 0, %s896
      %p893 = scmp.ge.s32.totalorder %s892, 1
      %s897 = sphi %s882, %s882
      %s898 = sphi %s883, %s883
    $region680: #{tpu_custom_call.1} parent=676 // loop_header_branch
      %895 = sbr.rel (%p893) target = $region684
    $region681: #{tpu_custom_call.1} parent=676 // loop_body
      %v899 = vld [vmem:[%s897] sm:%s890]
      %900 = vst [vmem:[%s898] sm:%s890] %v899
    $region682: #{tpu_custom_call.1} parent=676 // loop_footer
      %s896 = sadd.s32 1, %s892
    $region683: #{tpu_custom_call.1} parent=676 // loop_footer_branch
      %891 = sbr.rel target = $region679
    $region684: #{tpu_custom_call.1} parent=676 // loop_exit
      _
  $region677: #{tpu_custom_call.1} parent=0 // pred_fallthru
    _
  // Predicated region
  $region696: #{tpu_custom_call.1} parent=0 // pred_check
    _
  $region697: #{tpu_custom_call.1} parent=0 // pred_check_branch
    %917 = sbr.rel (0) target = $region699
  $region698: #{tpu_custom_call.1} parent=0 // pred_region
    %918 = vsyncadd %s884, 16
  $region699: #{tpu_custom_call.1} parent=0 // pred_fallthru
    _
  %s919 = sadd.s32 %s646, 7
  %s920 = sld [smem:[#allocation5 + %s919]]
  %s921 = scalar_lea.vmem %s1, %s920
  %s922 = scalar_lea.vmem [#allocation2], 23
  %s923 = scalar_lea.sflag [#allocation3], 23
  // Predicated region
  $region700: #{tpu_custom_call.1} parent=0 // pred_check
    _
  $region701: #{tpu_custom_call.1} parent=0 // pred_check_branch
    %925 = sbr.rel target = $region703
  $region702: #{tpu_custom_call.1} parent=0 // pred_region
    // Predicated region
    $region715: #{tpu_custom_call.1} parent=702 // pred_check
      _
    $region716: #{tpu_custom_call.1} parent=702 // pred_check_branch
      %941 = sbr.rel (0) target = $region718
    $region717: #{tpu_custom_call.1} parent=702 // pred_region
      %s943 = ssub.s32 2, 1
      loop: start=0, step=1, limit=1
      $region719: #{tpu_custom_call.1} parent=717 // loop_pre_header
        _
      $region720: #{tpu_custom_call.1} parent=717 // loop_header
        %s945 = sphi 0, %s949
        %p946 = scmp.ge.s32.totalorder %s945, 1
        %s950 = sphi %s921, %s921
        %s951 = sphi %s922, %s922
      $region721: #{tpu_custom_call.1} parent=717 // loop_header_branch
        %948 = sbr.rel (%p946) target = $region725
      $region722: #{tpu_custom_call.1} parent=717 // loop_body
        %v952 = vld [vmem:[%s950] sm:%s943]
        %953 = vst [vmem:[%s951] sm:%s943] %v952
      $region723: #{tpu_custom_call.1} parent=717 // loop_footer
        %s949 = sadd.s32 1, %s945
      $region724: #{tpu_custom_call.1} parent=717 // loop_footer_branch
        %944 = sbr.rel target = $region720
      $region725: #{tpu_custom_call.1} parent=717 // loop_exit
        _
    $region718: #{tpu_custom_call.1} parent=702 // pred_fallthru
      _
  $region703: #{tpu_custom_call.1} parent=0 // pred_fallthru
    _
  // Predicated region
  $region704: #{tpu_custom_call.1} parent=0 // pred_check
    _
  $region705: #{tpu_custom_call.1} parent=0 // pred_check_branch
    %927 = sbr.rel (0) target = $region707
  $region706: #{tpu_custom_call.1} parent=0 // pred_region
    %s929 = ssub.s32 2, 1
    loop: start=0, step=1, limit=1
    $region708: #{tpu_custom_call.1} parent=706 // loop_pre_header
      _
    $region709: #{tpu_custom_call.1} parent=706 // loop_header
      %s931 = sphi 0, %s935
      %p932 = scmp.ge.s32.totalorder %s931, 1
      %s936 = sphi %s921, %s921
      %s937 = sphi %s922, %s922
    $region710: #{tpu_custom_call.1} parent=706 // loop_header_branch
      %934 = sbr.rel (%p932) target = $region714
    $region711: #{tpu_custom_call.1} parent=706 // loop_body
      %v938 = vld [vmem:[%s936] sm:%s929]
      %939 = vst [vmem:[%s937] sm:%s929] %v938
    $region712: #{tpu_custom_call.1} parent=706 // loop_footer
      %s935 = sadd.s32 1, %s931
    $region713: #{tpu_custom_call.1} parent=706 // loop_footer_branch
      %930 = sbr.rel target = $region709
    $region714: #{tpu_custom_call.1} parent=706 // loop_exit
      _
  $region707: #{tpu_custom_call.1} parent=0 // pred_fallthru
    _
  // Predicated region
  $region726: #{tpu_custom_call.1} parent=0 // pred_check
    _
  $region727: #{tpu_custom_call.1} parent=0 // pred_check_branch
    %956 = sbr.rel (0) target = $region729
  $region728: #{tpu_custom_call.1} parent=0 // pred_region
    %957 = vsyncadd %s923, 16
  $region729: #{tpu_custom_call.1} parent=0 // pred_fallthru
    _
  %s958 = sadd.s32 %s21, 3
  %s959 = smul.u32 %s958, 128
  %s960 = sld [smem:[#allocation5 + %s959]]
  %s961 = scalar_lea.vmem %s1, %s960
  %s962 = scalar_lea.vmem [#allocation2], 24
  %s963 = scalar_lea.sflag [#allocation3], 24
  // Predicated region
  $region730: #{tpu_custom_call.1} parent=0 // pred_check
    _
  $region731: #{tpu_custom_call.1} parent=0 // pred_check_branch
    %965 = sbr.rel target = $region733
  $region732: #{tpu_custom_call.1} parent=0 // pred_region
    // Predicated region
    $region745: #{tpu_custom_call.1} parent=732 // pred_check
      _
    $region746: #{tpu_custom_call.1} parent=732 // pred_check_branch
      %981 = sbr.rel (0) target = $region748
    $region747: #{tpu_custom_call.1} parent=732 // pred_region
      %s983 = ssub.s32 2, 1
      loop: start=0, step=1, limit=1
      $region749: #{tpu_custom_call.1} parent=747 // loop_pre_header
        _
      $region750: #{tpu_custom_call.1} parent=747 // loop_header
        %s985 = sphi 0, %s989
        %p986 = scmp.ge.s32.totalorder %s985, 1
        %s990 = sphi %s961, %s961
        %s991 = sphi %s962, %s962
      $region751: #{tpu_custom_call.1} parent=747 // loop_header_branch
        %988 = sbr.rel (%p986) target = $region755
      $region752: #{tpu_custom_call.1} parent=747 // loop_body
        %v992 = vld [vmem:[%s990] sm:%s983]
        %993 = vst [vmem:[%s991] sm:%s983] %v992
      $region753: #{tpu_custom_call.1} parent=747 // loop_footer
        %s989 = sadd.s32 1, %s985
      $region754: #{tpu_custom_call.1} parent=747 // loop_footer_branch
        %984 = sbr.rel target = $region750
      $region755: #{tpu_custom_call.1} parent=747 // loop_exit
        _
    $region748: #{tpu_custom_call.1} parent=732 // pred_fallthru
      _
  $region733: #{tpu_custom_call.1} parent=0 // pred_fallthru
    _
  // Predicated region
  $region734: #{tpu_custom_call.1} parent=0 // pred_check
    _
  $region735: #{tpu_custom_call.1} parent=0 // pred_check_branch
    %967 = sbr.rel (0) target = $region737
  $region736: #{tpu_custom_call.1} parent=0 // pred_region
    %s969 = ssub.s32 2, 1
    loop: start=0, step=1, limit=1
    $region738: #{tpu_custom_call.1} parent=736 // loop_pre_header
      _
    $region739: #{tpu_custom_call.1} parent=736 // loop_header
      %s971 = sphi 0, %s975
      %p972 = scmp.ge.s32.totalorder %s971, 1
      %s976 = sphi %s961, %s961
      %s977 = sphi %s962, %s962
    $region740: #{tpu_custom_call.1} parent=736 // loop_header_branch
      %974 = sbr.rel (%p972) target = $region744
    $region741: #{tpu_custom_call.1} parent=736 // loop_body
      %v978 = vld [vmem:[%s976] sm:%s969]
      %979 = vst [vmem:[%s977] sm:%s969] %v978
    $region742: #{tpu_custom_call.1} parent=736 // loop_footer
      %s975 = sadd.s32 1, %s971
    $region743: #{tpu_custom_call.1} parent=736 // loop_footer_branch
      %970 = sbr.rel target = $region739
    $region744: #{tpu_custom_call.1} parent=736 // loop_exit
      _
  $region737: #{tpu_custom_call.1} parent=0 // pred_fallthru
    _
  // Predicated region
  $region756: #{tpu_custom_call.1} parent=0 // pred_check
    _
  $region757: #{tpu_custom_call.1} parent=0 // pred_check_branch
    %996 = sbr.rel (0) target = $region759
  $region758: #{tpu_custom_call.1} parent=0 // pred_region
    %997 = vsyncadd %s963, 16
  $region759: #{tpu_custom_call.1} parent=0 // pred_fallthru
    _
  %s998 = sadd.s32 %s959, 1
  %s999 = sld [smem:[#allocation5 + %s998]]
  %s1000 = scalar_lea.vmem %s1, %s999
  %s1001 = scalar_lea.vmem [#allocation2], 25
  %s1002 = scalar_lea.sflag [#allocation3], 25
  // Predicated region
  $region760: #{tpu_custom_call.1} parent=0 // pred_check
    _
  $region761: #{tpu_custom_call.1} parent=0 // pred_check_branch
    %1004 = sbr.rel target = $region763
  $region762: #{tpu_custom_call.1} parent=0 // pred_region
    // Predicated region
    $region775: #{tpu_custom_call.1} parent=762 // pred_check
      _
    $region776: #{tpu_custom_call.1} parent=762 // pred_check_branch
      %1020 = sbr.rel (0) target = $region778
    $region777: #{tpu_custom_call.1} parent=762 // pred_region
      %s1022 = ssub.s32 2, 1
      loop: start=0, step=1, limit=1
      $region779: #{tpu_custom_call.1} parent=777 // loop_pre_header
        _
      $region780: #{tpu_custom_call.1} parent=777 // loop_header
        %s1024 = sphi 0, %s1028
        %p1025 = scmp.ge.s32.totalorder %s1024, 1
        %s1029 = sphi %s1000, %s1000
        %s1030 = sphi %s1001, %s1001
      $region781: #{tpu_custom_call.1} parent=777 // loop_header_branch
        %1027 = sbr.rel (%p1025) target = $region785
      $region782: #{tpu_custom_call.1} parent=777 // loop_body
        %v1031 = vld [vmem:[%s1029] sm:%s1022]
        %1032 = vst [vmem:[%s1030] sm:%s1022] %v1031
      $region783: #{tpu_custom_call.1} parent=777 // loop_footer
        %s1028 = sadd.s32 1, %s1024
      $region784: #{tpu_custom_call.1} parent=777 // loop_footer_branch
        %1023 = sbr.rel target = $region780
      $region785: #{tpu_custom_call.1} parent=777 // loop_exit
        _
    $region778: #{tpu_custom_call.1} parent=762 // pred_fallthru
      _
  $region763: #{tpu_custom_call.1} parent=0 // pred_fallthru
    _
  // Predicated region
  $region764: #{tpu_custom_call.1} parent=0 // pred_check
    _
  $region765: #{tpu_custom_call.1} parent=0 // pred_check_branch
    %1006 = sbr.rel (0) target = $region767
  $region766: #{tpu_custom_call.1} parent=0 // pred_region
    %s1008 = ssub.s32 2, 1
    loop: start=0, step=1, limit=1
    $region768: #{tpu_custom_call.1} parent=766 // loop_pre_header
      _
    $region769: #{tpu_custom_call.1} parent=766 // loop_header
      %s1010 = sphi 0, %s1014
      %p1011 = scmp.ge.s32.totalorder %s1010, 1
      %s1015 = sphi %s1000, %s1000
      %s1016 = sphi %s1001, %s1001
    $region770: #{tpu_custom_call.1} parent=766 // loop_header_branch
      %1013 = sbr.rel (%p1011) target = $region774
    $region771: #{tpu_custom_call.1} parent=766 // loop_body
      %v1017 = vld [vmem:[%s1015] sm:%s1008]
      %1018 = vst [vmem:[%s1016] sm:%s1008] %v1017
    $region772: #{tpu_custom_call.1} parent=766 // loop_footer
      %s1014 = sadd.s32 1, %s1010
    $region773: #{tpu_custom_call.1} parent=766 // loop_footer_branch
      %1009 = sbr.rel target = $region769
    $region774: #{tpu_custom_call.1} parent=766 // loop_exit
      _
  $region767: #{tpu_custom_call.1} parent=0 // pred_fallthru
    _
  // Predicated region
  $region786: #{tpu_custom_call.1} parent=0 // pred_check
    _
  $region787: #{tpu_custom_call.1} parent=0 // pred_check_branch
    %1035 = sbr.rel (0) target = $region789
  $region788: #{tpu_custom_call.1} parent=0 // pred_region
    %1036 = vsyncadd %s1002, 16
  $region789: #{tpu_custom_call.1} parent=0 // pred_fallthru
    _
  %s1037 = sadd.s32 %s959, 2
  %s1038 = sld [smem:[#allocation5 + %s1037]]
  %s1039 = scalar_lea.vmem %s1, %s1038
  %s1040 = scalar_lea.vmem [#allocation2], 26
  %s1041 = scalar_lea.sflag [#allocation3], 26
  // Predicated region
  $region790: #{tpu_custom_call.1} parent=0 // pred_check
    _
  $region791: #{tpu_custom_call.1} parent=0 // pred_check_branch
    %1043 = sbr.rel target = $region793
  $region792: #{tpu_custom_call.1} parent=0 // pred_region
    // Predicated region
    $region805: #{tpu_custom_call.1} parent=792 // pred_check
      _
    $region806: #{tpu_custom_call.1} parent=792 // pred_check_branch
      %1059 = sbr.rel (0) target = $region808
    $region807: #{tpu_custom_call.1} parent=792 // pred_region
      %s1061 = ssub.s32 2, 1
      loop: start=0, step=1, limit=1
      $region809: #{tpu_custom_call.1} parent=807 // loop_pre_header
        _
      $region810: #{tpu_custom_call.1} parent=807 // loop_header
        %s1063 = sphi 0, %s1067
        %p1064 = scmp.ge.s32.totalorder %s1063, 1
        %s1068 = sphi %s1039, %s1039
        %s1069 = sphi %s1040, %s1040
      $region811: #{tpu_custom_call.1} parent=807 // loop_header_branch
        %1066 = sbr.rel (%p1064) target = $region815
      $region812: #{tpu_custom_call.1} parent=807 // loop_body
        %v1070 = vld [vmem:[%s1068] sm:%s1061]
        %1071 = vst [vmem:[%s1069] sm:%s1061] %v1070
      $region813: #{tpu_custom_call.1} parent=807 // loop_footer
        %s1067 = sadd.s32 1, %s1063
      $region814: #{tpu_custom_call.1} parent=807 // loop_footer_branch
        %1062 = sbr.rel target = $region810
      $region815: #{tpu_custom_call.1} parent=807 // loop_exit
        _
    $region808: #{tpu_custom_call.1} parent=792 // pred_fallthru
      _
  $region793: #{tpu_custom_call.1} parent=0 // pred_fallthru
    _
  // Predicated region
  $region794: #{tpu_custom_call.1} parent=0 // pred_check
    _
  $region795: #{tpu_custom_call.1} parent=0 // pred_check_branch
    %1045 = sbr.rel (0) target = $region797
  $region796: #{tpu_custom_call.1} parent=0 // pred_region
    %s1047 = ssub.s32 2, 1
    loop: start=0, step=1, limit=1
    $region798: #{tpu_custom_call.1} parent=796 // loop_pre_header
      _
    $region799: #{tpu_custom_call.1} parent=796 // loop_header
      %s1049 = sphi 0, %s1053
      %p1050 = scmp.ge.s32.totalorder %s1049, 1
      %s1054 = sphi %s1039, %s1039
      %s1055 = sphi %s1040, %s1040
    $region800: #{tpu_custom_call.1} parent=796 // loop_header_branch
      %1052 = sbr.rel (%p1050) target = $region804
    $region801: #{tpu_custom_call.1} parent=796 // loop_body
      %v1056 = vld [vmem:[%s1054] sm:%s1047]
      %1057 = vst [vmem:[%s1055] sm:%s1047] %v1056
    $region802: #{tpu_custom_call.1} parent=796 // loop_footer
      %s1053 = sadd.s32 1, %s1049
    $region803: #{tpu_custom_call.1} parent=796 // loop_footer_branch
      %1048 = sbr.rel target = $region799
    $region804: #{tpu_custom_call.1} parent=796 // loop_exit
      _
  $region797: #{tpu_custom_call.1} parent=0 // pred_fallthru
    _
  // Predicated region
  $region816: #{tpu_custom_call.1} parent=0 // pred_check
    _
  $region817: #{tpu_custom_call.1} parent=0 // pred_check_branch
    %1074 = sbr.rel (0) target = $region819
  $region818: #{tpu_custom_call.1} parent=0 // pred_region
    %1075 = vsyncadd %s1041, 16
  $region819: #{tpu_custom_call.1} parent=0 // pred_fallthru
    _
  %s1076 = sadd.s32 %s959, 3
  %s1077 = sld [smem:[#allocation5 + %s1076]]
  %s1078 = scalar_lea.vmem %s1, %s1077
  %s1079 = scalar_lea.vmem [#allocation2], 27
  %s1080 = scalar_lea.sflag [#allocation3], 27
  // Predicated region
  $region820: #{tpu_custom_call.1} parent=0 // pred_check
    _
  $region821: #{tpu_custom_call.1} parent=0 // pred_check_branch
    %1082 = sbr.rel target = $region823
  $region822: #{tpu_custom_call.1} parent=0 // pred_region
    // Predicated region
    $region835: #{tpu_custom_call.1} parent=822 // pred_check
      _
    $region836: #{tpu_custom_call.1} parent=822 // pred_check_branch
      %1098 = sbr.rel (0) target = $region838
    $region837: #{tpu_custom_call.1} parent=822 // pred_region
      %s1100 = ssub.s32 2, 1
      loop: start=0, step=1, limit=1
      $region839: #{tpu_custom_call.1} parent=837 // loop_pre_header
        _
      $region840: #{tpu_custom_call.1} parent=837 // loop_header
        %s1102 = sphi 0, %s1106
        %p1103 = scmp.ge.s32.totalorder %s1102, 1
        %s1107 = sphi %s1078, %s1078
        %s1108 = sphi %s1079, %s1079
      $region841: #{tpu_custom_call.1} parent=837 // loop_header_branch
        %1105 = sbr.rel (%p1103) target = $region845
      $region842: #{tpu_custom_call.1} parent=837 // loop_body
        %v1109 = vld [vmem:[%s1107] sm:%s1100]
        %1110 = vst [vmem:[%s1108] sm:%s1100] %v1109
      $region843: #{tpu_custom_call.1} parent=837 // loop_footer
        %s1106 = sadd.s32 1, %s1102
      $region844: #{tpu_custom_call.1} parent=837 // loop_footer_branch
        %1101 = sbr.rel target = $region840
      $region845: #{tpu_custom_call.1} parent=837 // loop_exit
        _
    $region838: #{tpu_custom_call.1} parent=822 // pred_fallthru
      _
  $region823: #{tpu_custom_call.1} parent=0 // pred_fallthru
    _
  // Predicated region
  $region824: #{tpu_custom_call.1} parent=0 // pred_check
    _
  $region825: #{tpu_custom_call.1} parent=0 // pred_check_branch
    %1084 = sbr.rel (0) target = $region827
  $region826: #{tpu_custom_call.1} parent=0 // pred_region
    %s1086 = ssub.s32 2, 1
    loop: start=0, step=1, limit=1
    $region828: #{tpu_custom_call.1} parent=826 // loop_pre_header
      _
    $region829: #{tpu_custom_call.1} parent=826 // loop_header
      %s1088 = sphi 0, %s1092
      %p1089 = scmp.ge.s32.totalorder %s1088, 1
      %s1093 = sphi %s1078, %s1078
      %s1094 = sphi %s1079, %s1079
    $region830: #{tpu_custom_call.1} parent=826 // loop_header_branch
      %1091 = sbr.rel (%p1089) target = $region834
    $region831: #{tpu_custom_call.1} parent=826 // loop_body
      %v1095 = vld [vmem:[%s1093] sm:%s1086]
      %1096 = vst [vmem:[%s1094] sm:%s1086] %v1095
    $region832: #{tpu_custom_call.1} parent=826 // loop_footer
      %s1092 = sadd.s32 1, %s1088
    $region833: #{tpu_custom_call.1} parent=826 // loop_footer_branch
      %1087 = sbr.rel target = $region829
    $region834: #{tpu_custom_call.1} parent=826 // loop_exit
      _
  $region827: #{tpu_custom_call.1} parent=0 // pred_fallthru
    _
  // Predicated region
  $region846: #{tpu_custom_call.1} parent=0 // pred_check
    _
  $region847: #{tpu_custom_call.1} parent=0 // pred_check_branch
    %1113 = sbr.rel (0) target = $region849
  $region848: #{tpu_custom_call.1} parent=0 // pred_region
    %1114 = vsyncadd %s1080, 16
  $region849: #{tpu_custom_call.1} parent=0 // pred_fallthru
    _
  %s1115 = sadd.s32 %s959, 4
  %s1116 = sld [smem:[#allocation5 + %s1115]]
  %s1117 = scalar_lea.vmem %s1, %s1116
  %s1118 = scalar_lea.vmem [#allocation2], 28
  %s1119 = scalar_lea.sflag [#allocation3], 28
  // Predicated region
  $region850: #{tpu_custom_call.1} parent=0 // pred_check
    _
  $region851: #{tpu_custom_call.1} parent=0 // pred_check_branch
    %1121 = sbr.rel target = $region853
  $region852: #{tpu_custom_call.1} parent=0 // pred_region
    // Predicated region
    $region865: #{tpu_custom_call.1} parent=852 // pred_check
      _
    $region866: #{tpu_custom_call.1} parent=852 // pred_check_branch
      %1137 = sbr.rel (0) target = $region868
    $region867: #{tpu_custom_call.1} parent=852 // pred_region
      %s1139 = ssub.s32 2, 1
      loop: start=0, step=1, limit=1
      $region869: #{tpu_custom_call.1} parent=867 // loop_pre_header
        _
      $region870: #{tpu_custom_call.1} parent=867 // loop_header
        %s1141 = sphi 0, %s1145
        %p1142 = scmp.ge.s32.totalorder %s1141, 1
        %s1146 = sphi %s1117, %s1117
        %s1147 = sphi %s1118, %s1118
      $region871: #{tpu_custom_call.1} parent=867 // loop_header_branch
        %1144 = sbr.rel (%p1142) target = $region875
      $region872: #{tpu_custom_call.1} parent=867 // loop_body
        %v1148 = vld [vmem:[%s1146] sm:%s1139]
        %1149 = vst [vmem:[%s1147] sm:%s1139] %v1148
      $region873: #{tpu_custom_call.1} parent=867 // loop_footer
        %s1145 = sadd.s32 1, %s1141
      $region874: #{tpu_custom_call.1} parent=867 // loop_footer_branch
        %1140 = sbr.rel target = $region870
      $region875: #{tpu_custom_call.1} parent=867 // loop_exit
        _
    $region868: #{tpu_custom_call.1} parent=852 // pred_fallthru
      _
  $region853: #{tpu_custom_call.1} parent=0 // pred_fallthru
    _
  // Predicated region
  $region854: #{tpu_custom_call.1} parent=0 // pred_check
    _
  $region855: #{tpu_custom_call.1} parent=0 // pred_check_branch
    %1123 = sbr.rel (0) target = $region857
  $region856: #{tpu_custom_call.1} parent=0 // pred_region
    %s1125 = ssub.s32 2, 1
    loop: start=0, step=1, limit=1
    $region858: #{tpu_custom_call.1} parent=856 // loop_pre_header
      _
    $region859: #{tpu_custom_call.1} parent=856 // loop_header
      %s1127 = sphi 0, %s1131
      %p1128 = scmp.ge.s32.totalorder %s1127, 1
      %s1132 = sphi %s1117, %s1117
      %s1133 = sphi %s1118, %s1118
    $region860: #{tpu_custom_call.1} parent=856 // loop_header_branch
      %1130 = sbr.rel (%p1128) target = $region864
    $region861: #{tpu_custom_call.1} parent=856 // loop_body
      %v1134 = vld [vmem:[%s1132] sm:%s1125]
      %1135 = vst [vmem:[%s1133] sm:%s1125] %v1134
    $region862: #{tpu_custom_call.1} parent=856 // loop_footer
      %s1131 = sadd.s32 1, %s1127
    $region863: #{tpu_custom_call.1} parent=856 // loop_footer_branch
      %1126 = sbr.rel target = $region859
    $region864: #{tpu_custom_call.1} parent=856 // loop_exit
      _
  $region857: #{tpu_custom_call.1} parent=0 // pred_fallthru
    _
  // Predicated region
  $region876: #{tpu_custom_call.1} parent=0 // pred_check
    _
  $region877: #{tpu_custom_call.1} parent=0 // pred_check_branch
    %1152 = sbr.rel (0) target = $region879
  $region878: #{tpu_custom_call.1} parent=0 // pred_region
    %1153 = vsyncadd %s1119, 16
  $region879: #{tpu_custom_call.1} parent=0 // pred_fallthru
    _
  %s1154 = sadd.s32 %s959, 5
  %s1155 = sld [smem:[#allocation5 + %s1154]]
  %s1156 = scalar_lea.vmem %s1, %s1155
  %s1157 = scalar_lea.vmem [#allocation2], 29
  %s1158 = scalar_lea.sflag [#allocation3], 29
  // Predicated region
  $region880: #{tpu_custom_call.1} parent=0 // pred_check
    _
  $region881: #{tpu_custom_call.1} parent=0 // pred_check_branch
    %1160 = sbr.rel target = $region883
  $region882: #{tpu_custom_call.1} parent=0 // pred_region
    // Predicated region
    $region895: #{tpu_custom_call.1} parent=882 // pred_check
      _
    $region896: #{tpu_custom_call.1} parent=882 // pred_check_branch
      %1176 = sbr.rel (0) target = $region898
    $region897: #{tpu_custom_call.1} parent=882 // pred_region
      %s1178 = ssub.s32 2, 1
      loop: start=0, step=1, limit=1
      $region899: #{tpu_custom_call.1} parent=897 // loop_pre_header
        _
      $region900: #{tpu_custom_call.1} parent=897 // loop_header
        %s1180 = sphi 0, %s1184
        %p1181 = scmp.ge.s32.totalorder %s1180, 1
        %s1185 = sphi %s1156, %s1156
        %s1186 = sphi %s1157, %s1157
      $region901: #{tpu_custom_call.1} parent=897 // loop_header_branch
        %1183 = sbr.rel (%p1181) target = $region905
      $region902: #{tpu_custom_call.1} parent=897 // loop_body
        %v1187 = vld [vmem:[%s1185] sm:%s1178]
        %1188 = vst [vmem:[%s1186] sm:%s1178] %v1187
      $region903: #{tpu_custom_call.1} parent=897 // loop_footer
        %s1184 = sadd.s32 1, %s1180
      $region904: #{tpu_custom_call.1} parent=897 // loop_footer_branch
        %1179 = sbr.rel target = $region900
      $region905: #{tpu_custom_call.1} parent=897 // loop_exit
        _
    $region898: #{tpu_custom_call.1} parent=882 // pred_fallthru
      _
  $region883: #{tpu_custom_call.1} parent=0 // pred_fallthru
    _
  // Predicated region
  $region884: #{tpu_custom_call.1} parent=0 // pred_check
    _
  $region885: #{tpu_custom_call.1} parent=0 // pred_check_branch
    %1162 = sbr.rel (0) target = $region887
  $region886: #{tpu_custom_call.1} parent=0 // pred_region
    %s1164 = ssub.s32 2, 1
    loop: start=0, step=1, limit=1
    $region888: #{tpu_custom_call.1} parent=886 // loop_pre_header
      _
    $region889: #{tpu_custom_call.1} parent=886 // loop_header
      %s1166 = sphi 0, %s1170
      %p1167 = scmp.ge.s32.totalorder %s1166, 1
      %s1171 = sphi %s1156, %s1156
      %s1172 = sphi %s1157, %s1157
    $region890: #{tpu_custom_call.1} parent=886 // loop_header_branch
      %1169 = sbr.rel (%p1167) target = $region894
    $region891: #{tpu_custom_call.1} parent=886 // loop_body
      %v1173 = vld [vmem:[%s1171] sm:%s1164]
      %1174 = vst [vmem:[%s1172] sm:%s1164] %v1173
    $region892: #{tpu_custom_call.1} parent=886 // loop_footer
      %s1170 = sadd.s32 1, %s1166
    $region893: #{tpu_custom_call.1} parent=886 // loop_footer_branch
      %1165 = sbr.rel target = $region889
    $region894: #{tpu_custom_call.1} parent=886 // loop_exit
      _
  $region887: #{tpu_custom_call.1} parent=0 // pred_fallthru
    _
  // Predicated region
  $region906: #{tpu_custom_call.1} parent=0 // pred_check
    _
  $region907: #{tpu_custom_call.1} parent=0 // pred_check_branch
    %1191 = sbr.rel (0) target = $region909
  $region908: #{tpu_custom_call.1} parent=0 // pred_region
    %1192 = vsyncadd %s1158, 16
  $region909: #{tpu_custom_call.1} parent=0 // pred_fallthru
    _
  %s1193 = sadd.s32 %s959, 6
  %s1194 = sld [smem:[#allocation5 + %s1193]]
  %s1195 = scalar_lea.vmem %s1, %s1194
  %s1196 = scalar_lea.vmem [#allocation2], 30
  %s1197 = scalar_lea.sflag [#allocation3], 30
  // Predicated region
  $region910: #{tpu_custom_call.1} parent=0 // pred_check
    _
  $region911: #{tpu_custom_call.1} parent=0 // pred_check_branch
    %1199 = sbr.rel target = $region913
  $region912: #{tpu_custom_call.1} parent=0 // pred_region
    // Predicated region
    $region925: #{tpu_custom_call.1} parent=912 // pred_check
      _
    $region926: #{tpu_custom_call.1} parent=912 // pred_check_branch
      %1215 = sbr.rel (0) target = $region928
    $region927: #{tpu_custom_call.1} parent=912 // pred_region
      %s1217 = ssub.s32 2, 1
      loop: start=0, step=1, limit=1
      $region929: #{tpu_custom_call.1} parent=927 // loop_pre_header
        _
      $region930: #{tpu_custom_call.1} parent=927 // loop_header
        %s1219 = sphi 0, %s1223
        %p1220 = scmp.ge.s32.totalorder %s1219, 1
        %s1224 = sphi %s1195, %s1195
        %s1225 = sphi %s1196, %s1196
      $region931: #{tpu_custom_call.1} parent=927 // loop_header_branch
        %1222 = sbr.rel (%p1220) target = $region935
      $region932: #{tpu_custom_call.1} parent=927 // loop_body
        %v1226 = vld [vmem:[%s1224] sm:%s1217]
        %1227 = vst [vmem:[%s1225] sm:%s1217] %v1226
      $region933: #{tpu_custom_call.1} parent=927 // loop_footer
        %s1223 = sadd.s32 1, %s1219
      $region934: #{tpu_custom_call.1} parent=927 // loop_footer_branch
        %1218 = sbr.rel target = $region930
      $region935: #{tpu_custom_call.1} parent=927 // loop_exit
        _
    $region928: #{tpu_custom_call.1} parent=912 // pred_fallthru
      _
  $region913: #{tpu_custom_call.1} parent=0 // pred_fallthru
    _
  // Predicated region
  $region914: #{tpu_custom_call.1} parent=0 // pred_check
    _
  $region915: #{tpu_custom_call.1} parent=0 // pred_check_branch
    %1201 = sbr.rel (0) target = $region917
  $region916: #{tpu_custom_call.1} parent=0 // pred_region
    %s1203 = ssub.s32 2, 1
    loop: start=0, step=1, limit=1
    $region918: #{tpu_custom_call.1} parent=916 // loop_pre_header
      _
    $region919: #{tpu_custom_call.1} parent=916 // loop_header
      %s1205 = sphi 0, %s1209
      %p1206 = scmp.ge.s32.totalorder %s1205, 1
      %s1210 = sphi %s1195, %s1195
      %s1211 = sphi %s1196, %s1196
    $region920: #{tpu_custom_call.1} parent=916 // loop_header_branch
      %1208 = sbr.rel (%p1206) target = $region924
    $region921: #{tpu_custom_call.1} parent=916 // loop_body
      %v1212 = vld [vmem:[%s1210] sm:%s1203]
      %1213 = vst [vmem:[%s1211] sm:%s1203] %v1212
    $region922: #{tpu_custom_call.1} parent=916 // loop_footer
      %s1209 = sadd.s32 1, %s1205
    $region923: #{tpu_custom_call.1} parent=916 // loop_footer_branch
      %1204 = sbr.rel target = $region919
    $region924: #{tpu_custom_call.1} parent=916 // loop_exit
      _
  $region917: #{tpu_custom_call.1} parent=0 // pred_fallthru
    _
  // Predicated region
  $region936: #{tpu_custom_call.1} parent=0 // pred_check
    _
  $region937: #{tpu_custom_call.1} parent=0 // pred_check_branch
    %1230 = sbr.rel (0) target = $region939
  $region938: #{tpu_custom_call.1} parent=0 // pred_region
    %1231 = vsyncadd %s1197, 16
  $region939: #{tpu_custom_call.1} parent=0 // pred_fallthru
    _
  %s1232 = sadd.s32 %s959, 7
  %s1233 = sld [smem:[#allocation5 + %s1232]]
  %s1234 = scalar_lea.vmem %s1, %s1233
  %s1235 = scalar_lea.vmem [#allocation2], 31
  %s1236 = scalar_lea.sflag [#allocation3], 31
  // Predicated region
  $region940: #{tpu_custom_call.1} parent=0 // pred_check
    _
  $region941: #{tpu_custom_call.1} parent=0 // pred_check_branch
    %1238 = sbr.rel target = $region943
  $region942: #{tpu_custom_call.1} parent=0 // pred_region
    // Predicated region
    $region955: #{tpu_custom_call.1} parent=942 // pred_check
      _
    $region956: #{tpu_custom_call.1} parent=942 // pred_check_branch
      %1254 = sbr.rel (0) target = $region958
    $region957: #{tpu_custom_call.1} parent=942 // pred_region
      %s1256 = ssub.s32 2, 1
      loop: start=0, step=1, limit=1
      $region959: #{tpu_custom_call.1} parent=957 // loop_pre_header
        _
      $region960: #{tpu_custom_call.1} parent=957 // loop_header
        %s1258 = sphi 0, %s1262
        %p1259 = scmp.ge.s32.totalorder %s1258, 1
        %s1263 = sphi %s1234, %s1234
        %s1264 = sphi %s1235, %s1235
      $region961: #{tpu_custom_call.1} parent=957 // loop_header_branch
        %1261 = sbr.rel (%p1259) target = $region965
      $region962: #{tpu_custom_call.1} parent=957 // loop_body
        %v1265 = vld [vmem:[%s1263] sm:%s1256]
        %1266 = vst [vmem:[%s1264] sm:%s1256] %v1265
      $region963: #{tpu_custom_call.1} parent=957 // loop_footer
        %s1262 = sadd.s32 1, %s1258
      $region964: #{tpu_custom_call.1} parent=957 // loop_footer_branch
        %1257 = sbr.rel target = $region960
      $region965: #{tpu_custom_call.1} parent=957 // loop_exit
        _
    $region958: #{tpu_custom_call.1} parent=942 // pred_fallthru
      _
  $region943: #{tpu_custom_call.1} parent=0 // pred_fallthru
    _
  // Predicated region
  $region944: #{tpu_custom_call.1} parent=0 // pred_check
    _
  $region945: #{tpu_custom_call.1} parent=0 // pred_check_branch
    %1240 = sbr.rel (0) target = $region947
  $region946: #{tpu_custom_call.1} parent=0 // pred_region
    %s1242 = ssub.s32 2, 1
    loop: start=0, step=1, limit=1
    $region948: #{tpu_custom_call.1} parent=946 // loop_pre_header
      _
    $region949: #{tpu_custom_call.1} parent=946 // loop_header
      %s1244 = sphi 0, %s1248
      %p1245 = scmp.ge.s32.totalorder %s1244, 1
      %s1249 = sphi %s1234, %s1234
      %s1250 = sphi %s1235, %s1235
    $region950: #{tpu_custom_call.1} parent=946 // loop_header_branch
      %1247 = sbr.rel (%p1245) target = $region954
    $region951: #{tpu_custom_call.1} parent=946 // loop_body
      %v1251 = vld [vmem:[%s1249] sm:%s1242]
      %1252 = vst [vmem:[%s1250] sm:%s1242] %v1251
    $region952: #{tpu_custom_call.1} parent=946 // loop_footer
      %s1248 = sadd.s32 1, %s1244
    $region953: #{tpu_custom_call.1} parent=946 // loop_footer_branch
      %1243 = sbr.rel target = $region949
    $region954: #{tpu_custom_call.1} parent=946 // loop_exit
      _
  $region947: #{tpu_custom_call.1} parent=0 // pred_fallthru
    _
  // Predicated region
  $region966: #{tpu_custom_call.1} parent=0 // pred_check
    _
  $region967: #{tpu_custom_call.1} parent=0 // pred_check_branch
    %1269 = sbr.rel (0) target = $region969
  $region968: #{tpu_custom_call.1} parent=0 // pred_region
    %1270 = vsyncadd %s1236, 16
  $region969: #{tpu_custom_call.1} parent=0 // pred_fallthru
    _
  %s1271 = sadd.s32 %s21, 4
  %s1272 = smul.u32 %s1271, 128
  %s1273 = sld [smem:[#allocation5 + %s1272]]
  %s1274 = scalar_lea.vmem %s1, %s1273
  %s1275 = scalar_lea.vmem [#allocation2], 32
  %s1276 = scalar_lea.sflag [#allocation3], 32
  // Predicated region
  $region970: #{tpu_custom_call.1} parent=0 // pred_check
    _
  $region971: #{tpu_custom_call.1} parent=0 // pred_check_branch
    %1278 = sbr.rel target = $region973
  $region972: #{tpu_custom_call.1} parent=0 // pred_region
    // Predicated region
    $region985: #{tpu_custom_call.1} parent=972 // pred_check
      _
    $region986: #{tpu_custom_call.1} parent=972 // pred_check_branch
      %1294 = sbr.rel (0) target = $region988
    $region987: #{tpu_custom_call.1} parent=972 // pred_region
      %s1296 = ssub.s32 2, 1
      loop: start=0, step=1, limit=1
      $region989: #{tpu_custom_call.1} parent=987 // loop_pre_header
        _
      $region990: #{tpu_custom_call.1} parent=987 // loop_header
        %s1298 = sphi 0, %s1302
        %p1299 = scmp.ge.s32.totalorder %s1298, 1
        %s1303 = sphi %s1274, %s1274
        %s1304 = sphi %s1275, %s1275
      $region991: #{tpu_custom_call.1} parent=987 // loop_header_branch
        %1301 = sbr.rel (%p1299) target = $region995
      $region992: #{tpu_custom_call.1} parent=987 // loop_body
        %v1305 = vld [vmem:[%s1303] sm:%s1296]
        %1306 = vst [vmem:[%s1304] sm:%s1296] %v1305
      $region993: #{tpu_custom_call.1} parent=987 // loop_footer
        %s1302 = sadd.s32 1, %s1298
      $region994: #{tpu_custom_call.1} parent=987 // loop_footer_branch
        %1297 = sbr.rel target = $region990
      $region995: #{tpu_custom_call.1} parent=987 // loop_exit
        _
    $region988: #{tpu_custom_call.1} parent=972 // pred_fallthru
      _
  $region973: #{tpu_custom_call.1} parent=0 // pred_fallthru
    _
  // Predicated region
  $region974: #{tpu_custom_call.1} parent=0 // pred_check
    _
  $region975: #{tpu_custom_call.1} parent=0 // pred_check_branch
    %1280 = sbr.rel (0) target = $region977
  $region976: #{tpu_custom_call.1} parent=0 // pred_region
    %s1282 = ssub.s32 2, 1
    loop: start=0, step=1, limit=1
    $region978: #{tpu_custom_call.1} parent=976 // loop_pre_header
      _
    $region979: #{tpu_custom_call.1} parent=976 // loop_header
      %s1284 = sphi 0, %s1288
      %p1285 = scmp.ge.s32.totalorder %s1284, 1
      %s1289 = sphi %s1274, %s1274
      %s1290 = sphi %s1275, %s1275
    $region980: #{tpu_custom_call.1} parent=976 // loop_header_branch
      %1287 = sbr.rel (%p1285) target = $region984
    $region981: #{tpu_custom_call.1} parent=976 // loop_body
      %v1291 = vld [vmem:[%s1289] sm:%s1282]
      %1292 = vst [vmem:[%s1290] sm:%s1282] %v1291
    $region982: #{tpu_custom_call.1} parent=976 // loop_footer
      %s1288 = sadd.s32 1, %s1284
    $region983: #{tpu_custom_call.1} parent=976 // loop_footer_branch
      %1283 = sbr.rel target = $region979
    $region984: #{tpu_custom_call.1} parent=976 // loop_exit
      _
  $region977: #{tpu_custom_call.1} parent=0 // pred_fallthru
    _
  // Predicated region
  $region996: #{tpu_custom_call.1} parent=0 // pred_check
    _
  $region997: #{tpu_custom_call.1} parent=0 // pred_check_branch
    %1309 = sbr.rel (0) target = $region999
  $region998: #{tpu_custom_call.1} parent=0 // pred_region
    %1310 = vsyncadd %s1276, 16
  $region999: #{tpu_custom_call.1} parent=0 // pred_fallthru
    _
  %s1311 = sadd.s32 %s1272, 1
  %s1312 = sld [smem:[#allocation5 + %s1311]]
  %s1313 = scalar_lea.vmem %s1, %s1312
  %s1314 = scalar_lea.vmem [#allocation2], 33
  %s1315 = scalar_lea.sflag [#allocation3], 33
  // Predicated region
  $region1000: #{tpu_custom_call.1} parent=0 // pred_check
    _
  $region1001: #{tpu_custom_call.1} parent=0 // pred_check_branch
    %1317 = sbr.rel target = $region1003
  $region1002: #{tpu_custom_call.1} parent=0 // pred_region
    // Predicated region
    $region1015: #{tpu_custom_call.1} parent=1002 // pred_check
      _
    $region1016: #{tpu_custom_call.1} parent=1002 // pred_check_branch
      %1333 = sbr.rel (0) target = $region1018
    $region1017: #{tpu_custom_call.1} parent=1002 // pred_region
      %s1335 = ssub.s32 2, 1
      loop: start=0, step=1, limit=1
      $region1019: #{tpu_custom_call.1} parent=1017 // loop_pre_header
        _
      $region1020: #{tpu_custom_call.1} parent=1017 // loop_header
        %s1337 = sphi 0, %s1341
        %p1338 = scmp.ge.s32.totalorder %s1337, 1
        %s1342 = sphi %s1313, %s1313
        %s1343 = sphi %s1314, %s1314
      $region1021: #{tpu_custom_call.1} parent=1017 // loop_header_branch
        %1340 = sbr.rel (%p1338) target = $region1025
      $region1022: #{tpu_custom_call.1} parent=1017 // loop_body
        %v1344 = vld [vmem:[%s1342] sm:%s1335]
        %1345 = vst [vmem:[%s1343] sm:%s1335] %v1344
      $region1023: #{tpu_custom_call.1} parent=1017 // loop_footer
        %s1341 = sadd.s32 1, %s1337
      $region1024: #{tpu_custom_call.1} parent=1017 // loop_footer_branch
        %1336 = sbr.rel target = $region1020
      $region1025: #{tpu_custom_call.1} parent=1017 // loop_exit
        _
    $region1018: #{tpu_custom_call.1} parent=1002 // pred_fallthru
      _
  $region1003: #{tpu_custom_call.1} parent=0 // pred_fallthru
    _
  // Predicated region
  $region1004: #{tpu_custom_call.1} parent=0 // pred_check
    _
  $region1005: #{tpu_custom_call.1} parent=0 // pred_check_branch
    %1319 = sbr.rel (0) target = $region1007
  $region1006: #{tpu_custom_call.1} parent=0 // pred_region
    %s1321 = ssub.s32 2, 1
    loop: start=0, step=1, limit=1
    $region1008: #{tpu_custom_call.1} parent=1006 // loop_pre_header
      _
    $region1009: #{tpu_custom_call.1} parent=1006 // loop_header
      %s1323 = sphi 0, %s1327
      %p1324 = scmp.ge.s32.totalorder %s1323, 1
      %s1328 = sphi %s1313, %s1313
      %s1329 = sphi %s1314, %s1314
    $region1010: #{tpu_custom_call.1} parent=1006 // loop_header_branch
      %1326 = sbr.rel (%p1324) target = $region1014
    $region1011: #{tpu_custom_call.1} parent=1006 // loop_body
      %v1330 = vld [vmem:[%s1328] sm:%s1321]
      %1331 = vst [vmem:[%s1329] sm:%s1321] %v1330
    $region1012: #{tpu_custom_call.1} parent=1006 // loop_footer
      %s1327 = sadd.s32 1, %s1323
    $region1013: #{tpu_custom_call.1} parent=1006 // loop_footer_branch
      %1322 = sbr.rel target = $region1009
    $region1014: #{tpu_custom_call.1} parent=1006 // loop_exit
      _
  $region1007: #{tpu_custom_call.1} parent=0 // pred_fallthru
    _
  // Predicated region
  $region1026: #{tpu_custom_call.1} parent=0 // pred_check
    _
  $region1027: #{tpu_custom_call.1} parent=0 // pred_check_branch
    %1348 = sbr.rel (0) target = $region1029
  $region1028: #{tpu_custom_call.1} parent=0 // pred_region
    %1349 = vsyncadd %s1315, 16
  $region1029: #{tpu_custom_call.1} parent=0 // pred_fallthru
    _
  %s1350 = sadd.s32 %s1272, 2
  %s1351 = sld [smem:[#allocation5 + %s1350]]
  %s1352 = scalar_lea.vmem %s1, %s1351
  %s1353 = scalar_lea.vmem [#allocation2], 34
  %s1354 = scalar_lea.sflag [#allocation3], 34
  // Predicated region
  $region1030: #{tpu_custom_call.1} parent=0 // pred_check
    _
  $region1031: #{tpu_custom_call.1} parent=0 // pred_check_branch
    %1356 = sbr.rel target = $region1033
  $region1032: #{tpu_custom_call.1} parent=0 // pred_region
    // Predicated region
    $region1045: #{tpu_custom_call.1} parent=1032 // pred_check
      _
    $region1046: #{tpu_custom_call.1} parent=1032 // pred_check_branch
      %1372 = sbr.rel (0) target = $region1048
    $region1047: #{tpu_custom_call.1} parent=1032 // pred_region
      %s1374 = ssub.s32 2, 1
      loop: start=0, step=1, limit=1
      $region1049: #{tpu_custom_call.1} parent=1047 // loop_pre_header
        _
      $region1050: #{tpu_custom_call.1} parent=1047 // loop_header
        %s1376 = sphi 0, %s1380
        %p1377 = scmp.ge.s32.totalorder %s1376, 1
        %s1381 = sphi %s1352, %s1352
        %s1382 = sphi %s1353, %s1353
      $region1051: #{tpu_custom_call.1} parent=1047 // loop_header_branch
        %1379 = sbr.rel (%p1377) target = $region1055
      $region1052: #{tpu_custom_call.1} parent=1047 // loop_body
        %v1383 = vld [vmem:[%s1381] sm:%s1374]
        %1384 = vst [vmem:[%s1382] sm:%s1374] %v1383
      $region1053: #{tpu_custom_call.1} parent=1047 // loop_footer
        %s1380 = sadd.s32 1, %s1376
      $region1054: #{tpu_custom_call.1} parent=1047 // loop_footer_branch
        %1375 = sbr.rel target = $region1050
      $region1055: #{tpu_custom_call.1} parent=1047 // loop_exit
        _
    $region1048: #{tpu_custom_call.1} parent=1032 // pred_fallthru
      _
  $region1033: #{tpu_custom_call.1} parent=0 // pred_fallthru
    _
  // Predicated region
  $region1034: #{tpu_custom_call.1} parent=0 // pred_check
    _
  $region1035: #{tpu_custom_call.1} parent=0 // pred_check_branch
    %1358 = sbr.rel (0) target = $region1037
  $region1036: #{tpu_custom_call.1} parent=0 // pred_region
    %s1360 = ssub.s32 2, 1
    loop: start=0, step=1, limit=1
    $region1038: #{tpu_custom_call.1} parent=1036 // loop_pre_header
      _
    $region1039: #{tpu_custom_call.1} parent=1036 // loop_header
      %s1362 = sphi 0, %s1366
      %p1363 = scmp.ge.s32.totalorder %s1362, 1
      %s1367 = sphi %s1352, %s1352
      %s1368 = sphi %s1353, %s1353
    $region1040: #{tpu_custom_call.1} parent=1036 // loop_header_branch
      %1365 = sbr.rel (%p1363) target = $region1044
    $region1041: #{tpu_custom_call.1} parent=1036 // loop_body
      %v1369 = vld [vmem:[%s1367] sm:%s1360]
      %1370 = vst [vmem:[%s1368] sm:%s1360] %v1369
    $region1042: #{tpu_custom_call.1} parent=1036 // loop_footer
      %s1366 = sadd.s32 1, %s1362
    $region1043: #{tpu_custom_call.1} parent=1036 // loop_footer_branch
      %1361 = sbr.rel target = $region1039
    $region1044: #{tpu_custom_call.1} parent=1036 // loop_exit
      _
  $region1037: #{tpu_custom_call.1} parent=0 // pred_fallthru
    _
  // Predicated region
  $region1056: #{tpu_custom_call.1} parent=0 // pred_check
    _
  $region1057: #{tpu_custom_call.1} parent=0 // pred_check_branch
    %1387 = sbr.rel (0) target = $region1059
  $region1058: #{tpu_custom_call.1} parent=0 // pred_region
    %1388 = vsyncadd %s1354, 16
  $region1059: #{tpu_custom_call.1} parent=0 // pred_fallthru
    _
  %s1389 = sadd.s32 %s1272, 3
  %s1390 = sld [smem:[#allocation5 + %s1389]]
  %s1391 = scalar_lea.vmem %s1, %s1390
  %s1392 = scalar_lea.vmem [#allocation2], 35
  %s1393 = scalar_lea.sflag [#allocation3], 35
  // Predicated region
  $region1060: #{tpu_custom_call.1} parent=0 // pred_check
    _
  $region1061: #{tpu_custom_call.1} parent=0 // pred_check_branch
    %1395 = sbr.rel target = $region1063
  $region1062: #{tpu_custom_call.1} parent=0 // pred_region
    // Predicated region
    $region1075: #{tpu_custom_call.1} parent=1062 // pred_check
      _
    $region1076: #{tpu_custom_call.1} parent=1062 // pred_check_branch
      %1411 = sbr.rel (0) target = $region1078
    $region1077: #{tpu_custom_call.1} parent=1062 // pred_region
      %s1413 = ssub.s32 2, 1
      loop: start=0, step=1, limit=1
      $region1079: #{tpu_custom_call.1} parent=1077 // loop_pre_header
        _
      $region1080: #{tpu_custom_call.1} parent=1077 // loop_header
        %s1415 = sphi 0, %s1419
        %p1416 = scmp.ge.s32.totalorder %s1415, 1
        %s1420 = sphi %s1391, %s1391
        %s1421 = sphi %s1392, %s1392
      $region1081: #{tpu_custom_call.1} parent=1077 // loop_header_branch
        %1418 = sbr.rel (%p1416) target = $region1085
      $region1082: #{tpu_custom_call.1} parent=1077 // loop_body
        %v1422 = vld [vmem:[%s1420] sm:%s1413]
        %1423 = vst [vmem:[%s1421] sm:%s1413] %v1422
      $region1083: #{tpu_custom_call.1} parent=1077 // loop_footer
        %s1419 = sadd.s32 1, %s1415
      $region1084: #{tpu_custom_call.1} parent=1077 // loop_footer_branch
        %1414 = sbr.rel target = $region1080
      $region1085: #{tpu_custom_call.1} parent=1077 // loop_exit
        _
    $region1078: #{tpu_custom_call.1} parent=1062 // pred_fallthru
      _
  $region1063: #{tpu_custom_call.1} parent=0 // pred_fallthru
    _
  // Predicated region
  $region1064: #{tpu_custom_call.1} parent=0 // pred_check
    _
  $region1065: #{tpu_custom_call.1} parent=0 // pred_check_branch
    %1397 = sbr.rel (0) target = $region1067
  $region1066: #{tpu_custom_call.1} parent=0 // pred_region
    %s1399 = ssub.s32 2, 1
    loop: start=0, step=1, limit=1
    $region1068: #{tpu_custom_call.1} parent=1066 // loop_pre_header
      _
    $region1069: #{tpu_custom_call.1} parent=1066 // loop_header
      %s1401 = sphi 0, %s1405
      %p1402 = scmp.ge.s32.totalorder %s1401, 1
      %s1406 = sphi %s1391, %s1391
      %s1407 = sphi %s1392, %s1392
    $region1070: #{tpu_custom_call.1} parent=1066 // loop_header_branch
      %1404 = sbr.rel (%p1402) target = $region1074
    $region1071: #{tpu_custom_call.1} parent=1066 // loop_body
      %v1408 = vld [vmem:[%s1406] sm:%s1399]
      %1409 = vst [vmem:[%s1407] sm:%s1399] %v1408
    $region1072: #{tpu_custom_call.1} parent=1066 // loop_footer
      %s1405 = sadd.s32 1, %s1401
    $region1073: #{tpu_custom_call.1} parent=1066 // loop_footer_branch
      %1400 = sbr.rel target = $region1069
    $region1074: #{tpu_custom_call.1} parent=1066 // loop_exit
      _
  $region1067: #{tpu_custom_call.1} parent=0 // pred_fallthru
    _
  // Predicated region
  $region1086: #{tpu_custom_call.1} parent=0 // pred_check
    _
  $region1087: #{tpu_custom_call.1} parent=0 // pred_check_branch
    %1426 = sbr.rel (0) target = $region1089
  $region1088: #{tpu_custom_call.1} parent=0 // pred_region
    %1427 = vsyncadd %s1393, 16
  $region1089: #{tpu_custom_call.1} parent=0 // pred_fallthru
    _
  %s1428 = sadd.s32 %s1272, 4
  %s1429 = sld [smem:[#allocation5 + %s1428]]
  %s1430 = scalar_lea.vmem %s1, %s1429
  %s1431 = scalar_lea.vmem [#allocation2], 36
  %s1432 = scalar_lea.sflag [#allocation3], 36
  // Predicated region
  $region1090: #{tpu_custom_call.1} parent=0 // pred_check
    _
  $region1091: #{tpu_custom_call.1} parent=0 // pred_check_branch
    %1434 = sbr.rel target = $region1093
  $region1092: #{tpu_custom_call.1} parent=0 // pred_region
    // Predicated region
    $region1105: #{tpu_custom_call.1} parent=1092 // pred_check
      _
    $region1106: #{tpu_custom_call.1} parent=1092 // pred_check_branch
      %1450 = sbr.rel (0) target = $region1108
    $region1107: #{tpu_custom_call.1} parent=1092 // pred_region
      %s1452 = ssub.s32 2, 1
      loop: start=0, step=1, limit=1
      $region1109: #{tpu_custom_call.1} parent=1107 // loop_pre_header
        _
      $region1110: #{tpu_custom_call.1} parent=1107 // loop_header
        %s1454 = sphi 0, %s1458
        %p1455 = scmp.ge.s32.totalorder %s1454, 1
        %s1459 = sphi %s1430, %s1430
        %s1460 = sphi %s1431, %s1431
      $region1111: #{tpu_custom_call.1} parent=1107 // loop_header_branch
        %1457 = sbr.rel (%p1455) target = $region1115
      $region1112: #{tpu_custom_call.1} parent=1107 // loop_body
        %v1461 = vld [vmem:[%s1459] sm:%s1452]
        %1462 = vst [vmem:[%s1460] sm:%s1452] %v1461
      $region1113: #{tpu_custom_call.1} parent=1107 // loop_footer
        %s1458 = sadd.s32 1, %s1454
      $region1114: #{tpu_custom_call.1} parent=1107 // loop_footer_branch
        %1453 = sbr.rel target = $region1110
      $region1115: #{tpu_custom_call.1} parent=1107 // loop_exit
        _
    $region1108: #{tpu_custom_call.1} parent=1092 // pred_fallthru
      _
  $region1093: #{tpu_custom_call.1} parent=0 // pred_fallthru
    _
  // Predicated region
  $region1094: #{tpu_custom_call.1} parent=0 // pred_check
    _
  $region1095: #{tpu_custom_call.1} parent=0 // pred_check_branch
    %1436 = sbr.rel (0) target = $region1097
  $region1096: #{tpu_custom_call.1} parent=0 // pred_region
    %s1438 = ssub.s32 2, 1
    loop: start=0, step=1, limit=1
    $region1098: #{tpu_custom_call.1} parent=1096 // loop_pre_header
      _
    $region1099: #{tpu_custom_call.1} parent=1096 // loop_header
      %s1440 = sphi 0, %s1444
      %p1441 = scmp.ge.s32.totalorder %s1440, 1
      %s1445 = sphi %s1430, %s1430
      %s1446 = sphi %s1431, %s1431
    $region1100: #{tpu_custom_call.1} parent=1096 // loop_header_branch
      %1443 = sbr.rel (%p1441) target = $region1104
    $region1101: #{tpu_custom_call.1} parent=1096 // loop_body
      %v1447 = vld [vmem:[%s1445] sm:%s1438]
      %1448 = vst [vmem:[%s1446] sm:%s1438] %v1447
    $region1102: #{tpu_custom_call.1} parent=1096 // loop_footer
      %s1444 = sadd.s32 1, %s1440
    $region1103: #{tpu_custom_call.1} parent=1096 // loop_footer_branch
      %1439 = sbr.rel target = $region1099
    $region1104: #{tpu_custom_call.1} parent=1096 // loop_exit
      _
  $region1097: #{tpu_custom_call.1} parent=0 // pred_fallthru
    _
  // Predicated region
  $region1116: #{tpu_custom_call.1} parent=0 // pred_check
    _
  $region1117: #{tpu_custom_call.1} parent=0 // pred_check_branch
    %1465 = sbr.rel (0) target = $region1119
  $region1118: #{tpu_custom_call.1} parent=0 // pred_region
    %1466 = vsyncadd %s1432, 16
  $region1119: #{tpu_custom_call.1} parent=0 // pred_fallthru
    _
  %s1467 = sadd.s32 %s1272, 5
  %s1468 = sld [smem:[#allocation5 + %s1467]]
  %s1469 = scalar_lea.vmem %s1, %s1468
  %s1470 = scalar_lea.vmem [#allocation2], 37
  %s1471 = scalar_lea.sflag [#allocation3], 37
  // Predicated region
  $region1120: #{tpu_custom_call.1} parent=0 // pred_check
    _
  $region1121: #{tpu_custom_call.1} parent=0 // pred_check_branch
    %1473 = sbr.rel target = $region1123
  $region1122: #{tpu_custom_call.1} parent=0 // pred_region
    // Predicated region
    $region1135: #{tpu_custom_call.1} parent=1122 // pred_check
      _
    $region1136: #{tpu_custom_call.1} parent=1122 // pred_check_branch
      %1489 = sbr.rel (0) target = $region1138
    $region1137: #{tpu_custom_call.1} parent=1122 // pred_region
      %s1491 = ssub.s32 2, 1
      loop: start=0, step=1, limit=1
      $region1139: #{tpu_custom_call.1} parent=1137 // loop_pre_header
        _
      $region1140: #{tpu_custom_call.1} parent=1137 // loop_header
        %s1493 = sphi 0, %s1497
        %p1494 = scmp.ge.s32.totalorder %s1493, 1
        %s1498 = sphi %s1469, %s1469
        %s1499 = sphi %s1470, %s1470
      $region1141: #{tpu_custom_call.1} parent=1137 // loop_header_branch
        %1496 = sbr.rel (%p1494) target = $region1145
      $region1142: #{tpu_custom_call.1} parent=1137 // loop_body
        %v1500 = vld [vmem:[%s1498] sm:%s1491]
        %1501 = vst [vmem:[%s1499] sm:%s1491] %v1500
      $region1143: #{tpu_custom_call.1} parent=1137 // loop_footer
        %s1497 = sadd.s32 1, %s1493
      $region1144: #{tpu_custom_call.1} parent=1137 // loop_footer_branch
        %1492 = sbr.rel target = $region1140
      $region1145: #{tpu_custom_call.1} parent=1137 // loop_exit
        _
    $region1138: #{tpu_custom_call.1} parent=1122 // pred_fallthru
      _
  $region1123: #{tpu_custom_call.1} parent=0 // pred_fallthru
    _
  // Predicated region
  $region1124: #{tpu_custom_call.1} parent=0 // pred_check
    _
  $region1125: #{tpu_custom_call.1} parent=0 // pred_check_branch
    %1475 = sbr.rel (0) target = $region1127
  $region1126: #{tpu_custom_call.1} parent=0 // pred_region
    %s1477 = ssub.s32 2, 1
    loop: start=0, step=1, limit=1
    $region1128: #{tpu_custom_call.1} parent=1126 // loop_pre_header
      _
    $region1129: #{tpu_custom_call.1} parent=1126 // loop_header
      %s1479 = sphi 0, %s1483
      %p1480 = scmp.ge.s32.totalorder %s1479, 1
      %s1484 = sphi %s1469, %s1469
      %s1485 = sphi %s1470, %s1470
    $region1130: #{tpu_custom_call.1} parent=1126 // loop_header_branch
      %1482 = sbr.rel (%p1480) target = $region1134
    $region1131: #{tpu_custom_call.1} parent=1126 // loop_body
      %v1486 = vld [vmem:[%s1484] sm:%s1477]
      %1487 = vst [vmem:[%s1485] sm:%s1477] %v1486
    $region1132: #{tpu_custom_call.1} parent=1126 // loop_footer
      %s1483 = sadd.s32 1, %s1479
    $region1133: #{tpu_custom_call.1} parent=1126 // loop_footer_branch
      %1478 = sbr.rel target = $region1129
    $region1134: #{tpu_custom_call.1} parent=1126 // loop_exit
      _
  $region1127: #{tpu_custom_call.1} parent=0 // pred_fallthru
    _
  // Predicated region
  $region1146: #{tpu_custom_call.1} parent=0 // pred_check
    _
  $region1147: #{tpu_custom_call.1} parent=0 // pred_check_branch
    %1504 = sbr.rel (0) target = $region1149
  $region1148: #{tpu_custom_call.1} parent=0 // pred_region
    %1505 = vsyncadd %s1471, 16
  $region1149: #{tpu_custom_call.1} parent=0 // pred_fallthru
    _
  %s1506 = sadd.s32 %s1272, 6
  %s1507 = sld [smem:[#allocation5 + %s1506]]
  %s1508 = scalar_lea.vmem %s1, %s1507
  %s1509 = scalar_lea.vmem [#allocation2], 38
  %s1510 = scalar_lea.sflag [#allocation3], 38
  // Predicated region
  $region1150: #{tpu_custom_call.1} parent=0 // pred_check
    _
  $region1151: #{tpu_custom_call.1} parent=0 // pred_check_branch
    %1512 = sbr.rel target = $region1153
  $region1152: #{tpu_custom_call.1} parent=0 // pred_region
    // Predicated region
    $region1165: #{tpu_custom_call.1} parent=1152 // pred_check
      _
    $region1166: #{tpu_custom_call.1} parent=1152 // pred_check_branch
      %1528 = sbr.rel (0) target = $region1168
    $region1167: #{tpu_custom_call.1} parent=1152 // pred_region
      %s1530 = ssub.s32 2, 1
      loop: start=0, step=1, limit=1
      $region1169: #{tpu_custom_call.1} parent=1167 // loop_pre_header
        _
      $region1170: #{tpu_custom_call.1} parent=1167 // loop_header
        %s1532 = sphi 0, %s1536
        %p1533 = scmp.ge.s32.totalorder %s1532, 1
        %s1537 = sphi %s1508, %s1508
        %s1538 = sphi %s1509, %s1509
      $region1171: #{tpu_custom_call.1} parent=1167 // loop_header_branch
        %1535 = sbr.rel (%p1533) target = $region1175
      $region1172: #{tpu_custom_call.1} parent=1167 // loop_body
        %v1539 = vld [vmem:[%s1537] sm:%s1530]
        %1540 = vst [vmem:[%s1538] sm:%s1530] %v1539
      $region1173: #{tpu_custom_call.1} parent=1167 // loop_footer
        %s1536 = sadd.s32 1, %s1532
      $region1174: #{tpu_custom_call.1} parent=1167 // loop_footer_branch
        %1531 = sbr.rel target = $region1170
      $region1175: #{tpu_custom_call.1} parent=1167 // loop_exit
        _
    $region1168: #{tpu_custom_call.1} parent=1152 // pred_fallthru
      _
  $region1153: #{tpu_custom_call.1} parent=0 // pred_fallthru
    _
  // Predicated region
  $region1154: #{tpu_custom_call.1} parent=0 // pred_check
    _
  $region1155: #{tpu_custom_call.1} parent=0 // pred_check_branch
    %1514 = sbr.rel (0) target = $region1157
  $region1156: #{tpu_custom_call.1} parent=0 // pred_region
    %s1516 = ssub.s32 2, 1
    loop: start=0, step=1, limit=1
    $region1158: #{tpu_custom_call.1} parent=1156 // loop_pre_header
      _
    $region1159: #{tpu_custom_call.1} parent=1156 // loop_header
      %s1518 = sphi 0, %s1522
      %p1519 = scmp.ge.s32.totalorder %s1518, 1
      %s1523 = sphi %s1508, %s1508
      %s1524 = sphi %s1509, %s1509
    $region1160: #{tpu_custom_call.1} parent=1156 // loop_header_branch
      %1521 = sbr.rel (%p1519) target = $region1164
    $region1161: #{tpu_custom_call.1} parent=1156 // loop_body
      %v1525 = vld [vmem:[%s1523] sm:%s1516]
      %1526 = vst [vmem:[%s1524] sm:%s1516] %v1525
    $region1162: #{tpu_custom_call.1} parent=1156 // loop_footer
      %s1522 = sadd.s32 1, %s1518
    $region1163: #{tpu_custom_call.1} parent=1156 // loop_footer_branch
      %1517 = sbr.rel target = $region1159
    $region1164: #{tpu_custom_call.1} parent=1156 // loop_exit
      _
  $region1157: #{tpu_custom_call.1} parent=0 // pred_fallthru
    _
  // Predicated region
  $region1176: #{tpu_custom_call.1} parent=0 // pred_check
    _
  $region1177: #{tpu_custom_call.1} parent=0 // pred_check_branch
    %1543 = sbr.rel (0) target = $region1179
  $region1178: #{tpu_custom_call.1} parent=0 // pred_region
    %1544 = vsyncadd %s1510, 16
  $region1179: #{tpu_custom_call.1} parent=0 // pred_fallthru
    _
  %s1545 = sadd.s32 %s1272, 7
  %s1546 = sld [smem:[#allocation5 + %s1545]]
  %s1547 = scalar_lea.vmem %s1, %s1546
  %s1548 = scalar_lea.vmem [#allocation2], 39
  %s1549 = scalar_lea.sflag [#allocation3], 39
  // Predicated region
  $region1180: #{tpu_custom_call.1} parent=0 // pred_check
    _
  $region1181: #{tpu_custom_call.1} parent=0 // pred_check_branch
    %1551 = sbr.rel target = $region1183
  $region1182: #{tpu_custom_call.1} parent=0 // pred_region
    // Predicated region
    $region1195: #{tpu_custom_call.1} parent=1182 // pred_check
      _
    $region1196: #{tpu_custom_call.1} parent=1182 // pred_check_branch
      %1567 = sbr.rel (0) target = $region1198
    $region1197: #{tpu_custom_call.1} parent=1182 // pred_region
      %s1569 = ssub.s32 2, 1
      loop: start=0, step=1, limit=1
      $region1199: #{tpu_custom_call.1} parent=1197 // loop_pre_header
        _
      $region1200: #{tpu_custom_call.1} parent=1197 // loop_header
        %s1571 = sphi 0, %s1575
        %p1572 = scmp.ge.s32.totalorder %s1571, 1
        %s1576 = sphi %s1547, %s1547
        %s1577 = sphi %s1548, %s1548
      $region1201: #{tpu_custom_call.1} parent=1197 // loop_header_branch
        %1574 = sbr.rel (%p1572) target = $region1205
      $region1202: #{tpu_custom_call.1} parent=1197 // loop_body
        %v1578 = vld [vmem:[%s1576] sm:%s1569]
        %1579 = vst [vmem:[%s1577] sm:%s1569] %v1578
      $region1203: #{tpu_custom_call.1} parent=1197 // loop_footer
        %s1575 = sadd.s32 1, %s1571
      $region1204: #{tpu_custom_call.1} parent=1197 // loop_footer_branch
        %1570 = sbr.rel target = $region1200
      $region1205: #{tpu_custom_call.1} parent=1197 // loop_exit
        _
    $region1198: #{tpu_custom_call.1} parent=1182 // pred_fallthru
      _
  $region1183: #{tpu_custom_call.1} parent=0 // pred_fallthru
    _
  // Predicated region
  $region1184: #{tpu_custom_call.1} parent=0 // pred_check
    _
  $region1185: #{tpu_custom_call.1} parent=0 // pred_check_branch
    %1553 = sbr.rel (0) target = $region1187
  $region1186: #{tpu_custom_call.1} parent=0 // pred_region
    %s1555 = ssub.s32 2, 1
    loop: start=0, step=1, limit=1
    $region1188: #{tpu_custom_call.1} parent=1186 // loop_pre_header
      _
    $region1189: #{tpu_custom_call.1} parent=1186 // loop_header
      %s1557 = sphi 0, %s1561
      %p1558 = scmp.ge.s32.totalorder %s1557, 1
      %s1562 = sphi %s1547, %s1547
      %s1563 = sphi %s1548, %s1548
    $region1190: #{tpu_custom_call.1} parent=1186 // loop_header_branch
      %1560 = sbr.rel (%p1558) target = $region1194
    $region1191: #{tpu_custom_call.1} parent=1186 // loop_body
      %v1564 = vld [vmem:[%s1562] sm:%s1555]
      %1565 = vst [vmem:[%s1563] sm:%s1555] %v1564
    $region1192: #{tpu_custom_call.1} parent=1186 // loop_footer
      %s1561 = sadd.s32 1, %s1557
    $region1193: #{tpu_custom_call.1} parent=1186 // loop_footer_branch
      %1556 = sbr.rel target = $region1189
    $region1194: #{tpu_custom_call.1} parent=1186 // loop_exit
      _
  $region1187: #{tpu_custom_call.1} parent=0 // pred_fallthru
    _
  // Predicated region
  $region1206: #{tpu_custom_call.1} parent=0 // pred_check
    _
  $region1207: #{tpu_custom_call.1} parent=0 // pred_check_branch
    %1582 = sbr.rel (0) target = $region1209
  $region1208: #{tpu_custom_call.1} parent=0 // pred_region
    %1583 = vsyncadd %s1549, 16
  $region1209: #{tpu_custom_call.1} parent=0 // pred_fallthru
    _
  %s1584 = sadd.s32 %s21, 5
  %s1585 = smul.u32 %s1584, 128
  %s1586 = sld [smem:[#allocation5 + %s1585]]
  %s1587 = scalar_lea.vmem %s1, %s1586
  %s1588 = scalar_lea.vmem [#allocation2], 40
  %s1589 = scalar_lea.sflag [#allocation3], 40
  // Predicated region
  $region1210: #{tpu_custom_call.1} parent=0 // pred_check
    _
  $region1211: #{tpu_custom_call.1} parent=0 // pred_check_branch
    %1591 = sbr.rel target = $region1213
  $region1212: #{tpu_custom_call.1} parent=0 // pred_region
    // Predicated region
    $region1225: #{tpu_custom_call.1} parent=1212 // pred_check
      _
    $region1226: #{tpu_custom_call.1} parent=1212 // pred_check_branch
      %1607 = sbr.rel (0) target = $region1228
    $region1227: #{tpu_custom_call.1} parent=1212 // pred_region
      %s1609 = ssub.s32 2, 1
      loop: start=0, step=1, limit=1
      $region1229: #{tpu_custom_call.1} parent=1227 // loop_pre_header
        _
      $region1230: #{tpu_custom_call.1} parent=1227 // loop_header
        %s1611 = sphi 0, %s1615
        %p1612 = scmp.ge.s32.totalorder %s1611, 1
        %s1616 = sphi %s1587, %s1587
        %s1617 = sphi %s1588, %s1588
      $region1231: #{tpu_custom_call.1} parent=1227 // loop_header_branch
        %1614 = sbr.rel (%p1612) target = $region1235
      $region1232: #{tpu_custom_call.1} parent=1227 // loop_body
        %v1618 = vld [vmem:[%s1616] sm:%s1609]
        %1619 = vst [vmem:[%s1617] sm:%s1609] %v1618
      $region1233: #{tpu_custom_call.1} parent=1227 // loop_footer
        %s1615 = sadd.s32 1, %s1611
      $region1234: #{tpu_custom_call.1} parent=1227 // loop_footer_branch
        %1610 = sbr.rel target = $region1230
      $region1235: #{tpu_custom_call.1} parent=1227 // loop_exit
        _
    $region1228: #{tpu_custom_call.1} parent=1212 // pred_fallthru
      _
  $region1213: #{tpu_custom_call.1} parent=0 // pred_fallthru
    _
  // Predicated region
  $region1214: #{tpu_custom_call.1} parent=0 // pred_check
    _
  $region1215: #{tpu_custom_call.1} parent=0 // pred_check_branch
    %1593 = sbr.rel (0) target = $region1217
  $region1216: #{tpu_custom_call.1} parent=0 // pred_region
    %s1595 = ssub.s32 2, 1
    loop: start=0, step=1, limit=1
    $region1218: #{tpu_custom_call.1} parent=1216 // loop_pre_header
      _
    $region1219: #{tpu_custom_call.1} parent=1216 // loop_header
      %s1597 = sphi 0, %s1601
      %p1598 = scmp.ge.s32.totalorder %s1597, 1
      %s1602 = sphi %s1587, %s1587
      %s1603 = sphi %s1588, %s1588
    $region1220: #{tpu_custom_call.1} parent=1216 // loop_header_branch
      %1600 = sbr.rel (%p1598) target = $region1224
    $region1221: #{tpu_custom_call.1} parent=1216 // loop_body
      %v1604 = vld [vmem:[%s1602] sm:%s1595]
      %1605 = vst [vmem:[%s1603] sm:%s1595] %v1604
    $region1222: #{tpu_custom_call.1} parent=1216 // loop_footer
      %s1601 = sadd.s32 1, %s1597
    $region1223: #{tpu_custom_call.1} parent=1216 // loop_footer_branch
      %1596 = sbr.rel target = $region1219
    $region1224: #{tpu_custom_call.1} parent=1216 // loop_exit
      _
  $region1217: #{tpu_custom_call.1} parent=0 // pred_fallthru
    _
  // Predicated region
  $region1236: #{tpu_custom_call.1} parent=0 // pred_check
    _
  $region1237: #{tpu_custom_call.1} parent=0 // pred_check_branch
    %1622 = sbr.rel (0) target = $region1239
  $region1238: #{tpu_custom_call.1} parent=0 // pred_region
    %1623 = vsyncadd %s1589, 16
  $region1239: #{tpu_custom_call.1} parent=0 // pred_fallthru
    _
  %s1624 = sadd.s32 %s1585, 1
  %s1625 = sld [smem:[#allocation5 + %s1624]]
  %s1626 = scalar_lea.vmem %s1, %s1625
  %s1627 = scalar_lea.vmem [#allocation2], 41
  %s1628 = scalar_lea.sflag [#allocation3], 41
  // Predicated region
  $region1240: #{tpu_custom_call.1} parent=0 // pred_check
    _
  $region1241: #{tpu_custom_call.1} parent=0 // pred_check_branch
    %1630 = sbr.rel target = $region1243
  $region1242: #{tpu_custom_call.1} parent=0 // pred_region
    // Predicated region
    $region1255: #{tpu_custom_call.1} parent=1242 // pred_check
      _
    $region1256: #{tpu_custom_call.1} parent=1242 // pred_check_branch
      %1646 = sbr.rel (0) target = $region1258
    $region1257: #{tpu_custom_call.1} parent=1242 // pred_region
      %s1648 = ssub.s32 2, 1
      loop: start=0, step=1, limit=1
      $region1259: #{tpu_custom_call.1} parent=1257 // loop_pre_header
        _
      $region1260: #{tpu_custom_call.1} parent=1257 // loop_header
        %s1650 = sphi 0, %s1654
        %p1651 = scmp.ge.s32.totalorder %s1650, 1
        %s1655 = sphi %s1626, %s1626
        %s1656 = sphi %s1627, %s1627
      $region1261: #{tpu_custom_call.1} parent=1257 // loop_header_branch
        %1653 = sbr.rel (%p1651) target = $region1265
      $region1262: #{tpu_custom_call.1} parent=1257 // loop_body
        %v1657 = vld [vmem:[%s1655] sm:%s1648]
        %1658 = vst [vmem:[%s1656] sm:%s1648] %v1657
      $region1263: #{tpu_custom_call.1} parent=1257 // loop_footer
        %s1654 = sadd.s32 1, %s1650
      $region1264: #{tpu_custom_call.1} parent=1257 // loop_footer_branch
        %1649 = sbr.rel target = $region1260
      $region1265: #{tpu_custom_call.1} parent=1257 // loop_exit
        _
    $region1258: #{tpu_custom_call.1} parent=1242 // pred_fallthru
      _
  $region1243: #{tpu_custom_call.1} parent=0 // pred_fallthru
    _
  // Predicated region
  $region1244: #{tpu_custom_call.1} parent=0 // pred_check
    _
  $region1245: #{tpu_custom_call.1} parent=0 // pred_check_branch
    %1632 = sbr.rel (0) target = $region1247
  $region1246: #{tpu_custom_call.1} parent=0 // pred_region
    %s1634 = ssub.s32 2, 1
    loop: start=0, step=1, limit=1
    $region1248: #{tpu_custom_call.1} parent=1246 // loop_pre_header
      _
    $region1249: #{tpu_custom_call.1} parent=1246 // loop_header
      %s1636 = sphi 0, %s1640
      %p1637 = scmp.ge.s32.totalorder %s1636, 1
      %s1641 = sphi %s1626, %s1626
      %s1642 = sphi %s1627, %s1627
    $region1250: #{tpu_custom_call.1} parent=1246 // loop_header_branch
      %1639 = sbr.rel (%p1637) target = $region1254
    $region1251: #{tpu_custom_call.1} parent=1246 // loop_body
      %v1643 = vld [vmem:[%s1641] sm:%s1634]
      %1644 = vst [vmem:[%s1642] sm:%s1634] %v1643
    $region1252: #{tpu_custom_call.1} parent=1246 // loop_footer
      %s1640 = sadd.s32 1, %s1636
    $region1253: #{tpu_custom_call.1} parent=1246 // loop_footer_branch
      %1635 = sbr.rel target = $region1249
    $region1254: #{tpu_custom_call.1} parent=1246 // loop_exit
      _
  $region1247: #{tpu_custom_call.1} parent=0 // pred_fallthru
    _
  // Predicated region
  $region1266: #{tpu_custom_call.1} parent=0 // pred_check
    _
  $region1267: #{tpu_custom_call.1} parent=0 // pred_check_branch
    %1661 = sbr.rel (0) target = $region1269
  $region1268: #{tpu_custom_call.1} parent=0 // pred_region
    %1662 = vsyncadd %s1628, 16
  $region1269: #{tpu_custom_call.1} parent=0 // pred_fallthru
    _
  %s1663 = sadd.s32 %s1585, 2
  %s1664 = sld [smem:[#allocation5 + %s1663]]
  %s1665 = scalar_lea.vmem %s1, %s1664
  %s1666 = scalar_lea.vmem [#allocation2], 42
  %s1667 = scalar_lea.sflag [#allocation3], 42
  // Predicated region
  $region1270: #{tpu_custom_call.1} parent=0 // pred_check
    _
  $region1271: #{tpu_custom_call.1} parent=0 // pred_check_branch
    %1669 = sbr.rel target = $region1273
  $region1272: #{tpu_custom_call.1} parent=0 // pred_region
    // Predicated region
    $region1285: #{tpu_custom_call.1} parent=1272 // pred_check
      _
    $region1286: #{tpu_custom_call.1} parent=1272 // pred_check_branch
      %1685 = sbr.rel (0) target = $region1288
    $region1287: #{tpu_custom_call.1} parent=1272 // pred_region
      %s1687 = ssub.s32 2, 1
      loop: start=0, step=1, limit=1
      $region1289: #{tpu_custom_call.1} parent=1287 // loop_pre_header
        _
      $region1290: #{tpu_custom_call.1} parent=1287 // loop_header
        %s1689 = sphi 0, %s1693
        %p1690 = scmp.ge.s32.totalorder %s1689, 1
        %s1694 = sphi %s1665, %s1665
        %s1695 = sphi %s1666, %s1666
      $region1291: #{tpu_custom_call.1} parent=1287 // loop_header_branch
        %1692 = sbr.rel (%p1690) target = $region1295
      $region1292: #{tpu_custom_call.1} parent=1287 // loop_body
        %v1696 = vld [vmem:[%s1694] sm:%s1687]
        %1697 = vst [vmem:[%s1695] sm:%s1687] %v1696
      $region1293: #{tpu_custom_call.1} parent=1287 // loop_footer
        %s1693 = sadd.s32 1, %s1689
      $region1294: #{tpu_custom_call.1} parent=1287 // loop_footer_branch
        %1688 = sbr.rel target = $region1290
      $region1295: #{tpu_custom_call.1} parent=1287 // loop_exit
        _
    $region1288: #{tpu_custom_call.1} parent=1272 // pred_fallthru
      _
  $region1273: #{tpu_custom_call.1} parent=0 // pred_fallthru
    _
  // Predicated region
  $region1274: #{tpu_custom_call.1} parent=0 // pred_check
    _
  $region1275: #{tpu_custom_call.1} parent=0 // pred_check_branch
    %1671 = sbr.rel (0) target = $region1277
  $region1276: #{tpu_custom_call.1} parent=0 // pred_region
    %s1673 = ssub.s32 2, 1
    loop: start=0, step=1, limit=1
    $region1278: #{tpu_custom_call.1} parent=1276 // loop_pre_header
      _
    $region1279: #{tpu_custom_call.1} parent=1276 // loop_header
      %s1675 = sphi 0, %s1679
      %p1676 = scmp.ge.s32.totalorder %s1675, 1
      %s1680 = sphi %s1665, %s1665
      %s1681 = sphi %s1666, %s1666
    $region1280: #{tpu_custom_call.1} parent=1276 // loop_header_branch
      %1678 = sbr.rel (%p1676) target = $region1284
    $region1281: #{tpu_custom_call.1} parent=1276 // loop_body
      %v1682 = vld [vmem:[%s1680] sm:%s1673]
      %1683 = vst [vmem:[%s1681] sm:%s1673] %v1682
    $region1282: #{tpu_custom_call.1} parent=1276 // loop_footer
      %s1679 = sadd.s32 1, %s1675
    $region1283: #{tpu_custom_call.1} parent=1276 // loop_footer_branch
      %1674 = sbr.rel target = $region1279
    $region1284: #{tpu_custom_call.1} parent=1276 // loop_exit
      _
  $region1277: #{tpu_custom_call.1} parent=0 // pred_fallthru
    _
  // Predicated region
  $region1296: #{tpu_custom_call.1} parent=0 // pred_check
    _
  $region1297: #{tpu_custom_call.1} parent=0 // pred_check_branch
    %1700 = sbr.rel (0) target = $region1299
  $region1298: #{tpu_custom_call.1} parent=0 // pred_region
    %1701 = vsyncadd %s1667, 16
  $region1299: #{tpu_custom_call.1} parent=0 // pred_fallthru
    _
  %s1702 = sadd.s32 %s1585, 3
  %s1703 = sld [smem:[#allocation5 + %s1702]]
  %s1704 = scalar_lea.vmem %s1, %s1703
  %s1705 = scalar_lea.vmem [#allocation2], 43
  %s1706 = scalar_lea.sflag [#allocation3], 43
  // Predicated region
  $region1300: #{tpu_custom_call.1} parent=0 // pred_check
    _
  $region1301: #{tpu_custom_call.1} parent=0 // pred_check_branch
    %1708 = sbr.rel target = $region1303
  $region1302: #{tpu_custom_call.1} parent=0 // pred_region
    // Predicated region
    $region1315: #{tpu_custom_call.1} parent=1302 // pred_check
      _
    $region1316: #{tpu_custom_call.1} parent=1302 // pred_check_branch
      %1724 = sbr.rel (0) target = $region1318
    $region1317: #{tpu_custom_call.1} parent=1302 // pred_region
      %s1726 = ssub.s32 2, 1
      loop: start=0, step=1, limit=1
      $region1319: #{tpu_custom_call.1} parent=1317 // loop_pre_header
        _
      $region1320: #{tpu_custom_call.1} parent=1317 // loop_header
        %s1728 = sphi 0, %s1732
        %p1729 = scmp.ge.s32.totalorder %s1728, 1
        %s1733 = sphi %s1704, %s1704
        %s1734 = sphi %s1705, %s1705
      $region1321: #{tpu_custom_call.1} parent=1317 // loop_header_branch
        %1731 = sbr.rel (%p1729) target = $region1325
      $region1322: #{tpu_custom_call.1} parent=1317 // loop_body
        %v1735 = vld [vmem:[%s1733] sm:%s1726]
        %1736 = vst [vmem:[%s1734] sm:%s1726] %v1735
      $region1323: #{tpu_custom_call.1} parent=1317 // loop_footer
        %s1732 = sadd.s32 1, %s1728
      $region1324: #{tpu_custom_call.1} parent=1317 // loop_footer_branch
        %1727 = sbr.rel target = $region1320
      $region1325: #{tpu_custom_call.1} parent=1317 // loop_exit
        _
    $region1318: #{tpu_custom_call.1} parent=1302 // pred_fallthru
      _
  $region1303: #{tpu_custom_call.1} parent=0 // pred_fallthru
    _
  // Predicated region
  $region1304: #{tpu_custom_call.1} parent=0 // pred_check
    _
  $region1305: #{tpu_custom_call.1} parent=0 // pred_check_branch
    %1710 = sbr.rel (0) target = $region1307
  $region1306: #{tpu_custom_call.1} parent=0 // pred_region
    %s1712 = ssub.s32 2, 1
    loop: start=0, step=1, limit=1
    $region1308: #{tpu_custom_call.1} parent=1306 // loop_pre_header
      _
    $region1309: #{tpu_custom_call.1} parent=1306 // loop_header
      %s1714 = sphi 0, %s1718
      %p1715 = scmp.ge.s32.totalorder %s1714, 1
      %s1719 = sphi %s1704, %s1704
      %s1720 = sphi %s1705, %s1705
    $region1310: #{tpu_custom_call.1} parent=1306 // loop_header_branch
      %1717 = sbr.rel (%p1715) target = $region1314
    $region1311: #{tpu_custom_call.1} parent=1306 // loop_body
      %v1721 = vld [vmem:[%s1719] sm:%s1712]
      %1722 = vst [vmem:[%s1720] sm:%s1712] %v1721
    $region1312: #{tpu_custom_call.1} parent=1306 // loop_footer
      %s1718 = sadd.s32 1, %s1714
    $region1313: #{tpu_custom_call.1} parent=1306 // loop_footer_branch
      %1713 = sbr.rel target = $region1309
    $region1314: #{tpu_custom_call.1} parent=1306 // loop_exit
      _
  $region1307: #{tpu_custom_call.1} parent=0 // pred_fallthru
    _
  // Predicated region
  $region1326: #{tpu_custom_call.1} parent=0 // pred_check
    _
  $region1327: #{tpu_custom_call.1} parent=0 // pred_check_branch
    %1739 = sbr.rel (0) target = $region1329
  $region1328: #{tpu_custom_call.1} parent=0 // pred_region
    %1740 = vsyncadd %s1706, 16
  $region1329: #{tpu_custom_call.1} parent=0 // pred_fallthru
    _
  %s1741 = sadd.s32 %s1585, 4
  %s1742 = sld [smem:[#allocation5 + %s1741]]
  %s1743 = scalar_lea.vmem %s1, %s1742
  %s1744 = scalar_lea.vmem [#allocation2], 44
  %s1745 = scalar_lea.sflag [#allocation3], 44
  // Predicated region
  $region1330: #{tpu_custom_call.1} parent=0 // pred_check
    _
  $region1331: #{tpu_custom_call.1} parent=0 // pred_check_branch
    %1747 = sbr.rel target = $region1333
  $region1332: #{tpu_custom_call.1} parent=0 // pred_region
    // Predicated region
    $region1345: #{tpu_custom_call.1} parent=1332 // pred_check
      _
    $region1346: #{tpu_custom_call.1} parent=1332 // pred_check_branch
      %1763 = sbr.rel (0) target = $region1348
    $region1347: #{tpu_custom_call.1} parent=1332 // pred_region
      %s1765 = ssub.s32 2, 1
      loop: start=0, step=1, limit=1
      $region1349: #{tpu_custom_call.1} parent=1347 // loop_pre_header
        _
      $region1350: #{tpu_custom_call.1} parent=1347 // loop_header
        %s1767 = sphi 0, %s1771
        %p1768 = scmp.ge.s32.totalorder %s1767, 1
        %s1772 = sphi %s1743, %s1743
        %s1773 = sphi %s1744, %s1744
      $region1351: #{tpu_custom_call.1} parent=1347 // loop_header_branch
        %1770 = sbr.rel (%p1768) target = $region1355
      $region1352: #{tpu_custom_call.1} parent=1347 // loop_body
        %v1774 = vld [vmem:[%s1772] sm:%s1765]
        %1775 = vst [vmem:[%s1773] sm:%s1765] %v1774
      $region1353: #{tpu_custom_call.1} parent=1347 // loop_footer
        %s1771 = sadd.s32 1, %s1767
      $region1354: #{tpu_custom_call.1} parent=1347 // loop_footer_branch
        %1766 = sbr.rel target = $region1350
      $region1355: #{tpu_custom_call.1} parent=1347 // loop_exit
        _
    $region1348: #{tpu_custom_call.1} parent=1332 // pred_fallthru
      _
  $region1333: #{tpu_custom_call.1} parent=0 // pred_fallthru
    _
  // Predicated region
  $region1334: #{tpu_custom_call.1} parent=0 // pred_check
    _
  $region1335: #{tpu_custom_call.1} parent=0 // pred_check_branch
    %1749 = sbr.rel (0) target = $region1337
  $region1336: #{tpu_custom_call.1} parent=0 // pred_region
    %s1751 = ssub.s32 2, 1
    loop: start=0, step=1, limit=1
    $region1338: #{tpu_custom_call.1} parent=1336 // loop_pre_header
      _
    $region1339: #{tpu_custom_call.1} parent=1336 // loop_header
      %s1753 = sphi 0, %s1757
      %p1754 = scmp.ge.s32.totalorder %s1753, 1
      %s1758 = sphi %s1743, %s1743
      %s1759 = sphi %s1744, %s1744
    $region1340: #{tpu_custom_call.1} parent=1336 // loop_header_branch
      %1756 = sbr.rel (%p1754) target = $region1344
    $region1341: #{tpu_custom_call.1} parent=1336 // loop_body
      %v1760 = vld [vmem:[%s1758] sm:%s1751]
      %1761 = vst [vmem:[%s1759] sm:%s1751] %v1760
    $region1342: #{tpu_custom_call.1} parent=1336 // loop_footer
      %s1757 = sadd.s32 1, %s1753
    $region1343: #{tpu_custom_call.1} parent=1336 // loop_footer_branch
      %1752 = sbr.rel target = $region1339
    $region1344: #{tpu_custom_call.1} parent=1336 // loop_exit
      _
  $region1337: #{tpu_custom_call.1} parent=0 // pred_fallthru
    _
  // Predicated region
  $region1356: #{tpu_custom_call.1} parent=0 // pred_check
    _
  $region1357: #{tpu_custom_call.1} parent=0 // pred_check_branch
    %1778 = sbr.rel (0) target = $region1359
  $region1358: #{tpu_custom_call.1} parent=0 // pred_region
    %1779 = vsyncadd %s1745, 16
  $region1359: #{tpu_custom_call.1} parent=0 // pred_fallthru
    _
  %s1780 = sadd.s32 %s1585, 5
  %s1781 = sld [smem:[#allocation5 + %s1780]]
  %s1782 = scalar_lea.vmem %s1, %s1781
  %s1783 = scalar_lea.vmem [#allocation2], 45
  %s1784 = scalar_lea.sflag [#allocation3], 45
  // Predicated region
  $region1360: #{tpu_custom_call.1} parent=0 // pred_check
    _
  $region1361: #{tpu_custom_call.1} parent=0 // pred_check_branch
    %1786 = sbr.rel target = $region1363
  $region1362: #{tpu_custom_call.1} parent=0 // pred_region
    // Predicated region
    $region1375: #{tpu_custom_call.1} parent=1362 // pred_check
      _
    $region1376: #{tpu_custom_call.1} parent=1362 // pred_check_branch
      %1802 = sbr.rel (0) target = $region1378
    $region1377: #{tpu_custom_call.1} parent=1362 // pred_region
      %s1804 = ssub.s32 2, 1
      loop: start=0, step=1, limit=1
      $region1379: #{tpu_custom_call.1} parent=1377 // loop_pre_header
        _
      $region1380: #{tpu_custom_call.1} parent=1377 // loop_header
        %s1806 = sphi 0, %s1810
        %p1807 = scmp.ge.s32.totalorder %s1806, 1
        %s1811 = sphi %s1782, %s1782
        %s1812 = sphi %s1783, %s1783
      $region1381: #{tpu_custom_call.1} parent=1377 // loop_header_branch
        %1809 = sbr.rel (%p1807) target = $region1385
      $region1382: #{tpu_custom_call.1} parent=1377 // loop_body
        %v1813 = vld [vmem:[%s1811] sm:%s1804]
        %1814 = vst [vmem:[%s1812] sm:%s1804] %v1813
      $region1383: #{tpu_custom_call.1} parent=1377 // loop_footer
        %s1810 = sadd.s32 1, %s1806
      $region1384: #{tpu_custom_call.1} parent=1377 // loop_footer_branch
        %1805 = sbr.rel target = $region1380
      $region1385: #{tpu_custom_call.1} parent=1377 // loop_exit
        _
    $region1378: #{tpu_custom_call.1} parent=1362 // pred_fallthru
      _
  $region1363: #{tpu_custom_call.1} parent=0 // pred_fallthru
    _
  // Predicated region
  $region1364: #{tpu_custom_call.1} parent=0 // pred_check
    _
  $region1365: #{tpu_custom_call.1} parent=0 // pred_check_branch
    %1788 = sbr.rel (0) target = $region1367
  $region1366: #{tpu_custom_call.1} parent=0 // pred_region
    %s1790 = ssub.s32 2, 1
    loop: start=0, step=1, limit=1
    $region1368: #{tpu_custom_call.1} parent=1366 // loop_pre_header
      _
    $region1369: #{tpu_custom_call.1} parent=1366 // loop_header
      %s1792 = sphi 0, %s1796
      %p1793 = scmp.ge.s32.totalorder %s1792, 1
      %s1797 = sphi %s1782, %s1782
      %s1798 = sphi %s1783, %s1783
    $region1370: #{tpu_custom_call.1} parent=1366 // loop_header_branch
      %1795 = sbr.rel (%p1793) target = $region1374
    $region1371: #{tpu_custom_call.1} parent=1366 // loop_body
      %v1799 = vld [vmem:[%s1797] sm:%s1790]
      %1800 = vst [vmem:[%s1798] sm:%s1790] %v1799
    $region1372: #{tpu_custom_call.1} parent=1366 // loop_footer
      %s1796 = sadd.s32 1, %s1792
    $region1373: #{tpu_custom_call.1} parent=1366 // loop_footer_branch
      %1791 = sbr.rel target = $region1369
    $region1374: #{tpu_custom_call.1} parent=1366 // loop_exit
      _
  $region1367: #{tpu_custom_call.1} parent=0 // pred_fallthru
    _
  // Predicated region
  $region1386: #{tpu_custom_call.1} parent=0 // pred_check
    _
  $region1387: #{tpu_custom_call.1} parent=0 // pred_check_branch
    %1817 = sbr.rel (0) target = $region1389
  $region1388: #{tpu_custom_call.1} parent=0 // pred_region
    %1818 = vsyncadd %s1784, 16
  $region1389: #{tpu_custom_call.1} parent=0 // pred_fallthru
    _
  %s1819 = sadd.s32 %s1585, 6
  %s1820 = sld [smem:[#allocation5 + %s1819]]
  %s1821 = scalar_lea.vmem %s1, %s1820
  %s1822 = scalar_lea.vmem [#allocation2], 46
  %s1823 = scalar_lea.sflag [#allocation3], 46
  // Predicated region
  $region1390: #{tpu_custom_call.1} parent=0 // pred_check
    _
  $region1391: #{tpu_custom_call.1} parent=0 // pred_check_branch
    %1825 = sbr.rel target = $region1393
  $region1392: #{tpu_custom_call.1} parent=0 // pred_region
    // Predicated region
    $region1405: #{tpu_custom_call.1} parent=1392 // pred_check
      _
    $region1406: #{tpu_custom_call.1} parent=1392 // pred_check_branch
      %1841 = sbr.rel (0) target = $region1408
    $region1407: #{tpu_custom_call.1} parent=1392 // pred_region
      %s1843 = ssub.s32 2, 1
      loop: start=0, step=1, limit=1
      $region1409: #{tpu_custom_call.1} parent=1407 // loop_pre_header
        _
      $region1410: #{tpu_custom_call.1} parent=1407 // loop_header
        %s1845 = sphi 0, %s1849
        %p1846 = scmp.ge.s32.totalorder %s1845, 1
        %s1850 = sphi %s1821, %s1821
        %s1851 = sphi %s1822, %s1822
      $region1411: #{tpu_custom_call.1} parent=1407 // loop_header_branch
        %1848 = sbr.rel (%p1846) target = $region1415
      $region1412: #{tpu_custom_call.1} parent=1407 // loop_body
        %v1852 = vld [vmem:[%s1850] sm:%s1843]
        %1853 = vst [vmem:[%s1851] sm:%s1843] %v1852
      $region1413: #{tpu_custom_call.1} parent=1407 // loop_footer
        %s1849 = sadd.s32 1, %s1845
      $region1414: #{tpu_custom_call.1} parent=1407 // loop_footer_branch
        %1844 = sbr.rel target = $region1410
      $region1415: #{tpu_custom_call.1} parent=1407 // loop_exit
        _
    $region1408: #{tpu_custom_call.1} parent=1392 // pred_fallthru
      _
  $region1393: #{tpu_custom_call.1} parent=0 // pred_fallthru
    _
  // Predicated region
  $region1394: #{tpu_custom_call.1} parent=0 // pred_check
    _
  $region1395: #{tpu_custom_call.1} parent=0 // pred_check_branch
    %1827 = sbr.rel (0) target = $region1397
  $region1396: #{tpu_custom_call.1} parent=0 // pred_region
    %s1829 = ssub.s32 2, 1
    loop: start=0, step=1, limit=1
    $region1398: #{tpu_custom_call.1} parent=1396 // loop_pre_header
      _
    $region1399: #{tpu_custom_call.1} parent=1396 // loop_header
      %s1831 = sphi 0, %s1835
      %p1832 = scmp.ge.s32.totalorder %s1831, 1
      %s1836 = sphi %s1821, %s1821
      %s1837 = sphi %s1822, %s1822
    $region1400: #{tpu_custom_call.1} parent=1396 // loop_header_branch
      %1834 = sbr.rel (%p1832) target = $region1404
    $region1401: #{tpu_custom_call.1} parent=1396 // loop_body
      %v1838 = vld [vmem:[%s1836] sm:%s1829]
      %1839 = vst [vmem:[%s1837] sm:%s1829] %v1838
    $region1402: #{tpu_custom_call.1} parent=1396 // loop_footer
      %s1835 = sadd.s32 1, %s1831
    $region1403: #{tpu_custom_call.1} parent=1396 // loop_footer_branch
      %1830 = sbr.rel target = $region1399
    $region1404: #{tpu_custom_call.1} parent=1396 // loop_exit
      _
  $region1397: #{tpu_custom_call.1} parent=0 // pred_fallthru
    _
  // Predicated region
  $region1416: #{tpu_custom_call.1} parent=0 // pred_check
    _
  $region1417: #{tpu_custom_call.1} parent=0 // pred_check_branch
    %1856 = sbr.rel (0) target = $region1419
  $region1418: #{tpu_custom_call.1} parent=0 // pred_region
    %1857 = vsyncadd %s1823, 16
  $region1419: #{tpu_custom_call.1} parent=0 // pred_fallthru
    _
  %s1858 = sadd.s32 %s1585, 7
  %s1859 = sld [smem:[#allocation5 + %s1858]]
  %s1860 = scalar_lea.vmem %s1, %s1859
  %s1861 = scalar_lea.vmem [#allocation2], 47
  %s1862 = scalar_lea.sflag [#allocation3], 47
  // Predicated region
  $region1420: #{tpu_custom_call.1} parent=0 // pred_check
    _
  $region1421: #{tpu_custom_call.1} parent=0 // pred_check_branch
    %1864 = sbr.rel target = $region1423
  $region1422: #{tpu_custom_call.1} parent=0 // pred_region
    // Predicated region
    $region1435: #{tpu_custom_call.1} parent=1422 // pred_check
      _
    $region1436: #{tpu_custom_call.1} parent=1422 // pred_check_branch
      %1880 = sbr.rel (0) target = $region1438
    $region1437: #{tpu_custom_call.1} parent=1422 // pred_region
      %s1882 = ssub.s32 2, 1
      loop: start=0, step=1, limit=1
      $region1439: #{tpu_custom_call.1} parent=1437 // loop_pre_header
        _
      $region1440: #{tpu_custom_call.1} parent=1437 // loop_header
        %s1884 = sphi 0, %s1888
        %p1885 = scmp.ge.s32.totalorder %s1884, 1
        %s1889 = sphi %s1860, %s1860
        %s1890 = sphi %s1861, %s1861
      $region1441: #{tpu_custom_call.1} parent=1437 // loop_header_branch
        %1887 = sbr.rel (%p1885) target = $region1445
      $region1442: #{tpu_custom_call.1} parent=1437 // loop_body
        %v1891 = vld [vmem:[%s1889] sm:%s1882]
        %1892 = vst [vmem:[%s1890] sm:%s1882] %v1891
      $region1443: #{tpu_custom_call.1} parent=1437 // loop_footer
        %s1888 = sadd.s32 1, %s1884
      $region1444: #{tpu_custom_call.1} parent=1437 // loop_footer_branch
        %1883 = sbr.rel target = $region1440
      $region1445: #{tpu_custom_call.1} parent=1437 // loop_exit
        _
    $region1438: #{tpu_custom_call.1} parent=1422 // pred_fallthru
      _
  $region1423: #{tpu_custom_call.1} parent=0 // pred_fallthru
    _
  // Predicated region
  $region1424: #{tpu_custom_call.1} parent=0 // pred_check
    _
  $region1425: #{tpu_custom_call.1} parent=0 // pred_check_branch
    %1866 = sbr.rel (0) target = $region1427
  $region1426: #{tpu_custom_call.1} parent=0 // pred_region
    %s1868 = ssub.s32 2, 1
    loop: start=0, step=1, limit=1
    $region1428: #{tpu_custom_call.1} parent=1426 // loop_pre_header
      _
    $region1429: #{tpu_custom_call.1} parent=1426 // loop_header
      %s1870 = sphi 0, %s1874
      %p1871 = scmp.ge.s32.totalorder %s1870, 1
      %s1875 = sphi %s1860, %s1860
      %s1876 = sphi %s1861, %s1861
    $region1430: #{tpu_custom_call.1} parent=1426 // loop_header_branch
      %1873 = sbr.rel (%p1871) target = $region1434
    $region1431: #{tpu_custom_call.1} parent=1426 // loop_body
      %v1877 = vld [vmem:[%s1875] sm:%s1868]
      %1878 = vst [vmem:[%s1876] sm:%s1868] %v1877
    $region1432: #{tpu_custom_call.1} parent=1426 // loop_footer
      %s1874 = sadd.s32 1, %s1870
    $region1433: #{tpu_custom_call.1} parent=1426 // loop_footer_branch
      %1869 = sbr.rel target = $region1429
    $region1434: #{tpu_custom_call.1} parent=1426 // loop_exit
      _
  $region1427: #{tpu_custom_call.1} parent=0 // pred_fallthru
    _
  // Predicated region
  $region1446: #{tpu_custom_call.1} parent=0 // pred_check
    _
  $region1447: #{tpu_custom_call.1} parent=0 // pred_check_branch
    %1895 = sbr.rel (0) target = $region1449
  $region1448: #{tpu_custom_call.1} parent=0 // pred_region
    %1896 = vsyncadd %s1862, 16
  $region1449: #{tpu_custom_call.1} parent=0 // pred_fallthru
    _
  %s1897 = sadd.s32 %s21, 6
  %s1898 = smul.u32 %s1897, 128
  %s1899 = sld [smem:[#allocation5 + %s1898]]
  %s1900 = scalar_lea.vmem %s1, %s1899
  %s1901 = scalar_lea.vmem [#allocation2], 48
  %s1902 = scalar_lea.sflag [#allocation3], 48
  // Predicated region
  $region1450: #{tpu_custom_call.1} parent=0 // pred_check
    _
  $region1451: #{tpu_custom_call.1} parent=0 // pred_check_branch
    %1904 = sbr.rel target = $region1453
  $region1452: #{tpu_custom_call.1} parent=0 // pred_region
    // Predicated region
    $region1465: #{tpu_custom_call.1} parent=1452 // pred_check
      _
    $region1466: #{tpu_custom_call.1} parent=1452 // pred_check_branch
      %1920 = sbr.rel (0) target = $region1468
    $region1467: #{tpu_custom_call.1} parent=1452 // pred_region
      %s1922 = ssub.s32 2, 1
      loop: start=0, step=1, limit=1
      $region1469: #{tpu_custom_call.1} parent=1467 // loop_pre_header
        _
      $region1470: #{tpu_custom_call.1} parent=1467 // loop_header
        %s1924 = sphi 0, %s1928
        %p1925 = scmp.ge.s32.totalorder %s1924, 1
        %s1929 = sphi %s1900, %s1900
        %s1930 = sphi %s1901, %s1901
      $region1471: #{tpu_custom_call.1} parent=1467 // loop_header_branch
        %1927 = sbr.rel (%p1925) target = $region1475
      $region1472: #{tpu_custom_call.1} parent=1467 // loop_body
        %v1931 = vld [vmem:[%s1929] sm:%s1922]
        %1932 = vst [vmem:[%s1930] sm:%s1922] %v1931
      $region1473: #{tpu_custom_call.1} parent=1467 // loop_footer
        %s1928 = sadd.s32 1, %s1924
      $region1474: #{tpu_custom_call.1} parent=1467 // loop_footer_branch
        %1923 = sbr.rel target = $region1470
      $region1475: #{tpu_custom_call.1} parent=1467 // loop_exit
        _
    $region1468: #{tpu_custom_call.1} parent=1452 // pred_fallthru
      _
  $region1453: #{tpu_custom_call.1} parent=0 // pred_fallthru
    _
  // Predicated region
  $region1454: #{tpu_custom_call.1} parent=0 // pred_check
    _
  $region1455: #{tpu_custom_call.1} parent=0 // pred_check_branch
    %1906 = sbr.rel (0) target = $region1457
  $region1456: #{tpu_custom_call.1} parent=0 // pred_region
    %s1908 = ssub.s32 2, 1
    loop: start=0, step=1, limit=1
    $region1458: #{tpu_custom_call.1} parent=1456 // loop_pre_header
      _
    $region1459: #{tpu_custom_call.1} parent=1456 // loop_header
      %s1910 = sphi 0, %s1914
      %p1911 = scmp.ge.s32.totalorder %s1910, 1
      %s1915 = sphi %s1900, %s1900
      %s1916 = sphi %s1901, %s1901
    $region1460: #{tpu_custom_call.1} parent=1456 // loop_header_branch
      %1913 = sbr.rel (%p1911) target = $region1464
    $region1461: #{tpu_custom_call.1} parent=1456 // loop_body
      %v1917 = vld [vmem:[%s1915] sm:%s1908]
      %1918 = vst [vmem:[%s1916] sm:%s1908] %v1917
    $region1462: #{tpu_custom_call.1} parent=1456 // loop_footer
      %s1914 = sadd.s32 1, %s1910
    $region1463: #{tpu_custom_call.1} parent=1456 // loop_footer_branch
      %1909 = sbr.rel target = $region1459
    $region1464: #{tpu_custom_call.1} parent=1456 // loop_exit
      _
  $region1457: #{tpu_custom_call.1} parent=0 // pred_fallthru
    _
  // Predicated region
  $region1476: #{tpu_custom_call.1} parent=0 // pred_check
    _
  $region1477: #{tpu_custom_call.1} parent=0 // pred_check_branch
    %1935 = sbr.rel (0) target = $region1479
  $region1478: #{tpu_custom_call.1} parent=0 // pred_region
    %1936 = vsyncadd %s1902, 16
  $region1479: #{tpu_custom_call.1} parent=0 // pred_fallthru
    _
  %s1937 = sadd.s32 %s1898, 1
  %s1938 = sld [smem:[#allocation5 + %s1937]]
  %s1939 = scalar_lea.vmem %s1, %s1938
  %s1940 = scalar_lea.vmem [#allocation2], 49
  %s1941 = scalar_lea.sflag [#allocation3], 49
  // Predicated region
  $region1480: #{tpu_custom_call.1} parent=0 // pred_check
    _
  $region1481: #{tpu_custom_call.1} parent=0 // pred_check_branch
    %1943 = sbr.rel target = $region1483
  $region1482: #{tpu_custom_call.1} parent=0 // pred_region
    // Predicated region
    $region1495: #{tpu_custom_call.1} parent=1482 // pred_check
      _
    $region1496: #{tpu_custom_call.1} parent=1482 // pred_check_branch
      %1959 = sbr.rel (0) target = $region1498
    $region1497: #{tpu_custom_call.1} parent=1482 // pred_region
      %s1961 = ssub.s32 2, 1
      loop: start=0, step=1, limit=1
      $region1499: #{tpu_custom_call.1} parent=1497 // loop_pre_header
        _
      $region1500: #{tpu_custom_call.1} parent=1497 // loop_header
        %s1963 = sphi 0, %s1967
        %p1964 = scmp.ge.s32.totalorder %s1963, 1
        %s1968 = sphi %s1939, %s1939
        %s1969 = sphi %s1940, %s1940
      $region1501: #{tpu_custom_call.1} parent=1497 // loop_header_branch
        %1966 = sbr.rel (%p1964) target = $region1505
      $region1502: #{tpu_custom_call.1} parent=1497 // loop_body
        %v1970 = vld [vmem:[%s1968] sm:%s1961]
        %1971 = vst [vmem:[%s1969] sm:%s1961] %v1970
      $region1503: #{tpu_custom_call.1} parent=1497 // loop_footer
        %s1967 = sadd.s32 1, %s1963
      $region1504: #{tpu_custom_call.1} parent=1497 // loop_footer_branch
        %1962 = sbr.rel target = $region1500
      $region1505: #{tpu_custom_call.1} parent=1497 // loop_exit
        _
    $region1498: #{tpu_custom_call.1} parent=1482 // pred_fallthru
      _
  $region1483: #{tpu_custom_call.1} parent=0 // pred_fallthru
    _
  // Predicated region
  $region1484: #{tpu_custom_call.1} parent=0 // pred_check
    _
  $region1485: #{tpu_custom_call.1} parent=0 // pred_check_branch
    %1945 = sbr.rel (0) target = $region1487
  $region1486: #{tpu_custom_call.1} parent=0 // pred_region
    %s1947 = ssub.s32 2, 1
    loop: start=0, step=1, limit=1
    $region1488: #{tpu_custom_call.1} parent=1486 // loop_pre_header
      _
    $region1489: #{tpu_custom_call.1} parent=1486 // loop_header
      %s1949 = sphi 0, %s1953
      %p1950 = scmp.ge.s32.totalorder %s1949, 1
      %s1954 = sphi %s1939, %s1939
      %s1955 = sphi %s1940, %s1940
    $region1490: #{tpu_custom_call.1} parent=1486 // loop_header_branch
      %1952 = sbr.rel (%p1950) target = $region1494
    $region1491: #{tpu_custom_call.1} parent=1486 // loop_body
      %v1956 = vld [vmem:[%s1954] sm:%s1947]
      %1957 = vst [vmem:[%s1955] sm:%s1947] %v1956
    $region1492: #{tpu_custom_call.1} parent=1486 // loop_footer
      %s1953 = sadd.s32 1, %s1949
    $region1493: #{tpu_custom_call.1} parent=1486 // loop_footer_branch
      %1948 = sbr.rel target = $region1489
    $region1494: #{tpu_custom_call.1} parent=1486 // loop_exit
      _
  $region1487: #{tpu_custom_call.1} parent=0 // pred_fallthru
    _
  // Predicated region
  $region1506: #{tpu_custom_call.1} parent=0 // pred_check
    _
  $region1507: #{tpu_custom_call.1} parent=0 // pred_check_branch
    %1974 = sbr.rel (0) target = $region1509
  $region1508: #{tpu_custom_call.1} parent=0 // pred_region
    %1975 = vsyncadd %s1941, 16
  $region1509: #{tpu_custom_call.1} parent=0 // pred_fallthru
    _
  %s1976 = sadd.s32 %s1898, 2
  %s1977 = sld [smem:[#allocation5 + %s1976]]
  %s1978 = scalar_lea.vmem %s1, %s1977
  %s1979 = scalar_lea.vmem [#allocation2], 50
  %s1980 = scalar_lea.sflag [#allocation3], 50
  // Predicated region
  $region1510: #{tpu_custom_call.1} parent=0 // pred_check
    _
  $region1511: #{tpu_custom_call.1} parent=0 // pred_check_branch
    %1982 = sbr.rel target = $region1513
  $region1512: #{tpu_custom_call.1} parent=0 // pred_region
    // Predicated region
    $region1525: #{tpu_custom_call.1} parent=1512 // pred_check
      _
    $region1526: #{tpu_custom_call.1} parent=1512 // pred_check_branch
      %1998 = sbr.rel (0) target = $region1528
    $region1527: #{tpu_custom_call.1} parent=1512 // pred_region
      %s2000 = ssub.s32 2, 1
      loop: start=0, step=1, limit=1
      $region1529: #{tpu_custom_call.1} parent=1527 // loop_pre_header
        _
      $region1530: #{tpu_custom_call.1} parent=1527 // loop_header
        %s2002 = sphi 0, %s2006
        %p2003 = scmp.ge.s32.totalorder %s2002, 1
        %s2007 = sphi %s1978, %s1978
        %s2008 = sphi %s1979, %s1979
      $region1531: #{tpu_custom_call.1} parent=1527 // loop_header_branch
        %2005 = sbr.rel (%p2003) target = $region1535
      $region1532: #{tpu_custom_call.1} parent=1527 // loop_body
        %v2009 = vld [vmem:[%s2007] sm:%s2000]
        %2010 = vst [vmem:[%s2008] sm:%s2000] %v2009
      $region1533: #{tpu_custom_call.1} parent=1527 // loop_footer
        %s2006 = sadd.s32 1, %s2002
      $region1534: #{tpu_custom_call.1} parent=1527 // loop_footer_branch
        %2001 = sbr.rel target = $region1530
      $region1535: #{tpu_custom_call.1} parent=1527 // loop_exit
        _
    $region1528: #{tpu_custom_call.1} parent=1512 // pred_fallthru
      _
  $region1513: #{tpu_custom_call.1} parent=0 // pred_fallthru
    _
  // Predicated region
  $region1514: #{tpu_custom_call.1} parent=0 // pred_check
    _
  $region1515: #{tpu_custom_call.1} parent=0 // pred_check_branch
    %1984 = sbr.rel (0) target = $region1517
  $region1516: #{tpu_custom_call.1} parent=0 // pred_region
    %s1986 = ssub.s32 2, 1
    loop: start=0, step=1, limit=1
    $region1518: #{tpu_custom_call.1} parent=1516 // loop_pre_header
      _
    $region1519: #{tpu_custom_call.1} parent=1516 // loop_header
      %s1988 = sphi 0, %s1992
      %p1989 = scmp.ge.s32.totalorder %s1988, 1
      %s1993 = sphi %s1978, %s1978
      %s1994 = sphi %s1979, %s1979
    $region1520: #{tpu_custom_call.1} parent=1516 // loop_header_branch
      %1991 = sbr.rel (%p1989) target = $region1524
    $region1521: #{tpu_custom_call.1} parent=1516 // loop_body
      %v1995 = vld [vmem:[%s1993] sm:%s1986]
      %1996 = vst [vmem:[%s1994] sm:%s1986] %v1995
    $region1522: #{tpu_custom_call.1} parent=1516 // loop_footer
      %s1992 = sadd.s32 1, %s1988
    $region1523: #{tpu_custom_call.1} parent=1516 // loop_footer_branch
      %1987 = sbr.rel target = $region1519
    $region1524: #{tpu_custom_call.1} parent=1516 // loop_exit
      _
  $region1517: #{tpu_custom_call.1} parent=0 // pred_fallthru
    _
  // Predicated region
  $region1536: #{tpu_custom_call.1} parent=0 // pred_check
    _
  $region1537: #{tpu_custom_call.1} parent=0 // pred_check_branch
    %2013 = sbr.rel (0) target = $region1539
  $region1538: #{tpu_custom_call.1} parent=0 // pred_region
    %2014 = vsyncadd %s1980, 16
  $region1539: #{tpu_custom_call.1} parent=0 // pred_fallthru
    _
  %s2015 = sadd.s32 %s1898, 3
  %s2016 = sld [smem:[#allocation5 + %s2015]]
  %s2017 = scalar_lea.vmem %s1, %s2016
  %s2018 = scalar_lea.vmem [#allocation2], 51
  %s2019 = scalar_lea.sflag [#allocation3], 51
  // Predicated region
  $region1540: #{tpu_custom_call.1} parent=0 // pred_check
    _
  $region1541: #{tpu_custom_call.1} parent=0 // pred_check_branch
    %2021 = sbr.rel target = $region1543
  $region1542: #{tpu_custom_call.1} parent=0 // pred_region
    // Predicated region
    $region1555: #{tpu_custom_call.1} parent=1542 // pred_check
      _
    $region1556: #{tpu_custom_call.1} parent=1542 // pred_check_branch
      %2037 = sbr.rel (0) target = $region1558
    $region1557: #{tpu_custom_call.1} parent=1542 // pred_region
      %s2039 = ssub.s32 2, 1
      loop: start=0, step=1, limit=1
      $region1559: #{tpu_custom_call.1} parent=1557 // loop_pre_header
        _
      $region1560: #{tpu_custom_call.1} parent=1557 // loop_header
        %s2041 = sphi 0, %s2045
        %p2042 = scmp.ge.s32.totalorder %s2041, 1
        %s2046 = sphi %s2017, %s2017
        %s2047 = sphi %s2018, %s2018
      $region1561: #{tpu_custom_call.1} parent=1557 // loop_header_branch
        %2044 = sbr.rel (%p2042) target = $region1565
      $region1562: #{tpu_custom_call.1} parent=1557 // loop_body
        %v2048 = vld [vmem:[%s2046] sm:%s2039]
        %2049 = vst [vmem:[%s2047] sm:%s2039] %v2048
      $region1563: #{tpu_custom_call.1} parent=1557 // loop_footer
        %s2045 = sadd.s32 1, %s2041
      $region1564: #{tpu_custom_call.1} parent=1557 // loop_footer_branch
        %2040 = sbr.rel target = $region1560
      $region1565: #{tpu_custom_call.1} parent=1557 // loop_exit
        _
    $region1558: #{tpu_custom_call.1} parent=1542 // pred_fallthru
      _
  $region1543: #{tpu_custom_call.1} parent=0 // pred_fallthru
    _
  // Predicated region
  $region1544: #{tpu_custom_call.1} parent=0 // pred_check
    _
  $region1545: #{tpu_custom_call.1} parent=0 // pred_check_branch
    %2023 = sbr.rel (0) target = $region1547
  $region1546: #{tpu_custom_call.1} parent=0 // pred_region
    %s2025 = ssub.s32 2, 1
    loop: start=0, step=1, limit=1
    $region1548: #{tpu_custom_call.1} parent=1546 // loop_pre_header
      _
    $region1549: #{tpu_custom_call.1} parent=1546 // loop_header
      %s2027 = sphi 0, %s2031
      %p2028 = scmp.ge.s32.totalorder %s2027, 1
      %s2032 = sphi %s2017, %s2017
      %s2033 = sphi %s2018, %s2018
    $region1550: #{tpu_custom_call.1} parent=1546 // loop_header_branch
      %2030 = sbr.rel (%p2028) target = $region1554
    $region1551: #{tpu_custom_call.1} parent=1546 // loop_body
      %v2034 = vld [vmem:[%s2032] sm:%s2025]
      %2035 = vst [vmem:[%s2033] sm:%s2025] %v2034
    $region1552: #{tpu_custom_call.1} parent=1546 // loop_footer
      %s2031 = sadd.s32 1, %s2027
    $region1553: #{tpu_custom_call.1} parent=1546 // loop_footer_branch
      %2026 = sbr.rel target = $region1549
    $region1554: #{tpu_custom_call.1} parent=1546 // loop_exit
      _
  $region1547: #{tpu_custom_call.1} parent=0 // pred_fallthru
    _
  // Predicated region
  $region1566: #{tpu_custom_call.1} parent=0 // pred_check
    _
  $region1567: #{tpu_custom_call.1} parent=0 // pred_check_branch
    %2052 = sbr.rel (0) target = $region1569
  $region1568: #{tpu_custom_call.1} parent=0 // pred_region
    %2053 = vsyncadd %s2019, 16
  $region1569: #{tpu_custom_call.1} parent=0 // pred_fallthru
    _
  %s2054 = sadd.s32 %s1898, 4
  %s2055 = sld [smem:[#allocation5 + %s2054]]
  %s2056 = scalar_lea.vmem %s1, %s2055
  %s2057 = scalar_lea.vmem [#allocation2], 52
  %s2058 = scalar_lea.sflag [#allocation3], 52
  // Predicated region
  $region1570: #{tpu_custom_call.1} parent=0 // pred_check
    _
  $region1571: #{tpu_custom_call.1} parent=0 // pred_check_branch
    %2060 = sbr.rel target = $region1573
  $region1572: #{tpu_custom_call.1} parent=0 // pred_region
    // Predicated region
    $region1585: #{tpu_custom_call.1} parent=1572 // pred_check
      _
    $region1586: #{tpu_custom_call.1} parent=1572 // pred_check_branch
      %2076 = sbr.rel (0) target = $region1588
    $region1587: #{tpu_custom_call.1} parent=1572 // pred_region
      %s2078 = ssub.s32 2, 1
      loop: start=0, step=1, limit=1
      $region1589: #{tpu_custom_call.1} parent=1587 // loop_pre_header
        _
      $region1590: #{tpu_custom_call.1} parent=1587 // loop_header
        %s2080 = sphi 0, %s2084
        %p2081 = scmp.ge.s32.totalorder %s2080, 1
        %s2085 = sphi %s2056, %s2056
        %s2086 = sphi %s2057, %s2057
      $region1591: #{tpu_custom_call.1} parent=1587 // loop_header_branch
        %2083 = sbr.rel (%p2081) target = $region1595
      $region1592: #{tpu_custom_call.1} parent=1587 // loop_body
        %v2087 = vld [vmem:[%s2085] sm:%s2078]
        %2088 = vst [vmem:[%s2086] sm:%s2078] %v2087
      $region1593: #{tpu_custom_call.1} parent=1587 // loop_footer
        %s2084 = sadd.s32 1, %s2080
      $region1594: #{tpu_custom_call.1} parent=1587 // loop_footer_branch
        %2079 = sbr.rel target = $region1590
      $region1595: #{tpu_custom_call.1} parent=1587 // loop_exit
        _
    $region1588: #{tpu_custom_call.1} parent=1572 // pred_fallthru
      _
  $region1573: #{tpu_custom_call.1} parent=0 // pred_fallthru
    _
  // Predicated region
  $region1574: #{tpu_custom_call.1} parent=0 // pred_check
    _
  $region1575: #{tpu_custom_call.1} parent=0 // pred_check_branch
    %2062 = sbr.rel (0) target = $region1577
  $region1576: #{tpu_custom_call.1} parent=0 // pred_region
    %s2064 = ssub.s32 2, 1
    loop: start=0, step=1, limit=1
    $region1578: #{tpu_custom_call.1} parent=1576 // loop_pre_header
      _
    $region1579: #{tpu_custom_call.1} parent=1576 // loop_header
      %s2066 = sphi 0, %s2070
      %p2067 = scmp.ge.s32.totalorder %s2066, 1
      %s2071 = sphi %s2056, %s2056
      %s2072 = sphi %s2057, %s2057
    $region1580: #{tpu_custom_call.1} parent=1576 // loop_header_branch
      %2069 = sbr.rel (%p2067) target = $region1584
    $region1581: #{tpu_custom_call.1} parent=1576 // loop_body
      %v2073 = vld [vmem:[%s2071] sm:%s2064]
      %2074 = vst [vmem:[%s2072] sm:%s2064] %v2073
    $region1582: #{tpu_custom_call.1} parent=1576 // loop_footer
      %s2070 = sadd.s32 1, %s2066
    $region1583: #{tpu_custom_call.1} parent=1576 // loop_footer_branch
      %2065 = sbr.rel target = $region1579
    $region1584: #{tpu_custom_call.1} parent=1576 // loop_exit
      _
  $region1577: #{tpu_custom_call.1} parent=0 // pred_fallthru
    _
  // Predicated region
  $region1596: #{tpu_custom_call.1} parent=0 // pred_check
    _
  $region1597: #{tpu_custom_call.1} parent=0 // pred_check_branch
    %2091 = sbr.rel (0) target = $region1599
  $region1598: #{tpu_custom_call.1} parent=0 // pred_region
    %2092 = vsyncadd %s2058, 16
  $region1599: #{tpu_custom_call.1} parent=0 // pred_fallthru
    _
  %s2093 = sadd.s32 %s1898, 5
  %s2094 = sld [smem:[#allocation5 + %s2093]]
  %s2095 = scalar_lea.vmem %s1, %s2094
  %s2096 = scalar_lea.vmem [#allocation2], 53
  %s2097 = scalar_lea.sflag [#allocation3], 53
  // Predicated region
  $region1600: #{tpu_custom_call.1} parent=0 // pred_check
    _
  $region1601: #{tpu_custom_call.1} parent=0 // pred_check_branch
    %2099 = sbr.rel target = $region1603
  $region1602: #{tpu_custom_call.1} parent=0 // pred_region
    // Predicated region
    $region1615: #{tpu_custom_call.1} parent=1602 // pred_check
      _
    $region1616: #{tpu_custom_call.1} parent=1602 // pred_check_branch
      %2115 = sbr.rel (0) target = $region1618
    $region1617: #{tpu_custom_call.1} parent=1602 // pred_region
      %s2117 = ssub.s32 2, 1
      loop: start=0, step=1, limit=1
      $region1619: #{tpu_custom_call.1} parent=1617 // loop_pre_header
        _
      $region1620: #{tpu_custom_call.1} parent=1617 // loop_header
        %s2119 = sphi 0, %s2123
        %p2120 = scmp.ge.s32.totalorder %s2119, 1
        %s2124 = sphi %s2095, %s2095
        %s2125 = sphi %s2096, %s2096
      $region1621: #{tpu_custom_call.1} parent=1617 // loop_header_branch
        %2122 = sbr.rel (%p2120) target = $region1625
      $region1622: #{tpu_custom_call.1} parent=1617 // loop_body
        %v2126 = vld [vmem:[%s2124] sm:%s2117]
        %2127 = vst [vmem:[%s2125] sm:%s2117] %v2126
      $region1623: #{tpu_custom_call.1} parent=1617 // loop_footer
        %s2123 = sadd.s32 1, %s2119
      $region1624: #{tpu_custom_call.1} parent=1617 // loop_footer_branch
        %2118 = sbr.rel target = $region1620
      $region1625: #{tpu_custom_call.1} parent=1617 // loop_exit
        _
    $region1618: #{tpu_custom_call.1} parent=1602 // pred_fallthru
      _
  $region1603: #{tpu_custom_call.1} parent=0 // pred_fallthru
    _
  // Predicated region
  $region1604: #{tpu_custom_call.1} parent=0 // pred_check
    _
  $region1605: #{tpu_custom_call.1} parent=0 // pred_check_branch
    %2101 = sbr.rel (0) target = $region1607
  $region1606: #{tpu_custom_call.1} parent=0 // pred_region
    %s2103 = ssub.s32 2, 1
    loop: start=0, step=1, limit=1
    $region1608: #{tpu_custom_call.1} parent=1606 // loop_pre_header
      _
    $region1609: #{tpu_custom_call.1} parent=1606 // loop_header
      %s2105 = sphi 0, %s2109
      %p2106 = scmp.ge.s32.totalorder %s2105, 1
      %s2110 = sphi %s2095, %s2095
      %s2111 = sphi %s2096, %s2096
    $region1610: #{tpu_custom_call.1} parent=1606 // loop_header_branch
      %2108 = sbr.rel (%p2106) target = $region1614
    $region1611: #{tpu_custom_call.1} parent=1606 // loop_body
      %v2112 = vld [vmem:[%s2110] sm:%s2103]
      %2113 = vst [vmem:[%s2111] sm:%s2103] %v2112
    $region1612: #{tpu_custom_call.1} parent=1606 // loop_footer
      %s2109 = sadd.s32 1, %s2105
    $region1613: #{tpu_custom_call.1} parent=1606 // loop_footer_branch
      %2104 = sbr.rel target = $region1609
    $region1614: #{tpu_custom_call.1} parent=1606 // loop_exit
      _
  $region1607: #{tpu_custom_call.1} parent=0 // pred_fallthru
    _
  // Predicated region
  $region1626: #{tpu_custom_call.1} parent=0 // pred_check
    _
  $region1627: #{tpu_custom_call.1} parent=0 // pred_check_branch
    %2130 = sbr.rel (0) target = $region1629
  $region1628: #{tpu_custom_call.1} parent=0 // pred_region
    %2131 = vsyncadd %s2097, 16
  $region1629: #{tpu_custom_call.1} parent=0 // pred_fallthru
    _
  %s2132 = sadd.s32 %s1898, 6
  %s2133 = sld [smem:[#allocation5 + %s2132]]
  %s2134 = scalar_lea.vmem %s1, %s2133
  %s2135 = scalar_lea.vmem [#allocation2], 54
  %s2136 = scalar_lea.sflag [#allocation3], 54
  // Predicated region
  $region1630: #{tpu_custom_call.1} parent=0 // pred_check
    _
  $region1631: #{tpu_custom_call.1} parent=0 // pred_check_branch
    %2138 = sbr.rel target = $region1633
  $region1632: #{tpu_custom_call.1} parent=0 // pred_region
    // Predicated region
    $region1645: #{tpu_custom_call.1} parent=1632 // pred_check
      _
    $region1646: #{tpu_custom_call.1} parent=1632 // pred_check_branch
      %2154 = sbr.rel (0) target = $region1648
    $region1647: #{tpu_custom_call.1} parent=1632 // pred_region
      %s2156 = ssub.s32 2, 1
      loop: start=0, step=1, limit=1
      $region1649: #{tpu_custom_call.1} parent=1647 // loop_pre_header
        _
      $region1650: #{tpu_custom_call.1} parent=1647 // loop_header
        %s2158 = sphi 0, %s2162
        %p2159 = scmp.ge.s32.totalorder %s2158, 1
        %s2163 = sphi %s2134, %s2134
        %s2164 = sphi %s2135, %s2135
      $region1651: #{tpu_custom_call.1} parent=1647 // loop_header_branch
        %2161 = sbr.rel (%p2159) target = $region1655
      $region1652: #{tpu_custom_call.1} parent=1647 // loop_body
        %v2165 = vld [vmem:[%s2163] sm:%s2156]
        %2166 = vst [vmem:[%s2164] sm:%s2156] %v2165
      $region1653: #{tpu_custom_call.1} parent=1647 // loop_footer
        %s2162 = sadd.s32 1, %s2158
      $region1654: #{tpu_custom_call.1} parent=1647 // loop_footer_branch
        %2157 = sbr.rel target = $region1650
      $region1655: #{tpu_custom_call.1} parent=1647 // loop_exit
        _
    $region1648: #{tpu_custom_call.1} parent=1632 // pred_fallthru
      _
  $region1633: #{tpu_custom_call.1} parent=0 // pred_fallthru
    _
  // Predicated region
  $region1634: #{tpu_custom_call.1} parent=0 // pred_check
    _
  $region1635: #{tpu_custom_call.1} parent=0 // pred_check_branch
    %2140 = sbr.rel (0) target = $region1637
  $region1636: #{tpu_custom_call.1} parent=0 // pred_region
    %s2142 = ssub.s32 2, 1
    loop: start=0, step=1, limit=1
    $region1638: #{tpu_custom_call.1} parent=1636 // loop_pre_header
      _
    $region1639: #{tpu_custom_call.1} parent=1636 // loop_header
      %s2144 = sphi 0, %s2148
      %p2145 = scmp.ge.s32.totalorder %s2144, 1
      %s2149 = sphi %s2134, %s2134
      %s2150 = sphi %s2135, %s2135
    $region1640: #{tpu_custom_call.1} parent=1636 // loop_header_branch
      %2147 = sbr.rel (%p2145) target = $region1644
    $region1641: #{tpu_custom_call.1} parent=1636 // loop_body
      %v2151 = vld [vmem:[%s2149] sm:%s2142]
      %2152 = vst [vmem:[%s2150] sm:%s2142] %v2151
    $region1642: #{tpu_custom_call.1} parent=1636 // loop_footer
      %s2148 = sadd.s32 1, %s2144
    $region1643: #{tpu_custom_call.1} parent=1636 // loop_footer_branch
      %2143 = sbr.rel target = $region1639
    $region1644: #{tpu_custom_call.1} parent=1636 // loop_exit
      _
  $region1637: #{tpu_custom_call.1} parent=0 // pred_fallthru
    _
  // Predicated region
  $region1656: #{tpu_custom_call.1} parent=0 // pred_check
    _
  $region1657: #{tpu_custom_call.1} parent=0 // pred_check_branch
    %2169 = sbr.rel (0) target = $region1659
  $region1658: #{tpu_custom_call.1} parent=0 // pred_region
    %2170 = vsyncadd %s2136, 16
  $region1659: #{tpu_custom_call.1} parent=0 // pred_fallthru
    _
  %s2171 = sadd.s32 %s1898, 7
  %s2172 = sld [smem:[#allocation5 + %s2171]]
  %s2173 = scalar_lea.vmem %s1, %s2172
  %s2174 = scalar_lea.vmem [#allocation2], 55
  %s2175 = scalar_lea.sflag [#allocation3], 55
  // Predicated region
  $region1660: #{tpu_custom_call.1} parent=0 // pred_check
    _
  $region1661: #{tpu_custom_call.1} parent=0 // pred_check_branch
    %2177 = sbr.rel target = $region1663
  $region1662: #{tpu_custom_call.1} parent=0 // pred_region
    // Predicated region
    $region1675: #{tpu_custom_call.1} parent=1662 // pred_check
      _
    $region1676: #{tpu_custom_call.1} parent=1662 // pred_check_branch
      %2193 = sbr.rel (0) target = $region1678
    $region1677: #{tpu_custom_call.1} parent=1662 // pred_region
      %s2195 = ssub.s32 2, 1
      loop: start=0, step=1, limit=1
      $region1679: #{tpu_custom_call.1} parent=1677 // loop_pre_header
        _
      $region1680: #{tpu_custom_call.1} parent=1677 // loop_header
        %s2197 = sphi 0, %s2201
        %p2198 = scmp.ge.s32.totalorder %s2197, 1
        %s2202 = sphi %s2173, %s2173
        %s2203 = sphi %s2174, %s2174
      $region1681: #{tpu_custom_call.1} parent=1677 // loop_header_branch
        %2200 = sbr.rel (%p2198) target = $region1685
      $region1682: #{tpu_custom_call.1} parent=1677 // loop_body
        %v2204 = vld [vmem:[%s2202] sm:%s2195]
        %2205 = vst [vmem:[%s2203] sm:%s2195] %v2204
      $region1683: #{tpu_custom_call.1} parent=1677 // loop_footer
        %s2201 = sadd.s32 1, %s2197
      $region1684: #{tpu_custom_call.1} parent=1677 // loop_footer_branch
        %2196 = sbr.rel target = $region1680
      $region1685: #{tpu_custom_call.1} parent=1677 // loop_exit
        _
    $region1678: #{tpu_custom_call.1} parent=1662 // pred_fallthru
      _
  $region1663: #{tpu_custom_call.1} parent=0 // pred_fallthru
    _
  // Predicated region
  $region1664: #{tpu_custom_call.1} parent=0 // pred_check
    _
  $region1665: #{tpu_custom_call.1} parent=0 // pred_check_branch
    %2179 = sbr.rel (0) target = $region1667
  $region1666: #{tpu_custom_call.1} parent=0 // pred_region
    %s2181 = ssub.s32 2, 1
    loop: start=0, step=1, limit=1
    $region1668: #{tpu_custom_call.1} parent=1666 // loop_pre_header
      _
    $region1669: #{tpu_custom_call.1} parent=1666 // loop_header
      %s2183 = sphi 0, %s2187
      %p2184 = scmp.ge.s32.totalorder %s2183, 1
      %s2188 = sphi %s2173, %s2173
      %s2189 = sphi %s2174, %s2174
    $region1670: #{tpu_custom_call.1} parent=1666 // loop_header_branch
      %2186 = sbr.rel (%p2184) target = $region1674
    $region1671: #{tpu_custom_call.1} parent=1666 // loop_body
      %v2190 = vld [vmem:[%s2188] sm:%s2181]
      %2191 = vst [vmem:[%s2189] sm:%s2181] %v2190
    $region1672: #{tpu_custom_call.1} parent=1666 // loop_footer
      %s2187 = sadd.s32 1, %s2183
    $region1673: #{tpu_custom_call.1} parent=1666 // loop_footer_branch
      %2182 = sbr.rel target = $region1669
    $region1674: #{tpu_custom_call.1} parent=1666 // loop_exit
      _
  $region1667: #{tpu_custom_call.1} parent=0 // pred_fallthru
    _
  // Predicated region
  $region1686: #{tpu_custom_call.1} parent=0 // pred_check
    _
  $region1687: #{tpu_custom_call.1} parent=0 // pred_check_branch
    %2208 = sbr.rel (0) target = $region1689
  $region1688: #{tpu_custom_call.1} parent=0 // pred_region
    %2209 = vsyncadd %s2175, 16
  $region1689: #{tpu_custom_call.1} parent=0 // pred_fallthru
    _
  %s2210 = sadd.s32 %s21, 7
  %s2211 = smul.u32 %s2210, 128
  %s2212 = sld [smem:[#allocation5 + %s2211]]
  %s2213 = scalar_lea.vmem %s1, %s2212
  %s2214 = scalar_lea.vmem [#allocation2], 56
  %s2215 = scalar_lea.sflag [#allocation3], 56
  // Predicated region
  $region1690: #{tpu_custom_call.1} parent=0 // pred_check
    _
  $region1691: #{tpu_custom_call.1} parent=0 // pred_check_branch
    %2217 = sbr.rel target = $region1693
  $region1692: #{tpu_custom_call.1} parent=0 // pred_region
    // Predicated region
    $region1705: #{tpu_custom_call.1} parent=1692 // pred_check
      _
    $region1706: #{tpu_custom_call.1} parent=1692 // pred_check_branch
      %2233 = sbr.rel (0) target = $region1708
    $region1707: #{tpu_custom_call.1} parent=1692 // pred_region
      %s2235 = ssub.s32 2, 1
      loop: start=0, step=1, limit=1
      $region1709: #{tpu_custom_call.1} parent=1707 // loop_pre_header
        _
      $region1710: #{tpu_custom_call.1} parent=1707 // loop_header
        %s2237 = sphi 0, %s2241
        %p2238 = scmp.ge.s32.totalorder %s2237, 1
        %s2242 = sphi %s2213, %s2213
        %s2243 = sphi %s2214, %s2214
      $region1711: #{tpu_custom_call.1} parent=1707 // loop_header_branch
        %2240 = sbr.rel (%p2238) target = $region1715
      $region1712: #{tpu_custom_call.1} parent=1707 // loop_body
        %v2244 = vld [vmem:[%s2242] sm:%s2235]
        %2245 = vst [vmem:[%s2243] sm:%s2235] %v2244
      $region1713: #{tpu_custom_call.1} parent=1707 // loop_footer
        %s2241 = sadd.s32 1, %s2237
      $region1714: #{tpu_custom_call.1} parent=1707 // loop_footer_branch
        %2236 = sbr.rel target = $region1710
      $region1715: #{tpu_custom_call.1} parent=1707 // loop_exit
        _
    $region1708: #{tpu_custom_call.1} parent=1692 // pred_fallthru
      _
  $region1693: #{tpu_custom_call.1} parent=0 // pred_fallthru
    _
  // Predicated region
  $region1694: #{tpu_custom_call.1} parent=0 // pred_check
    _
  $region1695: #{tpu_custom_call.1} parent=0 // pred_check_branch
    %2219 = sbr.rel (0) target = $region1697
  $region1696: #{tpu_custom_call.1} parent=0 // pred_region
    %s2221 = ssub.s32 2, 1
    loop: start=0, step=1, limit=1
    $region1698: #{tpu_custom_call.1} parent=1696 // loop_pre_header
      _
    $region1699: #{tpu_custom_call.1} parent=1696 // loop_header
      %s2223 = sphi 0, %s2227
      %p2224 = scmp.ge.s32.totalorder %s2223, 1
      %s2228 = sphi %s2213, %s2213
      %s2229 = sphi %s2214, %s2214
    $region1700: #{tpu_custom_call.1} parent=1696 // loop_header_branch
      %2226 = sbr.rel (%p2224) target = $region1704
    $region1701: #{tpu_custom_call.1} parent=1696 // loop_body
      %v2230 = vld [vmem:[%s2228] sm:%s2221]
      %2231 = vst [vmem:[%s2229] sm:%s2221] %v2230
    $region1702: #{tpu_custom_call.1} parent=1696 // loop_footer
      %s2227 = sadd.s32 1, %s2223
    $region1703: #{tpu_custom_call.1} parent=1696 // loop_footer_branch
      %2222 = sbr.rel target = $region1699
    $region1704: #{tpu_custom_call.1} parent=1696 // loop_exit
      _
  $region1697: #{tpu_custom_call.1} parent=0 // pred_fallthru
    _
  // Predicated region
  $region1716: #{tpu_custom_call.1} parent=0 // pred_check
    _
  $region1717: #{tpu_custom_call.1} parent=0 // pred_check_branch
    %2248 = sbr.rel (0) target = $region1719
  $region1718: #{tpu_custom_call.1} parent=0 // pred_region
    %2249 = vsyncadd %s2215, 16
  $region1719: #{tpu_custom_call.1} parent=0 // pred_fallthru
    _
  %s2250 = sadd.s32 %s2211, 1
  %s2251 = sld [smem:[#allocation5 + %s2250]]
  %s2252 = scalar_lea.vmem %s1, %s2251
  %s2253 = scalar_lea.vmem [#allocation2], 57
  %s2254 = scalar_lea.sflag [#allocation3], 57
  // Predicated region
  $region1720: #{tpu_custom_call.1} parent=0 // pred_check
    _
  $region1721: #{tpu_custom_call.1} parent=0 // pred_check_branch
    %2256 = sbr.rel target = $region1723
  $region1722: #{tpu_custom_call.1} parent=0 // pred_region
    // Predicated region
    $region1735: #{tpu_custom_call.1} parent=1722 // pred_check
      _
    $region1736: #{tpu_custom_call.1} parent=1722 // pred_check_branch
      %2272 = sbr.rel (0) target = $region1738
    $region1737: #{tpu_custom_call.1} parent=1722 // pred_region
      %s2274 = ssub.s32 2, 1
      loop: start=0, step=1, limit=1
      $region1739: #{tpu_custom_call.1} parent=1737 // loop_pre_header
        _
      $region1740: #{tpu_custom_call.1} parent=1737 // loop_header
        %s2276 = sphi 0, %s2280
        %p2277 = scmp.ge.s32.totalorder %s2276, 1
        %s2281 = sphi %s2252, %s2252
        %s2282 = sphi %s2253, %s2253
      $region1741: #{tpu_custom_call.1} parent=1737 // loop_header_branch
        %2279 = sbr.rel (%p2277) target = $region1745
      $region1742: #{tpu_custom_call.1} parent=1737 // loop_body
        %v2283 = vld [vmem:[%s2281] sm:%s2274]
        %2284 = vst [vmem:[%s2282] sm:%s2274] %v2283
      $region1743: #{tpu_custom_call.1} parent=1737 // loop_footer
        %s2280 = sadd.s32 1, %s2276
      $region1744: #{tpu_custom_call.1} parent=1737 // loop_footer_branch
        %2275 = sbr.rel target = $region1740
      $region1745: #{tpu_custom_call.1} parent=1737 // loop_exit
        _
    $region1738: #{tpu_custom_call.1} parent=1722 // pred_fallthru
      _
  $region1723: #{tpu_custom_call.1} parent=0 // pred_fallthru
    _
  // Predicated region
  $region1724: #{tpu_custom_call.1} parent=0 // pred_check
    _
  $region1725: #{tpu_custom_call.1} parent=0 // pred_check_branch
    %2258 = sbr.rel (0) target = $region1727
  $region1726: #{tpu_custom_call.1} parent=0 // pred_region
    %s2260 = ssub.s32 2, 1
    loop: start=0, step=1, limit=1
    $region1728: #{tpu_custom_call.1} parent=1726 // loop_pre_header
      _
    $region1729: #{tpu_custom_call.1} parent=1726 // loop_header
      %s2262 = sphi 0, %s2266
      %p2263 = scmp.ge.s32.totalorder %s2262, 1
      %s2267 = sphi %s2252, %s2252
      %s2268 = sphi %s2253, %s2253
    $region1730: #{tpu_custom_call.1} parent=1726 // loop_header_branch
      %2265 = sbr.rel (%p2263) target = $region1734
    $region1731: #{tpu_custom_call.1} parent=1726 // loop_body
      %v2269 = vld [vmem:[%s2267] sm:%s2260]
      %2270 = vst [vmem:[%s2268] sm:%s2260] %v2269
    $region1732: #{tpu_custom_call.1} parent=1726 // loop_footer
      %s2266 = sadd.s32 1, %s2262
    $region1733: #{tpu_custom_call.1} parent=1726 // loop_footer_branch
      %2261 = sbr.rel target = $region1729
    $region1734: #{tpu_custom_call.1} parent=1726 // loop_exit
      _
  $region1727: #{tpu_custom_call.1} parent=0 // pred_fallthru
    _
  // Predicated region
  $region1746: #{tpu_custom_call.1} parent=0 // pred_check
    _
  $region1747: #{tpu_custom_call.1} parent=0 // pred_check_branch
    %2287 = sbr.rel (0) target = $region1749
  $region1748: #{tpu_custom_call.1} parent=0 // pred_region
    %2288 = vsyncadd %s2254, 16
  $region1749: #{tpu_custom_call.1} parent=0 // pred_fallthru
    _
  %s2289 = sadd.s32 %s2211, 2
  %s2290 = sld [smem:[#allocation5 + %s2289]]
  %s2291 = scalar_lea.vmem %s1, %s2290
  %s2292 = scalar_lea.vmem [#allocation2], 58
  %s2293 = scalar_lea.sflag [#allocation3], 58
  // Predicated region
  $region1750: #{tpu_custom_call.1} parent=0 // pred_check
    _
  $region1751: #{tpu_custom_call.1} parent=0 // pred_check_branch
    %2295 = sbr.rel target = $region1753
  $region1752: #{tpu_custom_call.1} parent=0 // pred_region
    // Predicated region
    $region1765: #{tpu_custom_call.1} parent=1752 // pred_check
      _
    $region1766: #{tpu_custom_call.1} parent=1752 // pred_check_branch
      %2311 = sbr.rel (0) target = $region1768
    $region1767: #{tpu_custom_call.1} parent=1752 // pred_region
      %s2313 = ssub.s32 2, 1
      loop: start=0, step=1, limit=1
      $region1769: #{tpu_custom_call.1} parent=1767 // loop_pre_header
        _
      $region1770: #{tpu_custom_call.1} parent=1767 // loop_header
        %s2315 = sphi 0, %s2319
        %p2316 = scmp.ge.s32.totalorder %s2315, 1
        %s2320 = sphi %s2291, %s2291
        %s2321 = sphi %s2292, %s2292
      $region1771: #{tpu_custom_call.1} parent=1767 // loop_header_branch
        %2318 = sbr.rel (%p2316) target = $region1775
      $region1772: #{tpu_custom_call.1} parent=1767 // loop_body
        %v2322 = vld [vmem:[%s2320] sm:%s2313]
        %2323 = vst [vmem:[%s2321] sm:%s2313] %v2322
      $region1773: #{tpu_custom_call.1} parent=1767 // loop_footer
        %s2319 = sadd.s32 1, %s2315
      $region1774: #{tpu_custom_call.1} parent=1767 // loop_footer_branch
        %2314 = sbr.rel target = $region1770
      $region1775: #{tpu_custom_call.1} parent=1767 // loop_exit
        _
    $region1768: #{tpu_custom_call.1} parent=1752 // pred_fallthru
      _
  $region1753: #{tpu_custom_call.1} parent=0 // pred_fallthru
    _
  // Predicated region
  $region1754: #{tpu_custom_call.1} parent=0 // pred_check
    _
  $region1755: #{tpu_custom_call.1} parent=0 // pred_check_branch
    %2297 = sbr.rel (0) target = $region1757
  $region1756: #{tpu_custom_call.1} parent=0 // pred_region
    %s2299 = ssub.s32 2, 1
    loop: start=0, step=1, limit=1
    $region1758: #{tpu_custom_call.1} parent=1756 // loop_pre_header
      _
    $region1759: #{tpu_custom_call.1} parent=1756 // loop_header
      %s2301 = sphi 0, %s2305
      %p2302 = scmp.ge.s32.totalorder %s2301, 1
      %s2306 = sphi %s2291, %s2291
      %s2307 = sphi %s2292, %s2292
    $region1760: #{tpu_custom_call.1} parent=1756 // loop_header_branch
      %2304 = sbr.rel (%p2302) target = $region1764
    $region1761: #{tpu_custom_call.1} parent=1756 // loop_body
      %v2308 = vld [vmem:[%s2306] sm:%s2299]
      %2309 = vst [vmem:[%s2307] sm:%s2299] %v2308
    $region1762: #{tpu_custom_call.1} parent=1756 // loop_footer
      %s2305 = sadd.s32 1, %s2301
    $region1763: #{tpu_custom_call.1} parent=1756 // loop_footer_branch
      %2300 = sbr.rel target = $region1759
    $region1764: #{tpu_custom_call.1} parent=1756 // loop_exit
      _
  $region1757: #{tpu_custom_call.1} parent=0 // pred_fallthru
    _
  // Predicated region
  $region1776: #{tpu_custom_call.1} parent=0 // pred_check
    _
  $region1777: #{tpu_custom_call.1} parent=0 // pred_check_branch
    %2326 = sbr.rel (0) target = $region1779
  $region1778: #{tpu_custom_call.1} parent=0 // pred_region
    %2327 = vsyncadd %s2293, 16
  $region1779: #{tpu_custom_call.1} parent=0 // pred_fallthru
    _
  %s2328 = sadd.s32 %s2211, 3
  %s2329 = sld [smem:[#allocation5 + %s2328]]
  %s2330 = scalar_lea.vmem %s1, %s2329
  %s2331 = scalar_lea.vmem [#allocation2], 59
  %s2332 = scalar_lea.sflag [#allocation3], 59
  // Predicated region
  $region1780: #{tpu_custom_call.1} parent=0 // pred_check
    _
  $region1781: #{tpu_custom_call.1} parent=0 // pred_check_branch
    %2334 = sbr.rel target = $region1783
  $region1782: #{tpu_custom_call.1} parent=0 // pred_region
    // Predicated region
    $region1795: #{tpu_custom_call.1} parent=1782 // pred_check
      _
    $region1796: #{tpu_custom_call.1} parent=1782 // pred_check_branch
      %2350 = sbr.rel (0) target = $region1798
    $region1797: #{tpu_custom_call.1} parent=1782 // pred_region
      %s2352 = ssub.s32 2, 1
      loop: start=0, step=1, limit=1
      $region1799: #{tpu_custom_call.1} parent=1797 // loop_pre_header
        _
      $region1800: #{tpu_custom_call.1} parent=1797 // loop_header
        %s2354 = sphi 0, %s2358
        %p2355 = scmp.ge.s32.totalorder %s2354, 1
        %s2359 = sphi %s2330, %s2330
        %s2360 = sphi %s2331, %s2331
      $region1801: #{tpu_custom_call.1} parent=1797 // loop_header_branch
        %2357 = sbr.rel (%p2355) target = $region1805
      $region1802: #{tpu_custom_call.1} parent=1797 // loop_body
        %v2361 = vld [vmem:[%s2359] sm:%s2352]
        %2362 = vst [vmem:[%s2360] sm:%s2352] %v2361
      $region1803: #{tpu_custom_call.1} parent=1797 // loop_footer
        %s2358 = sadd.s32 1, %s2354
      $region1804: #{tpu_custom_call.1} parent=1797 // loop_footer_branch
        %2353 = sbr.rel target = $region1800
      $region1805: #{tpu_custom_call.1} parent=1797 // loop_exit
        _
    $region1798: #{tpu_custom_call.1} parent=1782 // pred_fallthru
      _
  $region1783: #{tpu_custom_call.1} parent=0 // pred_fallthru
    _
  // Predicated region
  $region1784: #{tpu_custom_call.1} parent=0 // pred_check
    _
  $region1785: #{tpu_custom_call.1} parent=0 // pred_check_branch
    %2336 = sbr.rel (0) target = $region1787
  $region1786: #{tpu_custom_call.1} parent=0 // pred_region
    %s2338 = ssub.s32 2, 1
    loop: start=0, step=1, limit=1
    $region1788: #{tpu_custom_call.1} parent=1786 // loop_pre_header
      _
    $region1789: #{tpu_custom_call.1} parent=1786 // loop_header
      %s2340 = sphi 0, %s2344
      %p2341 = scmp.ge.s32.totalorder %s2340, 1
      %s2345 = sphi %s2330, %s2330
      %s2346 = sphi %s2331, %s2331
    $region1790: #{tpu_custom_call.1} parent=1786 // loop_header_branch
      %2343 = sbr.rel (%p2341) target = $region1794
    $region1791: #{tpu_custom_call.1} parent=1786 // loop_body
      %v2347 = vld [vmem:[%s2345] sm:%s2338]
      %2348 = vst [vmem:[%s2346] sm:%s2338] %v2347
    $region1792: #{tpu_custom_call.1} parent=1786 // loop_footer
      %s2344 = sadd.s32 1, %s2340
    $region1793: #{tpu_custom_call.1} parent=1786 // loop_footer_branch
      %2339 = sbr.rel target = $region1789
    $region1794: #{tpu_custom_call.1} parent=1786 // loop_exit
      _
  $region1787: #{tpu_custom_call.1} parent=0 // pred_fallthru
    _
  // Predicated region
  $region1806: #{tpu_custom_call.1} parent=0 // pred_check
    _
  $region1807: #{tpu_custom_call.1} parent=0 // pred_check_branch
    %2365 = sbr.rel (0) target = $region1809
  $region1808: #{tpu_custom_call.1} parent=0 // pred_region
    %2366 = vsyncadd %s2332, 16
  $region1809: #{tpu_custom_call.1} parent=0 // pred_fallthru
    _
  %s2367 = sadd.s32 %s2211, 4
  %s2368 = sld [smem:[#allocation5 + %s2367]]
  %s2369 = scalar_lea.vmem %s1, %s2368
  %s2370 = scalar_lea.vmem [#allocation2], 60
  %s2371 = scalar_lea.sflag [#allocation3], 60
  // Predicated region
  $region1810: #{tpu_custom_call.1} parent=0 // pred_check
    _
  $region1811: #{tpu_custom_call.1} parent=0 // pred_check_branch
    %2373 = sbr.rel target = $region1813
  $region1812: #{tpu_custom_call.1} parent=0 // pred_region
    // Predicated region
    $region1825: #{tpu_custom_call.1} parent=1812 // pred_check
      _
    $region1826: #{tpu_custom_call.1} parent=1812 // pred_check_branch
      %2389 = sbr.rel (0) target = $region1828
    $region1827: #{tpu_custom_call.1} parent=1812 // pred_region
      %s2391 = ssub.s32 2, 1
      loop: start=0, step=1, limit=1
      $region1829: #{tpu_custom_call.1} parent=1827 // loop_pre_header
        _
      $region1830: #{tpu_custom_call.1} parent=1827 // loop_header
        %s2393 = sphi 0, %s2397
        %p2394 = scmp.ge.s32.totalorder %s2393, 1
        %s2398 = sphi %s2369, %s2369
        %s2399 = sphi %s2370, %s2370
      $region1831: #{tpu_custom_call.1} parent=1827 // loop_header_branch
        %2396 = sbr.rel (%p2394) target = $region1835
      $region1832: #{tpu_custom_call.1} parent=1827 // loop_body
        %v2400 = vld [vmem:[%s2398] sm:%s2391]
        %2401 = vst [vmem:[%s2399] sm:%s2391] %v2400
      $region1833: #{tpu_custom_call.1} parent=1827 // loop_footer
        %s2397 = sadd.s32 1, %s2393
      $region1834: #{tpu_custom_call.1} parent=1827 // loop_footer_branch
        %2392 = sbr.rel target = $region1830
      $region1835: #{tpu_custom_call.1} parent=1827 // loop_exit
        _
    $region1828: #{tpu_custom_call.1} parent=1812 // pred_fallthru
      _
  $region1813: #{tpu_custom_call.1} parent=0 // pred_fallthru
    _
  // Predicated region
  $region1814: #{tpu_custom_call.1} parent=0 // pred_check
    _
  $region1815: #{tpu_custom_call.1} parent=0 // pred_check_branch
    %2375 = sbr.rel (0) target = $region1817
  $region1816: #{tpu_custom_call.1} parent=0 // pred_region
    %s2377 = ssub.s32 2, 1
    loop: start=0, step=1, limit=1
    $region1818: #{tpu_custom_call.1} parent=1816 // loop_pre_header
      _
    $region1819: #{tpu_custom_call.1} parent=1816 // loop_header
      %s2379 = sphi 0, %s2383
      %p2380 = scmp.ge.s32.totalorder %s2379, 1
      %s2384 = sphi %s2369, %s2369
      %s2385 = sphi %s2370, %s2370
    $region1820: #{tpu_custom_call.1} parent=1816 // loop_header_branch
      %2382 = sbr.rel (%p2380) target = $region1824
    $region1821: #{tpu_custom_call.1} parent=1816 // loop_body
      %v2386 = vld [vmem:[%s2384] sm:%s2377]
      %2387 = vst [vmem:[%s2385] sm:%s2377] %v2386
    $region1822: #{tpu_custom_call.1} parent=1816 // loop_footer
      %s2383 = sadd.s32 1, %s2379
    $region1823: #{tpu_custom_call.1} parent=1816 // loop_footer_branch
      %2378 = sbr.rel target = $region1819
    $region1824: #{tpu_custom_call.1} parent=1816 // loop_exit
      _
  $region1817: #{tpu_custom_call.1} parent=0 // pred_fallthru
    _
  // Predicated region
  $region1836: #{tpu_custom_call.1} parent=0 // pred_check
    _
  $region1837: #{tpu_custom_call.1} parent=0 // pred_check_branch
    %2404 = sbr.rel (0) target = $region1839
  $region1838: #{tpu_custom_call.1} parent=0 // pred_region
    %2405 = vsyncadd %s2371, 16
  $region1839: #{tpu_custom_call.1} parent=0 // pred_fallthru
    _
  %s2406 = sadd.s32 %s2211, 5
  %s2407 = sld [smem:[#allocation5 + %s2406]]
  %s2408 = scalar_lea.vmem %s1, %s2407
  %s2409 = scalar_lea.vmem [#allocation2], 61
  %s2410 = scalar_lea.sflag [#allocation3], 61
  // Predicated region
  $region1840: #{tpu_custom_call.1} parent=0 // pred_check
    _
  $region1841: #{tpu_custom_call.1} parent=0 // pred_check_branch
    %2412 = sbr.rel target = $region1843
  $region1842: #{tpu_custom_call.1} parent=0 // pred_region
    // Predicated region
    $region1855: #{tpu_custom_call.1} parent=1842 // pred_check
      _
    $region1856: #{tpu_custom_call.1} parent=1842 // pred_check_branch
      %2428 = sbr.rel (0) target = $region1858
    $region1857: #{tpu_custom_call.1} parent=1842 // pred_region
      %s2430 = ssub.s32 2, 1
      loop: start=0, step=1, limit=1
      $region1859: #{tpu_custom_call.1} parent=1857 // loop_pre_header
        _
      $region1860: #{tpu_custom_call.1} parent=1857 // loop_header
        %s2432 = sphi 0, %s2436
        %p2433 = scmp.ge.s32.totalorder %s2432, 1
        %s2437 = sphi %s2408, %s2408
        %s2438 = sphi %s2409, %s2409
      $region1861: #{tpu_custom_call.1} parent=1857 // loop_header_branch
        %2435 = sbr.rel (%p2433) target = $region1865
      $region1862: #{tpu_custom_call.1} parent=1857 // loop_body
        %v2439 = vld [vmem:[%s2437] sm:%s2430]
        %2440 = vst [vmem:[%s2438] sm:%s2430] %v2439
      $region1863: #{tpu_custom_call.1} parent=1857 // loop_footer
        %s2436 = sadd.s32 1, %s2432
      $region1864: #{tpu_custom_call.1} parent=1857 // loop_footer_branch
        %2431 = sbr.rel target = $region1860
      $region1865: #{tpu_custom_call.1} parent=1857 // loop_exit
        _
    $region1858: #{tpu_custom_call.1} parent=1842 // pred_fallthru
      _
  $region1843: #{tpu_custom_call.1} parent=0 // pred_fallthru
    _
  // Predicated region
  $region1844: #{tpu_custom_call.1} parent=0 // pred_check
    _
  $region1845: #{tpu_custom_call.1} parent=0 // pred_check_branch
    %2414 = sbr.rel (0) target = $region1847
  $region1846: #{tpu_custom_call.1} parent=0 // pred_region
    %s2416 = ssub.s32 2, 1
    loop: start=0, step=1, limit=1
    $region1848: #{tpu_custom_call.1} parent=1846 // loop_pre_header
      _
    $region1849: #{tpu_custom_call.1} parent=1846 // loop_header
      %s2418 = sphi 0, %s2422
      %p2419 = scmp.ge.s32.totalorder %s2418, 1
      %s2423 = sphi %s2408, %s2408
      %s2424 = sphi %s2409, %s2409
    $region1850: #{tpu_custom_call.1} parent=1846 // loop_header_branch
      %2421 = sbr.rel (%p2419) target = $region1854
    $region1851: #{tpu_custom_call.1} parent=1846 // loop_body
      %v2425 = vld [vmem:[%s2423] sm:%s2416]
      %2426 = vst [vmem:[%s2424] sm:%s2416] %v2425
    $region1852: #{tpu_custom_call.1} parent=1846 // loop_footer
      %s2422 = sadd.s32 1, %s2418
    $region1853: #{tpu_custom_call.1} parent=1846 // loop_footer_branch
      %2417 = sbr.rel target = $region1849
    $region1854: #{tpu_custom_call.1} parent=1846 // loop_exit
      _
  $region1847: #{tpu_custom_call.1} parent=0 // pred_fallthru
    _
  // Predicated region
  $region1866: #{tpu_custom_call.1} parent=0 // pred_check
    _
  $region1867: #{tpu_custom_call.1} parent=0 // pred_check_branch
    %2443 = sbr.rel (0) target = $region1869
  $region1868: #{tpu_custom_call.1} parent=0 // pred_region
    %2444 = vsyncadd %s2410, 16
  $region1869: #{tpu_custom_call.1} parent=0 // pred_fallthru
    _
  %s2445 = sadd.s32 %s2211, 6
  %s2446 = sld [smem:[#allocation5 + %s2445]]
  %s2447 = scalar_lea.vmem %s1, %s2446
  %s2448 = scalar_lea.vmem [#allocation2], 62
  %s2449 = scalar_lea.sflag [#allocation3], 62
  // Predicated region
  $region1870: #{tpu_custom_call.1} parent=0 // pred_check
    _
  $region1871: #{tpu_custom_call.1} parent=0 // pred_check_branch
    %2451 = sbr.rel target = $region1873
  $region1872: #{tpu_custom_call.1} parent=0 // pred_region
    // Predicated region
    $region1885: #{tpu_custom_call.1} parent=1872 // pred_check
      _
    $region1886: #{tpu_custom_call.1} parent=1872 // pred_check_branch
      %2467 = sbr.rel (0) target = $region1888
    $region1887: #{tpu_custom_call.1} parent=1872 // pred_region
      %s2469 = ssub.s32 2, 1
      loop: start=0, step=1, limit=1
      $region1889: #{tpu_custom_call.1} parent=1887 // loop_pre_header
        _
      $region1890: #{tpu_custom_call.1} parent=1887 // loop_header
        %s2471 = sphi 0, %s2475
        %p2472 = scmp.ge.s32.totalorder %s2471, 1
        %s2476 = sphi %s2447, %s2447
        %s2477 = sphi %s2448, %s2448
      $region1891: #{tpu_custom_call.1} parent=1887 // loop_header_branch
        %2474 = sbr.rel (%p2472) target = $region1895
      $region1892: #{tpu_custom_call.1} parent=1887 // loop_body
        %v2478 = vld [vmem:[%s2476] sm:%s2469]
        %2479 = vst [vmem:[%s2477] sm:%s2469] %v2478
      $region1893: #{tpu_custom_call.1} parent=1887 // loop_footer
        %s2475 = sadd.s32 1, %s2471
      $region1894: #{tpu_custom_call.1} parent=1887 // loop_footer_branch
        %2470 = sbr.rel target = $region1890
      $region1895: #{tpu_custom_call.1} parent=1887 // loop_exit
        _
    $region1888: #{tpu_custom_call.1} parent=1872 // pred_fallthru
      _
  $region1873: #{tpu_custom_call.1} parent=0 // pred_fallthru
    _
  // Predicated region
  $region1874: #{tpu_custom_call.1} parent=0 // pred_check
    _
  $region1875: #{tpu_custom_call.1} parent=0 // pred_check_branch
    %2453 = sbr.rel (0) target = $region1877
  $region1876: #{tpu_custom_call.1} parent=0 // pred_region
    %s2455 = ssub.s32 2, 1
    loop: start=0, step=1, limit=1
    $region1878: #{tpu_custom_call.1} parent=1876 // loop_pre_header
      _
    $region1879: #{tpu_custom_call.1} parent=1876 // loop_header
      %s2457 = sphi 0, %s2461
      %p2458 = scmp.ge.s32.totalorder %s2457, 1
      %s2462 = sphi %s2447, %s2447
      %s2463 = sphi %s2448, %s2448
    $region1880: #{tpu_custom_call.1} parent=1876 // loop_header_branch
      %2460 = sbr.rel (%p2458) target = $region1884
    $region1881: #{tpu_custom_call.1} parent=1876 // loop_body
      %v2464 = vld [vmem:[%s2462] sm:%s2455]
      %2465 = vst [vmem:[%s2463] sm:%s2455] %v2464
    $region1882: #{tpu_custom_call.1} parent=1876 // loop_footer
      %s2461 = sadd.s32 1, %s2457
    $region1883: #{tpu_custom_call.1} parent=1876 // loop_footer_branch
      %2456 = sbr.rel target = $region1879
    $region1884: #{tpu_custom_call.1} parent=1876 // loop_exit
      _
  $region1877: #{tpu_custom_call.1} parent=0 // pred_fallthru
    _
  // Predicated region
  $region1896: #{tpu_custom_call.1} parent=0 // pred_check
    _
  $region1897: #{tpu_custom_call.1} parent=0 // pred_check_branch
    %2482 = sbr.rel (0) target = $region1899
  $region1898: #{tpu_custom_call.1} parent=0 // pred_region
    %2483 = vsyncadd %s2449, 16
  $region1899: #{tpu_custom_call.1} parent=0 // pred_fallthru
    _
  %s2484 = sadd.s32 %s2211, 7
  %s2485 = sld [smem:[#allocation5 + %s2484]]
  %s2486 = scalar_lea.vmem %s1, %s2485
  %s2487 = scalar_lea.vmem [#allocation2], 63
  %s2488 = scalar_lea.sflag [#allocation3], 63
  // Predicated region
  $region1900: #{tpu_custom_call.1} parent=0 // pred_check
    _
  $region1901: #{tpu_custom_call.1} parent=0 // pred_check_branch
    %2490 = sbr.rel target = $region1903
  $region1902: #{tpu_custom_call.1} parent=0 // pred_region
    // Predicated region
    $region1915: #{tpu_custom_call.1} parent=1902 // pred_check
      _
    $region1916: #{tpu_custom_call.1} parent=1902 // pred_check_branch
      %2506 = sbr.rel (0) target = $region1918
    $region1917: #{tpu_custom_call.1} parent=1902 // pred_region
      %s2508 = ssub.s32 2, 1
      loop: start=0, step=1, limit=1
      $region1919: #{tpu_custom_call.1} parent=1917 // loop_pre_header
        _
      $region1920: #{tpu_custom_call.1} parent=1917 // loop_header
        %s2510 = sphi 0, %s2514
        %p2511 = scmp.ge.s32.totalorder %s2510, 1
        %s2515 = sphi %s2486, %s2486
        %s2516 = sphi %s2487, %s2487
      $region1921: #{tpu_custom_call.1} parent=1917 // loop_header_branch
        %2513 = sbr.rel (%p2511) target = $region1925
      $region1922: #{tpu_custom_call.1} parent=1917 // loop_body
        %v2517 = vld [vmem:[%s2515] sm:%s2508]
        %2518 = vst [vmem:[%s2516] sm:%s2508] %v2517
      $region1923: #{tpu_custom_call.1} parent=1917 // loop_footer
        %s2514 = sadd.s32 1, %s2510
      $region1924: #{tpu_custom_call.1} parent=1917 // loop_footer_branch
        %2509 = sbr.rel target = $region1920
      $region1925: #{tpu_custom_call.1} parent=1917 // loop_exit
        _
    $region1918: #{tpu_custom_call.1} parent=1902 // pred_fallthru
      _
  $region1903: #{tpu_custom_call.1} parent=0 // pred_fallthru
    _
  // Predicated region
  $region1904: #{tpu_custom_call.1} parent=0 // pred_check
    _
  $region1905: #{tpu_custom_call.1} parent=0 // pred_check_branch
    %2492 = sbr.rel (0) target = $region1907
  $region1906: #{tpu_custom_call.1} parent=0 // pred_region
    %s2494 = ssub.s32 2, 1
    loop: start=0, step=1, limit=1
    $region1908: #{tpu_custom_call.1} parent=1906 // loop_pre_header
      _
    $region1909: #{tpu_custom_call.1} parent=1906 // loop_header
      %s2496 = sphi 0, %s2500
      %p2497 = scmp.ge.s32.totalorder %s2496, 1
      %s2501 = sphi %s2486, %s2486
      %s2502 = sphi %s2487, %s2487
    $region1910: #{tpu_custom_call.1} parent=1906 // loop_header_branch
      %2499 = sbr.rel (%p2497) target = $region1914
    $region1911: #{tpu_custom_call.1} parent=1906 // loop_body
      %v2503 = vld [vmem:[%s2501] sm:%s2494]
      %2504 = vst [vmem:[%s2502] sm:%s2494] %v2503
    $region1912: #{tpu_custom_call.1} parent=1906 // loop_footer
      %s2500 = sadd.s32 1, %s2496
    $region1913: #{tpu_custom_call.1} parent=1906 // loop_footer_branch
      %2495 = sbr.rel target = $region1909
    $region1914: #{tpu_custom_call.1} parent=1906 // loop_exit
      _
  $region1907: #{tpu_custom_call.1} parent=0 // pred_fallthru
    _
  // Predicated region
  $region1926: #{tpu_custom_call.1} parent=0 // pred_check
    _
  $region1927: #{tpu_custom_call.1} parent=0 // pred_check_branch
    %2521 = sbr.rel (0) target = $region1929
  $region1928: #{tpu_custom_call.1} parent=0 // pred_region
    %2522 = vsyncadd %s2488, 16
  $region1929: #{tpu_custom_call.1} parent=0 // pred_fallthru
    _
  %2524 = dma.done [#allocation3], 16
  %2526 = dma.done %s63, 16
  %2528 = dma.done %s102, 16
  %2530 = dma.done %s141, 16
  %2532 = dma.done %s180, 16
  %2534 = dma.done %s219, 16
  %2536 = dma.done %s258, 16
  %2538 = dma.done %s297, 16
  %2540 = dma.done %s337, 16
  %2542 = dma.done %s376, 16
  %2544 = dma.done %s415, 16
  %2546 = dma.done %s454, 16
  %2548 = dma.done %s493, 16
  %2550 = dma.done %s532, 16
  %2552 = dma.done %s571, 16
  %2554 = dma.done %s610, 16
  %2556 = dma.done %s650, 16
  %2558 = dma.done %s689, 16
  %2560 = dma.done %s728, 16
  %2562 = dma.done %s767, 16
  %2564 = dma.done %s806, 16
  %2566 = dma.done %s845, 16
  %2568 = dma.done %s884, 16
  %2570 = dma.done %s923, 16
  %2572 = dma.done %s963, 16
  %2574 = dma.done %s1002, 16
  %2576 = dma.done %s1041, 16
  %2578 = dma.done %s1080, 16
  %2580 = dma.done %s1119, 16
  %2582 = dma.done %s1158, 16
  %2584 = dma.done %s1197, 16
  %2586 = dma.done %s1236, 16
  %2588 = dma.done %s1276, 16
  %2590 = dma.done %s1315, 16
  %2592 = dma.done %s1354, 16
  %2594 = dma.done %s1393, 16
  %2596 = dma.done %s1432, 16
  %2598 = dma.done %s1471, 16
  %2600 = dma.done %s1510, 16
  %2602 = dma.done %s1549, 16
  %2604 = dma.done %s1589, 16
  %2606 = dma.done %s1628, 16
  %2608 = dma.done %s1667, 16
  %2610 = dma.done %s1706, 16
  %2612 = dma.done %s1745, 16
  %2614 = dma.done %s1784, 16
  %2616 = dma.done %s1823, 16
  %2618 = dma.done %s1862, 16
  %2620 = dma.done %s1902, 16
  %2622 = dma.done %s1941, 16
  %2624 = dma.done %s1980, 16
  %2626 = dma.done %s2019, 16
  %2628 = dma.done %s2058, 16
  %2630 = dma.done %s2097, 16
  %2632 = dma.done %s2136, 16
  %2634 = dma.done %s2175, 16
  %2636 = dma.done %s2215, 16
  %2638 = dma.done %s2254, 16
  %2640 = dma.done %s2293, 16
  %2642 = dma.done %s2332, 16
  %2644 = dma.done %s2371, 16
  %2646 = dma.done %s2410, 16
  %2648 = dma.done %s2449, 16
  %2650 = dma.done %s2488, 16
  %v2651 = vld [vmem:[#allocation2] sm:$0xff]
  %v2652 = vld [vmem:[#allocation2 + $0x8] sm:$0xff]
  %v2653 = vld [vmem:[#allocation2 + $0x10] sm:$0xff]
  %v2654 = vld [vmem:[#allocation2 + $0x18] sm:$0xff]
  %v2655 = vld [vmem:[#allocation2 + $0x20] sm:$0xff]
  %v2656 = vld [vmem:[#allocation2 + $0x28] sm:$0xff]
  %v2657 = vld [vmem:[#allocation2 + $0x30] sm:$0xff]
  %v2658 = vld [vmem:[#allocation2 + $0x38] sm:$0xff]
  %v2659 = vrot.slane %v2651, 4
  %v2660 = vadd.f32 %v2651, %v2659
  %v2661 = vrot.slane %v2660, 2
  %v2662 = vadd.f32 %v2660, %v2661
  %v2663 = vrot.slane %v2662, 1
  %v2664 = vadd.f32 %v2662, %v2663
  %v2665 = vrot.slane %v2652, 4
  %v2666 = vadd.f32 %v2652, %v2665
  %v2667 = vrot.slane %v2666, 2
  %v2668 = vadd.f32 %v2666, %v2667
  %v2669 = vrot.slane %v2668, 1
  %v2670 = vadd.f32 %v2668, %v2669
  %v2671 = vrot.slane %v2653, 4
  %v2672 = vadd.f32 %v2653, %v2671
  %v2673 = vrot.slane %v2672, 2
  %v2674 = vadd.f32 %v2672, %v2673
  %v2675 = vrot.slane %v2674, 1
  %v2676 = vadd.f32 %v2674, %v2675
  %v2677 = vrot.slane %v2654, 4
  %v2678 = vadd.f32 %v2654, %v2677
  %v2679 = vrot.slane %v2678, 2
  %v2680 = vadd.f32 %v2678, %v2679
  %v2681 = vrot.slane %v2680, 1
  %v2682 = vadd.f32 %v2680, %v2681
  %v2683 = vrot.slane %v2655, 4
  %v2684 = vadd.f32 %v2655, %v2683
  %v2685 = vrot.slane %v2684, 2
  %v2686 = vadd.f32 %v2684, %v2685
  %v2687 = vrot.slane %v2686, 1
  %v2688 = vadd.f32 %v2686, %v2687
  %v2689 = vrot.slane %v2656, 4
  %v2690 = vadd.f32 %v2656, %v2689
  %v2691 = vrot.slane %v2690, 2
  %v2692 = vadd.f32 %v2690, %v2691
  %v2693 = vrot.slane %v2692, 1
  %v2694 = vadd.f32 %v2692, %v2693
  %v2695 = vrot.slane %v2657, 4
  %v2696 = vadd.f32 %v2657, %v2695
  %v2697 = vrot.slane %v2696, 2
  %v2698 = vadd.f32 %v2696, %v2697
  %v2699 = vrot.slane %v2698, 1
  %v2700 = vadd.f32 %v2698, %v2699
  %v2701 = vrot.slane %v2658, 4
  %v2702 = vadd.f32 %v2658, %v2701
  %v2703 = vrot.slane %v2702, 2
  %v2704 = vadd.f32 %v2702, %v2703
  %v2705 = vrot.slane %v2704, 1
  %v2706 = vadd.f32 %v2704, %v2705
  %v2707 = vld [vmem:[%s2] sm:$0xff]
  %v2708 = vld [vmem:[%s2 + $0x8] sm:$0xff]
  %v2709 = vld [vmem:[%s2 + $0x10] sm:$0xff]
  %v2710 = vld [vmem:[%s2 + $0x18] sm:$0xff]
  %v2711 = vld [vmem:[%s2 + $0x20] sm:$0xff]
  %v2712 = vld [vmem:[%s2 + $0x28] sm:$0xff]
  %v2713 = vld [vmem:[%s2 + $0x30] sm:$0xff]
  %v2714 = vld [vmem:[%s2 + $0x38] sm:$0xff]
  %v2715 = vld [vmem:[%s2 + $0x40] sm:$0xff]
  %v2716 = vld [vmem:[%s2 + $0x48] sm:$0xff]
  %v2717 = vld [vmem:[%s2 + $0x50] sm:$0xff]
  %v2718 = vld [vmem:[%s2 + $0x58] sm:$0xff]
  %v2719 = vld [vmem:[%s2 + $0x60] sm:$0xff]
  %v2720 = vld [vmem:[%s2 + $0x68] sm:$0xff]
  %v2721 = vld [vmem:[%s2 + $0x70] sm:$0xff]
  %v2722 = vld [vmem:[%s2 + $0x78] sm:$0xff]
  %v2723 = vld [vmem:[%s3] sm:$0x1]
  %v2725 = vperm.slane %v2723, 0
  %vm2735 = vcmask 1041409
  %v2736 = vsel %vm2735, %v2670, %v2664
  %vm2737 = vcmask 1042434
  %v2738 = vsel %vm2737, %v2676, %v2736
  %vm2739 = vcmask 1043459
  %v2740 = vsel %vm2739, %v2682, %v2738
  %vm2741 = vcmask 1044484
  %v2742 = vsel %vm2741, %v2688, %v2740
  %vm2743 = vcmask 1045509
  %v2744 = vsel %vm2743, %v2694, %v2742
  %vm2745 = vcmask 1046534
  %v2746 = vsel %vm2745, %v2700, %v2744
  %vm2747 = vcmask 1047559
  %v2748 = vsel %vm2747, %v2706, %v2746
  %2750 = vmatpush.msra.mxu0 %v2722
  %2751 = vmatpush.msra.mxu0 %v2721
  %2752 = vmatpush.msra.mxu0 %v2720
  %2753 = vmatpush.msra.mxu0 %v2719
  %2754 = vmatpush.msra.mxu0 %v2718
  %2755 = vmatpush.msra.mxu0 %v2717
  %2756 = vmatpush.msra.mxu0 %v2716
  %2757 = vmatpush.msra.mxu0 %v2715
  %2758 = vmatpush.msra.mxu0 %v2714
  %2759 = vmatpush.msra.mxu0 %v2713
  %2760 = vmatpush.msra.mxu0 %v2712
  %2761 = vmatpush.msra.mxu0 %v2711
  %2762 = vmatpush.msra.mxu0 %v2710
  %2763 = vmatpush.msra.mxu0 %v2709
  %2764 = vmatpush.msra.mxu0 %v2708
  %2765 = vmatpush.msra.mxu0 %v2707
  %2766 = vmatmul.f32.gmra.mxu0 %v2748
  %v2767 = vpop.f32.mrf.mxu0
  %v2768 = vadd.f32 %v2725, %v2767
  %2769 = vdwg.mxu0
  %vm2770 = vcmask 15360
  %2771 = vst.msk [vmem:[%s4] sm:$0xff] %vm2770, %v2768
  // Predicated region
  $region1930: #{tpu_custom_call.1} parent=0 // pred_check
    _
  $region1931: #{tpu_custom_call.1} parent=0 // pred_check_branch
    %2773 = sbr.rel (0) target = $region1933
  $region1932: #{tpu_custom_call.1} parent=0 // pred_region
    _
  $region1933: #{tpu_custom_call.1} parent=0 // pred_fallthru
    _
  // Predicated region
  $region1934: #{tpu_custom_call.1} parent=0 // pred_check
    _
  $region1935: #{tpu_custom_call.1} parent=0 // pred_check_branch
    %2775 = sbr.rel (0) target = $region1937
  $region1936: #{tpu_custom_call.1} parent=0 // pred_region
    _
  $region1937: #{tpu_custom_call.1} parent=0 // pred_fallthru
    _
  %2776 = vsyncmov [#allocation3]
  %s2777 = vpop.sfrf %2776
  %p2778 = scmp.eq.s32.totalorder %s2777, 0
  %p2779 = pneg %p2778
  %2781 = shalt.err (%p2779)
  %s2782 = scalar_lea.sflag [#allocation3], 1
  %2783 = vsyncmov %s2782
  %s2784 = vpop.sfrf %2783
  %p2785 = scmp.eq.s32.totalorder %s2784, 0
  %p2786 = pneg %p2785
  %2788 = shalt.err (%p2786)
  %s2789 = scalar_lea.sflag [#allocation3], 2
  %2790 = vsyncmov %s2789
  %s2791 = vpop.sfrf %2790
  %p2792 = scmp.eq.s32.totalorder %s2791, 0
  %p2793 = pneg %p2792
  %2795 = shalt.err (%p2793)
  %s2796 = scalar_lea.sflag [#allocation3], 3
  %2797 = vsyncmov %s2796
  %s2798 = vpop.sfrf %2797
  %p2799 = scmp.eq.s32.totalorder %s2798, 0
  %p2800 = pneg %p2799
  %2802 = shalt.err (%p2800)
  %s2803 = scalar_lea.sflag [#allocation3], 4
  %2804 = vsyncmov %s2803
  %s2805 = vpop.sfrf %2804
  %p2806 = scmp.eq.s32.totalorder %s2805, 0
  %p2807 = pneg %p2806
  %2809 = shalt.err (%p2807)
  %s2810 = scalar_lea.sflag [#allocation3], 5
  %2811 = vsyncmov %s2810
  %s2812 = vpop.sfrf %2811
  %p2813 = scmp.eq.s32.totalorder %s2812, 0
  %p2814 = pneg %p2813
  %2816 = shalt.err (%p2814)
  %s2817 = scalar_lea.sflag [#allocation3], 6
  %2818 = vsyncmov %s2817
  %s2819 = vpop.sfrf %2818
  %p2820 = scmp.eq.s32.totalorder %s2819, 0
  %p2821 = pneg %p2820
  %2823 = shalt.err (%p2821)
  %s2824 = scalar_lea.sflag [#allocation3], 7
  %2825 = vsyncmov %s2824
  %s2826 = vpop.sfrf %2825
  %p2827 = scmp.eq.s32.totalorder %s2826, 0
  %p2828 = pneg %p2827
  %2830 = shalt.err (%p2828)
  %s2831 = scalar_lea.sflag [#allocation3], 8
  %2832 = vsyncmov %s2831
  %s2833 = vpop.sfrf %2832
  %p2834 = scmp.eq.s32.totalorder %s2833, 0
  %p2835 = pneg %p2834
  %2837 = shalt.err (%p2835)
  %s2838 = scalar_lea.sflag [#allocation3], 9
  %2839 = vsyncmov %s2838
  %s2840 = vpop.sfrf %2839
  %p2841 = scmp.eq.s32.totalorder %s2840, 0
  %p2842 = pneg %p2841
  %2844 = shalt.err (%p2842)
  %s2845 = scalar_lea.sflag [#allocation3], 10
  %2846 = vsyncmov %s2845
  %s2847 = vpop.sfrf %2846
  %p2848 = scmp.eq.s32.totalorder %s2847, 0
  %p2849 = pneg %p2848
  %2851 = shalt.err (%p2849)
  %s2852 = scalar_lea.sflag [#allocation3], 11
  %2853 = vsyncmov %s2852
  %s2854 = vpop.sfrf %2853
  %p2855 = scmp.eq.s32.totalorder %s2854, 0
  %p2856 = pneg %p2855
  %2858 = shalt.err (%p2856)
  %s2859 = scalar_lea.sflag [#allocation3], 12
  %2860 = vsyncmov %s2859
  %s2861 = vpop.sfrf %2860
  %p2862 = scmp.eq.s32.totalorder %s2861, 0
  %p2863 = pneg %p2862
  %2865 = shalt.err (%p2863)
  %s2866 = scalar_lea.sflag [#allocation3], 13
  %2867 = vsyncmov %s2866
  %s2868 = vpop.sfrf %2867
  %p2869 = scmp.eq.s32.totalorder %s2868, 0
  %p2870 = pneg %p2869
  %2872 = shalt.err (%p2870)
  %s2873 = scalar_lea.sflag [#allocation3], 14
  %2874 = vsyncmov %s2873
  %s2875 = vpop.sfrf %2874
  %p2876 = scmp.eq.s32.totalorder %s2875, 0
  %p2877 = pneg %p2876
  %2879 = shalt.err (%p2877)
  %s2880 = scalar_lea.sflag [#allocation3], 15
  %2881 = vsyncmov %s2880
  %s2882 = vpop.sfrf %2881
  %p2883 = scmp.eq.s32.totalorder %s2882, 0
  %p2884 = pneg %p2883
  %2886 = shalt.err (%p2884)
  %s2887 = scalar_lea.sflag [#allocation3], 16
  %2888 = vsyncmov %s2887
  %s2889 = vpop.sfrf %2888
  %p2890 = scmp.eq.s32.totalorder %s2889, 0
  %p2891 = pneg %p2890
  %2893 = shalt.err (%p2891)
  %s2894 = scalar_lea.sflag [#allocation3], 17
  %2895 = vsyncmov %s2894
  %s2896 = vpop.sfrf %2895
  %p2897 = scmp.eq.s32.totalorder %s2896, 0
  %p2898 = pneg %p2897
  %2900 = shalt.err (%p2898)
  %s2901 = scalar_lea.sflag [#allocation3], 18
  %2902 = vsyncmov %s2901
  %s2903 = vpop.sfrf %2902
  %p2904 = scmp.eq.s32.totalorder %s2903, 0
  %p2905 = pneg %p2904
  %2907 = shalt.err (%p2905)
  %s2908 = scalar_lea.sflag [#allocation3], 19
  %2909 = vsyncmov %s2908
  %s2910 = vpop.sfrf %2909
  %p2911 = scmp.eq.s32.totalorder %s2910, 0
  %p2912 = pneg %p2911
  %2914 = shalt.err (%p2912)
  %s2915 = scalar_lea.sflag [#allocation3], 20
  %2916 = vsyncmov %s2915
  %s2917 = vpop.sfrf %2916
  %p2918 = scmp.eq.s32.totalorder %s2917, 0
  %p2919 = pneg %p2918
  %2921 = shalt.err (%p2919)
  %s2922 = scalar_lea.sflag [#allocation3], 21
  %2923 = vsyncmov %s2922
  %s2924 = vpop.sfrf %2923
  %p2925 = scmp.eq.s32.totalorder %s2924, 0
  %p2926 = pneg %p2925
  %2928 = shalt.err (%p2926)
  %s2929 = scalar_lea.sflag [#allocation3], 22
  %2930 = vsyncmov %s2929
  %s2931 = vpop.sfrf %2930
  %p2932 = scmp.eq.s32.totalorder %s2931, 0
  %p2933 = pneg %p2932
  %2935 = shalt.err (%p2933)
  %s2936 = scalar_lea.sflag [#allocation3], 23
  %2937 = vsyncmov %s2936
  %s2938 = vpop.sfrf %2937
  %p2939 = scmp.eq.s32.totalorder %s2938, 0
  %p2940 = pneg %p2939
  %2942 = shalt.err (%p2940)
  %s2943 = scalar_lea.sflag [#allocation3], 24
  %2944 = vsyncmov %s2943
  %s2945 = vpop.sfrf %2944
  %p2946 = scmp.eq.s32.totalorder %s2945, 0
  %p2947 = pneg %p2946
  %2949 = shalt.err (%p2947)
  %s2950 = scalar_lea.sflag [#allocation3], 25
  %2951 = vsyncmov %s2950
  %s2952 = vpop.sfrf %2951
  %p2953 = scmp.eq.s32.totalorder %s2952, 0
  %p2954 = pneg %p2953
  %2956 = shalt.err (%p2954)
  %s2957 = scalar_lea.sflag [#allocation3], 26
  %2958 = vsyncmov %s2957
  %s2959 = vpop.sfrf %2958
  %p2960 = scmp.eq.s32.totalorder %s2959, 0
  %p2961 = pneg %p2960
  %2963 = shalt.err (%p2961)
  %s2964 = scalar_lea.sflag [#allocation3], 27
  %2965 = vsyncmov %s2964
  %s2966 = vpop.sfrf %2965
  %p2967 = scmp.eq.s32.totalorder %s2966, 0
  %p2968 = pneg %p2967
  %2970 = shalt.err (%p2968)
  %s2971 = scalar_lea.sflag [#allocation3], 28
  %2972 = vsyncmov %s2971
  %s2973 = vpop.sfrf %2972
  %p2974 = scmp.eq.s32.totalorder %s2973, 0
  %p2975 = pneg %p2974
  %2977 = shalt.err (%p2975)
  %s2978 = scalar_lea.sflag [#allocation3], 29
  %2979 = vsyncmov %s2978
  %s2980 = vpop.sfrf %2979
  %p2981 = scmp.eq.s32.totalorder %s2980, 0
  %p2982 = pneg %p2981
  %2984 = shalt.err (%p2982)
  %s2985 = scalar_lea.sflag [#allocation3], 30
  %2986 = vsyncmov %s2985
  %s2987 = vpop.sfrf %2986
  %p2988 = scmp.eq.s32.totalorder %s2987, 0
  %p2989 = pneg %p2988
  %2991 = shalt.err (%p2989)
  %s2992 = scalar_lea.sflag [#allocation3], 31
  %2993 = vsyncmov %s2992
  %s2994 = vpop.sfrf %2993
  %p2995 = scmp.eq.s32.totalorder %s2994, 0
  %p2996 = pneg %p2995
  %2998 = shalt.err (%p2996)
  %s2999 = scalar_lea.sflag [#allocation3], 32
  %3000 = vsyncmov %s2999
  %s3001 = vpop.sfrf %3000
  %p3002 = scmp.eq.s32.totalorder %s3001, 0
  %p3003 = pneg %p3002
  %3005 = shalt.err (%p3003)
  %s3006 = scalar_lea.sflag [#allocation3], 33
  %3007 = vsyncmov %s3006
  %s3008 = vpop.sfrf %3007
  %p3009 = scmp.eq.s32.totalorder %s3008, 0
  %p3010 = pneg %p3009
  %3012 = shalt.err (%p3010)
  %s3013 = scalar_lea.sflag [#allocation3], 34
  %3014 = vsyncmov %s3013
  %s3015 = vpop.sfrf %3014
  %p3016 = scmp.eq.s32.totalorder %s3015, 0
  %p3017 = pneg %p3016
  %3019 = shalt.err (%p3017)
  %s3020 = scalar_lea.sflag [#allocation3], 35
  %3021 = vsyncmov %s3020
  %s3022 = vpop.sfrf %3021
  %p3023 = scmp.eq.s32.totalorder %s3022, 0
  %p3024 = pneg %p3023
  %3026 = shalt.err (%p3024)
  %s3027 = scalar_lea.sflag [#allocation3], 36
  %3028 = vsyncmov %s3027
  %s3029 = vpop.sfrf %3028
  %p3030 = scmp.eq.s32.totalorder %s3029, 0
  %p3031 = pneg %p3030
  %3033 = shalt.err (%p3031)
  %s3034 = scalar_lea.sflag [#allocation3], 37
  %3035 = vsyncmov %s3034
  %s3036 = vpop.sfrf %3035
  %p3037 = scmp.eq.s32.totalorder %s3036, 0
  %p3038 = pneg %p3037
  %3040 = shalt.err (%p3038)
  %s3041 = scalar_lea.sflag [#allocation3], 38
  %3042 = vsyncmov %s3041
  %s3043 = vpop.sfrf %3042
  %p3044 = scmp.eq.s32.totalorder %s3043, 0
  %p3045 = pneg %p3044
  %3047 = shalt.err (%p3045)
  %s3048 = scalar_lea.sflag [#allocation3], 39
  %3049 = vsyncmov %s3048
  %s3050 = vpop.sfrf %3049
  %p3051 = scmp.eq.s32.totalorder %s3050, 0
  %p3052 = pneg %p3051
  %3054 = shalt.err (%p3052)
  %s3055 = scalar_lea.sflag [#allocation3], 40
  %3056 = vsyncmov %s3055
  %s3057 = vpop.sfrf %3056
  %p3058 = scmp.eq.s32.totalorder %s3057, 0
  %p3059 = pneg %p3058
  %3061 = shalt.err (%p3059)
  %s3062 = scalar_lea.sflag [#allocation3], 41
  %3063 = vsyncmov %s3062
  %s3064 = vpop.sfrf %3063
  %p3065 = scmp.eq.s32.totalorder %s3064, 0
  %p3066 = pneg %p3065
  %3068 = shalt.err (%p3066)
  %s3069 = scalar_lea.sflag [#allocation3], 42
  %3070 = vsyncmov %s3069
  %s3071 = vpop.sfrf %3070
  %p3072 = scmp.eq.s32.totalorder %s3071, 0
  %p3073 = pneg %p3072
  %3075 = shalt.err (%p3073)
  %s3076 = scalar_lea.sflag [#allocation3], 43
  %3077 = vsyncmov %s3076
  %s3078 = vpop.sfrf %3077
  %p3079 = scmp.eq.s32.totalorder %s3078, 0
  %p3080 = pneg %p3079
  %3082 = shalt.err (%p3080)
  %s3083 = scalar_lea.sflag [#allocation3], 44
  %3084 = vsyncmov %s3083
  %s3085 = vpop.sfrf %3084
  %p3086 = scmp.eq.s32.totalorder %s3085, 0
  %p3087 = pneg %p3086
  %3089 = shalt.err (%p3087)
  %s3090 = scalar_lea.sflag [#allocation3], 45
  %3091 = vsyncmov %s3090
  %s3092 = vpop.sfrf %3091
  %p3093 = scmp.eq.s32.totalorder %s3092, 0
  %p3094 = pneg %p3093
  %3096 = shalt.err (%p3094)
  %s3097 = scalar_lea.sflag [#allocation3], 46
  %3098 = vsyncmov %s3097
  %s3099 = vpop.sfrf %3098
  %p3100 = scmp.eq.s32.totalorder %s3099, 0
  %p3101 = pneg %p3100
  %3103 = shalt.err (%p3101)
  %s3104 = scalar_lea.sflag [#allocation3], 47
  %3105 = vsyncmov %s3104
  %s3106 = vpop.sfrf %3105
  %p3107 = scmp.eq.s32.totalorder %s3106, 0
  %p3108 = pneg %p3107
  %3110 = shalt.err (%p3108)
  %s3111 = scalar_lea.sflag [#allocation3], 48
  %3112 = vsyncmov %s3111
  %s3113 = vpop.sfrf %3112
  %p3114 = scmp.eq.s32.totalorder %s3113, 0
  %p3115 = pneg %p3114
  %3117 = shalt.err (%p3115)
  %s3118 = scalar_lea.sflag [#allocation3], 49
  %3119 = vsyncmov %s3118
  %s3120 = vpop.sfrf %3119
  %p3121 = scmp.eq.s32.totalorder %s3120, 0
  %p3122 = pneg %p3121
  %3124 = shalt.err (%p3122)
  %s3125 = scalar_lea.sflag [#allocation3], 50
  %3126 = vsyncmov %s3125
  %s3127 = vpop.sfrf %3126
  %p3128 = scmp.eq.s32.totalorder %s3127, 0
  %p3129 = pneg %p3128
  %3131 = shalt.err (%p3129)
  %s3132 = scalar_lea.sflag [#allocation3], 51
  %3133 = vsyncmov %s3132
  %s3134 = vpop.sfrf %3133
  %p3135 = scmp.eq.s32.totalorder %s3134, 0
  %p3136 = pneg %p3135
  %3138 = shalt.err (%p3136)
  %s3139 = scalar_lea.sflag [#allocation3], 52
  %3140 = vsyncmov %s3139
  %s3141 = vpop.sfrf %3140
  %p3142 = scmp.eq.s32.totalorder %s3141, 0
  %p3143 = pneg %p3142
  %3145 = shalt.err (%p3143)
  %s3146 = scalar_lea.sflag [#allocation3], 53
  %3147 = vsyncmov %s3146
  %s3148 = vpop.sfrf %3147
  %p3149 = scmp.eq.s32.totalorder %s3148, 0
  %p3150 = pneg %p3149
  %3152 = shalt.err (%p3150)
  %s3153 = scalar_lea.sflag [#allocation3], 54
  %3154 = vsyncmov %s3153
  %s3155 = vpop.sfrf %3154
  %p3156 = scmp.eq.s32.totalorder %s3155, 0
  %p3157 = pneg %p3156
  %3159 = shalt.err (%p3157)
  %s3160 = scalar_lea.sflag [#allocation3], 55
  %3161 = vsyncmov %s3160
  %s3162 = vpop.sfrf %3161
  %p3163 = scmp.eq.s32.totalorder %s3162, 0
  %p3164 = pneg %p3163
  %3166 = shalt.err (%p3164)
  %s3167 = scalar_lea.sflag [#allocation3], 56
  %3168 = vsyncmov %s3167
  %s3169 = vpop.sfrf %3168
  %p3170 = scmp.eq.s32.totalorder %s3169, 0
  %p3171 = pneg %p3170
  %3173 = shalt.err (%p3171)
  %s3174 = scalar_lea.sflag [#allocation3], 57
  %3175 = vsyncmov %s3174
  %s3176 = vpop.sfrf %3175
  %p3177 = scmp.eq.s32.totalorder %s3176, 0
  %p3178 = pneg %p3177
  %3180 = shalt.err (%p3178)
  %s3181 = scalar_lea.sflag [#allocation3], 58
  %3182 = vsyncmov %s3181
  %s3183 = vpop.sfrf %3182
  %p3184 = scmp.eq.s32.totalorder %s3183, 0
  %p3185 = pneg %p3184
  %3187 = shalt.err (%p3185)
  %s3188 = scalar_lea.sflag [#allocation3], 59
  %3189 = vsyncmov %s3188
  %s3190 = vpop.sfrf %3189
  %p3191 = scmp.eq.s32.totalorder %s3190, 0
  %p3192 = pneg %p3191
  %3194 = shalt.err (%p3192)
  %s3195 = scalar_lea.sflag [#allocation3], 60
  %3196 = vsyncmov %s3195
  %s3197 = vpop.sfrf %3196
  %p3198 = scmp.eq.s32.totalorder %s3197, 0
  %p3199 = pneg %p3198
  %3201 = shalt.err (%p3199)
  %s3202 = scalar_lea.sflag [#allocation3], 61
  %3203 = vsyncmov %s3202
  %s3204 = vpop.sfrf %3203
  %p3205 = scmp.eq.s32.totalorder %s3204, 0
  %p3206 = pneg %p3205
  %3208 = shalt.err (%p3206)
  %s3209 = scalar_lea.sflag [#allocation3], 62
  %3210 = vsyncmov %s3209
  %s3211 = vpop.sfrf %3210
  %p3212 = scmp.eq.s32.totalorder %s3211, 0
  %p3213 = pneg %p3212
  %3215 = shalt.err (%p3213)
  %s3216 = scalar_lea.sflag [#allocation3], 63
  %3217 = vsyncmov %s3216
  %s3218 = vpop.sfrf %3217
  %p3219 = scmp.eq.s32.totalorder %s3218, 0
  %p3220 = pneg %p3219
  %3222 = shalt.err (%p3220)

</llo_original>
